<compile_context>
chip_gen: v7x
topology: tpu7x:2x2x1
jax: 0.10.0
libtpu: 0.0.40
codegen_flags: <defaults>
</compile_context>

<pallas_src>
import functools

import jax
import jax.numpy as jnp
from jax import lax
from jax.experimental import pallas as pl
from jax.experimental.pallas import tpu as pltpu

D_IN, H1, H2, H3, D_OUT = 28 * 28, 1024, 512, 256, 1


def _leaky_relu(x, slope=0.2):
    return jnp.where(x > 0, x, slope * x)


def _sigmoid(x):
    # Numerically stable sigmoid: only exponentiates non-positive values.
    z = jnp.exp(-jnp.abs(x))
    return jnp.where(x >= 0, 1.0 / (1.0 + z), z / (1.0 + z))


def discriminator_kernel(
    x_ref,
    w1_ref, b1_ref,
    w2_ref, b2_ref,
    w3_ref, b3_ref,
    w4t_ref, b4_ref,
    o_ref,
):
    # Layer 1: Linear(784 -> 1024) + LeakyReLU  [Dropout = identity, eval mode]
    x = x_ref[...].astype(jnp.bfloat16)
    h = jnp.dot(x, w1_ref[...], preferred_element_type=jnp.float32)
    h = _leaky_relu(h + b1_ref[...])

    # Layer 2: Linear(1024 -> 512) + LeakyReLU
    h = jnp.dot(h.astype(jnp.bfloat16), w2_ref[...],
                preferred_element_type=jnp.float32)
    h = _leaky_relu(h + b2_ref[...])

    # Layer 3: Linear(512 -> 256) + LeakyReLU
    h = jnp.dot(h.astype(jnp.bfloat16), w3_ref[...],
                preferred_element_type=jnp.float32)
    h = _leaky_relu(h + b3_ref[...])

    # Layer 4: Linear(256 -> 1) + Sigmoid, computed as (1,256) x (tile,256)^T
    # so the result lands lane-dense as (1, batch_tile) -> unmasked stores.
    # (Contraction is on both last dims; verified tiny vs. the MXU work above.)
    logits = lax.dot_general(
        w4t_ref[...], h.astype(jnp.bfloat16),
        dimension_numbers=(((1,), (1,)), ((), ())),
        preferred_element_type=jnp.float32,
    )
    logits = logits + b4_ref[0]  # scalar bias from SMEM
    o_ref[...] = _sigmoid(logits).astype(o_ref.dtype)


@functools.lru_cache(maxsize=None)
def _build_forward(b_pad, tile):
    """Builds (and caches) the pallas_call for a padded batch of size b_pad."""
    wspec = lambda shape: pl.BlockSpec(shape, lambda i: (0, 0))  # grid-resident

    grid_spec = pltpu.PrefetchScalarGridSpec(
        num_scalar_prefetch=0,
        grid=(b_pad // tile,),
        in_specs=[
            pl.BlockSpec((tile, D_IN), lambda i: (i, 0)),         # x tile (f32)
            wspec((D_IN, H1)), wspec((1, H1)),                    # w1 bf16, b1 f32
            wspec((H1, H2)), wspec((1, H2)),                      # w2 bf16, b2 f32
            wspec((H2, H3)), wspec((1, H3)),                      # w3 bf16, b3 f32
            wspec((1, H3)),                                       # w4^T bf16
            pl.BlockSpec(memory_space=pltpu.MemorySpace.SMEM),    # b4 scalar
        ],
        # Lane-dense output: batch on the lane axis, one unmasked store/step.
        out_specs=pl.BlockSpec((1, tile), lambda i: (0, i)),
    )

    return pl.pallas_call(
        discriminator_kernel,
        out_shape=jax.ShapeDtypeStruct((1, b_pad), jnp.float32),
        grid_spec=grid_spec,
        compiler_params=pltpu.CompilerParams(
            dimension_semantics=("parallel",),   # shards grid across v7x TCs
            vmem_limit_bytes=32 << 20,           # actual need ~8 MiB (bf16 weights)
        ),
    )


def _tiling(B, requested_tile):
    """Pick (tile, padded_batch). Tile is a multiple of 8; when B > 128 it is a
    multiple of 128 chosen so the grid has >= 2 steps (v7x megacore)."""
    if B <= 128:
        tile = max(8, ((B + 7) // 8) * 8)
        return tile, tile                                   # single full block
    half = (((B + 1) // 2) + 127) // 128 * 128               # ceil(B/2) -> x128
    tile = min(requested_tile, half)
    b_pad = ((B + tile - 1) // tile) * tile
    return tile, b_pad


def prepare_params(params):
    """One-time param prep: bf16 weights, f32 biases, (1,256) w4^T, SMEM b4."""
    w1, b1, w2, b2, w3, b3, w4, b4 = params
    return (
        w1.astype(jnp.bfloat16), b1.astype(jnp.float32),
        w2.astype(jnp.bfloat16), b2.astype(jnp.float32),
        w3.astype(jnp.bfloat16), b3.astype(jnp.float32),
        w4.reshape(1, H3).astype(jnp.bfloat16),
        b4.reshape(1).astype(jnp.float32),
    )


def discriminator_forward(x, prepared_params, batch_tile=256):
    """x: (B, 784) float32 -> (B, 1) float32.

    batch_tile: sweep per chip (256 on v5e/v7x, 512 on v6e once comfortable);
    the batch is zero-padded up to a multiple of the chosen tile.
    """
    B = x.shape[0]
    tile, b_pad = _tiling(B, batch_tile)
    x_p = x if b_pad == B else jnp.pad(x, ((0, b_pad - B), (0, 0)))
    out = _build_forward(b_pad, tile)(x_p, *prepared_params)
    return out[0, :B].reshape(B, 1)


def init_params(key):
    """Deterministic init mimicking PyTorch Linear (uniform +/- 1/sqrt(fan_in))."""
    dims = [(D_IN, H1), (H1, H2), (H2, H3), (H3, D_OUT)]
    params = []
    for i, (fan_in, fan_out) in enumerate(dims):
        kw, kb = jax.random.split(jax.random.fold_in(key, i))
        bound = 1.0 / jnp.sqrt(fan_in)
        w = jax.random.uniform(kw, (fan_in, fan_out), jnp.float32, -bound, bound)
        b = jax.random.uniform(kb, (1, fan_out), jnp.float32, -bound, bound)
        params += [w, b]
    return tuple(params)


def reference_forward(x, params):
    w1, b1, w2, b2, w3, b3, w4, b4 = params
    h = _leaky_relu(x @ w1 + b1)
    h = _leaky_relu(h @ w2 + b2)
    h = _leaky_relu(h @ w3 + b3)
    return jax.nn.sigmoid(h @ w4 + b4)


if __name__ == "__main__":
    key = jax.random.PRNGKey(0)
    k_x, k_p = jax.random.split(key)

    # 512 rows / tile=256 -> 2 parallel grid steps (keeps both v7x TCs busy).
    batch = 512
    x = jax.random.normal(k_x, (batch, D_IN), dtype=jnp.float32)
    params = init_params(k_p)
    prepared = prepare_params(params)   # one-time bf16 cast / reshape

    out = jax.block_until_ready(discriminator_forward(x, prepared, batch_tile=256))

    ref = reference_forward(x, params)  # f32 reference
    assert out.shape == (batch, 1)
    max_err = float(jnp.max(jnp.abs(out - ref)))
    # bf16 MXU inputs with f32 accumulation: tolerance loosened vs. f32 ref.
    assert jnp.allclose(out, ref, atol=2e-2, rtol=2e-2), f"mismatch {max_err}"

    print("KERNEL_OK")
</pallas_src>

<mosaic_0001>
module attributes {stable_mosaic.version = 11 : i64} {
  func.func @discriminator_kernel(%arg0: i32, %arg1: memref<256x784xf32, #tpu.memory_space<vmem>>, %arg2: memref<784x1024xbf16, #tpu.memory_space<vmem>>, %arg3: memref<1x1024xf32, #tpu.memory_space<vmem>>, %arg4: memref<1024x512xbf16, #tpu.memory_space<vmem>>, %arg5: memref<1x512xf32, #tpu.memory_space<vmem>>, %arg6: memref<512x256xbf16, #tpu.memory_space<vmem>>, %arg7: memref<1x256xf32, #tpu.memory_space<vmem>>, %arg8: memref<1x256xbf16, #tpu.memory_space<vmem>>, %arg9: memref<1xf32, #tpu.memory_space<smem>>, %arg10: memref<1x256xf32, #tpu.memory_space<vmem>>) attributes {dimension_semantics = [#tpu.dimension_semantics<parallel>], iteration_bounds = array<i64: 2>, scalar_prefetch = 0 : i64, scratch_operands = 0 : i64, tpu.core_type = #tpu.core_type<tc>, window_params = [{transform_indices = @transform_0, window_bounds = array<i64: 256, 784>}, {pipeline_mode = #tpu.pipeline_mode<synchronous>, transform_indices = @transform_1, window_bounds = array<i64: 784, 1024>}, {pipeline_mode = #tpu.pipeline_mode<synchronous>, transform_indices = @transform_2, window_bounds = array<i64: 1, 1024>}, {pipeline_mode = #tpu.pipeline_mode<synchronous>, transform_indices = @transform_3, window_bounds = array<i64: 1024, 512>}, {pipeline_mode = #tpu.pipeline_mode<synchronous>, transform_indices = @transform_4, window_bounds = array<i64: 1, 512>}, {pipeline_mode = #tpu.pipeline_mode<synchronous>, transform_indices = @transform_5, window_bounds = array<i64: 512, 256>}, {pipeline_mode = #tpu.pipeline_mode<synchronous>, transform_indices = @transform_6, window_bounds = array<i64: 1, 256>}, {pipeline_mode = #tpu.pipeline_mode<synchronous>, transform_indices = @transform_7, window_bounds = array<i64: 1, 256>}, {transform_indices = @transform_8, window_bounds = array<i64: 1>}, {transform_indices = @transform_9, window_bounds = array<i64: 1, 256>}]} {
    %c0 = arith.constant 0 : index
    %c0_0 = arith.constant 0 : index
    %0 = vector.load %arg1[%c0, %c0_0] : memref<256x784xf32, #tpu.memory_space<vmem>>, vector<256x784xf32>
    %1 = arith.truncf %0 : vector<256x784xf32> to vector<256x784xbf16>
    %c0_1 = arith.constant 0 : index
    %c0_2 = arith.constant 0 : index
    %2 = vector.load %arg2[%c0_1, %c0_2] : memref<784x1024xbf16, #tpu.memory_space<vmem>>, vector<784x1024xbf16>
    %cst = arith.constant dense<0.000000e+00> : vector<256x1024xf32>
    %3 = tpu.matmul %1, %2, %cst {dimension_numbers = #tpu.dot_dimension_numbers<[1], [0], [0], [1], [0, 0, 1, 1], [], []>} : vector<256x784xbf16>, vector<784x1024xbf16>, vector<256x1024xf32> -> vector<256x1024xf32>
    %c0_3 = arith.constant 0 : index
    %c0_4 = arith.constant 0 : index
    %4 = vector.load %arg3[%c0_3, %c0_4] : memref<1x1024xf32, #tpu.memory_space<vmem>>, vector<1x1024xf32>
    %5 = vector.broadcast %4 : vector<1x1024xf32> to vector<256x1024xf32>
    %6 = arith.addf %3, %5 : vector<256x1024xf32>
    %cst_5 = arith.constant 0.000000e+00 : f32
    %7 = vector.broadcast %cst_5 : f32 to vector<256x1024xf32>
    %8 = arith.cmpf ogt, %6, %7 : vector<256x1024xf32>
    %cst_6 = arith.constant 2.000000e-01 : f32
    %9 = vector.broadcast %cst_6 : f32 to vector<256x1024xf32>
    %10 = arith.mulf %9, %6 : vector<256x1024xf32>
    %11 = arith.select %8, %6, %10 : vector<256x1024xi1>, vector<256x1024xf32>
    %12 = arith.truncf %11 : vector<256x1024xf32> to vector<256x1024xbf16>
    %c0_7 = arith.constant 0 : index
    %c0_8 = arith.constant 0 : index
    %13 = vector.load %arg4[%c0_7, %c0_8] : memref<1024x512xbf16, #tpu.memory_space<vmem>>, vector<1024x512xbf16>
    %cst_9 = arith.constant dense<0.000000e+00> : vector<256x512xf32>
    %14 = tpu.matmul %12, %13, %cst_9 {dimension_numbers = #tpu.dot_dimension_numbers<[1], [0], [0], [1], [0, 0, 1, 1], [], []>} : vector<256x1024xbf16>, vector<1024x512xbf16>, vector<256x512xf32> -> vector<256x512xf32>
    %c0_10 = arith.constant 0 : index
    %c0_11 = arith.constant 0 : index
    %15 = vector.load %arg5[%c0_10, %c0_11] : memref<1x512xf32, #tpu.memory_space<vmem>>, vector<1x512xf32>
    %16 = vector.broadcast %15 : vector<1x512xf32> to vector<256x512xf32>
    %17 = arith.addf %14, %16 : vector<256x512xf32>
    %cst_12 = arith.constant 0.000000e+00 : f32
    %18 = vector.broadcast %cst_12 : f32 to vector<256x512xf32>
    %19 = arith.cmpf ogt, %17, %18 : vector<256x512xf32>
    %cst_13 = arith.constant 2.000000e-01 : f32
    %20 = vector.broadcast %cst_13 : f32 to vector<256x512xf32>
    %21 = arith.mulf %20, %17 : vector<256x512xf32>
    %22 = arith.select %19, %17, %21 : vector<256x512xi1>, vector<256x512xf32>
    %23 = arith.truncf %22 : vector<256x512xf32> to vector<256x512xbf16>
    %c0_14 = arith.constant 0 : index
    %c0_15 = arith.constant 0 : index
    %24 = vector.load %arg6[%c0_14, %c0_15] : memref<512x256xbf16, #tpu.memory_space<vmem>>, vector<512x256xbf16>
    %cst_16 = arith.constant dense<0.000000e+00> : vector<256x256xf32>
    %25 = tpu.matmul %23, %24, %cst_16 {dimension_numbers = #tpu.dot_dimension_numbers<[1], [0], [0], [1], [0, 0, 1, 1], [], []>} : vector<256x512xbf16>, vector<512x256xbf16>, vector<256x256xf32> -> vector<256x256xf32>
    %c0_17 = arith.constant 0 : index
    %c0_18 = arith.constant 0 : index
    %26 = vector.load %arg7[%c0_17, %c0_18] : memref<1x256xf32, #tpu.memory_space<vmem>>, vector<1x256xf32>
    %27 = vector.broadcast %26 : vector<1x256xf32> to vector<256x256xf32>
    %28 = arith.addf %25, %27 : vector<256x256xf32>
    %cst_19 = arith.constant 0.000000e+00 : f32
    %29 = vector.broadcast %cst_19 : f32 to vector<256x256xf32>
    %30 = arith.cmpf ogt, %28, %29 : vector<256x256xf32>
    %cst_20 = arith.constant 2.000000e-01 : f32
    %31 = vector.broadcast %cst_20 : f32 to vector<256x256xf32>
    %32 = arith.mulf %31, %28 : vector<256x256xf32>
    %33 = arith.select %30, %28, %32 : vector<256x256xi1>, vector<256x256xf32>
    %c0_21 = arith.constant 0 : index
    %c0_22 = arith.constant 0 : index
    %34 = vector.load %arg8[%c0_21, %c0_22] : memref<1x256xbf16, #tpu.memory_space<vmem>>, vector<1x256xbf16>
    %35 = arith.truncf %33 : vector<256x256xf32> to vector<256x256xbf16>
    %cst_23 = arith.constant dense<0.000000e+00> : vector<1x256xf32>
    %36 = tpu.matmul %34, %35, %cst_23 {dimension_numbers = #tpu.dot_dimension_numbers<[1], [1], [0], [0], [0, 0, 1, 0], [], []>} : vector<1x256xbf16>, vector<256x256xbf16>, vector<1x256xf32> -> vector<1x256xf32>
    %c0_24 = arith.constant 0 : index
    %37 = memref.load %arg9[%c0_24] : memref<1xf32, #tpu.memory_space<smem>>
    %38 = vector.broadcast %37 : f32 to vector<1x256xf32>
    %39 = arith.addf %36, %38 : vector<1x256xf32>
    %40 = math.absf %39 : vector<1x256xf32>
    %cst_25 = arith.constant 0.000000e+00 : f32
    %41 = vector.broadcast %cst_25 : f32 to vector<1x256xf32>
    %42 = arith.subf %41, %40 : vector<1x256xf32>
    %43 = math.exp %42 : vector<1x256xf32>
    %cst_26 = arith.constant 0.000000e+00 : f32
    %44 = vector.broadcast %cst_26 : f32 to vector<1x256xf32>
    %45 = arith.cmpf oge, %39, %44 : vector<1x256xf32>
    %cst_27 = arith.constant 1.000000e+00 : f32
    %46 = vector.broadcast %cst_27 : f32 to vector<1x256xf32>
    %47 = arith.addf %46, %43 : vector<1x256xf32>
    %cst_28 = arith.constant 1.000000e+00 : f32
    %48 = vector.broadcast %cst_28 : f32 to vector<1x256xf32>
    %49 = arith.divf %48, %47 : vector<1x256xf32>
    %cst_29 = arith.constant 1.000000e+00 : f32
    %50 = vector.broadcast %cst_29 : f32 to vector<1x256xf32>
    %51 = arith.addf %50, %43 : vector<1x256xf32>
    %52 = arith.divf %43, %51 : vector<1x256xf32>
    %53 = arith.select %45, %49, %52 : vector<1x256xi1>, vector<1x256xf32>
    %c0_30 = arith.constant 0 : index
    %c0_31 = arith.constant 0 : index
    %54 = vector.load %arg10[%c0_30, %c0_31] : memref<1x256xf32, #tpu.memory_space<vmem>>, vector<1x256xf32>
    tpu.vector_store %arg10[%c0_30, %c0_31], %53 {strides = array<i32>} : memref<1x256xf32, #tpu.memory_space<vmem>>, vector<1x256xf32>,
    return
  }
  func.func @transform_0(%arg0: i32) -> (i32, i32) {
    %c0_i32 = arith.constant 0 : i32
    %c0_i32_0 = arith.constant 0 : i32
    return %arg0, %c0_i32 : i32, i32
  }
  func.func @transform_1(%arg0: i32) -> (i32, i32) {
    %c0_i32 = arith.constant 0 : i32
    %c0_i32_0 = arith.constant 0 : i32
    %c0_i32_1 = arith.constant 0 : i32
    return %c0_i32, %c0_i32_0 : i32, i32
  }
  func.func @transform_2(%arg0: i32) -> (i32, i32) {
    %c0_i32 = arith.constant 0 : i32
    %c0_i32_0 = arith.constant 0 : i32
    %c0_i32_1 = arith.constant 0 : i32
    return %c0_i32, %c0_i32_0 : i32, i32
  }
  func.func @transform_3(%arg0: i32) -> (i32, i32) {
    %c0_i32 = arith.constant 0 : i32
    %c0_i32_0 = arith.constant 0 : i32
    %c0_i32_1 = arith.constant 0 : i32
    return %c0_i32, %c0_i32_0 : i32, i32
  }
  func.func @transform_4(%arg0: i32) -> (i32, i32) {
    %c0_i32 = arith.constant 0 : i32
    %c0_i32_0 = arith.constant 0 : i32
    %c0_i32_1 = arith.constant 0 : i32
    return %c0_i32, %c0_i32_0 : i32, i32
  }
  func.func @transform_5(%arg0: i32) -> (i32, i32) {
    %c0_i32 = arith.constant 0 : i32
    %c0_i32_0 = arith.constant 0 : i32
    %c0_i32_1 = arith.constant 0 : i32
    return %c0_i32, %c0_i32_0 : i32, i32
  }
  func.func @transform_6(%arg0: i32) -> (i32, i32) {
    %c0_i32 = arith.constant 0 : i32
    %c0_i32_0 = arith.constant 0 : i32
    %c0_i32_1 = arith.constant 0 : i32
    return %c0_i32, %c0_i32_0 : i32, i32
  }
  func.func @transform_7(%arg0: i32) -> (i32, i32) {
    %c0_i32 = arith.constant 0 : i32
    %c0_i32_0 = arith.constant 0 : i32
    %c0_i32_1 = arith.constant 0 : i32
    return %c0_i32, %c0_i32_0 : i32, i32
  }
  func.func @transform_8(%arg0: i32) -> i32 {
    %c0_i32 = arith.constant 0 : i32
    %c0_i32_0 = arith.constant 0 : i32
    return %c0_i32 : i32
  }
  func.func @transform_9(%arg0: i32) -> (i32, i32) {
    %c0_i32 = arith.constant 0 : i32
    %c0_i32_0 = arith.constant 0 : i32
    return %c0_i32, %arg0 : i32, i32
  }
}

</mosaic_0001>

<llo_original>
// kernel: tpu_custom_call.1
$region0: #{tpu_custom_call.1}
  #allocation0 [shape = 'u32[]', space=smem, size = 0x4, offset = 0x4, fixed_abs, tag = 'smem constant byte address 0x4 - core index']
  #allocation1 [shape = 'u32[144,128]{1,0:T(1,128)}', space=vmem, size = 0x12000, scoped, tag = 'internal scratch']
  #allocation2 [shape = 'f32[1]{0:T(128)S(6)}', space=smem, size = 0x200, scoped, tag = 'scoped memory for tpu_custom_call.1']
  %s0 = inlined_call_operand.vmem [shape: f32[512,784], index: 0, kind: input, shape index: {}]
  %s1 = inlined_call_operand.vmem [shape: bf16[784,1024], index: 1, kind: input, shape index: {}]
  %s2 = inlined_call_operand.vmem [shape: f32[1,1024], index: 2, kind: input, shape index: {}]
  %s3 = inlined_call_operand.vmem [shape: bf16[1024,512], index: 3, kind: input, shape index: {}]
  %s4 = inlined_call_operand.vmem [shape: f32[1,512], index: 4, kind: input, shape index: {}]
  %s5 = inlined_call_operand.vmem [shape: bf16[512,256], index: 5, kind: input, shape index: {}]
  %s6 = inlined_call_operand.vmem [shape: f32[1,256], index: 6, kind: input, shape index: {}]
  %s7 = inlined_call_operand.vmem [shape: bf16[1,256], index: 7, kind: input, shape index: {}]
  %s8 = inlined_call_operand.<no memory space> [shape: f32[1], index: 8, kind: input, shape index: {}]
  %s9 = inlined_call_operand.hbm [shape: f32[1,512], index: 9, kind: output, shape index: {}]
  %s10 = sld [smem:[#allocation0]]
  $region69: #{tpu_custom_call.1} parent=0
    _
  %s12 = ssub.s32 1, %s10
  %s13 = scalar_select 0, %s12, %s10
  %14 = sst [smem:[#allocation2]] %s8
  $region1: #{tpu_custom_call.1} parent=0
    #allocation3 [shape = 'u8[2048]{0}', space=vmem, size = 0x800, scoped, tag = 'output window, operand 0']
    #allocation4 [shape = 's32[2]{0}', space=sflag, size = 0x8, scoped, tag = 'scoped memory for tpu_custom_call.1']
    %15 = vsyncpa [#allocation4], 0
    %s16 = scalar_lea.sflag [#allocation4], 1
    %17 = vsyncpa %s16, 0
    loop: start=0, step=1, limit=4
    $region2: #{tpu_custom_call.1} parent=1 // loop_pre_header
      _
    $region3: #{tpu_custom_call.1} parent=1 // loop_header
      %s19 = sphi 0, %s23
      %p20 = scmp.ge.s32.totalorder %s19, 4
      %s29 = sphi 0, %s31
      %s32 = sphi 0, %s29
      %s33 = sphi 0, %s32
      %s49 = sphi 0, %s33
      %s53 = sphi 0, %s53
      %s55 = sphi 0, %s53
      %s56 = sphi 0, %s55
      %s70 = sphi 0, %s56
      %s74 = sphi 0, %s74
      %s76 = sphi 0, %s74
      %s77 = sphi 0, %s76
      %s91 = sphi 0, %s77
      %s95 = sphi 0, %s95
      %s97 = sphi 0, %s95
      %s98 = sphi 0, %s97
      %s112 = sphi 0, %s98
      %s116 = sphi 0, %s116
      %s118 = sphi 0, %s116
      %s119 = sphi 0, %s118
      %s133 = sphi 0, %s119
      %s137 = sphi 0, %s137
      %s139 = sphi 0, %s137
      %s140 = sphi 0, %s139
      %s154 = sphi 0, %s140
      %s158 = sphi 0, %s158
      %s160 = sphi 0, %s158
      %s161 = sphi 0, %s160
      %s175 = sphi 0, %s161
      %s179 = sphi 0, %s179
      %s181 = sphi 0, %s179
      %s182 = sphi 0, %s181
      %s196 = sphi 0, %s182
      %s200 = sphi 0, %s200
      %s202 = sphi 0, %s200
      %s203 = sphi 0, %s202
      %s217 = sphi 0, %s203
      %s223 = sphi 0, %s225
      %s226 = sphi 0, %s223
      %s227 = sphi 0, %s226
      %s243 = sphi 0, %s227
    $region4: #{tpu_custom_call.1} parent=1 // loop_header_branch
      %22 = sbr.rel (%p20) target = $region8
    $region5: #{tpu_custom_call.1} parent=1 // loop_body
      %s24 = ssub.s32 %s19, 1
      %s25 = ssub.s32 %s19, 2
      %s26 = sadd.s32 %s19, 1
      %s27 = ssub.s32 %s19, %s26
      %p28 = scmp.eq.s32.totalorder %s27, 0
      %s30 = sadd.s32 %s29, 1
      %s31 = scalar_select %p28, %s29, %s30
      %p34 = pneg %p28
      %p35 = scmp.eq.s32.totalorder %s19, 1
      %p36 = por %p34, %p35
      %p37 = scmp.ne.s32.totalorder %s29, %s32
      %p38 = scmp.eq.s32.totalorder %s19, 0
      %p39 = por %p37, %p38
      %p40 = scmp.ne.s32.totalorder %s29, %s32
      %p41 = scmp.eq.s32.totalorder %s24, 1
      %p42 = por %p40, %p41
      %p43 = scmp.ne.s32.totalorder %s32, %s33
      %p44 = scmp.eq.s32.totalorder %s24, 0
      %p45 = por %p43, %p44
      %p46 = scmp.ne.s32.totalorder %s32, %s33
      %p47 = scmp.eq.s32.totalorder %s25, 1
      %p48 = por %p46, %p47
      %p50 = scmp.ne.s32.totalorder %s33, %s49
      %p51 = scmp.eq.s32.totalorder %s25, 0
      %p52 = por %p50, %p51
      %s54 = sadd.s32 %s53, 1
      %p57 = scmp.eq.s32.totalorder %s19, 1
      %p58 = scmp.ne.s32.totalorder %s53, %s55
      %p59 = scmp.eq.s32.totalorder %s19, 0
      %p60 = por %p58, %p59
      %p61 = scmp.ne.s32.totalorder %s53, %s55
      %p62 = scmp.eq.s32.totalorder %s24, 1
      %p63 = por %p61, %p62
      %p64 = scmp.ne.s32.totalorder %s55, %s56
      %p65 = scmp.eq.s32.totalorder %s24, 0
      %p66 = por %p64, %p65
      %p67 = scmp.ne.s32.totalorder %s55, %s56
      %p68 = scmp.eq.s32.totalorder %s25, 1
      %p69 = por %p67, %p68
      %p71 = scmp.ne.s32.totalorder %s56, %s70
      %p72 = scmp.eq.s32.totalorder %s25, 0
      %p73 = por %p71, %p72
      %s75 = sadd.s32 %s74, 1
      %p78 = scmp.eq.s32.totalorder %s19, 1
      %p79 = scmp.ne.s32.totalorder %s74, %s76
      %p80 = scmp.eq.s32.totalorder %s19, 0
      %p81 = por %p79, %p80
      %p82 = scmp.ne.s32.totalorder %s74, %s76
      %p83 = scmp.eq.s32.totalorder %s24, 1
      %p84 = por %p82, %p83
      %p85 = scmp.ne.s32.totalorder %s76, %s77
      %p86 = scmp.eq.s32.totalorder %s24, 0
      %p87 = por %p85, %p86
      %p88 = scmp.ne.s32.totalorder %s76, %s77
      %p89 = scmp.eq.s32.totalorder %s25, 1
      %p90 = por %p88, %p89
      %p92 = scmp.ne.s32.totalorder %s77, %s91
      %p93 = scmp.eq.s32.totalorder %s25, 0
      %p94 = por %p92, %p93
      %s96 = sadd.s32 %s95, 1
      %p99 = scmp.eq.s32.totalorder %s19, 1
      %p100 = scmp.ne.s32.totalorder %s95, %s97
      %p101 = scmp.eq.s32.totalorder %s19, 0
      %p102 = por %p100, %p101
      %p103 = scmp.ne.s32.totalorder %s95, %s97
      %p104 = scmp.eq.s32.totalorder %s24, 1
      %p105 = por %p103, %p104
      %p106 = scmp.ne.s32.totalorder %s97, %s98
      %p107 = scmp.eq.s32.totalorder %s24, 0
      %p108 = por %p106, %p107
      %p109 = scmp.ne.s32.totalorder %s97, %s98
      %p110 = scmp.eq.s32.totalorder %s25, 1
      %p111 = por %p109, %p110
      %p113 = scmp.ne.s32.totalorder %s98, %s112
      %p114 = scmp.eq.s32.totalorder %s25, 0
      %p115 = por %p113, %p114
      %s117 = sadd.s32 %s116, 1
      %p120 = scmp.eq.s32.totalorder %s19, 1
      %p121 = scmp.ne.s32.totalorder %s116, %s118
      %p122 = scmp.eq.s32.totalorder %s19, 0
      %p123 = por %p121, %p122
      %p124 = scmp.ne.s32.totalorder %s116, %s118
      %p125 = scmp.eq.s32.totalorder %s24, 1
      %p126 = por %p124, %p125
      %p127 = scmp.ne.s32.totalorder %s118, %s119
      %p128 = scmp.eq.s32.totalorder %s24, 0
      %p129 = por %p127, %p128
      %p130 = scmp.ne.s32.totalorder %s118, %s119
      %p131 = scmp.eq.s32.totalorder %s25, 1
      %p132 = por %p130, %p131
      %p134 = scmp.ne.s32.totalorder %s119, %s133
      %p135 = scmp.eq.s32.totalorder %s25, 0
      %p136 = por %p134, %p135
      %s138 = sadd.s32 %s137, 1
      %p141 = scmp.eq.s32.totalorder %s19, 1
      %p142 = scmp.ne.s32.totalorder %s137, %s139
      %p143 = scmp.eq.s32.totalorder %s19, 0
      %p144 = por %p142, %p143
      %p145 = scmp.ne.s32.totalorder %s137, %s139
      %p146 = scmp.eq.s32.totalorder %s24, 1
      %p147 = por %p145, %p146
      %p148 = scmp.ne.s32.totalorder %s139, %s140
      %p149 = scmp.eq.s32.totalorder %s24, 0
      %p150 = por %p148, %p149
      %p151 = scmp.ne.s32.totalorder %s139, %s140
      %p152 = scmp.eq.s32.totalorder %s25, 1
      %p153 = por %p151, %p152
      %p155 = scmp.ne.s32.totalorder %s140, %s154
      %p156 = scmp.eq.s32.totalorder %s25, 0
      %p157 = por %p155, %p156
      %s159 = sadd.s32 %s158, 1
      %p162 = scmp.eq.s32.totalorder %s19, 1
      %p163 = scmp.ne.s32.totalorder %s158, %s160
      %p164 = scmp.eq.s32.totalorder %s19, 0
      %p165 = por %p163, %p164
      %p166 = scmp.ne.s32.totalorder %s158, %s160
      %p167 = scmp.eq.s32.totalorder %s24, 1
      %p168 = por %p166, %p167
      %p169 = scmp.ne.s32.totalorder %s160, %s161
      %p170 = scmp.eq.s32.totalorder %s24, 0
      %p171 = por %p169, %p170
      %p172 = scmp.ne.s32.totalorder %s160, %s161
      %p173 = scmp.eq.s32.totalorder %s25, 1
      %p174 = por %p172, %p173
      %p176 = scmp.ne.s32.totalorder %s161, %s175
      %p177 = scmp.eq.s32.totalorder %s25, 0
      %p178 = por %p176, %p177
      %s180 = sadd.s32 %s179, 1
      %p183 = scmp.eq.s32.totalorder %s19, 1
      %p184 = scmp.ne.s32.totalorder %s179, %s181
      %p185 = scmp.eq.s32.totalorder %s19, 0
      %p186 = por %p184, %p185
      %p187 = scmp.ne.s32.totalorder %s179, %s181
      %p188 = scmp.eq.s32.totalorder %s24, 1
      %p189 = por %p187, %p188
      %p190 = scmp.ne.s32.totalorder %s181, %s182
      %p191 = scmp.eq.s32.totalorder %s24, 0
      %p192 = por %p190, %p191
      %p193 = scmp.ne.s32.totalorder %s181, %s182
      %p194 = scmp.eq.s32.totalorder %s25, 1
      %p195 = por %p193, %p194
      %p197 = scmp.ne.s32.totalorder %s182, %s196
      %p198 = scmp.eq.s32.totalorder %s25, 0
      %p199 = por %p197, %p198
      %s201 = sadd.s32 %s200, 1
      %p204 = scmp.eq.s32.totalorder %s19, 1
      %p205 = scmp.ne.s32.totalorder %s200, %s202
      %p206 = scmp.eq.s32.totalorder %s19, 0
      %p207 = por %p205, %p206
      %p208 = scmp.ne.s32.totalorder %s200, %s202
      %p209 = scmp.eq.s32.totalorder %s24, 1
      %p210 = por %p208, %p209
      %p211 = scmp.ne.s32.totalorder %s202, %s203
      %p212 = scmp.eq.s32.totalorder %s24, 0
      %p213 = por %p211, %p212
      %p214 = scmp.ne.s32.totalorder %s202, %s203
      %p215 = scmp.eq.s32.totalorder %s25, 1
      %p216 = por %p214, %p215
      %p218 = scmp.ne.s32.totalorder %s203, %s217
      %p219 = scmp.eq.s32.totalorder %s25, 0
      %p220 = por %p218, %p219
      %s221 = ssub.s32 %s19, %s26
      %p222 = scmp.eq.s32.totalorder %s221, 0
      %s224 = sadd.s32 %s223, 1
      %s225 = scalar_select %p222, %s223, %s224
      %p228 = pneg %p222
      %p229 = scmp.eq.s32.totalorder %s19, 1
      %p230 = por %p228, %p229
      %p231 = scmp.ne.s32.totalorder %s223, %s226
      %p232 = scmp.eq.s32.totalorder %s19, 0
      %p233 = por %p231, %p232
      %p234 = scmp.ne.s32.totalorder %s223, %s226
      %p235 = scmp.eq.s32.totalorder %s24, 1
      %p236 = por %p234, %p235
      %p237 = scmp.ne.s32.totalorder %s226, %s227
      %p238 = scmp.eq.s32.totalorder %s24, 0
      %p239 = por %p237, %p238
      %p240 = scmp.ne.s32.totalorder %s226, %s227
      %p241 = scmp.eq.s32.totalorder %s25, 1
      %p242 = por %p240, %p241
      %p244 = scmp.ne.s32.totalorder %s227, %s243
      %p245 = scmp.eq.s32.totalorder %s25, 0
      %p246 = por %p244, %p245
      %p247 = scmp.le.s32.totalorder 1, %s19
      %p248 = scmp.lt.s32.totalorder %s19, 3
      %p249 = pnand %p247, %p248
      %p250 = pneg %p249
      // Predicated region
      $region9: #{tpu_custom_call.1} parent=5 // pred_check
        _
      $region10: #{tpu_custom_call.1} parent=5 // pred_check_branch
        %252 = sbr.rel (%p249) target = $region12
      $region11: #{tpu_custom_call.1} parent=5 // pred_region
        %s253 = ssub.s32 %s19, 1
        // Predicated region
        $region13: #{tpu_custom_call.1} parent=11 // pred_check
          %p254 = pneg %p66
        $region14: #{tpu_custom_call.1} parent=11 // pred_check_branch
          %256 = sbr.rel (%p254) target = $region16
        $region15: #{tpu_custom_call.1} parent=11 // pred_region
          _
        $region16: #{tpu_custom_call.1} parent=11 // pred_fallthru
          _
        // Predicated region
        $region17: #{tpu_custom_call.1} parent=11 // pred_check
          %p257 = pneg %p87
        $region18: #{tpu_custom_call.1} parent=11 // pred_check_branch
          %259 = sbr.rel (%p257) target = $region20
        $region19: #{tpu_custom_call.1} parent=11 // pred_region
          _
        $region20: #{tpu_custom_call.1} parent=11 // pred_fallthru
          _
        // Predicated region
        $region21: #{tpu_custom_call.1} parent=11 // pred_check
          %p260 = pneg %p108
        $region22: #{tpu_custom_call.1} parent=11 // pred_check_branch
          %262 = sbr.rel (%p260) target = $region24
        $region23: #{tpu_custom_call.1} parent=11 // pred_region
          _
        $region24: #{tpu_custom_call.1} parent=11 // pred_fallthru
          _
        // Predicated region
        $region25: #{tpu_custom_call.1} parent=11 // pred_check
          %p263 = pneg %p129
        $region26: #{tpu_custom_call.1} parent=11 // pred_check_branch
          %265 = sbr.rel (%p263) target = $region28
        $region27: #{tpu_custom_call.1} parent=11 // pred_region
          _
        $region28: #{tpu_custom_call.1} parent=11 // pred_fallthru
          _
        // Predicated region
        $region29: #{tpu_custom_call.1} parent=11 // pred_check
          %p266 = pneg %p150
        $region30: #{tpu_custom_call.1} parent=11 // pred_check_branch
          %268 = sbr.rel (%p266) target = $region32
        $region31: #{tpu_custom_call.1} parent=11 // pred_region
          _
        $region32: #{tpu_custom_call.1} parent=11 // pred_fallthru
          _
        // Predicated region
        $region33: #{tpu_custom_call.1} parent=11 // pred_check
          %p269 = pneg %p171
        $region34: #{tpu_custom_call.1} parent=11 // pred_check_branch
          %271 = sbr.rel (%p269) target = $region36
        $region35: #{tpu_custom_call.1} parent=11 // pred_region
          _
        $region36: #{tpu_custom_call.1} parent=11 // pred_fallthru
          _
        // Predicated region
        $region37: #{tpu_custom_call.1} parent=11 // pred_check
          %p272 = pneg %p192
        $region38: #{tpu_custom_call.1} parent=11 // pred_check_branch
          %274 = sbr.rel (%p272) target = $region40
        $region39: #{tpu_custom_call.1} parent=11 // pred_region
          _
        $region40: #{tpu_custom_call.1} parent=11 // pred_fallthru
          _
        // Predicated region
        $region41: #{tpu_custom_call.1} parent=11 // pred_check
          %p275 = pneg %p213
        $region42: #{tpu_custom_call.1} parent=11 // pred_check_branch
          %277 = sbr.rel (%p275) target = $region44
        $region43: #{tpu_custom_call.1} parent=11 // pred_region
          _
        $region44: #{tpu_custom_call.1} parent=11 // pred_fallthru
          _
      $region12: #{tpu_custom_call.1} parent=5 // pred_fallthru
        _
      %p278 = scmp.lt.s32.totalorder %s19, 2
      // Predicated region
      $region45: #{tpu_custom_call.1} parent=5 // pred_check
        %p279 = pneg %p278
      $region46: #{tpu_custom_call.1} parent=5 // pred_check_branch
        %281 = sbr.rel (%p279) target = $region48
      $region47: #{tpu_custom_call.1} parent=5 // pred_region
        // Predicated region
        $region49: #{tpu_custom_call.1} parent=47 // pred_check
          %p282 = pneg %p39
        $region50: #{tpu_custom_call.1} parent=47 // pred_check_branch
          %284 = sbr.rel (%p282) target = $region52
        $region51: #{tpu_custom_call.1} parent=47 // pred_region
          %s285 = smul.u32 32, %s19
          %p286 = scmp.lt.s32.totalorder %s285, 63
          %s287 = scalar_select %p286, %s285, 63
          %s288 = smul.addr %s287, 7
          %s289 = smul.addr %s288, 8
          %s290 = scalar_lea.vmem %s0, %s289
          %s291 = smul.u32 32, %s19
        $region52: #{tpu_custom_call.1} parent=47 // pred_fallthru
          _
      $region48: #{tpu_custom_call.1} parent=5 // pred_fallthru
        _
      %p292 = scmp.le.s32.totalorder 1, %s19
      %p293 = scmp.lt.s32.totalorder %s19, 3
      %p294 = pnand %p292, %p293
      %p295 = pneg %p294
      // Predicated region
      $region53: #{tpu_custom_call.1} parent=5 // pred_check
        _
      $region54: #{tpu_custom_call.1} parent=5 // pred_check_branch
        %297 = sbr.rel (%p294) target = $region56
      $region55: #{tpu_custom_call.1} parent=5 // pred_region
        %s298 = ssub.s32 %s19, 1
        %s299 = smul.u32 32, %s24
        %p300 = scmp.lt.s32.totalorder %s299, 63
        %s301 = scalar_select %p300, %s299, 63
        %s302 = smul.addr %s301, 7
        %s303 = smul.addr %s302, 8
        %s304 = scalar_lea.vmem %s0, %s303
        %p305 = pneg %p45
        %p306 = pneg %p42
        %p307 = pneg %p66
        %p308 = pneg %p63
        %p309 = pneg %p87
        %p310 = pneg %p84
        %p311 = pneg %p108
        %p312 = pneg %p105
        %p313 = pneg %p129
        %p314 = pneg %p126
        %p315 = pneg %p150
        %p316 = pneg %p147
        %p317 = pneg %p171
        %p318 = pneg %p168
        %p319 = pneg %p192
        %p320 = pneg %p189
        %p321 = pneg %p213
        %p322 = pneg %p210
        %p323 = pneg %p239
        %p324 = pneg %p236
        %s325 = sand.u32 %s226, 1
        %s326 = scalar_lea.sflag [#allocation4], %s325
        %s327 = sand.u32 %s226, 1
        %s328 = smul.addr %s327, 2
        %s329 = scalar_lea.vmem [#allocation3], %s328
        %s330 = smul.u32 32, %s24
        %p331 = scmp.lt.s32.totalorder %s330, 63
        %s332 = scalar_select %p331, %s330, 63
        %s333 = smul.addr %s332, 7
        %s334 = smul.addr %s333, 8
        %s335 = scalar_lea.vmem %s0, %s334
        %s336 = smul.u32 32, %s24
        %s337 = smul.u32 2, %s24
        %v339 = vld [vmem:[%s335] sm:$0xff]
        %v340 = vld [vmem:[%s335 + $0x8] sm:$0xff]
        %v341 = vld [vmem:[%s335 + $0x10] sm:$0xff]
        %v342 = vld [vmem:[%s335 + $0x18] sm:$0xff]
        %v343 = vld [vmem:[%s335 + $0x20] sm:$0xff]
        %v344 = vld [vmem:[%s335 + $0x28] sm:$0xff]
        %v345 = vld [vmem:[%s335 + $0x30] sm:$0xff]
        %v346 = vld [vmem:[%s335 + $0x38] sm:$0xff]
        %v347 = vld [vmem:[%s335 + $0x40] sm:$0xff]
        %v348 = vld [vmem:[%s335 + $0x48] sm:$0xff]
        %v349 = vld [vmem:[%s335 + $0x50] sm:$0xff]
        %v350 = vld [vmem:[%s335 + $0x58] sm:$0xff]
        %v351 = vld [vmem:[%s335 + $0x60] sm:$0xff]
        %v352 = vld [vmem:[%s335 + $0x68] sm:$0xff]
        %v353 = vld [vmem:[%s335 + $0x70] sm:$0xff]
        %v354 = vld [vmem:[%s335 + $0x78] sm:$0xff]
        %v355 = vld [vmem:[%s335 + $0x80] sm:$0xff]
        %v356 = vld [vmem:[%s335 + $0x88] sm:$0xff]
        %v357 = vld [vmem:[%s335 + $0x90] sm:$0xff]
        %v358 = vld [vmem:[%s335 + $0x98] sm:$0xff]
        %v359 = vld [vmem:[%s335 + $0xa0] sm:$0xff]
        %v360 = vld [vmem:[%s335 + $0xa8] sm:$0xff]
        %v361 = vld [vmem:[%s335 + $0xb0] sm:$0xff]
        %v362 = vld [vmem:[%s335 + $0xb8] sm:$0xff]
        %v363 = vld [vmem:[%s335 + $0xc0] sm:$0xff]
        %v364 = vld [vmem:[%s335 + $0xc8] sm:$0xff]
        %v365 = vld [vmem:[%s335 + $0xd0] sm:$0xff]
        %v366 = vld [vmem:[%s335 + $0xd8] sm:$0xff]
        %v367 = vld [vmem:[%s335 + $0xe0] sm:$0xff]
        %v368 = vld [vmem:[%s335 + $0xe8] sm:$0xff]
        %v369 = vld [vmem:[%s335 + $0xf0] sm:$0xff]
        %v370 = vld [vmem:[%s335 + $0xf8] sm:$0xff]
        %v371 = vld [vmem:[%s335 + $0x100] sm:$0xff]
        %v372 = vld [vmem:[%s335 + $0x108] sm:$0xff]
        %v373 = vld [vmem:[%s335 + $0x110] sm:$0xff]
        %v374 = vld [vmem:[%s335 + $0x118] sm:$0xff]
        %v375 = vld [vmem:[%s335 + $0x120] sm:$0xff]
        %v376 = vld [vmem:[%s335 + $0x128] sm:$0xff]
        %v377 = vld [vmem:[%s335 + $0x130] sm:$0xff]
        %v378 = vld [vmem:[%s335 + $0x138] sm:$0xff]
        %v379 = vld [vmem:[%s335 + $0x140] sm:$0xff]
        %v380 = vld [vmem:[%s335 + $0x148] sm:$0xff]
        %v381 = vld [vmem:[%s335 + $0x150] sm:$0xff]
        %v382 = vld [vmem:[%s335 + $0x158] sm:$0xff]
        %v383 = vld [vmem:[%s335 + $0x160] sm:$0xff]
        %v384 = vld [vmem:[%s335 + $0x168] sm:$0xff]
        %v385 = vld [vmem:[%s335 + $0x170] sm:$0xff]
        %v386 = vld [vmem:[%s335 + $0x178] sm:$0xff]
        %v387 = vld [vmem:[%s335 + $0x180] sm:$0xff]
        %v388 = vld [vmem:[%s335 + $0x188] sm:$0xff]
        %v389 = vld [vmem:[%s335 + $0x190] sm:$0xff]
        %v390 = vld [vmem:[%s335 + $0x198] sm:$0xff]
        %v391 = vld [vmem:[%s335 + $0x1a0] sm:$0xff]
        %v392 = vld [vmem:[%s335 + $0x1a8] sm:$0xff]
        %v393 = vld [vmem:[%s335 + $0x1b0] sm:$0xff]
        %v394 = vld [vmem:[%s335 + $0x1b8] sm:$0xff]
        %v395 = vld [vmem:[%s335 + $0x1c0] sm:$0xff]
        %v396 = vld [vmem:[%s335 + $0x1c8] sm:$0xff]
        %v397 = vld [vmem:[%s335 + $0x1d0] sm:$0xff]
        %v398 = vld [vmem:[%s335 + $0x1d8] sm:$0xff]
        %v399 = vld [vmem:[%s335 + $0x1e0] sm:$0xff]
        %v400 = vld [vmem:[%s335 + $0x1e8] sm:$0xff]
        %v401 = vld [vmem:[%s335 + $0x1f0] sm:$0xff]
        %v402 = vld [vmem:[%s335 + $0x1f8] sm:$0xff]
        %v403 = vld [vmem:[%s335 + $0x200] sm:$0xff]
        %v404 = vld [vmem:[%s335 + $0x208] sm:$0xff]
        %v405 = vld [vmem:[%s335 + $0x210] sm:$0xff]
        %v406 = vld [vmem:[%s335 + $0x218] sm:$0xff]
        %v407 = vld [vmem:[%s335 + $0x220] sm:$0xff]
        %v408 = vld [vmem:[%s335 + $0x228] sm:$0xff]
        %v409 = vld [vmem:[%s335 + $0x230] sm:$0xff]
        %v410 = vld [vmem:[%s335 + $0x238] sm:$0xff]
        %v411 = vld [vmem:[%s335 + $0x240] sm:$0xff]
        %v412 = vld [vmem:[%s335 + $0x248] sm:$0xff]
        %v413 = vld [vmem:[%s335 + $0x250] sm:$0xff]
        %v414 = vld [vmem:[%s335 + $0x258] sm:$0xff]
        %v415 = vld [vmem:[%s335 + $0x260] sm:$0xff]
        %v416 = vld [vmem:[%s335 + $0x268] sm:$0xff]
        %v417 = vld [vmem:[%s335 + $0x270] sm:$0xff]
        %v418 = vld [vmem:[%s335 + $0x278] sm:$0xff]
        %v419 = vld [vmem:[%s335 + $0x280] sm:$0xff]
        %v420 = vld [vmem:[%s335 + $0x288] sm:$0xff]
        %v421 = vld [vmem:[%s335 + $0x290] sm:$0xff]
        %v422 = vld [vmem:[%s335 + $0x298] sm:$0xff]
        %v423 = vld [vmem:[%s335 + $0x2a0] sm:$0xff]
        %v424 = vld [vmem:[%s335 + $0x2a8] sm:$0xff]
        %v425 = vld [vmem:[%s335 + $0x2b0] sm:$0xff]
        %v426 = vld [vmem:[%s335 + $0x2b8] sm:$0xff]
        %v427 = vld [vmem:[%s335 + $0x2c0] sm:$0xff]
        %v428 = vld [vmem:[%s335 + $0x2c8] sm:$0xff]
        %v429 = vld [vmem:[%s335 + $0x2d0] sm:$0xff]
        %v430 = vld [vmem:[%s335 + $0x2d8] sm:$0xff]
        %v431 = vld [vmem:[%s335 + $0x2e0] sm:$0xff]
        %v432 = vld [vmem:[%s335 + $0x2e8] sm:$0xff]
        %v433 = vld [vmem:[%s335 + $0x2f0] sm:$0xff]
        %v434 = vld [vmem:[%s335 + $0x2f8] sm:$0xff]
        %v435 = vld [vmem:[%s335 + $0x300] sm:$0xff]
        %v436 = vld [vmem:[%s335 + $0x308] sm:$0xff]
        %v437 = vld [vmem:[%s335 + $0x310] sm:$0xff]
        %v438 = vld [vmem:[%s335 + $0x318] sm:$0xff]
        %v439 = vld [vmem:[%s335 + $0x320] sm:$0xff]
        %v440 = vld [vmem:[%s335 + $0x328] sm:$0xff]
        %v441 = vld [vmem:[%s335 + $0x330] sm:$0xff]
        %v442 = vld [vmem:[%s335 + $0x338] sm:$0xff]
        %v443 = vld [vmem:[%s335 + $0x340] sm:$0xff]
        %v444 = vld [vmem:[%s335 + $0x348] sm:$0xff]
        %v445 = vld [vmem:[%s335 + $0x350] sm:$0xff]
        %v446 = vld [vmem:[%s335 + $0x358] sm:$0xff]
        %v447 = vld [vmem:[%s335 + $0x360] sm:$0xff]
        %v448 = vld [vmem:[%s335 + $0x368] sm:$0xff]
        %v449 = vld [vmem:[%s335 + $0x370] sm:$0xff]
        %v450 = vld [vmem:[%s335 + $0x378] sm:$0xff]
        %v451 = vld [vmem:[%s335 + $0x380] sm:$0xff]
        %v452 = vld [vmem:[%s335 + $0x388] sm:$0xff]
        %v453 = vld [vmem:[%s335 + $0x390] sm:$0xff]
        %v454 = vld [vmem:[%s335 + $0x398] sm:$0xff]
        %v455 = vld [vmem:[%s335 + $0x3a0] sm:$0xff]
        %v456 = vld [vmem:[%s335 + $0x3a8] sm:$0xff]
        %v457 = vld [vmem:[%s335 + $0x3b0] sm:$0xff]
        %v458 = vld [vmem:[%s335 + $0x3b8] sm:$0xff]
        %v459 = vld [vmem:[%s335 + $0x3c0] sm:$0xff]
        %v460 = vld [vmem:[%s335 + $0x3c8] sm:$0xff]
        %v461 = vld [vmem:[%s335 + $0x3d0] sm:$0xff]
        %v462 = vld [vmem:[%s335 + $0x3d8] sm:$0xff]
        %v463 = vld [vmem:[%s335 + $0x3e0] sm:$0xff]
        %v464 = vld [vmem:[%s335 + $0x3e8] sm:$0xff]
        %v465 = vld [vmem:[%s335 + $0x3f0] sm:$0xff]
        %v466 = vld [vmem:[%s335 + $0x3f8] sm:$0xff]
        %v467 = vld [vmem:[%s335 + $0x400] sm:$0xff]
        %v468 = vld [vmem:[%s335 + $0x408] sm:$0xff]
        %v469 = vld [vmem:[%s335 + $0x410] sm:$0xff]
        %v470 = vld [vmem:[%s335 + $0x418] sm:$0xff]
        %v471 = vld [vmem:[%s335 + $0x420] sm:$0xff]
        %v472 = vld [vmem:[%s335 + $0x428] sm:$0xff]
        %v473 = vld [vmem:[%s335 + $0x430] sm:$0xff]
        %v474 = vld [vmem:[%s335 + $0x438] sm:$0xff]
        %v475 = vld [vmem:[%s335 + $0x440] sm:$0xff]
        %v476 = vld [vmem:[%s335 + $0x448] sm:$0xff]
        %v477 = vld [vmem:[%s335 + $0x450] sm:$0xff]
        %v478 = vld [vmem:[%s335 + $0x458] sm:$0xff]
        %v479 = vld [vmem:[%s335 + $0x460] sm:$0xff]
        %v480 = vld [vmem:[%s335 + $0x468] sm:$0xff]
        %v481 = vld [vmem:[%s335 + $0x470] sm:$0xff]
        %v482 = vld [vmem:[%s335 + $0x478] sm:$0xff]
        %v483 = vld [vmem:[%s335 + $0x480] sm:$0xff]
        %v484 = vld [vmem:[%s335 + $0x488] sm:$0xff]
        %v485 = vld [vmem:[%s335 + $0x490] sm:$0xff]
        %v486 = vld [vmem:[%s335 + $0x498] sm:$0xff]
        %v487 = vld [vmem:[%s335 + $0x4a0] sm:$0xff]
        %v488 = vld [vmem:[%s335 + $0x4a8] sm:$0xff]
        %v489 = vld [vmem:[%s335 + $0x4b0] sm:$0xff]
        %v490 = vld [vmem:[%s335 + $0x4b8] sm:$0xff]
        %v491 = vld [vmem:[%s335 + $0x4c0] sm:$0xff]
        %v492 = vld [vmem:[%s335 + $0x4c8] sm:$0xff]
        %v493 = vld [vmem:[%s335 + $0x4d0] sm:$0xff]
        %v494 = vld [vmem:[%s335 + $0x4d8] sm:$0xff]
        %v495 = vld [vmem:[%s335 + $0x4e0] sm:$0xff]
        %v496 = vld [vmem:[%s335 + $0x4e8] sm:$0xff]
        %v497 = vld [vmem:[%s335 + $0x4f0] sm:$0xff]
        %v498 = vld [vmem:[%s335 + $0x4f8] sm:$0xff]
        %v499 = vld [vmem:[%s335 + $0x500] sm:$0xff]
        %v500 = vld [vmem:[%s335 + $0x508] sm:$0xff]
        %v501 = vld [vmem:[%s335 + $0x510] sm:$0xff]
        %v502 = vld [vmem:[%s335 + $0x518] sm:$0xff]
        %v503 = vld [vmem:[%s335 + $0x520] sm:$0xff]
        %v504 = vld [vmem:[%s335 + $0x528] sm:$0xff]
        %v505 = vld [vmem:[%s335 + $0x530] sm:$0xff]
        %v506 = vld [vmem:[%s335 + $0x538] sm:$0xff]
        %v507 = vld [vmem:[%s335 + $0x540] sm:$0xff]
        %v508 = vld [vmem:[%s335 + $0x548] sm:$0xff]
        %v509 = vld [vmem:[%s335 + $0x550] sm:$0xff]
        %v510 = vld [vmem:[%s335 + $0x558] sm:$0xff]
        %v511 = vld [vmem:[%s335 + $0x560] sm:$0xff]
        %v512 = vld [vmem:[%s335 + $0x568] sm:$0xff]
        %v513 = vld [vmem:[%s335 + $0x570] sm:$0xff]
        %v514 = vld [vmem:[%s335 + $0x578] sm:$0xff]
        %v515 = vld [vmem:[%s335 + $0x580] sm:$0xff]
        %v516 = vld [vmem:[%s335 + $0x588] sm:$0xff]
        %v517 = vld [vmem:[%s335 + $0x590] sm:$0xff]
        %v518 = vld [vmem:[%s335 + $0x598] sm:$0xff]
        %v519 = vld [vmem:[%s335 + $0x5a0] sm:$0xff]
        %v520 = vld [vmem:[%s335 + $0x5a8] sm:$0xff]
        %v521 = vld [vmem:[%s335 + $0x5b0] sm:$0xff]
        %v522 = vld [vmem:[%s335 + $0x5b8] sm:$0xff]
        %v523 = vld [vmem:[%s335 + $0x5c0] sm:$0xff]
        %v524 = vld [vmem:[%s335 + $0x5c8] sm:$0xff]
        %v525 = vld [vmem:[%s335 + $0x5d0] sm:$0xff]
        %v526 = vld [vmem:[%s335 + $0x5d8] sm:$0xff]
        %v527 = vld [vmem:[%s335 + $0x5e0] sm:$0xff]
        %v528 = vld [vmem:[%s335 + $0x5e8] sm:$0xff]
        %v529 = vld [vmem:[%s335 + $0x5f0] sm:$0xff]
        %v530 = vld [vmem:[%s335 + $0x5f8] sm:$0xff]
        %v531 = vld [vmem:[%s335 + $0x600] sm:$0xff]
        %v532 = vld [vmem:[%s335 + $0x608] sm:$0xff]
        %v533 = vld [vmem:[%s335 + $0x610] sm:$0xff]
        %v534 = vld [vmem:[%s335 + $0x618] sm:$0xff]
        %v535 = vld [vmem:[%s335 + $0x620] sm:$0xff]
        %v536 = vld [vmem:[%s335 + $0x628] sm:$0xff]
        %v537 = vld [vmem:[%s335 + $0x630] sm:$0xff]
        %v538 = vld [vmem:[%s335 + $0x638] sm:$0xff]
        %v539 = vld [vmem:[%s335 + $0x640] sm:$0xff]
        %v540 = vld [vmem:[%s335 + $0x648] sm:$0xff]
        %v541 = vld [vmem:[%s335 + $0x650] sm:$0xff]
        %v542 = vld [vmem:[%s335 + $0x658] sm:$0xff]
        %v543 = vld [vmem:[%s335 + $0x660] sm:$0xff]
        %v544 = vld [vmem:[%s335 + $0x668] sm:$0xff]
        %v545 = vld [vmem:[%s335 + $0x670] sm:$0xff]
        %v546 = vld [vmem:[%s335 + $0x678] sm:$0xff]
        %v547 = vld [vmem:[%s335 + $0x680] sm:$0xff]
        %v548 = vld [vmem:[%s335 + $0x688] sm:$0xff]
        %v549 = vld [vmem:[%s335 + $0x690] sm:$0xff]
        %v550 = vld [vmem:[%s335 + $0x698] sm:$0xff]
        %v551 = vld [vmem:[%s335 + $0x6a0] sm:$0xff]
        %v552 = vld [vmem:[%s335 + $0x6a8] sm:$0xff]
        %v553 = vld [vmem:[%s335 + $0x6b0] sm:$0xff]
        %v554 = vld [vmem:[%s335 + $0x6b8] sm:$0xff]
        %v555 = vld [vmem:[%s335 + $0x6c0] sm:$0xff]
        %v556 = vld [vmem:[%s335 + $0x6c8] sm:$0xff]
        %v557 = vld [vmem:[%s335 + $0x6d0] sm:$0xff]
        %v558 = vld [vmem:[%s335 + $0x6d8] sm:$0xff]
        %v559 = vld [vmem:[%s335 + $0x6e0] sm:$0xff]
        %v560 = vld [vmem:[%s335 + $0x6e8] sm:$0xff]
        %v561 = vld [vmem:[%s335 + $0x6f0] sm:$0xff]
        %v562 = vld [vmem:[%s335 + $0x6f8] sm:$0xff]
        %v563 = vpack.c.bf16 %v346, %v339
        %v564 = vpack.c.bf16 %v347, %v340
        %v565 = vpack.c.bf16 %v348, %v341
        %v566 = vpack.c.bf16 %v349, %v342
        %v567 = vpack.c.bf16 %v350, %v343
        %v568 = vpack.c.bf16 %v351, %v344
        %v569 = vpack.c.bf16 %v352, %v345
        %v570 = vpack.c.bf16 %v360, %v353
        %v571 = vpack.c.bf16 %v361, %v354
        %v572 = vpack.c.bf16 %v362, %v355
        %v573 = vpack.c.bf16 %v363, %v356
        %v574 = vpack.c.bf16 %v364, %v357
        %v575 = vpack.c.bf16 %v365, %v358
        %v576 = vpack.c.bf16 %v366, %v359
        %v577 = vpack.c.bf16 %v374, %v367
        %v578 = vpack.c.bf16 %v375, %v368
        %v579 = vpack.c.bf16 %v376, %v369
        %v580 = vpack.c.bf16 %v377, %v370
        %v581 = vpack.c.bf16 %v378, %v371
        %v582 = vpack.c.bf16 %v379, %v372
        %v583 = vpack.c.bf16 %v380, %v373
        %v584 = vpack.c.bf16 %v388, %v381
        %v585 = vpack.c.bf16 %v389, %v382
        %v586 = vpack.c.bf16 %v390, %v383
        %v587 = vpack.c.bf16 %v391, %v384
        %v588 = vpack.c.bf16 %v392, %v385
        %v589 = vpack.c.bf16 %v393, %v386
        %v590 = vpack.c.bf16 %v394, %v387
        %v591 = vpack.c.bf16 %v402, %v395
        %v592 = vpack.c.bf16 %v403, %v396
        %v593 = vpack.c.bf16 %v404, %v397
        %v594 = vpack.c.bf16 %v405, %v398
        %v595 = vpack.c.bf16 %v406, %v399
        %v596 = vpack.c.bf16 %v407, %v400
        %v597 = vpack.c.bf16 %v408, %v401
        %v598 = vpack.c.bf16 %v416, %v409
        %v599 = vpack.c.bf16 %v417, %v410
        %v600 = vpack.c.bf16 %v418, %v411
        %v601 = vpack.c.bf16 %v419, %v412
        %v602 = vpack.c.bf16 %v420, %v413
        %v603 = vpack.c.bf16 %v421, %v414
        %v604 = vpack.c.bf16 %v422, %v415
        %v605 = vpack.c.bf16 %v430, %v423
        %v606 = vpack.c.bf16 %v431, %v424
        %v607 = vpack.c.bf16 %v432, %v425
        %v608 = vpack.c.bf16 %v433, %v426
        %v609 = vpack.c.bf16 %v434, %v427
        %v610 = vpack.c.bf16 %v435, %v428
        %v611 = vpack.c.bf16 %v436, %v429
        %v612 = vpack.c.bf16 %v444, %v437
        %v613 = vpack.c.bf16 %v445, %v438
        %v614 = vpack.c.bf16 %v446, %v439
        %v615 = vpack.c.bf16 %v447, %v440
        %v616 = vpack.c.bf16 %v448, %v441
        %v617 = vpack.c.bf16 %v449, %v442
        %v618 = vpack.c.bf16 %v450, %v443
        %v619 = vpack.c.bf16 %v458, %v451
        %v620 = vpack.c.bf16 %v459, %v452
        %v621 = vpack.c.bf16 %v460, %v453
        %v622 = vpack.c.bf16 %v461, %v454
        %v623 = vpack.c.bf16 %v462, %v455
        %v624 = vpack.c.bf16 %v463, %v456
        %v625 = vpack.c.bf16 %v464, %v457
        %v626 = vpack.c.bf16 %v472, %v465
        %v627 = vpack.c.bf16 %v473, %v466
        %v628 = vpack.c.bf16 %v474, %v467
        %v629 = vpack.c.bf16 %v475, %v468
        %v630 = vpack.c.bf16 %v476, %v469
        %v631 = vpack.c.bf16 %v477, %v470
        %v632 = vpack.c.bf16 %v478, %v471
        %v633 = vpack.c.bf16 %v486, %v479
        %v634 = vpack.c.bf16 %v487, %v480
        %v635 = vpack.c.bf16 %v488, %v481
        %v636 = vpack.c.bf16 %v489, %v482
        %v637 = vpack.c.bf16 %v490, %v483
        %v638 = vpack.c.bf16 %v491, %v484
        %v639 = vpack.c.bf16 %v492, %v485
        %v640 = vpack.c.bf16 %v500, %v493
        %v641 = vpack.c.bf16 %v501, %v494
        %v642 = vpack.c.bf16 %v502, %v495
        %v643 = vpack.c.bf16 %v503, %v496
        %v644 = vpack.c.bf16 %v504, %v497
        %v645 = vpack.c.bf16 %v505, %v498
        %v646 = vpack.c.bf16 %v506, %v499
        %v647 = vpack.c.bf16 %v514, %v507
        %v648 = vpack.c.bf16 %v515, %v508
        %v649 = vpack.c.bf16 %v516, %v509
        %v650 = vpack.c.bf16 %v517, %v510
        %v651 = vpack.c.bf16 %v518, %v511
        %v652 = vpack.c.bf16 %v519, %v512
        %v653 = vpack.c.bf16 %v520, %v513
        %v654 = vpack.c.bf16 %v528, %v521
        %v655 = vpack.c.bf16 %v529, %v522
        %v656 = vpack.c.bf16 %v530, %v523
        %v657 = vpack.c.bf16 %v531, %v524
        %v658 = vpack.c.bf16 %v532, %v525
        %v659 = vpack.c.bf16 %v533, %v526
        %v660 = vpack.c.bf16 %v534, %v527
        %v661 = vpack.c.bf16 %v542, %v535
        %v662 = vpack.c.bf16 %v543, %v536
        %v663 = vpack.c.bf16 %v544, %v537
        %v664 = vpack.c.bf16 %v545, %v538
        %v665 = vpack.c.bf16 %v546, %v539
        %v666 = vpack.c.bf16 %v547, %v540
        %v667 = vpack.c.bf16 %v548, %v541
        %v668 = vpack.c.bf16 %v556, %v549
        %v669 = vpack.c.bf16 %v557, %v550
        %v670 = vpack.c.bf16 %v558, %v551
        %v671 = vpack.c.bf16 %v559, %v552
        %v672 = vpack.c.bf16 %v560, %v553
        %v673 = vpack.c.bf16 %v561, %v554
        %v674 = vpack.c.bf16 %v562, %v555
        %v675 = vld [vmem:[%s1] sm:$0xff]
        %v676 = vld [vmem:[%s1 + $0x8] sm:$0xff]
        %v677 = vld [vmem:[%s1 + $0x10] sm:$0xff]
        %v678 = vld [vmem:[%s1 + $0x18] sm:$0xff]
        %v679 = vld [vmem:[%s1 + $0x20] sm:$0xff]
        %v680 = vld [vmem:[%s1 + $0x28] sm:$0xff]
        %v681 = vld [vmem:[%s1 + $0x30] sm:$0xff]
        %v682 = vld [vmem:[%s1 + $0x38] sm:$0xff]
        %v683 = vld [vmem:[%s1 + $0x40] sm:$0xff]
        %v684 = vld [vmem:[%s1 + $0x48] sm:$0xff]
        %v685 = vld [vmem:[%s1 + $0x50] sm:$0xff]
        %v686 = vld [vmem:[%s1 + $0x58] sm:$0xff]
        %v687 = vld [vmem:[%s1 + $0x60] sm:$0xff]
        %v688 = vld [vmem:[%s1 + $0x68] sm:$0xff]
        %v689 = vld [vmem:[%s1 + $0x70] sm:$0xff]
        %v690 = vld [vmem:[%s1 + $0x78] sm:$0xff]
        %v691 = vld [vmem:[%s1 + $0x80] sm:$0xff]
        %v692 = vld [vmem:[%s1 + $0x88] sm:$0xff]
        %v693 = vld [vmem:[%s1 + $0x90] sm:$0xff]
        %v694 = vld [vmem:[%s1 + $0x98] sm:$0xff]
        %v695 = vld [vmem:[%s1 + $0xa0] sm:$0xff]
        %v696 = vld [vmem:[%s1 + $0xa8] sm:$0xff]
        %v697 = vld [vmem:[%s1 + $0xb0] sm:$0xff]
        %v698 = vld [vmem:[%s1 + $0xb8] sm:$0xff]
        %v699 = vld [vmem:[%s1 + $0xc0] sm:$0xff]
        %v700 = vld [vmem:[%s1 + $0xc8] sm:$0xff]
        %v701 = vld [vmem:[%s1 + $0xd0] sm:$0xff]
        %v702 = vld [vmem:[%s1 + $0xd8] sm:$0xff]
        %v703 = vld [vmem:[%s1 + $0xe0] sm:$0xff]
        %v704 = vld [vmem:[%s1 + $0xe8] sm:$0xff]
        %v705 = vld [vmem:[%s1 + $0xf0] sm:$0xff]
        %v706 = vld [vmem:[%s1 + $0xf8] sm:$0xff]
        %v707 = vld [vmem:[%s1 + $0x100] sm:$0xff]
        %v708 = vld [vmem:[%s1 + $0x108] sm:$0xff]
        %v709 = vld [vmem:[%s1 + $0x110] sm:$0xff]
        %v710 = vld [vmem:[%s1 + $0x118] sm:$0xff]
        %v711 = vld [vmem:[%s1 + $0x120] sm:$0xff]
        %v712 = vld [vmem:[%s1 + $0x128] sm:$0xff]
        %v713 = vld [vmem:[%s1 + $0x130] sm:$0xff]
        %v714 = vld [vmem:[%s1 + $0x138] sm:$0xff]
        %v715 = vld [vmem:[%s1 + $0x140] sm:$0xff]
        %v716 = vld [vmem:[%s1 + $0x148] sm:$0xff]
        %v717 = vld [vmem:[%s1 + $0x150] sm:$0xff]
        %v718 = vld [vmem:[%s1 + $0x158] sm:$0xff]
        %v719 = vld [vmem:[%s1 + $0x160] sm:$0xff]
        %v720 = vld [vmem:[%s1 + $0x168] sm:$0xff]
        %v721 = vld [vmem:[%s1 + $0x170] sm:$0xff]
        %v722 = vld [vmem:[%s1 + $0x178] sm:$0xff]
        %v723 = vld [vmem:[%s1 + $0x180] sm:$0xff]
        %v724 = vld [vmem:[%s1 + $0x188] sm:$0xff]
        %v725 = vld [vmem:[%s1 + $0x190] sm:$0xff]
        %v726 = vld [vmem:[%s1 + $0x198] sm:$0xff]
        %v727 = vld [vmem:[%s1 + $0x1a0] sm:$0xff]
        %v728 = vld [vmem:[%s1 + $0x1a8] sm:$0xff]
        %v729 = vld [vmem:[%s1 + $0x1b0] sm:$0xff]
        %v730 = vld [vmem:[%s1 + $0x1b8] sm:$0xff]
        %v731 = vld [vmem:[%s1 + $0x1c0] sm:$0xff]
        %v732 = vld [vmem:[%s1 + $0x1c8] sm:$0xff]
        %v733 = vld [vmem:[%s1 + $0x1d0] sm:$0xff]
        %v734 = vld [vmem:[%s1 + $0x1d8] sm:$0xff]
        %v735 = vld [vmem:[%s1 + $0x1e0] sm:$0xff]
        %v736 = vld [vmem:[%s1 + $0x1e8] sm:$0xff]
        %v737 = vld [vmem:[%s1 + $0x1f0] sm:$0xff]
        %v738 = vld [vmem:[%s1 + $0x1f8] sm:$0xff]
        %v739 = vld [vmem:[%s1 + $0x200] sm:$0xff]
        %v740 = vld [vmem:[%s1 + $0x208] sm:$0xff]
        %v741 = vld [vmem:[%s1 + $0x210] sm:$0xff]
        %v742 = vld [vmem:[%s1 + $0x218] sm:$0xff]
        %v743 = vld [vmem:[%s1 + $0x220] sm:$0xff]
        %v744 = vld [vmem:[%s1 + $0x228] sm:$0xff]
        %v745 = vld [vmem:[%s1 + $0x230] sm:$0xff]
        %v746 = vld [vmem:[%s1 + $0x238] sm:$0xff]
        %v747 = vld [vmem:[%s1 + $0x240] sm:$0xff]
        %v748 = vld [vmem:[%s1 + $0x248] sm:$0xff]
        %v749 = vld [vmem:[%s1 + $0x250] sm:$0xff]
        %v750 = vld [vmem:[%s1 + $0x258] sm:$0xff]
        %v751 = vld [vmem:[%s1 + $0x260] sm:$0xff]
        %v752 = vld [vmem:[%s1 + $0x268] sm:$0xff]
        %v753 = vld [vmem:[%s1 + $0x270] sm:$0xff]
        %v754 = vld [vmem:[%s1 + $0x278] sm:$0xff]
        %v755 = vld [vmem:[%s1 + $0x280] sm:$0xff]
        %v756 = vld [vmem:[%s1 + $0x288] sm:$0xff]
        %v757 = vld [vmem:[%s1 + $0x290] sm:$0xff]
        %v758 = vld [vmem:[%s1 + $0x298] sm:$0xff]
        %v759 = vld [vmem:[%s1 + $0x2a0] sm:$0xff]
        %v760 = vld [vmem:[%s1 + $0x2a8] sm:$0xff]
        %v761 = vld [vmem:[%s1 + $0x2b0] sm:$0xff]
        %v762 = vld [vmem:[%s1 + $0x2b8] sm:$0xff]
        %v763 = vld [vmem:[%s1 + $0x2c0] sm:$0xff]
        %v764 = vld [vmem:[%s1 + $0x2c8] sm:$0xff]
        %v765 = vld [vmem:[%s1 + $0x2d0] sm:$0xff]
        %v766 = vld [vmem:[%s1 + $0x2d8] sm:$0xff]
        %v767 = vld [vmem:[%s1 + $0x2e0] sm:$0xff]
        %v768 = vld [vmem:[%s1 + $0x2e8] sm:$0xff]
        %v769 = vld [vmem:[%s1 + $0x2f0] sm:$0xff]
        %v770 = vld [vmem:[%s1 + $0x2f8] sm:$0xff]
        %v771 = vld [vmem:[%s1 + $0x300] sm:$0xff]
        %v772 = vld [vmem:[%s1 + $0x308] sm:$0xff]
        %v773 = vld [vmem:[%s1 + $0x310] sm:$0xff]
        %v774 = vld [vmem:[%s1 + $0x318] sm:$0xff]
        %v775 = vld [vmem:[%s1 + $0x320] sm:$0xff]
        %v776 = vld [vmem:[%s1 + $0x328] sm:$0xff]
        %v777 = vld [vmem:[%s1 + $0x330] sm:$0xff]
        %v778 = vld [vmem:[%s1 + $0x338] sm:$0xff]
        %v779 = vld [vmem:[%s1 + $0x340] sm:$0xff]
        %v780 = vld [vmem:[%s1 + $0x348] sm:$0xff]
        %v781 = vld [vmem:[%s1 + $0x350] sm:$0xff]
        %v782 = vld [vmem:[%s1 + $0x358] sm:$0xff]
        %v783 = vld [vmem:[%s1 + $0x360] sm:$0xff]
        %v784 = vld [vmem:[%s1 + $0x368] sm:$0xff]
        %v785 = vld [vmem:[%s1 + $0x370] sm:$0xff]
        %v786 = vld [vmem:[%s1 + $0x378] sm:$0xff]
        %v787 = vld [vmem:[%s1 + $0x380] sm:$0xff]
        %v788 = vld [vmem:[%s1 + $0x388] sm:$0xff]
        %v789 = vld [vmem:[%s1 + $0x390] sm:$0xff]
        %v790 = vld [vmem:[%s1 + $0x398] sm:$0xff]
        %v791 = vld [vmem:[%s1 + $0x3a0] sm:$0xff]
        %v792 = vld [vmem:[%s1 + $0x3a8] sm:$0xff]
        %v793 = vld [vmem:[%s1 + $0x3b0] sm:$0xff]
        %v794 = vld [vmem:[%s1 + $0x3b8] sm:$0xff]
        %v795 = vld [vmem:[%s1 + $0x3c0] sm:$0xff]
        %v796 = vld [vmem:[%s1 + $0x3c8] sm:$0xff]
        %v797 = vld [vmem:[%s1 + $0x3d0] sm:$0xff]
        %v798 = vld [vmem:[%s1 + $0x3d8] sm:$0xff]
        %v799 = vld [vmem:[%s1 + $0x3e0] sm:$0xff]
        %v800 = vld [vmem:[%s1 + $0x3e8] sm:$0xff]
        %v801 = vld [vmem:[%s1 + $0x3f0] sm:$0xff]
        %v802 = vld [vmem:[%s1 + $0x3f8] sm:$0xff]
        %v803 = vld [vmem:[%s1 + $0x400] sm:$0xff]
        %v804 = vld [vmem:[%s1 + $0x408] sm:$0xff]
        %v805 = vld [vmem:[%s1 + $0x410] sm:$0xff]
        %v806 = vld [vmem:[%s1 + $0x418] sm:$0xff]
        %v807 = vld [vmem:[%s1 + $0x420] sm:$0xff]
        %v808 = vld [vmem:[%s1 + $0x428] sm:$0xff]
        %v809 = vld [vmem:[%s1 + $0x430] sm:$0xff]
        %v810 = vld [vmem:[%s1 + $0x438] sm:$0xff]
        %v811 = vld [vmem:[%s1 + $0x440] sm:$0xff]
        %v812 = vld [vmem:[%s1 + $0x448] sm:$0xff]
        %v813 = vld [vmem:[%s1 + $0x450] sm:$0xff]
        %v814 = vld [vmem:[%s1 + $0x458] sm:$0xff]
        %v815 = vld [vmem:[%s1 + $0x460] sm:$0xff]
        %v816 = vld [vmem:[%s1 + $0x468] sm:$0xff]
        %v817 = vld [vmem:[%s1 + $0x470] sm:$0xff]
        %v818 = vld [vmem:[%s1 + $0x478] sm:$0xff]
        %v819 = vld [vmem:[%s1 + $0x480] sm:$0xff]
        %v820 = vld [vmem:[%s1 + $0x488] sm:$0xff]
        %v821 = vld [vmem:[%s1 + $0x490] sm:$0xff]
        %v822 = vld [vmem:[%s1 + $0x498] sm:$0xff]
        %v823 = vld [vmem:[%s1 + $0x4a0] sm:$0xff]
        %v824 = vld [vmem:[%s1 + $0x4a8] sm:$0xff]
        %v825 = vld [vmem:[%s1 + $0x4b0] sm:$0xff]
        %v826 = vld [vmem:[%s1 + $0x4b8] sm:$0xff]
        %v827 = vld [vmem:[%s1 + $0x4c0] sm:$0xff]
        %v828 = vld [vmem:[%s1 + $0x4c8] sm:$0xff]
        %v829 = vld [vmem:[%s1 + $0x4d0] sm:$0xff]
        %v830 = vld [vmem:[%s1 + $0x4d8] sm:$0xff]
        %v831 = vld [vmem:[%s1 + $0x4e0] sm:$0xff]
        %v832 = vld [vmem:[%s1 + $0x4e8] sm:$0xff]
        %v833 = vld [vmem:[%s1 + $0x4f0] sm:$0xff]
        %v834 = vld [vmem:[%s1 + $0x4f8] sm:$0xff]
        %v835 = vld [vmem:[%s1 + $0x500] sm:$0xff]
        %v836 = vld [vmem:[%s1 + $0x508] sm:$0xff]
        %v837 = vld [vmem:[%s1 + $0x510] sm:$0xff]
        %v838 = vld [vmem:[%s1 + $0x518] sm:$0xff]
        %v839 = vld [vmem:[%s1 + $0x520] sm:$0xff]
        %v840 = vld [vmem:[%s1 + $0x528] sm:$0xff]
        %v841 = vld [vmem:[%s1 + $0x530] sm:$0xff]
        %v842 = vld [vmem:[%s1 + $0x538] sm:$0xff]
        %v843 = vld [vmem:[%s1 + $0x540] sm:$0xff]
        %v844 = vld [vmem:[%s1 + $0x548] sm:$0xff]
        %v845 = vld [vmem:[%s1 + $0x550] sm:$0xff]
        %v846 = vld [vmem:[%s1 + $0x558] sm:$0xff]
        %v847 = vld [vmem:[%s1 + $0x560] sm:$0xff]
        %v848 = vld [vmem:[%s1 + $0x568] sm:$0xff]
        %v849 = vld [vmem:[%s1 + $0x570] sm:$0xff]
        %v850 = vld [vmem:[%s1 + $0x578] sm:$0xff]
        %v851 = vld [vmem:[%s1 + $0x580] sm:$0xff]
        %v852 = vld [vmem:[%s1 + $0x588] sm:$0xff]
        %v853 = vld [vmem:[%s1 + $0x590] sm:$0xff]
        %v854 = vld [vmem:[%s1 + $0x598] sm:$0xff]
        %v855 = vld [vmem:[%s1 + $0x5a0] sm:$0xff]
        %v856 = vld [vmem:[%s1 + $0x5a8] sm:$0xff]
        %v857 = vld [vmem:[%s1 + $0x5b0] sm:$0xff]
        %v858 = vld [vmem:[%s1 + $0x5b8] sm:$0xff]
        %v859 = vld [vmem:[%s1 + $0x5c0] sm:$0xff]
        %v860 = vld [vmem:[%s1 + $0x5c8] sm:$0xff]
        %v861 = vld [vmem:[%s1 + $0x5d0] sm:$0xff]
        %v862 = vld [vmem:[%s1 + $0x5d8] sm:$0xff]
        %v863 = vld [vmem:[%s1 + $0x5e0] sm:$0xff]
        %v864 = vld [vmem:[%s1 + $0x5e8] sm:$0xff]
        %v865 = vld [vmem:[%s1 + $0x5f0] sm:$0xff]
        %v866 = vld [vmem:[%s1 + $0x5f8] sm:$0xff]
        %v867 = vld [vmem:[%s1 + $0x600] sm:$0xff]
        %v868 = vld [vmem:[%s1 + $0x608] sm:$0xff]
        %v869 = vld [vmem:[%s1 + $0x610] sm:$0xff]
        %v870 = vld [vmem:[%s1 + $0x618] sm:$0xff]
        %v871 = vld [vmem:[%s1 + $0x620] sm:$0xff]
        %v872 = vld [vmem:[%s1 + $0x628] sm:$0xff]
        %v873 = vld [vmem:[%s1 + $0x630] sm:$0xff]
        %v874 = vld [vmem:[%s1 + $0x638] sm:$0xff]
        %v875 = vld [vmem:[%s1 + $0x640] sm:$0xff]
        %v876 = vld [vmem:[%s1 + $0x648] sm:$0xff]
        %v877 = vld [vmem:[%s1 + $0x650] sm:$0xff]
        %v878 = vld [vmem:[%s1 + $0x658] sm:$0xff]
        %v879 = vld [vmem:[%s1 + $0x660] sm:$0xff]
        %v880 = vld [vmem:[%s1 + $0x668] sm:$0xff]
        %v881 = vld [vmem:[%s1 + $0x670] sm:$0xff]
        %v882 = vld [vmem:[%s1 + $0x678] sm:$0xff]
        %v883 = vld [vmem:[%s1 + $0x680] sm:$0xff]
        %v884 = vld [vmem:[%s1 + $0x688] sm:$0xff]
        %v885 = vld [vmem:[%s1 + $0x690] sm:$0xff]
        %v886 = vld [vmem:[%s1 + $0x698] sm:$0xff]
        %v887 = vld [vmem:[%s1 + $0x6a0] sm:$0xff]
        %v888 = vld [vmem:[%s1 + $0x6a8] sm:$0xff]
        %v889 = vld [vmem:[%s1 + $0x6b0] sm:$0xff]
        %v890 = vld [vmem:[%s1 + $0x6b8] sm:$0xff]
        %v891 = vld [vmem:[%s1 + $0x6c0] sm:$0xff]
        %v892 = vld [vmem:[%s1 + $0x6c8] sm:$0xff]
        %v893 = vld [vmem:[%s1 + $0x6d0] sm:$0xff]
        %v894 = vld [vmem:[%s1 + $0x6d8] sm:$0xff]
        %v895 = vld [vmem:[%s1 + $0x6e0] sm:$0xff]
        %v896 = vld [vmem:[%s1 + $0x6e8] sm:$0xff]
        %v897 = vld [vmem:[%s1 + $0x6f0] sm:$0xff]
        %v898 = vld [vmem:[%s1 + $0x6f8] sm:$0xff]
        %v899 = vld [vmem:[%s1 + $0x700] sm:$0xff]
        %v900 = vld [vmem:[%s1 + $0x708] sm:$0xff]
        %v901 = vld [vmem:[%s1 + $0x710] sm:$0xff]
        %v902 = vld [vmem:[%s1 + $0x718] sm:$0xff]
        %v903 = vld [vmem:[%s1 + $0x720] sm:$0xff]
        %v904 = vld [vmem:[%s1 + $0x728] sm:$0xff]
        %v905 = vld [vmem:[%s1 + $0x730] sm:$0xff]
        %v906 = vld [vmem:[%s1 + $0x738] sm:$0xff]
        %v907 = vld [vmem:[%s1 + $0x740] sm:$0xff]
        %v908 = vld [vmem:[%s1 + $0x748] sm:$0xff]
        %v909 = vld [vmem:[%s1 + $0x750] sm:$0xff]
        %v910 = vld [vmem:[%s1 + $0x758] sm:$0xff]
        %v911 = vld [vmem:[%s1 + $0x760] sm:$0xff]
        %v912 = vld [vmem:[%s1 + $0x768] sm:$0xff]
        %v913 = vld [vmem:[%s1 + $0x770] sm:$0xff]
        %v914 = vld [vmem:[%s1 + $0x778] sm:$0xff]
        %v915 = vld [vmem:[%s1 + $0x780] sm:$0xff]
        %v916 = vld [vmem:[%s1 + $0x788] sm:$0xff]
        %v917 = vld [vmem:[%s1 + $0x790] sm:$0xff]
        %v918 = vld [vmem:[%s1 + $0x798] sm:$0xff]
        %v919 = vld [vmem:[%s1 + $0x7a0] sm:$0xff]
        %v920 = vld [vmem:[%s1 + $0x7a8] sm:$0xff]
        %v921 = vld [vmem:[%s1 + $0x7b0] sm:$0xff]
        %v922 = vld [vmem:[%s1 + $0x7b8] sm:$0xff]
        %v923 = vld [vmem:[%s1 + $0x7c0] sm:$0xff]
        %v924 = vld [vmem:[%s1 + $0x7c8] sm:$0xff]
        %v925 = vld [vmem:[%s1 + $0x7d0] sm:$0xff]
        %v926 = vld [vmem:[%s1 + $0x7d8] sm:$0xff]
        %v927 = vld [vmem:[%s1 + $0x7e0] sm:$0xff]
        %v928 = vld [vmem:[%s1 + $0x7e8] sm:$0xff]
        %v929 = vld [vmem:[%s1 + $0x7f0] sm:$0xff]
        %v930 = vld [vmem:[%s1 + $0x7f8] sm:$0xff]
        %v931 = vld [vmem:[%s1 + $0x800] sm:$0xff]
        %v932 = vld [vmem:[%s1 + $0x808] sm:$0xff]
        %v933 = vld [vmem:[%s1 + $0x810] sm:$0xff]
        %v934 = vld [vmem:[%s1 + $0x818] sm:$0xff]
        %v935 = vld [vmem:[%s1 + $0x820] sm:$0xff]
        %v936 = vld [vmem:[%s1 + $0x828] sm:$0xff]
        %v937 = vld [vmem:[%s1 + $0x830] sm:$0xff]
        %v938 = vld [vmem:[%s1 + $0x838] sm:$0xff]
        %v939 = vld [vmem:[%s1 + $0x840] sm:$0xff]
        %v940 = vld [vmem:[%s1 + $0x848] sm:$0xff]
        %v941 = vld [vmem:[%s1 + $0x850] sm:$0xff]
        %v942 = vld [vmem:[%s1 + $0x858] sm:$0xff]
        %v943 = vld [vmem:[%s1 + $0x860] sm:$0xff]
        %v944 = vld [vmem:[%s1 + $0x868] sm:$0xff]
        %v945 = vld [vmem:[%s1 + $0x870] sm:$0xff]
        %v946 = vld [vmem:[%s1 + $0x878] sm:$0xff]
        %v947 = vld [vmem:[%s1 + $0x880] sm:$0xff]
        %v948 = vld [vmem:[%s1 + $0x888] sm:$0xff]
        %v949 = vld [vmem:[%s1 + $0x890] sm:$0xff]
        %v950 = vld [vmem:[%s1 + $0x898] sm:$0xff]
        %v951 = vld [vmem:[%s1 + $0x8a0] sm:$0xff]
        %v952 = vld [vmem:[%s1 + $0x8a8] sm:$0xff]
        %v953 = vld [vmem:[%s1 + $0x8b0] sm:$0xff]
        %v954 = vld [vmem:[%s1 + $0x8b8] sm:$0xff]
        %v955 = vld [vmem:[%s1 + $0x8c0] sm:$0xff]
        %v956 = vld [vmem:[%s1 + $0x8c8] sm:$0xff]
        %v957 = vld [vmem:[%s1 + $0x8d0] sm:$0xff]
        %v958 = vld [vmem:[%s1 + $0x8d8] sm:$0xff]
        %v959 = vld [vmem:[%s1 + $0x8e0] sm:$0xff]
        %v960 = vld [vmem:[%s1 + $0x8e8] sm:$0xff]
        %v961 = vld [vmem:[%s1 + $0x8f0] sm:$0xff]
        %v962 = vld [vmem:[%s1 + $0x8f8] sm:$0xff]
        %v963 = vld [vmem:[%s1 + $0x900] sm:$0xff]
        %v964 = vld [vmem:[%s1 + $0x908] sm:$0xff]
        %v965 = vld [vmem:[%s1 + $0x910] sm:$0xff]
        %v966 = vld [vmem:[%s1 + $0x918] sm:$0xff]
        %v967 = vld [vmem:[%s1 + $0x920] sm:$0xff]
        %v968 = vld [vmem:[%s1 + $0x928] sm:$0xff]
        %v969 = vld [vmem:[%s1 + $0x930] sm:$0xff]
        %v970 = vld [vmem:[%s1 + $0x938] sm:$0xff]
        %v971 = vld [vmem:[%s1 + $0x940] sm:$0xff]
        %v972 = vld [vmem:[%s1 + $0x948] sm:$0xff]
        %v973 = vld [vmem:[%s1 + $0x950] sm:$0xff]
        %v974 = vld [vmem:[%s1 + $0x958] sm:$0xff]
        %v975 = vld [vmem:[%s1 + $0x960] sm:$0xff]
        %v976 = vld [vmem:[%s1 + $0x968] sm:$0xff]
        %v977 = vld [vmem:[%s1 + $0x970] sm:$0xff]
        %v978 = vld [vmem:[%s1 + $0x978] sm:$0xff]
        %v979 = vld [vmem:[%s1 + $0x980] sm:$0xff]
        %v980 = vld [vmem:[%s1 + $0x988] sm:$0xff]
        %v981 = vld [vmem:[%s1 + $0x990] sm:$0xff]
        %v982 = vld [vmem:[%s1 + $0x998] sm:$0xff]
        %v983 = vld [vmem:[%s1 + $0x9a0] sm:$0xff]
        %v984 = vld [vmem:[%s1 + $0x9a8] sm:$0xff]
        %v985 = vld [vmem:[%s1 + $0x9b0] sm:$0xff]
        %v986 = vld [vmem:[%s1 + $0x9b8] sm:$0xff]
        %v987 = vld [vmem:[%s1 + $0x9c0] sm:$0xff]
        %v988 = vld [vmem:[%s1 + $0x9c8] sm:$0xff]
        %v989 = vld [vmem:[%s1 + $0x9d0] sm:$0xff]
        %v990 = vld [vmem:[%s1 + $0x9d8] sm:$0xff]
        %v991 = vld [vmem:[%s1 + $0x9e0] sm:$0xff]
        %v992 = vld [vmem:[%s1 + $0x9e8] sm:$0xff]
        %v993 = vld [vmem:[%s1 + $0x9f0] sm:$0xff]
        %v994 = vld [vmem:[%s1 + $0x9f8] sm:$0xff]
        %v995 = vld [vmem:[%s1 + $0xa00] sm:$0xff]
        %v996 = vld [vmem:[%s1 + $0xa08] sm:$0xff]
        %v997 = vld [vmem:[%s1 + $0xa10] sm:$0xff]
        %v998 = vld [vmem:[%s1 + $0xa18] sm:$0xff]
        %v999 = vld [vmem:[%s1 + $0xa20] sm:$0xff]
        %v1000 = vld [vmem:[%s1 + $0xa28] sm:$0xff]
        %v1001 = vld [vmem:[%s1 + $0xa30] sm:$0xff]
        %v1002 = vld [vmem:[%s1 + $0xa38] sm:$0xff]
        %v1003 = vld [vmem:[%s1 + $0xa40] sm:$0xff]
        %v1004 = vld [vmem:[%s1 + $0xa48] sm:$0xff]
        %v1005 = vld [vmem:[%s1 + $0xa50] sm:$0xff]
        %v1006 = vld [vmem:[%s1 + $0xa58] sm:$0xff]
        %v1007 = vld [vmem:[%s1 + $0xa60] sm:$0xff]
        %v1008 = vld [vmem:[%s1 + $0xa68] sm:$0xff]
        %v1009 = vld [vmem:[%s1 + $0xa70] sm:$0xff]
        %v1010 = vld [vmem:[%s1 + $0xa78] sm:$0xff]
        %v1011 = vld [vmem:[%s1 + $0xa80] sm:$0xff]
        %v1012 = vld [vmem:[%s1 + $0xa88] sm:$0xff]
        %v1013 = vld [vmem:[%s1 + $0xa90] sm:$0xff]
        %v1014 = vld [vmem:[%s1 + $0xa98] sm:$0xff]
        %v1015 = vld [vmem:[%s1 + $0xaa0] sm:$0xff]
        %v1016 = vld [vmem:[%s1 + $0xaa8] sm:$0xff]
        %v1017 = vld [vmem:[%s1 + $0xab0] sm:$0xff]
        %v1018 = vld [vmem:[%s1 + $0xab8] sm:$0xff]
        %v1019 = vld [vmem:[%s1 + $0xac0] sm:$0xff]
        %v1020 = vld [vmem:[%s1 + $0xac8] sm:$0xff]
        %v1021 = vld [vmem:[%s1 + $0xad0] sm:$0xff]
        %v1022 = vld [vmem:[%s1 + $0xad8] sm:$0xff]
        %v1023 = vld [vmem:[%s1 + $0xae0] sm:$0xff]
        %v1024 = vld [vmem:[%s1 + $0xae8] sm:$0xff]
        %v1025 = vld [vmem:[%s1 + $0xaf0] sm:$0xff]
        %v1026 = vld [vmem:[%s1 + $0xaf8] sm:$0xff]
        %v1027 = vld [vmem:[%s1 + $0xb00] sm:$0xff]
        %v1028 = vld [vmem:[%s1 + $0xb08] sm:$0xff]
        %v1029 = vld [vmem:[%s1 + $0xb10] sm:$0xff]
        %v1030 = vld [vmem:[%s1 + $0xb18] sm:$0xff]
        %v1031 = vld [vmem:[%s1 + $0xb20] sm:$0xff]
        %v1032 = vld [vmem:[%s1 + $0xb28] sm:$0xff]
        %v1033 = vld [vmem:[%s1 + $0xb30] sm:$0xff]
        %v1034 = vld [vmem:[%s1 + $0xb38] sm:$0xff]
        %v1035 = vld [vmem:[%s1 + $0xb40] sm:$0xff]
        %v1036 = vld [vmem:[%s1 + $0xb48] sm:$0xff]
        %v1037 = vld [vmem:[%s1 + $0xb50] sm:$0xff]
        %v1038 = vld [vmem:[%s1 + $0xb58] sm:$0xff]
        %v1039 = vld [vmem:[%s1 + $0xb60] sm:$0xff]
        %v1040 = vld [vmem:[%s1 + $0xb68] sm:$0xff]
        %v1041 = vld [vmem:[%s1 + $0xb70] sm:$0xff]
        %v1042 = vld [vmem:[%s1 + $0xb78] sm:$0xff]
        %v1043 = vld [vmem:[%s1 + $0xb80] sm:$0xff]
        %v1044 = vld [vmem:[%s1 + $0xb88] sm:$0xff]
        %v1045 = vld [vmem:[%s1 + $0xb90] sm:$0xff]
        %v1046 = vld [vmem:[%s1 + $0xb98] sm:$0xff]
        %v1047 = vld [vmem:[%s1 + $0xba0] sm:$0xff]
        %v1048 = vld [vmem:[%s1 + $0xba8] sm:$0xff]
        %v1049 = vld [vmem:[%s1 + $0xbb0] sm:$0xff]
        %v1050 = vld [vmem:[%s1 + $0xbb8] sm:$0xff]
        %v1051 = vld [vmem:[%s1 + $0xbc0] sm:$0xff]
        %v1052 = vld [vmem:[%s1 + $0xbc8] sm:$0xff]
        %v1053 = vld [vmem:[%s1 + $0xbd0] sm:$0xff]
        %v1054 = vld [vmem:[%s1 + $0xbd8] sm:$0xff]
        %v1055 = vld [vmem:[%s1 + $0xbe0] sm:$0xff]
        %v1056 = vld [vmem:[%s1 + $0xbe8] sm:$0xff]
        %v1057 = vld [vmem:[%s1 + $0xbf0] sm:$0xff]
        %v1058 = vld [vmem:[%s1 + $0xbf8] sm:$0xff]
        %v1059 = vld [vmem:[%s1 + $0xc00] sm:$0xff]
        %v1060 = vld [vmem:[%s1 + $0xc08] sm:$0xff]
        %v1061 = vld [vmem:[%s1 + $0xc10] sm:$0xff]
        %v1062 = vld [vmem:[%s1 + $0xc18] sm:$0xff]
        %v1063 = vld [vmem:[%s1 + $0xc20] sm:$0xff]
        %v1064 = vld [vmem:[%s1 + $0xc28] sm:$0xff]
        %v1065 = vld [vmem:[%s1 + $0xc30] sm:$0xff]
        %v1066 = vld [vmem:[%s1 + $0xc38] sm:$0xff]
        %v1067 = vld [vmem:[%s2] sm:$0xff]
        %v1069 = vlaneseq
        %v1070 = vshrl.u32 %v1069, 7
        %v1071 = vsub.s32 0, %v1070
        %v1072 = vrot.slane %v1067, %v1071
        %v1073 = vlaneseq
        %v1074 = vshrl.u32 %v1073, 7
        %v1075 = vsub.s32 1, %v1074
        %v1076 = vrot.slane %v1067, %v1075
        %v1077 = vlaneseq
        %v1078 = vshrl.u32 %v1077, 7
        %v1079 = vsub.s32 2, %v1078
        %v1080 = vrot.slane %v1067, %v1079
        %v1081 = vlaneseq
        %v1082 = vshrl.u32 %v1081, 7
        %v1083 = vsub.s32 3, %v1082
        %v1084 = vrot.slane %v1067, %v1083
        %v1085 = vlaneseq
        %v1086 = vshrl.u32 %v1085, 7
        %v1087 = vsub.s32 4, %v1086
        %v1088 = vrot.slane %v1067, %v1087
        %v1089 = vlaneseq
        %v1090 = vshrl.u32 %v1089, 7
        %v1091 = vsub.s32 5, %v1090
        %v1092 = vrot.slane %v1067, %v1091
        %v1093 = vlaneseq
        %v1094 = vshrl.u32 %v1093, 7
        %v1095 = vsub.s32 6, %v1094
        %v1096 = vrot.slane %v1067, %v1095
        %v1097 = vlaneseq
        %v1098 = vshrl.u32 %v1097, 7
        %v1099 = vsub.s32 7, %v1098
        %v1100 = vrot.slane %v1067, %v1099
        %v1501 = vunpack.c.l.b16 %v675
        %v1502 = vunpack.c.h.b16 %v675
        %v1503 = vunpack.c.l.b16 %v676
        %v1504 = vunpack.c.h.b16 %v676
        %v1505 = vunpack.c.l.b16 %v677
        %v1506 = vunpack.c.h.b16 %v677
        %v1507 = vunpack.c.l.b16 %v678
        %v1508 = vunpack.c.h.b16 %v678
        %v1509 = vunpack.c.l.b16 %v679
        %v1510 = vunpack.c.h.b16 %v679
        %v1511 = vunpack.c.l.b16 %v680
        %v1512 = vunpack.c.h.b16 %v680
        %v1513 = vunpack.c.l.b16 %v681
        %v1514 = vunpack.c.h.b16 %v681
        %v1515 = vunpack.c.l.b16 %v682
        %v1516 = vunpack.c.h.b16 %v682
        %v1517 = vunpack.c.l.b16 %v683
        %v1518 = vunpack.c.h.b16 %v683
        %v1519 = vunpack.c.l.b16 %v684
        %v1520 = vunpack.c.h.b16 %v684
        %v1521 = vunpack.c.l.b16 %v685
        %v1522 = vunpack.c.h.b16 %v685
        %v1523 = vunpack.c.l.b16 %v686
        %v1524 = vunpack.c.h.b16 %v686
        %v1525 = vunpack.c.l.b16 %v687
        %v1526 = vunpack.c.h.b16 %v687
        %v1527 = vunpack.c.l.b16 %v688
        %v1528 = vunpack.c.h.b16 %v688
        %v1529 = vunpack.c.l.b16 %v689
        %v1530 = vunpack.c.h.b16 %v689
        %v1531 = vunpack.c.l.b16 %v690
        %v1532 = vunpack.c.h.b16 %v690
        %v1533 = vunpack.c.l.b16 %v691
        %v1534 = vunpack.c.h.b16 %v691
        %v1535 = vunpack.c.l.b16 %v692
        %v1536 = vunpack.c.h.b16 %v692
        %v1537 = vunpack.c.l.b16 %v693
        %v1538 = vunpack.c.h.b16 %v693
        %v1539 = vunpack.c.l.b16 %v694
        %v1540 = vunpack.c.h.b16 %v694
        %v1541 = vunpack.c.l.b16 %v695
        %v1542 = vunpack.c.h.b16 %v695
        %v1543 = vunpack.c.l.b16 %v696
        %v1544 = vunpack.c.h.b16 %v696
        %v1545 = vunpack.c.l.b16 %v697
        %v1546 = vunpack.c.h.b16 %v697
        %v1547 = vunpack.c.l.b16 %v698
        %v1548 = vunpack.c.h.b16 %v698
        %v1549 = vunpack.c.l.b16 %v699
        %v1550 = vunpack.c.h.b16 %v699
        %v1551 = vunpack.c.l.b16 %v700
        %v1552 = vunpack.c.h.b16 %v700
        %v1553 = vunpack.c.l.b16 %v701
        %v1554 = vunpack.c.h.b16 %v701
        %v1555 = vunpack.c.l.b16 %v702
        %v1556 = vunpack.c.h.b16 %v702
        %v1557 = vunpack.c.l.b16 %v703
        %v1558 = vunpack.c.h.b16 %v703
        %v1559 = vunpack.c.l.b16 %v704
        %v1560 = vunpack.c.h.b16 %v704
        %v1561 = vunpack.c.l.b16 %v705
        %v1562 = vunpack.c.h.b16 %v705
        %v1563 = vunpack.c.l.b16 %v706
        %v1564 = vunpack.c.h.b16 %v706
        %v1565 = vunpack.c.l.b16 %v707
        %v1566 = vunpack.c.h.b16 %v707
        %v1567 = vunpack.c.l.b16 %v708
        %v1568 = vunpack.c.h.b16 %v708
        %v1569 = vunpack.c.l.b16 %v709
        %v1570 = vunpack.c.h.b16 %v709
        %v1571 = vunpack.c.l.b16 %v710
        %v1572 = vunpack.c.h.b16 %v710
        %v1573 = vunpack.c.l.b16 %v711
        %v1574 = vunpack.c.h.b16 %v711
        %v1575 = vunpack.c.l.b16 %v712
        %v1576 = vunpack.c.h.b16 %v712
        %v1577 = vunpack.c.l.b16 %v713
        %v1578 = vunpack.c.h.b16 %v713
        %v1579 = vunpack.c.l.b16 %v714
        %v1580 = vunpack.c.h.b16 %v714
        %v1581 = vunpack.c.l.b16 %v715
        %v1582 = vunpack.c.h.b16 %v715
        %v1583 = vunpack.c.l.b16 %v716
        %v1584 = vunpack.c.h.b16 %v716
        %v1585 = vunpack.c.l.b16 %v717
        %v1586 = vunpack.c.h.b16 %v717
        %v1587 = vunpack.c.l.b16 %v718
        %v1588 = vunpack.c.h.b16 %v718
        %v1589 = vunpack.c.l.b16 %v719
        %v1590 = vunpack.c.h.b16 %v719
        %v1591 = vunpack.c.l.b16 %v720
        %v1592 = vunpack.c.h.b16 %v720
        %v1593 = vunpack.c.l.b16 %v721
        %v1594 = vunpack.c.h.b16 %v721
        %v1595 = vunpack.c.l.b16 %v722
        %v1596 = vunpack.c.h.b16 %v722
        %v1597 = vunpack.c.l.b16 %v723
        %v1598 = vunpack.c.h.b16 %v723
        %v1599 = vunpack.c.l.b16 %v724
        %v1600 = vunpack.c.h.b16 %v724
        %v1601 = vunpack.c.l.b16 %v725
        %v1602 = vunpack.c.h.b16 %v725
        %v1603 = vunpack.c.l.b16 %v726
        %v1604 = vunpack.c.h.b16 %v726
        %v1605 = vunpack.c.l.b16 %v727
        %v1606 = vunpack.c.h.b16 %v727
        %v1607 = vunpack.c.l.b16 %v728
        %v1608 = vunpack.c.h.b16 %v728
        %v1609 = vunpack.c.l.b16 %v729
        %v1610 = vunpack.c.h.b16 %v729
        %v1611 = vunpack.c.l.b16 %v730
        %v1612 = vunpack.c.h.b16 %v730
        %v1613 = vunpack.c.l.b16 %v731
        %v1614 = vunpack.c.h.b16 %v731
        %v1615 = vunpack.c.l.b16 %v732
        %v1616 = vunpack.c.h.b16 %v732
        %v1617 = vunpack.c.l.b16 %v733
        %v1618 = vunpack.c.h.b16 %v733
        %v1619 = vunpack.c.l.b16 %v734
        %v1620 = vunpack.c.h.b16 %v734
        %v1621 = vunpack.c.l.b16 %v735
        %v1622 = vunpack.c.h.b16 %v735
        %v1623 = vunpack.c.l.b16 %v736
        %v1624 = vunpack.c.h.b16 %v736
        %v1625 = vunpack.c.l.b16 %v737
        %v1626 = vunpack.c.h.b16 %v737
        %v1627 = vunpack.c.l.b16 %v738
        %v1628 = vunpack.c.h.b16 %v738
        %v1629 = vunpack.c.l.b16 %v739
        %v1630 = vunpack.c.h.b16 %v739
        %v1631 = vunpack.c.l.b16 %v740
        %v1632 = vunpack.c.h.b16 %v740
        %v1633 = vunpack.c.l.b16 %v741
        %v1634 = vunpack.c.h.b16 %v741
        %v1635 = vunpack.c.l.b16 %v742
        %v1636 = vunpack.c.h.b16 %v742
        %v1637 = vunpack.c.l.b16 %v743
        %v1638 = vunpack.c.h.b16 %v743
        %v1639 = vunpack.c.l.b16 %v744
        %v1640 = vunpack.c.h.b16 %v744
        %v1641 = vunpack.c.l.b16 %v745
        %v1642 = vunpack.c.h.b16 %v745
        %v1643 = vunpack.c.l.b16 %v746
        %v1644 = vunpack.c.h.b16 %v746
        %v1645 = vunpack.c.l.b16 %v747
        %v1646 = vunpack.c.h.b16 %v747
        %v1647 = vunpack.c.l.b16 %v748
        %v1648 = vunpack.c.h.b16 %v748
        %v1649 = vunpack.c.l.b16 %v749
        %v1650 = vunpack.c.h.b16 %v749
        %v1651 = vunpack.c.l.b16 %v750
        %v1652 = vunpack.c.h.b16 %v750
        %v1653 = vunpack.c.l.b16 %v751
        %v1654 = vunpack.c.h.b16 %v751
        %v1655 = vunpack.c.l.b16 %v752
        %v1656 = vunpack.c.h.b16 %v752
        %v1657 = vunpack.c.l.b16 %v753
        %v1658 = vunpack.c.h.b16 %v753
        %v1659 = vunpack.c.l.b16 %v754
        %v1660 = vunpack.c.h.b16 %v754
        %v1661 = vunpack.c.l.b16 %v755
        %v1662 = vunpack.c.h.b16 %v755
        %v1663 = vunpack.c.l.b16 %v756
        %v1664 = vunpack.c.h.b16 %v756
        %v1665 = vunpack.c.l.b16 %v757
        %v1666 = vunpack.c.h.b16 %v757
        %v1667 = vunpack.c.l.b16 %v758
        %v1668 = vunpack.c.h.b16 %v758
        %v1669 = vunpack.c.l.b16 %v759
        %v1670 = vunpack.c.h.b16 %v759
        %v1671 = vunpack.c.l.b16 %v760
        %v1672 = vunpack.c.h.b16 %v760
        %v1673 = vunpack.c.l.b16 %v761
        %v1674 = vunpack.c.h.b16 %v761
        %v1675 = vunpack.c.l.b16 %v762
        %v1676 = vunpack.c.h.b16 %v762
        %v1677 = vunpack.c.l.b16 %v763
        %v1678 = vunpack.c.h.b16 %v763
        %v1679 = vunpack.c.l.b16 %v764
        %v1680 = vunpack.c.h.b16 %v764
        %v1681 = vunpack.c.l.b16 %v765
        %v1682 = vunpack.c.h.b16 %v765
        %v1683 = vunpack.c.l.b16 %v766
        %v1684 = vunpack.c.h.b16 %v766
        %v1685 = vunpack.c.l.b16 %v767
        %v1686 = vunpack.c.h.b16 %v767
        %v1687 = vunpack.c.l.b16 %v768
        %v1688 = vunpack.c.h.b16 %v768
        %v1689 = vunpack.c.l.b16 %v769
        %v1690 = vunpack.c.h.b16 %v769
        %v1691 = vunpack.c.l.b16 %v770
        %v1692 = vunpack.c.h.b16 %v770
        %v1693 = vunpack.c.l.b16 %v771
        %v1694 = vunpack.c.h.b16 %v771
        %v1695 = vunpack.c.l.b16 %v772
        %v1696 = vunpack.c.h.b16 %v772
        %v1697 = vunpack.c.l.b16 %v773
        %v1698 = vunpack.c.h.b16 %v773
        %v1699 = vunpack.c.l.b16 %v774
        %v1700 = vunpack.c.h.b16 %v774
        %v1701 = vunpack.c.l.b16 %v775
        %v1702 = vunpack.c.h.b16 %v775
        %v1703 = vunpack.c.l.b16 %v776
        %v1704 = vunpack.c.h.b16 %v776
        %v1705 = vunpack.c.l.b16 %v777
        %v1706 = vunpack.c.h.b16 %v777
        %v1707 = vunpack.c.l.b16 %v778
        %v1708 = vunpack.c.h.b16 %v778
        %v1709 = vunpack.c.l.b16 %v779
        %v1710 = vunpack.c.h.b16 %v779
        %v1711 = vunpack.c.l.b16 %v780
        %v1712 = vunpack.c.h.b16 %v780
        %v1713 = vunpack.c.l.b16 %v781
        %v1714 = vunpack.c.h.b16 %v781
        %v1715 = vunpack.c.l.b16 %v782
        %v1716 = vunpack.c.h.b16 %v782
        %v1717 = vunpack.c.l.b16 %v783
        %v1718 = vunpack.c.h.b16 %v783
        %v1719 = vunpack.c.l.b16 %v784
        %v1720 = vunpack.c.h.b16 %v784
        %v1721 = vunpack.c.l.b16 %v785
        %v1722 = vunpack.c.h.b16 %v785
        %v1723 = vunpack.c.l.b16 %v786
        %v1724 = vunpack.c.h.b16 %v786
        %v1725 = vunpack.c.l.b16 %v787
        %v1726 = vunpack.c.h.b16 %v787
        %v1727 = vunpack.c.l.b16 %v788
        %v1728 = vunpack.c.h.b16 %v788
        %v1729 = vunpack.c.l.b16 %v789
        %v1730 = vunpack.c.h.b16 %v789
        %v1731 = vunpack.c.l.b16 %v790
        %v1732 = vunpack.c.h.b16 %v790
        %v1733 = vunpack.c.l.b16 %v791
        %v1734 = vunpack.c.h.b16 %v791
        %v1735 = vunpack.c.l.b16 %v792
        %v1736 = vunpack.c.h.b16 %v792
        %v1737 = vunpack.c.l.b16 %v793
        %v1738 = vunpack.c.h.b16 %v793
        %v1739 = vunpack.c.l.b16 %v794
        %v1740 = vunpack.c.h.b16 %v794
        %v1741 = vunpack.c.l.b16 %v795
        %v1742 = vunpack.c.h.b16 %v795
        %v1743 = vunpack.c.l.b16 %v796
        %v1744 = vunpack.c.h.b16 %v796
        %v1745 = vunpack.c.l.b16 %v797
        %v1746 = vunpack.c.h.b16 %v797
        %v1747 = vunpack.c.l.b16 %v798
        %v1748 = vunpack.c.h.b16 %v798
        %v1749 = vunpack.c.l.b16 %v799
        %v1750 = vunpack.c.h.b16 %v799
        %v1751 = vunpack.c.l.b16 %v800
        %v1752 = vunpack.c.h.b16 %v800
        %v1753 = vunpack.c.l.b16 %v801
        %v1754 = vunpack.c.h.b16 %v801
        %v1755 = vunpack.c.l.b16 %v802
        %v1756 = vunpack.c.h.b16 %v802
        %v1757 = vunpack.c.l.b16 %v803
        %v1758 = vunpack.c.h.b16 %v803
        %v1759 = vunpack.c.l.b16 %v804
        %v1760 = vunpack.c.h.b16 %v804
        %v1761 = vunpack.c.l.b16 %v805
        %v1762 = vunpack.c.h.b16 %v805
        %v1763 = vunpack.c.l.b16 %v806
        %v1764 = vunpack.c.h.b16 %v806
        %v1765 = vunpack.c.l.b16 %v807
        %v1766 = vunpack.c.h.b16 %v807
        %v1767 = vunpack.c.l.b16 %v808
        %v1768 = vunpack.c.h.b16 %v808
        %v1769 = vunpack.c.l.b16 %v809
        %v1770 = vunpack.c.h.b16 %v809
        %v1771 = vunpack.c.l.b16 %v810
        %v1772 = vunpack.c.h.b16 %v810
        %v1773 = vunpack.c.l.b16 %v811
        %v1774 = vunpack.c.h.b16 %v811
        %v1775 = vunpack.c.l.b16 %v812
        %v1776 = vunpack.c.h.b16 %v812
        %v1777 = vunpack.c.l.b16 %v813
        %v1778 = vunpack.c.h.b16 %v813
        %v1779 = vunpack.c.l.b16 %v814
        %v1780 = vunpack.c.h.b16 %v814
        %v1781 = vunpack.c.l.b16 %v815
        %v1782 = vunpack.c.h.b16 %v815
        %v1783 = vunpack.c.l.b16 %v816
        %v1784 = vunpack.c.h.b16 %v816
        %v1785 = vunpack.c.l.b16 %v817
        %v1786 = vunpack.c.h.b16 %v817
        %v1787 = vunpack.c.l.b16 %v818
        %v1788 = vunpack.c.h.b16 %v818
        %v1789 = vunpack.c.l.b16 %v819
        %v1790 = vunpack.c.h.b16 %v819
        %v1791 = vunpack.c.l.b16 %v820
        %v1792 = vunpack.c.h.b16 %v820
        %v1793 = vunpack.c.l.b16 %v821
        %v1794 = vunpack.c.h.b16 %v821
        %v1795 = vunpack.c.l.b16 %v822
        %v1796 = vunpack.c.h.b16 %v822
        %v1797 = vunpack.c.l.b16 %v823
        %v1798 = vunpack.c.h.b16 %v823
        %v1799 = vunpack.c.l.b16 %v824
        %v1800 = vunpack.c.h.b16 %v824
        %v1801 = vunpack.c.l.b16 %v825
        %v1802 = vunpack.c.h.b16 %v825
        %v1803 = vunpack.c.l.b16 %v826
        %v1804 = vunpack.c.h.b16 %v826
        %v1805 = vunpack.c.l.b16 %v827
        %v1806 = vunpack.c.h.b16 %v827
        %v1807 = vunpack.c.l.b16 %v828
        %v1808 = vunpack.c.h.b16 %v828
        %v1809 = vunpack.c.l.b16 %v829
        %v1810 = vunpack.c.h.b16 %v829
        %v1811 = vunpack.c.l.b16 %v830
        %v1812 = vunpack.c.h.b16 %v830
        %v1813 = vunpack.c.l.b16 %v831
        %v1814 = vunpack.c.h.b16 %v831
        %v1815 = vunpack.c.l.b16 %v832
        %v1816 = vunpack.c.h.b16 %v832
        %v1817 = vunpack.c.l.b16 %v833
        %v1818 = vunpack.c.h.b16 %v833
        %v1819 = vunpack.c.l.b16 %v834
        %v1820 = vunpack.c.h.b16 %v834
        %v1821 = vunpack.c.l.b16 %v835
        %v1822 = vunpack.c.h.b16 %v835
        %v1823 = vunpack.c.l.b16 %v836
        %v1824 = vunpack.c.h.b16 %v836
        %v1825 = vunpack.c.l.b16 %v837
        %v1826 = vunpack.c.h.b16 %v837
        %v1827 = vunpack.c.l.b16 %v838
        %v1828 = vunpack.c.h.b16 %v838
        %v1829 = vunpack.c.l.b16 %v839
        %v1830 = vunpack.c.h.b16 %v839
        %v1831 = vunpack.c.l.b16 %v840
        %v1832 = vunpack.c.h.b16 %v840
        %v1833 = vunpack.c.l.b16 %v841
        %v1834 = vunpack.c.h.b16 %v841
        %v1835 = vunpack.c.l.b16 %v842
        %v1836 = vunpack.c.h.b16 %v842
        %v1837 = vunpack.c.l.b16 %v843
        %v1838 = vunpack.c.h.b16 %v843
        %v1839 = vunpack.c.l.b16 %v844
        %v1840 = vunpack.c.h.b16 %v844
        %v1841 = vunpack.c.l.b16 %v845
        %v1842 = vunpack.c.h.b16 %v845
        %v1843 = vunpack.c.l.b16 %v846
        %v1844 = vunpack.c.h.b16 %v846
        %v1845 = vunpack.c.l.b16 %v847
        %v1846 = vunpack.c.h.b16 %v847
        %v1847 = vunpack.c.l.b16 %v848
        %v1848 = vunpack.c.h.b16 %v848
        %v1849 = vunpack.c.l.b16 %v849
        %v1850 = vunpack.c.h.b16 %v849
        %v1851 = vunpack.c.l.b16 %v850
        %v1852 = vunpack.c.h.b16 %v850
        %v1853 = vunpack.c.l.b16 %v851
        %v1854 = vunpack.c.h.b16 %v851
        %v1855 = vunpack.c.l.b16 %v852
        %v1856 = vunpack.c.h.b16 %v852
        %v1857 = vunpack.c.l.b16 %v853
        %v1858 = vunpack.c.h.b16 %v853
        %v1859 = vunpack.c.l.b16 %v854
        %v1860 = vunpack.c.h.b16 %v854
        %v1861 = vunpack.c.l.b16 %v855
        %v1862 = vunpack.c.h.b16 %v855
        %v1863 = vunpack.c.l.b16 %v856
        %v1864 = vunpack.c.h.b16 %v856
        %v1865 = vunpack.c.l.b16 %v857
        %v1866 = vunpack.c.h.b16 %v857
        %v1867 = vunpack.c.l.b16 %v858
        %v1868 = vunpack.c.h.b16 %v858
        %v1869 = vunpack.c.l.b16 %v859
        %v1870 = vunpack.c.h.b16 %v859
        %v1871 = vunpack.c.l.b16 %v860
        %v1872 = vunpack.c.h.b16 %v860
        %v1873 = vunpack.c.l.b16 %v861
        %v1874 = vunpack.c.h.b16 %v861
        %v1875 = vunpack.c.l.b16 %v862
        %v1876 = vunpack.c.h.b16 %v862
        %v1877 = vunpack.c.l.b16 %v863
        %v1878 = vunpack.c.h.b16 %v863
        %v1879 = vunpack.c.l.b16 %v864
        %v1880 = vunpack.c.h.b16 %v864
        %v1881 = vunpack.c.l.b16 %v865
        %v1882 = vunpack.c.h.b16 %v865
        %v1883 = vunpack.c.l.b16 %v866
        %v1884 = vunpack.c.h.b16 %v866
        %v1885 = vunpack.c.l.b16 %v867
        %v1886 = vunpack.c.h.b16 %v867
        %v1887 = vunpack.c.l.b16 %v868
        %v1888 = vunpack.c.h.b16 %v868
        %v1889 = vunpack.c.l.b16 %v869
        %v1890 = vunpack.c.h.b16 %v869
        %v1891 = vunpack.c.l.b16 %v870
        %v1892 = vunpack.c.h.b16 %v870
        %v1893 = vunpack.c.l.b16 %v871
        %v1894 = vunpack.c.h.b16 %v871
        %v1895 = vunpack.c.l.b16 %v872
        %v1896 = vunpack.c.h.b16 %v872
        %v1897 = vunpack.c.l.b16 %v873
        %v1898 = vunpack.c.h.b16 %v873
        %v1899 = vunpack.c.l.b16 %v874
        %v1900 = vunpack.c.h.b16 %v874
        %v1901 = vunpack.c.l.b16 %v875
        %v1902 = vunpack.c.h.b16 %v875
        %v1903 = vunpack.c.l.b16 %v876
        %v1904 = vunpack.c.h.b16 %v876
        %v1905 = vunpack.c.l.b16 %v877
        %v1906 = vunpack.c.h.b16 %v877
        %v1907 = vunpack.c.l.b16 %v878
        %v1908 = vunpack.c.h.b16 %v878
        %v1909 = vunpack.c.l.b16 %v879
        %v1910 = vunpack.c.h.b16 %v879
        %v1911 = vunpack.c.l.b16 %v880
        %v1912 = vunpack.c.h.b16 %v880
        %v1913 = vunpack.c.l.b16 %v881
        %v1914 = vunpack.c.h.b16 %v881
        %v1915 = vunpack.c.l.b16 %v882
        %v1916 = vunpack.c.h.b16 %v882
        %v1917 = vunpack.c.l.b16 %v883
        %v1918 = vunpack.c.h.b16 %v883
        %v1919 = vunpack.c.l.b16 %v884
        %v1920 = vunpack.c.h.b16 %v884
        %v1921 = vunpack.c.l.b16 %v885
        %v1922 = vunpack.c.h.b16 %v885
        %v1923 = vunpack.c.l.b16 %v886
        %v1924 = vunpack.c.h.b16 %v886
        %v1925 = vunpack.c.l.b16 %v887
        %v1926 = vunpack.c.h.b16 %v887
        %v1927 = vunpack.c.l.b16 %v888
        %v1928 = vunpack.c.h.b16 %v888
        %v1929 = vunpack.c.l.b16 %v889
        %v1930 = vunpack.c.h.b16 %v889
        %v1931 = vunpack.c.l.b16 %v890
        %v1932 = vunpack.c.h.b16 %v890
        %v1933 = vunpack.c.l.b16 %v891
        %v1934 = vunpack.c.h.b16 %v891
        %v1935 = vunpack.c.l.b16 %v892
        %v1936 = vunpack.c.h.b16 %v892
        %v1937 = vunpack.c.l.b16 %v893
        %v1938 = vunpack.c.h.b16 %v893
        %v1939 = vunpack.c.l.b16 %v894
        %v1940 = vunpack.c.h.b16 %v894
        %v1941 = vunpack.c.l.b16 %v895
        %v1942 = vunpack.c.h.b16 %v895
        %v1943 = vunpack.c.l.b16 %v896
        %v1944 = vunpack.c.h.b16 %v896
        %v1945 = vunpack.c.l.b16 %v897
        %v1946 = vunpack.c.h.b16 %v897
        %v1947 = vunpack.c.l.b16 %v898
        %v1948 = vunpack.c.h.b16 %v898
        %v1949 = vunpack.c.l.b16 %v899
        %v1950 = vunpack.c.h.b16 %v899
        %v1951 = vunpack.c.l.b16 %v900
        %v1952 = vunpack.c.h.b16 %v900
        %v1953 = vunpack.c.l.b16 %v901
        %v1954 = vunpack.c.h.b16 %v901
        %v1955 = vunpack.c.l.b16 %v902
        %v1956 = vunpack.c.h.b16 %v902
        %v1957 = vunpack.c.l.b16 %v903
        %v1958 = vunpack.c.h.b16 %v903
        %v1959 = vunpack.c.l.b16 %v904
        %v1960 = vunpack.c.h.b16 %v904
        %v1961 = vunpack.c.l.b16 %v905
        %v1962 = vunpack.c.h.b16 %v905
        %v1963 = vunpack.c.l.b16 %v906
        %v1964 = vunpack.c.h.b16 %v906
        %v1965 = vunpack.c.l.b16 %v907
        %v1966 = vunpack.c.h.b16 %v907
        %v1967 = vunpack.c.l.b16 %v908
        %v1968 = vunpack.c.h.b16 %v908
        %v1969 = vunpack.c.l.b16 %v909
        %v1970 = vunpack.c.h.b16 %v909
        %v1971 = vunpack.c.l.b16 %v910
        %v1972 = vunpack.c.h.b16 %v910
        %v1973 = vunpack.c.l.b16 %v911
        %v1974 = vunpack.c.h.b16 %v911
        %v1975 = vunpack.c.l.b16 %v912
        %v1976 = vunpack.c.h.b16 %v912
        %v1977 = vunpack.c.l.b16 %v913
        %v1978 = vunpack.c.h.b16 %v913
        %v1979 = vunpack.c.l.b16 %v914
        %v1980 = vunpack.c.h.b16 %v914
        %v1981 = vunpack.c.l.b16 %v915
        %v1982 = vunpack.c.h.b16 %v915
        %v1983 = vunpack.c.l.b16 %v916
        %v1984 = vunpack.c.h.b16 %v916
        %v1985 = vunpack.c.l.b16 %v917
        %v1986 = vunpack.c.h.b16 %v917
        %v1987 = vunpack.c.l.b16 %v918
        %v1988 = vunpack.c.h.b16 %v918
        %v1989 = vunpack.c.l.b16 %v919
        %v1990 = vunpack.c.h.b16 %v919
        %v1991 = vunpack.c.l.b16 %v920
        %v1992 = vunpack.c.h.b16 %v920
        %v1993 = vunpack.c.l.b16 %v921
        %v1994 = vunpack.c.h.b16 %v921
        %v1995 = vunpack.c.l.b16 %v922
        %v1996 = vunpack.c.h.b16 %v922
        %v1997 = vunpack.c.l.b16 %v923
        %v1998 = vunpack.c.h.b16 %v923
        %v1999 = vunpack.c.l.b16 %v924
        %v2000 = vunpack.c.h.b16 %v924
        %v2001 = vunpack.c.l.b16 %v925
        %v2002 = vunpack.c.h.b16 %v925
        %v2003 = vunpack.c.l.b16 %v926
        %v2004 = vunpack.c.h.b16 %v926
        %v2005 = vunpack.c.l.b16 %v927
        %v2006 = vunpack.c.h.b16 %v927
        %v2007 = vunpack.c.l.b16 %v928
        %v2008 = vunpack.c.h.b16 %v928
        %v2009 = vunpack.c.l.b16 %v929
        %v2010 = vunpack.c.h.b16 %v929
        %v2011 = vunpack.c.l.b16 %v930
        %v2012 = vunpack.c.h.b16 %v930
        %v2013 = vunpack.c.l.b16 %v931
        %v2014 = vunpack.c.h.b16 %v931
        %v2015 = vunpack.c.l.b16 %v932
        %v2016 = vunpack.c.h.b16 %v932
        %v2017 = vunpack.c.l.b16 %v933
        %v2018 = vunpack.c.h.b16 %v933
        %v2019 = vunpack.c.l.b16 %v934
        %v2020 = vunpack.c.h.b16 %v934
        %v2021 = vunpack.c.l.b16 %v935
        %v2022 = vunpack.c.h.b16 %v935
        %v2023 = vunpack.c.l.b16 %v936
        %v2024 = vunpack.c.h.b16 %v936
        %v2025 = vunpack.c.l.b16 %v937
        %v2026 = vunpack.c.h.b16 %v937
        %v2027 = vunpack.c.l.b16 %v938
        %v2028 = vunpack.c.h.b16 %v938
        %v2029 = vunpack.c.l.b16 %v939
        %v2030 = vunpack.c.h.b16 %v939
        %v2031 = vunpack.c.l.b16 %v940
        %v2032 = vunpack.c.h.b16 %v940
        %v2033 = vunpack.c.l.b16 %v941
        %v2034 = vunpack.c.h.b16 %v941
        %v2035 = vunpack.c.l.b16 %v942
        %v2036 = vunpack.c.h.b16 %v942
        %v2037 = vunpack.c.l.b16 %v943
        %v2038 = vunpack.c.h.b16 %v943
        %v2039 = vunpack.c.l.b16 %v944
        %v2040 = vunpack.c.h.b16 %v944
        %v2041 = vunpack.c.l.b16 %v945
        %v2042 = vunpack.c.h.b16 %v945
        %v2043 = vunpack.c.l.b16 %v946
        %v2044 = vunpack.c.h.b16 %v946
        %v2045 = vunpack.c.l.b16 %v947
        %v2046 = vunpack.c.h.b16 %v947
        %v2047 = vunpack.c.l.b16 %v948
        %v2048 = vunpack.c.h.b16 %v948
        %v2049 = vunpack.c.l.b16 %v949
        %v2050 = vunpack.c.h.b16 %v949
        %v2051 = vunpack.c.l.b16 %v950
        %v2052 = vunpack.c.h.b16 %v950
        %v2053 = vunpack.c.l.b16 %v951
        %v2054 = vunpack.c.h.b16 %v951
        %v2055 = vunpack.c.l.b16 %v952
        %v2056 = vunpack.c.h.b16 %v952
        %v2057 = vunpack.c.l.b16 %v953
        %v2058 = vunpack.c.h.b16 %v953
        %v2059 = vunpack.c.l.b16 %v954
        %v2060 = vunpack.c.h.b16 %v954
        %v2061 = vunpack.c.l.b16 %v955
        %v2062 = vunpack.c.h.b16 %v955
        %v2063 = vunpack.c.l.b16 %v956
        %v2064 = vunpack.c.h.b16 %v956
        %v2065 = vunpack.c.l.b16 %v957
        %v2066 = vunpack.c.h.b16 %v957
        %v2067 = vunpack.c.l.b16 %v958
        %v2068 = vunpack.c.h.b16 %v958
        %v2069 = vunpack.c.l.b16 %v959
        %v2070 = vunpack.c.h.b16 %v959
        %v2071 = vunpack.c.l.b16 %v960
        %v2072 = vunpack.c.h.b16 %v960
        %v2073 = vunpack.c.l.b16 %v961
        %v2074 = vunpack.c.h.b16 %v961
        %v2075 = vunpack.c.l.b16 %v962
        %v2076 = vunpack.c.h.b16 %v962
        %v2077 = vunpack.c.l.b16 %v963
        %v2078 = vunpack.c.h.b16 %v963
        %v2079 = vunpack.c.l.b16 %v964
        %v2080 = vunpack.c.h.b16 %v964
        %v2081 = vunpack.c.l.b16 %v965
        %v2082 = vunpack.c.h.b16 %v965
        %v2083 = vunpack.c.l.b16 %v966
        %v2084 = vunpack.c.h.b16 %v966
        %v2085 = vunpack.c.l.b16 %v967
        %v2086 = vunpack.c.h.b16 %v967
        %v2087 = vunpack.c.l.b16 %v968
        %v2088 = vunpack.c.h.b16 %v968
        %v2089 = vunpack.c.l.b16 %v969
        %v2090 = vunpack.c.h.b16 %v969
        %v2091 = vunpack.c.l.b16 %v970
        %v2092 = vunpack.c.h.b16 %v970
        %v2093 = vunpack.c.l.b16 %v971
        %v2094 = vunpack.c.h.b16 %v971
        %v2095 = vunpack.c.l.b16 %v972
        %v2096 = vunpack.c.h.b16 %v972
        %v2097 = vunpack.c.l.b16 %v973
        %v2098 = vunpack.c.h.b16 %v973
        %v2099 = vunpack.c.l.b16 %v974
        %v2100 = vunpack.c.h.b16 %v974
        %v2101 = vunpack.c.l.b16 %v975
        %v2102 = vunpack.c.h.b16 %v975
        %v2103 = vunpack.c.l.b16 %v976
        %v2104 = vunpack.c.h.b16 %v976
        %v2105 = vunpack.c.l.b16 %v977
        %v2106 = vunpack.c.h.b16 %v977
        %v2107 = vunpack.c.l.b16 %v978
        %v2108 = vunpack.c.h.b16 %v978
        %v2109 = vunpack.c.l.b16 %v979
        %v2110 = vunpack.c.h.b16 %v979
        %v2111 = vunpack.c.l.b16 %v980
        %v2112 = vunpack.c.h.b16 %v980
        %v2113 = vunpack.c.l.b16 %v981
        %v2114 = vunpack.c.h.b16 %v981
        %v2115 = vunpack.c.l.b16 %v982
        %v2116 = vunpack.c.h.b16 %v982
        %v2117 = vunpack.c.l.b16 %v983
        %v2118 = vunpack.c.h.b16 %v983
        %v2119 = vunpack.c.l.b16 %v984
        %v2120 = vunpack.c.h.b16 %v984
        %v2121 = vunpack.c.l.b16 %v985
        %v2122 = vunpack.c.h.b16 %v985
        %v2123 = vunpack.c.l.b16 %v986
        %v2124 = vunpack.c.h.b16 %v986
        %v2125 = vunpack.c.l.b16 %v987
        %v2126 = vunpack.c.h.b16 %v987
        %v2127 = vunpack.c.l.b16 %v988
        %v2128 = vunpack.c.h.b16 %v988
        %v2129 = vunpack.c.l.b16 %v989
        %v2130 = vunpack.c.h.b16 %v989
        %v2131 = vunpack.c.l.b16 %v990
        %v2132 = vunpack.c.h.b16 %v990
        %v2133 = vunpack.c.l.b16 %v991
        %v2134 = vunpack.c.h.b16 %v991
        %v2135 = vunpack.c.l.b16 %v992
        %v2136 = vunpack.c.h.b16 %v992
        %v2137 = vunpack.c.l.b16 %v993
        %v2138 = vunpack.c.h.b16 %v993
        %v2139 = vunpack.c.l.b16 %v994
        %v2140 = vunpack.c.h.b16 %v994
        %v2141 = vunpack.c.l.b16 %v995
        %v2142 = vunpack.c.h.b16 %v995
        %v2143 = vunpack.c.l.b16 %v996
        %v2144 = vunpack.c.h.b16 %v996
        %v2145 = vunpack.c.l.b16 %v997
        %v2146 = vunpack.c.h.b16 %v997
        %v2147 = vunpack.c.l.b16 %v998
        %v2148 = vunpack.c.h.b16 %v998
        %v2149 = vunpack.c.l.b16 %v999
        %v2150 = vunpack.c.h.b16 %v999
        %v2151 = vunpack.c.l.b16 %v1000
        %v2152 = vunpack.c.h.b16 %v1000
        %v2153 = vunpack.c.l.b16 %v1001
        %v2154 = vunpack.c.h.b16 %v1001
        %v2155 = vunpack.c.l.b16 %v1002
        %v2156 = vunpack.c.h.b16 %v1002
        %v2157 = vunpack.c.l.b16 %v1003
        %v2158 = vunpack.c.h.b16 %v1003
        %v2159 = vunpack.c.l.b16 %v1004
        %v2160 = vunpack.c.h.b16 %v1004
        %v2161 = vunpack.c.l.b16 %v1005
        %v2162 = vunpack.c.h.b16 %v1005
        %v2163 = vunpack.c.l.b16 %v1006
        %v2164 = vunpack.c.h.b16 %v1006
        %v2165 = vunpack.c.l.b16 %v1007
        %v2166 = vunpack.c.h.b16 %v1007
        %v2167 = vunpack.c.l.b16 %v1008
        %v2168 = vunpack.c.h.b16 %v1008
        %v2169 = vunpack.c.l.b16 %v1009
        %v2170 = vunpack.c.h.b16 %v1009
        %v2171 = vunpack.c.l.b16 %v1010
        %v2172 = vunpack.c.h.b16 %v1010
        %v2173 = vunpack.c.l.b16 %v1011
        %v2174 = vunpack.c.h.b16 %v1011
        %v2175 = vunpack.c.l.b16 %v1012
        %v2176 = vunpack.c.h.b16 %v1012
        %v2177 = vunpack.c.l.b16 %v1013
        %v2178 = vunpack.c.h.b16 %v1013
        %v2179 = vunpack.c.l.b16 %v1014
        %v2180 = vunpack.c.h.b16 %v1014
        %v2181 = vunpack.c.l.b16 %v1015
        %v2182 = vunpack.c.h.b16 %v1015
        %v2183 = vunpack.c.l.b16 %v1016
        %v2184 = vunpack.c.h.b16 %v1016
        %v2185 = vunpack.c.l.b16 %v1017
        %v2186 = vunpack.c.h.b16 %v1017
        %v2187 = vunpack.c.l.b16 %v1018
        %v2188 = vunpack.c.h.b16 %v1018
        %v2189 = vunpack.c.l.b16 %v1019
        %v2190 = vunpack.c.h.b16 %v1019
        %v2191 = vunpack.c.l.b16 %v1020
        %v2192 = vunpack.c.h.b16 %v1020
        %v2193 = vunpack.c.l.b16 %v1021
        %v2194 = vunpack.c.h.b16 %v1021
        %v2195 = vunpack.c.l.b16 %v1022
        %v2196 = vunpack.c.h.b16 %v1022
        %v2197 = vunpack.c.l.b16 %v1023
        %v2198 = vunpack.c.h.b16 %v1023
        %v2199 = vunpack.c.l.b16 %v1024
        %v2200 = vunpack.c.h.b16 %v1024
        %v2201 = vunpack.c.l.b16 %v1025
        %v2202 = vunpack.c.h.b16 %v1025
        %v2203 = vunpack.c.l.b16 %v1026
        %v2204 = vunpack.c.h.b16 %v1026
        %v2205 = vunpack.c.l.b16 %v1027
        %v2206 = vunpack.c.h.b16 %v1027
        %v2207 = vunpack.c.l.b16 %v1028
        %v2208 = vunpack.c.h.b16 %v1028
        %v2209 = vunpack.c.l.b16 %v1029
        %v2210 = vunpack.c.h.b16 %v1029
        %v2211 = vunpack.c.l.b16 %v1030
        %v2212 = vunpack.c.h.b16 %v1030
        %v2213 = vunpack.c.l.b16 %v1031
        %v2214 = vunpack.c.h.b16 %v1031
        %v2215 = vunpack.c.l.b16 %v1032
        %v2216 = vunpack.c.h.b16 %v1032
        %v2217 = vunpack.c.l.b16 %v1033
        %v2218 = vunpack.c.h.b16 %v1033
        %v2219 = vunpack.c.l.b16 %v1034
        %v2220 = vunpack.c.h.b16 %v1034
        %v2221 = vunpack.c.l.b16 %v1035
        %v2222 = vunpack.c.h.b16 %v1035
        %v2223 = vunpack.c.l.b16 %v1036
        %v2224 = vunpack.c.h.b16 %v1036
        %v2225 = vunpack.c.l.b16 %v1037
        %v2226 = vunpack.c.h.b16 %v1037
        %v2227 = vunpack.c.l.b16 %v1038
        %v2228 = vunpack.c.h.b16 %v1038
        %v2229 = vunpack.c.l.b16 %v1039
        %v2230 = vunpack.c.h.b16 %v1039
        %v2231 = vunpack.c.l.b16 %v1040
        %v2232 = vunpack.c.h.b16 %v1040
        %v2233 = vunpack.c.l.b16 %v1041
        %v2234 = vunpack.c.h.b16 %v1041
        %v2235 = vunpack.c.l.b16 %v1042
        %v2236 = vunpack.c.h.b16 %v1042
        %v2237 = vunpack.c.l.b16 %v1043
        %v2238 = vunpack.c.h.b16 %v1043
        %v2239 = vunpack.c.l.b16 %v1044
        %v2240 = vunpack.c.h.b16 %v1044
        %v2241 = vunpack.c.l.b16 %v1045
        %v2242 = vunpack.c.h.b16 %v1045
        %v2243 = vunpack.c.l.b16 %v1046
        %v2244 = vunpack.c.h.b16 %v1046
        %v2245 = vunpack.c.l.b16 %v1047
        %v2246 = vunpack.c.h.b16 %v1047
        %v2247 = vunpack.c.l.b16 %v1048
        %v2248 = vunpack.c.h.b16 %v1048
        %v2249 = vunpack.c.l.b16 %v1049
        %v2250 = vunpack.c.h.b16 %v1049
        %v2251 = vunpack.c.l.b16 %v1050
        %v2252 = vunpack.c.h.b16 %v1050
        %v2253 = vunpack.c.l.b16 %v1051
        %v2254 = vunpack.c.h.b16 %v1051
        %v2255 = vunpack.c.l.b16 %v1052
        %v2256 = vunpack.c.h.b16 %v1052
        %v2257 = vunpack.c.l.b16 %v1053
        %v2258 = vunpack.c.h.b16 %v1053
        %v2259 = vunpack.c.l.b16 %v1054
        %v2260 = vunpack.c.h.b16 %v1054
        %v2261 = vunpack.c.l.b16 %v1055
        %v2262 = vunpack.c.h.b16 %v1055
        %v2263 = vunpack.c.l.b16 %v1056
        %v2264 = vunpack.c.h.b16 %v1056
        %v2265 = vunpack.c.l.b16 %v1057
        %v2266 = vunpack.c.h.b16 %v1057
        %v2267 = vunpack.c.l.b16 %v1058
        %v2268 = vunpack.c.h.b16 %v1058
        %v2269 = vunpack.c.l.b16 %v1059
        %v2270 = vunpack.c.h.b16 %v1059
        %v2271 = vunpack.c.l.b16 %v1060
        %v2272 = vunpack.c.h.b16 %v1060
        %v2273 = vunpack.c.l.b16 %v1061
        %v2274 = vunpack.c.h.b16 %v1061
        %v2275 = vunpack.c.l.b16 %v1062
        %v2276 = vunpack.c.h.b16 %v1062
        %v2277 = vunpack.c.l.b16 %v1063
        %v2278 = vunpack.c.h.b16 %v1063
        %v2279 = vunpack.c.l.b16 %v1064
        %v2280 = vunpack.c.h.b16 %v1064
        %v2281 = vunpack.c.l.b16 %v1065
        %v2282 = vunpack.c.h.b16 %v1065
        %v2283 = vunpack.c.l.b16 %v1066
        %v2284 = vunpack.c.h.b16 %v1066
        %v2285 = vpack.c.b16 %v1509, %v1501
        %v2286 = vpack.c.b16 %v1510, %v1502
        %v2287 = vpack.c.b16 %v1511, %v1503
        %v2288 = vpack.c.b16 %v1512, %v1504
        %v2289 = vpack.c.b16 %v1513, %v1505
        %v2290 = vpack.c.b16 %v1514, %v1506
        %v2291 = vpack.c.b16 %v1515, %v1507
        %v2292 = vpack.c.b16 %v1516, %v1508
        %v2293 = vpack.c.b16 %v1525, %v1517
        %v2294 = vpack.c.b16 %v1526, %v1518
        %v2295 = vpack.c.b16 %v1527, %v1519
        %v2296 = vpack.c.b16 %v1528, %v1520
        %v2297 = vpack.c.b16 %v1529, %v1521
        %v2298 = vpack.c.b16 %v1530, %v1522
        %v2299 = vpack.c.b16 %v1531, %v1523
        %v2300 = vpack.c.b16 %v1532, %v1524
        %v2301 = vpack.c.b16 %v1541, %v1533
        %v2302 = vpack.c.b16 %v1542, %v1534
        %v2303 = vpack.c.b16 %v1543, %v1535
        %v2304 = vpack.c.b16 %v1544, %v1536
        %v2305 = vpack.c.b16 %v1545, %v1537
        %v2306 = vpack.c.b16 %v1546, %v1538
        %v2307 = vpack.c.b16 %v1547, %v1539
        %v2308 = vpack.c.b16 %v1548, %v1540
        %v2309 = vpack.c.b16 %v1557, %v1549
        %v2310 = vpack.c.b16 %v1558, %v1550
        %v2311 = vpack.c.b16 %v1559, %v1551
        %v2312 = vpack.c.b16 %v1560, %v1552
        %v2313 = vpack.c.b16 %v1561, %v1553
        %v2314 = vpack.c.b16 %v1562, %v1554
        %v2315 = vpack.c.b16 %v1563, %v1555
        %v2316 = vpack.c.b16 %v1564, %v1556
        %v2317 = vpack.c.b16 %v1573, %v1565
        %v2318 = vpack.c.b16 %v1574, %v1566
        %v2319 = vpack.c.b16 %v1575, %v1567
        %v2320 = vpack.c.b16 %v1576, %v1568
        %v2321 = vpack.c.b16 %v1577, %v1569
        %v2322 = vpack.c.b16 %v1578, %v1570
        %v2323 = vpack.c.b16 %v1579, %v1571
        %v2324 = vpack.c.b16 %v1580, %v1572
        %v2325 = vpack.c.b16 %v1589, %v1581
        %v2326 = vpack.c.b16 %v1590, %v1582
        %v2327 = vpack.c.b16 %v1591, %v1583
        %v2328 = vpack.c.b16 %v1592, %v1584
        %v2329 = vpack.c.b16 %v1593, %v1585
        %v2330 = vpack.c.b16 %v1594, %v1586
        %v2331 = vpack.c.b16 %v1595, %v1587
        %v2332 = vpack.c.b16 %v1596, %v1588
        %v2333 = vpack.c.b16 %v1605, %v1597
        %v2334 = vpack.c.b16 %v1606, %v1598
        %v2335 = vpack.c.b16 %v1607, %v1599
        %v2336 = vpack.c.b16 %v1608, %v1600
        %v2337 = vpack.c.b16 %v1609, %v1601
        %v2338 = vpack.c.b16 %v1610, %v1602
        %v2339 = vpack.c.b16 %v1611, %v1603
        %v2340 = vpack.c.b16 %v1612, %v1604
        %v2341 = vpack.c.b16 %v1621, %v1613
        %v2342 = vpack.c.b16 %v1622, %v1614
        %v2343 = vpack.c.b16 %v1623, %v1615
        %v2344 = vpack.c.b16 %v1624, %v1616
        %v2345 = vpack.c.b16 %v1625, %v1617
        %v2346 = vpack.c.b16 %v1626, %v1618
        %v2347 = vpack.c.b16 %v1627, %v1619
        %v2348 = vpack.c.b16 %v1628, %v1620
        %v2349 = vpack.c.b16 %v1637, %v1629
        %v2350 = vpack.c.b16 %v1638, %v1630
        %v2351 = vpack.c.b16 %v1639, %v1631
        %v2352 = vpack.c.b16 %v1640, %v1632
        %v2353 = vpack.c.b16 %v1641, %v1633
        %v2354 = vpack.c.b16 %v1642, %v1634
        %v2355 = vpack.c.b16 %v1643, %v1635
        %v2356 = vpack.c.b16 %v1644, %v1636
        %v2357 = vpack.c.b16 %v1653, %v1645
        %v2358 = vpack.c.b16 %v1654, %v1646
        %v2359 = vpack.c.b16 %v1655, %v1647
        %v2360 = vpack.c.b16 %v1656, %v1648
        %v2361 = vpack.c.b16 %v1657, %v1649
        %v2362 = vpack.c.b16 %v1658, %v1650
        %v2363 = vpack.c.b16 %v1659, %v1651
        %v2364 = vpack.c.b16 %v1660, %v1652
        %v2365 = vpack.c.b16 %v1669, %v1661
        %v2366 = vpack.c.b16 %v1670, %v1662
        %v2367 = vpack.c.b16 %v1671, %v1663
        %v2368 = vpack.c.b16 %v1672, %v1664
        %v2369 = vpack.c.b16 %v1673, %v1665
        %v2370 = vpack.c.b16 %v1674, %v1666
        %v2371 = vpack.c.b16 %v1675, %v1667
        %v2372 = vpack.c.b16 %v1676, %v1668
        %v2373 = vpack.c.b16 %v1685, %v1677
        %v2374 = vpack.c.b16 %v1686, %v1678
        %v2375 = vpack.c.b16 %v1687, %v1679
        %v2376 = vpack.c.b16 %v1688, %v1680
        %v2377 = vpack.c.b16 %v1689, %v1681
        %v2378 = vpack.c.b16 %v1690, %v1682
        %v2379 = vpack.c.b16 %v1691, %v1683
        %v2380 = vpack.c.b16 %v1692, %v1684
        %v2381 = vpack.c.b16 %v1701, %v1693
        %v2382 = vpack.c.b16 %v1702, %v1694
        %v2383 = vpack.c.b16 %v1703, %v1695
        %v2384 = vpack.c.b16 %v1704, %v1696
        %v2385 = vpack.c.b16 %v1705, %v1697
        %v2386 = vpack.c.b16 %v1706, %v1698
        %v2387 = vpack.c.b16 %v1707, %v1699
        %v2388 = vpack.c.b16 %v1708, %v1700
        %v2389 = vpack.c.b16 %v1717, %v1709
        %v2390 = vpack.c.b16 %v1718, %v1710
        %v2391 = vpack.c.b16 %v1719, %v1711
        %v2392 = vpack.c.b16 %v1720, %v1712
        %v2393 = vpack.c.b16 %v1721, %v1713
        %v2394 = vpack.c.b16 %v1722, %v1714
        %v2395 = vpack.c.b16 %v1723, %v1715
        %v2396 = vpack.c.b16 %v1724, %v1716
        %v2397 = vpack.c.b16 %v1733, %v1725
        %v2398 = vpack.c.b16 %v1734, %v1726
        %v2399 = vpack.c.b16 %v1735, %v1727
        %v2400 = vpack.c.b16 %v1736, %v1728
        %v2401 = vpack.c.b16 %v1737, %v1729
        %v2402 = vpack.c.b16 %v1738, %v1730
        %v2403 = vpack.c.b16 %v1739, %v1731
        %v2404 = vpack.c.b16 %v1740, %v1732
        %v2405 = vpack.c.b16 %v1749, %v1741
        %v2406 = vpack.c.b16 %v1750, %v1742
        %v2407 = vpack.c.b16 %v1751, %v1743
        %v2408 = vpack.c.b16 %v1752, %v1744
        %v2409 = vpack.c.b16 %v1753, %v1745
        %v2410 = vpack.c.b16 %v1754, %v1746
        %v2411 = vpack.c.b16 %v1755, %v1747
        %v2412 = vpack.c.b16 %v1756, %v1748
        %v2413 = vpack.c.b16 %v1765, %v1757
        %v2414 = vpack.c.b16 %v1766, %v1758
        %v2415 = vpack.c.b16 %v1767, %v1759
        %v2416 = vpack.c.b16 %v1768, %v1760
        %v2417 = vpack.c.b16 %v1769, %v1761
        %v2418 = vpack.c.b16 %v1770, %v1762
        %v2419 = vpack.c.b16 %v1771, %v1763
        %v2420 = vpack.c.b16 %v1772, %v1764
        %v2421 = vpack.c.b16 %v1781, %v1773
        %v2422 = vpack.c.b16 %v1782, %v1774
        %v2423 = vpack.c.b16 %v1783, %v1775
        %v2424 = vpack.c.b16 %v1784, %v1776
        %v2425 = vpack.c.b16 %v1785, %v1777
        %v2426 = vpack.c.b16 %v1786, %v1778
        %v2427 = vpack.c.b16 %v1787, %v1779
        %v2428 = vpack.c.b16 %v1788, %v1780
        %v2429 = vpack.c.b16 %v1797, %v1789
        %v2430 = vpack.c.b16 %v1798, %v1790
        %v2431 = vpack.c.b16 %v1799, %v1791
        %v2432 = vpack.c.b16 %v1800, %v1792
        %v2433 = vpack.c.b16 %v1801, %v1793
        %v2434 = vpack.c.b16 %v1802, %v1794
        %v2435 = vpack.c.b16 %v1803, %v1795
        %v2436 = vpack.c.b16 %v1804, %v1796
        %v2437 = vpack.c.b16 %v1813, %v1805
        %v2438 = vpack.c.b16 %v1814, %v1806
        %v2439 = vpack.c.b16 %v1815, %v1807
        %v2440 = vpack.c.b16 %v1816, %v1808
        %v2441 = vpack.c.b16 %v1817, %v1809
        %v2442 = vpack.c.b16 %v1818, %v1810
        %v2443 = vpack.c.b16 %v1819, %v1811
        %v2444 = vpack.c.b16 %v1820, %v1812
        %v2445 = vpack.c.b16 %v1829, %v1821
        %v2446 = vpack.c.b16 %v1830, %v1822
        %v2447 = vpack.c.b16 %v1831, %v1823
        %v2448 = vpack.c.b16 %v1832, %v1824
        %v2449 = vpack.c.b16 %v1833, %v1825
        %v2450 = vpack.c.b16 %v1834, %v1826
        %v2451 = vpack.c.b16 %v1835, %v1827
        %v2452 = vpack.c.b16 %v1836, %v1828
        %v2453 = vpack.c.b16 %v1845, %v1837
        %v2454 = vpack.c.b16 %v1846, %v1838
        %v2455 = vpack.c.b16 %v1847, %v1839
        %v2456 = vpack.c.b16 %v1848, %v1840
        %v2457 = vpack.c.b16 %v1849, %v1841
        %v2458 = vpack.c.b16 %v1850, %v1842
        %v2459 = vpack.c.b16 %v1851, %v1843
        %v2460 = vpack.c.b16 %v1852, %v1844
        %v2461 = vpack.c.b16 %v1861, %v1853
        %v2462 = vpack.c.b16 %v1862, %v1854
        %v2463 = vpack.c.b16 %v1863, %v1855
        %v2464 = vpack.c.b16 %v1864, %v1856
        %v2465 = vpack.c.b16 %v1865, %v1857
        %v2466 = vpack.c.b16 %v1866, %v1858
        %v2467 = vpack.c.b16 %v1867, %v1859
        %v2468 = vpack.c.b16 %v1868, %v1860
        %v2469 = vpack.c.b16 %v1877, %v1869
        %v2470 = vpack.c.b16 %v1878, %v1870
        %v2471 = vpack.c.b16 %v1879, %v1871
        %v2472 = vpack.c.b16 %v1880, %v1872
        %v2473 = vpack.c.b16 %v1881, %v1873
        %v2474 = vpack.c.b16 %v1882, %v1874
        %v2475 = vpack.c.b16 %v1883, %v1875
        %v2476 = vpack.c.b16 %v1884, %v1876
        %v2477 = vpack.c.b16 %v1893, %v1885
        %v2478 = vpack.c.b16 %v1894, %v1886
        %v2479 = vpack.c.b16 %v1895, %v1887
        %v2480 = vpack.c.b16 %v1896, %v1888
        %v2481 = vpack.c.b16 %v1897, %v1889
        %v2482 = vpack.c.b16 %v1898, %v1890
        %v2483 = vpack.c.b16 %v1899, %v1891
        %v2484 = vpack.c.b16 %v1900, %v1892
        %v2485 = vpack.c.b16 %v1909, %v1901
        %v2486 = vpack.c.b16 %v1910, %v1902
        %v2487 = vpack.c.b16 %v1911, %v1903
        %v2488 = vpack.c.b16 %v1912, %v1904
        %v2489 = vpack.c.b16 %v1913, %v1905
        %v2490 = vpack.c.b16 %v1914, %v1906
        %v2491 = vpack.c.b16 %v1915, %v1907
        %v2492 = vpack.c.b16 %v1916, %v1908
        %v2493 = vpack.c.b16 %v1925, %v1917
        %v2494 = vpack.c.b16 %v1926, %v1918
        %v2495 = vpack.c.b16 %v1927, %v1919
        %v2496 = vpack.c.b16 %v1928, %v1920
        %v2497 = vpack.c.b16 %v1929, %v1921
        %v2498 = vpack.c.b16 %v1930, %v1922
        %v2499 = vpack.c.b16 %v1931, %v1923
        %v2500 = vpack.c.b16 %v1932, %v1924
        %v2501 = vpack.c.b16 %v1941, %v1933
        %v2502 = vpack.c.b16 %v1942, %v1934
        %v2503 = vpack.c.b16 %v1943, %v1935
        %v2504 = vpack.c.b16 %v1944, %v1936
        %v2505 = vpack.c.b16 %v1945, %v1937
        %v2506 = vpack.c.b16 %v1946, %v1938
        %v2507 = vpack.c.b16 %v1947, %v1939
        %v2508 = vpack.c.b16 %v1948, %v1940
        %v2509 = vpack.c.b16 %v1957, %v1949
        %v2510 = vpack.c.b16 %v1958, %v1950
        %v2511 = vpack.c.b16 %v1959, %v1951
        %v2512 = vpack.c.b16 %v1960, %v1952
        %v2513 = vpack.c.b16 %v1961, %v1953
        %v2514 = vpack.c.b16 %v1962, %v1954
        %v2515 = vpack.c.b16 %v1963, %v1955
        %v2516 = vpack.c.b16 %v1964, %v1956
        %v2517 = vpack.c.b16 %v1973, %v1965
        %v2518 = vpack.c.b16 %v1974, %v1966
        %v2519 = vpack.c.b16 %v1975, %v1967
        %v2520 = vpack.c.b16 %v1976, %v1968
        %v2521 = vpack.c.b16 %v1977, %v1969
        %v2522 = vpack.c.b16 %v1978, %v1970
        %v2523 = vpack.c.b16 %v1979, %v1971
        %v2524 = vpack.c.b16 %v1980, %v1972
        %v2525 = vpack.c.b16 %v1989, %v1981
        %v2526 = vpack.c.b16 %v1990, %v1982
        %v2527 = vpack.c.b16 %v1991, %v1983
        %v2528 = vpack.c.b16 %v1992, %v1984
        %v2529 = vpack.c.b16 %v1993, %v1985
        %v2530 = vpack.c.b16 %v1994, %v1986
        %v2531 = vpack.c.b16 %v1995, %v1987
        %v2532 = vpack.c.b16 %v1996, %v1988
        %v2533 = vpack.c.b16 %v2005, %v1997
        %v2534 = vpack.c.b16 %v2006, %v1998
        %v2535 = vpack.c.b16 %v2007, %v1999
        %v2536 = vpack.c.b16 %v2008, %v2000
        %v2537 = vpack.c.b16 %v2009, %v2001
        %v2538 = vpack.c.b16 %v2010, %v2002
        %v2539 = vpack.c.b16 %v2011, %v2003
        %v2540 = vpack.c.b16 %v2012, %v2004
        %v2541 = vpack.c.b16 %v2021, %v2013
        %v2542 = vpack.c.b16 %v2022, %v2014
        %v2543 = vpack.c.b16 %v2023, %v2015
        %v2544 = vpack.c.b16 %v2024, %v2016
        %v2545 = vpack.c.b16 %v2025, %v2017
        %v2546 = vpack.c.b16 %v2026, %v2018
        %v2547 = vpack.c.b16 %v2027, %v2019
        %v2548 = vpack.c.b16 %v2028, %v2020
        %v2549 = vpack.c.b16 %v2037, %v2029
        %v2550 = vpack.c.b16 %v2038, %v2030
        %v2551 = vpack.c.b16 %v2039, %v2031
        %v2552 = vpack.c.b16 %v2040, %v2032
        %v2553 = vpack.c.b16 %v2041, %v2033
        %v2554 = vpack.c.b16 %v2042, %v2034
        %v2555 = vpack.c.b16 %v2043, %v2035
        %v2556 = vpack.c.b16 %v2044, %v2036
        %v2557 = vpack.c.b16 %v2053, %v2045
        %v2558 = vpack.c.b16 %v2054, %v2046
        %v2559 = vpack.c.b16 %v2055, %v2047
        %v2560 = vpack.c.b16 %v2056, %v2048
        %v2561 = vpack.c.b16 %v2057, %v2049
        %v2562 = vpack.c.b16 %v2058, %v2050
        %v2563 = vpack.c.b16 %v2059, %v2051
        %v2564 = vpack.c.b16 %v2060, %v2052
        %v2565 = vpack.c.b16 %v2069, %v2061
        %v2566 = vpack.c.b16 %v2070, %v2062
        %v2567 = vpack.c.b16 %v2071, %v2063
        %v2568 = vpack.c.b16 %v2072, %v2064
        %v2569 = vpack.c.b16 %v2073, %v2065
        %v2570 = vpack.c.b16 %v2074, %v2066
        %v2571 = vpack.c.b16 %v2075, %v2067
        %v2572 = vpack.c.b16 %v2076, %v2068
        %v2573 = vpack.c.b16 %v2085, %v2077
        %v2574 = vpack.c.b16 %v2086, %v2078
        %v2575 = vpack.c.b16 %v2087, %v2079
        %v2576 = vpack.c.b16 %v2088, %v2080
        %v2577 = vpack.c.b16 %v2089, %v2081
        %v2578 = vpack.c.b16 %v2090, %v2082
        %v2579 = vpack.c.b16 %v2091, %v2083
        %v2580 = vpack.c.b16 %v2092, %v2084
        %v2581 = vpack.c.b16 %v2101, %v2093
        %v2582 = vpack.c.b16 %v2102, %v2094
        %v2583 = vpack.c.b16 %v2103, %v2095
        %v2584 = vpack.c.b16 %v2104, %v2096
        %v2585 = vpack.c.b16 %v2105, %v2097
        %v2586 = vpack.c.b16 %v2106, %v2098
        %v2587 = vpack.c.b16 %v2107, %v2099
        %v2588 = vpack.c.b16 %v2108, %v2100
        %v2589 = vpack.c.b16 %v2117, %v2109
        %v2590 = vpack.c.b16 %v2118, %v2110
        %v2591 = vpack.c.b16 %v2119, %v2111
        %v2592 = vpack.c.b16 %v2120, %v2112
        %v2593 = vpack.c.b16 %v2121, %v2113
        %v2594 = vpack.c.b16 %v2122, %v2114
        %v2595 = vpack.c.b16 %v2123, %v2115
        %v2596 = vpack.c.b16 %v2124, %v2116
        %v2597 = vpack.c.b16 %v2133, %v2125
        %v2598 = vpack.c.b16 %v2134, %v2126
        %v2599 = vpack.c.b16 %v2135, %v2127
        %v2600 = vpack.c.b16 %v2136, %v2128
        %v2601 = vpack.c.b16 %v2137, %v2129
        %v2602 = vpack.c.b16 %v2138, %v2130
        %v2603 = vpack.c.b16 %v2139, %v2131
        %v2604 = vpack.c.b16 %v2140, %v2132
        %v2605 = vpack.c.b16 %v2149, %v2141
        %v2606 = vpack.c.b16 %v2150, %v2142
        %v2607 = vpack.c.b16 %v2151, %v2143
        %v2608 = vpack.c.b16 %v2152, %v2144
        %v2609 = vpack.c.b16 %v2153, %v2145
        %v2610 = vpack.c.b16 %v2154, %v2146
        %v2611 = vpack.c.b16 %v2155, %v2147
        %v2612 = vpack.c.b16 %v2156, %v2148
        %v2613 = vpack.c.b16 %v2165, %v2157
        %v2614 = vpack.c.b16 %v2166, %v2158
        %v2615 = vpack.c.b16 %v2167, %v2159
        %v2616 = vpack.c.b16 %v2168, %v2160
        %v2617 = vpack.c.b16 %v2169, %v2161
        %v2618 = vpack.c.b16 %v2170, %v2162
        %v2619 = vpack.c.b16 %v2171, %v2163
        %v2620 = vpack.c.b16 %v2172, %v2164
        %v2621 = vpack.c.b16 %v2181, %v2173
        %v2622 = vpack.c.b16 %v2182, %v2174
        %v2623 = vpack.c.b16 %v2183, %v2175
        %v2624 = vpack.c.b16 %v2184, %v2176
        %v2625 = vpack.c.b16 %v2185, %v2177
        %v2626 = vpack.c.b16 %v2186, %v2178
        %v2627 = vpack.c.b16 %v2187, %v2179
        %v2628 = vpack.c.b16 %v2188, %v2180
        %v2629 = vpack.c.b16 %v2197, %v2189
        %v2630 = vpack.c.b16 %v2198, %v2190
        %v2631 = vpack.c.b16 %v2199, %v2191
        %v2632 = vpack.c.b16 %v2200, %v2192
        %v2633 = vpack.c.b16 %v2201, %v2193
        %v2634 = vpack.c.b16 %v2202, %v2194
        %v2635 = vpack.c.b16 %v2203, %v2195
        %v2636 = vpack.c.b16 %v2204, %v2196
        %v2637 = vpack.c.b16 %v2213, %v2205
        %v2638 = vpack.c.b16 %v2214, %v2206
        %v2639 = vpack.c.b16 %v2215, %v2207
        %v2640 = vpack.c.b16 %v2216, %v2208
        %v2641 = vpack.c.b16 %v2217, %v2209
        %v2642 = vpack.c.b16 %v2218, %v2210
        %v2643 = vpack.c.b16 %v2219, %v2211
        %v2644 = vpack.c.b16 %v2220, %v2212
        %v2645 = vpack.c.b16 %v2229, %v2221
        %v2646 = vpack.c.b16 %v2230, %v2222
        %v2647 = vpack.c.b16 %v2231, %v2223
        %v2648 = vpack.c.b16 %v2232, %v2224
        %v2649 = vpack.c.b16 %v2233, %v2225
        %v2650 = vpack.c.b16 %v2234, %v2226
        %v2651 = vpack.c.b16 %v2235, %v2227
        %v2652 = vpack.c.b16 %v2236, %v2228
        %v2653 = vpack.c.b16 %v2245, %v2237
        %v2654 = vpack.c.b16 %v2246, %v2238
        %v2655 = vpack.c.b16 %v2247, %v2239
        %v2656 = vpack.c.b16 %v2248, %v2240
        %v2657 = vpack.c.b16 %v2249, %v2241
        %v2658 = vpack.c.b16 %v2250, %v2242
        %v2659 = vpack.c.b16 %v2251, %v2243
        %v2660 = vpack.c.b16 %v2252, %v2244
        %v2661 = vpack.c.b16 %v2261, %v2253
        %v2662 = vpack.c.b16 %v2262, %v2254
        %v2663 = vpack.c.b16 %v2263, %v2255
        %v2664 = vpack.c.b16 %v2264, %v2256
        %v2665 = vpack.c.b16 %v2265, %v2257
        %v2666 = vpack.c.b16 %v2266, %v2258
        %v2667 = vpack.c.b16 %v2267, %v2259
        %v2668 = vpack.c.b16 %v2268, %v2260
        %v2669 = vpack.c.b16 %v2277, %v2269
        %v2670 = vpack.c.b16 %v2278, %v2270
        %v2671 = vpack.c.b16 %v2279, %v2271
        %v2672 = vpack.c.b16 %v2280, %v2272
        %v2673 = vpack.c.b16 %v2281, %v2273
        %v2674 = vpack.c.b16 %v2282, %v2274
        %v2675 = vpack.c.b16 %v2283, %v2275
        %v2676 = vpack.c.b16 %v2284, %v2276
        %vm3069 = vcmask 130048
        %v3071 = vsel %vm3069, %v569, 0
        %v3074 = vsel %vm3069, %v576, 0
        %v3077 = vsel %vm3069, %v583, 0
        %v3080 = vsel %vm3069, %v590, 0
        %v3083 = vsel %vm3069, %v597, 0
        %v3086 = vsel %vm3069, %v604, 0
        %v3089 = vsel %vm3069, %v611, 0
        %v3092 = vsel %vm3069, %v618, 0
        %v3095 = vsel %vm3069, %v625, 0
        %v3098 = vsel %vm3069, %v632, 0
        %v3101 = vsel %vm3069, %v639, 0
        %v3104 = vsel %vm3069, %v646, 0
        %v3107 = vsel %vm3069, %v653, 0
        %v3110 = vsel %vm3069, %v660, 0
        %v3113 = vsel %vm3069, %v667, 0
        %v3116 = vsel %vm3069, %v674, 0
        %3118 = vmatprep.subr.bf16.mxu0 %v2286
        %3119 = vmatpush1.bf16.msra.mxu0 %v2285
        %3120 = vmatprep.subr.bf16.mxu0 %v2294
        %3121 = vmatpush1.bf16.msra.mxu0 %v2293
        %3122 = vmatprep.subr.bf16.mxu0 %v2302
        %3123 = vmatpush1.bf16.msra.mxu0 %v2301
        %3124 = vmatprep.subr.bf16.mxu0 %v2310
        %3125 = vmatpush1.bf16.msra.mxu0 %v2309
        %3126 = vmatprep.subr.bf16.mxu0 %v2318
        %3127 = vmatpush1.bf16.msra.mxu0 %v2317
        %3128 = vmatprep.subr.bf16.mxu0 %v2326
        %3129 = vmatpush1.bf16.msra.mxu0 %v2325
        %3130 = vmatprep.subr.bf16.mxu0 %v2334
        %3131 = vmatpush1.bf16.msra.mxu0 %v2333
        %3132 = vmatprep.subr.bf16.mxu0 %v2342
        %3133 = vmatpush1.bf16.msra.mxu0 %v2341
        %3134 = vmatprep.subr.bf16.mxu0 %v2350
        %3135 = vmatpush1.bf16.msra.mxu0 %v2349
        %3136 = vmatprep.subr.bf16.mxu0 %v2358
        %3137 = vmatpush1.bf16.msra.mxu0 %v2357
        %3138 = vmatprep.subr.bf16.mxu0 %v2366
        %3139 = vmatpush1.bf16.msra.mxu0 %v2365
        %3140 = vmatprep.subr.bf16.mxu0 %v2374
        %3141 = vmatpush1.bf16.msra.mxu0 %v2373
        %3142 = vmatprep.subr.bf16.mxu0 %v2382
        %3143 = vmatpush1.bf16.msra.mxu0 %v2381
        %3144 = vmatprep.subr.bf16.mxu0 %v2390
        %3145 = vmatpush1.bf16.msra.mxu0 %v2389
        %3146 = vmatprep.subr.bf16.mxu0 %v2398
        %3147 = vmatpush1.bf16.msra.mxu0 %v2397
        %3148 = vmatprep.subr.bf16.mxu0 %v2406
        %3149 = vmatpush1.bf16.msra.mxu0 %v2405
        %3150 = vmatprep.mubr.bf16.mxu0 %v564
        %3151 = vmatmul.mubr.bf16.gmra.mrb[0].mxu0 %v563
        %v3152 = vpop.f32.mrb[0].mxu0
        %v3153 = vadd.f32 %v1072, %v3152
        %v3154 = vpop.f32.mrb[0].mxu0
        %v3155 = vadd.f32 %v1076, %v3154
        %v3156 = vpop.f32.mrb[0].mxu0
        %v3157 = vadd.f32 %v1072, %v3156
        %v3158 = vpop.f32.mrb[0].mxu0
        %v3159 = vadd.f32 %v1076, %v3158
        %3160 = vmatprep.mubr.bf16.mxu0 %v571
        %3161 = vmatmul.mubr.bf16.gmra.mrb[0].mxu0 %v570
        %v3162 = vpop.f32.mrb[0].mxu0
        %v3163 = vadd.f32 %v1072, %v3162
        %v3164 = vpop.f32.mrb[0].mxu0
        %v3165 = vadd.f32 %v1076, %v3164
        %v3166 = vpop.f32.mrb[0].mxu0
        %v3167 = vadd.f32 %v1072, %v3166
        %v3168 = vpop.f32.mrb[0].mxu0
        %v3169 = vadd.f32 %v1076, %v3168
        %3170 = vmatprep.mubr.bf16.mxu0 %v578
        %3171 = vmatmul.mubr.bf16.gmra.mrb[0].mxu0 %v577
        %v3172 = vpop.f32.mrb[0].mxu0
        %v3173 = vadd.f32 %v1072, %v3172
        %v3174 = vpop.f32.mrb[0].mxu0
        %v3175 = vadd.f32 %v1076, %v3174
        %v3176 = vpop.f32.mrb[0].mxu0
        %v3177 = vadd.f32 %v1072, %v3176
        %v3178 = vpop.f32.mrb[0].mxu0
        %v3179 = vadd.f32 %v1076, %v3178
        %3180 = vmatprep.mubr.bf16.mxu0 %v585
        %3181 = vmatmul.mubr.bf16.gmra.mrb[0].mxu0 %v584
        %v3182 = vpop.f32.mrb[0].mxu0
        %v3183 = vadd.f32 %v1072, %v3182
        %v3184 = vpop.f32.mrb[0].mxu0
        %v3185 = vadd.f32 %v1076, %v3184
        %v3186 = vpop.f32.mrb[0].mxu0
        %v3187 = vadd.f32 %v1072, %v3186
        %v3188 = vpop.f32.mrb[0].mxu0
        %v3189 = vadd.f32 %v1076, %v3188
        %3190 = vmatprep.mubr.bf16.mxu0 %v592
        %3191 = vmatmul.mubr.bf16.gmra.mrb[0].mxu0 %v591
        %v3192 = vpop.f32.mrb[0].mxu0
        %v3193 = vadd.f32 %v1072, %v3192
        %v3194 = vpop.f32.mrb[0].mxu0
        %v3195 = vadd.f32 %v1076, %v3194
        %v3196 = vpop.f32.mrb[0].mxu0
        %v3197 = vadd.f32 %v1072, %v3196
        %v3198 = vpop.f32.mrb[0].mxu0
        %v3199 = vadd.f32 %v1076, %v3198
        %3200 = vmatprep.mubr.bf16.mxu0 %v599
        %3201 = vmatmul.mubr.bf16.gmra.mrb[0].mxu0 %v598
        %v3202 = vpop.f32.mrb[0].mxu0
        %v3203 = vadd.f32 %v1072, %v3202
        %v3204 = vpop.f32.mrb[0].mxu0
        %v3205 = vadd.f32 %v1076, %v3204
        %v3206 = vpop.f32.mrb[0].mxu0
        %v3207 = vadd.f32 %v1072, %v3206
        %v3208 = vpop.f32.mrb[0].mxu0
        %v3209 = vadd.f32 %v1076, %v3208
        %3210 = vmatprep.mubr.bf16.mxu0 %v606
        %3211 = vmatmul.mubr.bf16.gmra.mrb[0].mxu0 %v605
        %v3212 = vpop.f32.mrb[0].mxu0
        %v3213 = vadd.f32 %v1072, %v3212
        %v3214 = vpop.f32.mrb[0].mxu0
        %v3215 = vadd.f32 %v1076, %v3214
        %v3216 = vpop.f32.mrb[0].mxu0
        %v3217 = vadd.f32 %v1072, %v3216
        %v3218 = vpop.f32.mrb[0].mxu0
        %v3219 = vadd.f32 %v1076, %v3218
        %3220 = vmatprep.mubr.bf16.mxu0 %v613
        %3221 = vmatmul.mubr.bf16.gmra.mrb[0].mxu0 %v612
        %v3222 = vpop.f32.mrb[0].mxu0
        %v3223 = vadd.f32 %v1072, %v3222
        %v3224 = vpop.f32.mrb[0].mxu0
        %v3225 = vadd.f32 %v1076, %v3224
        %v3226 = vpop.f32.mrb[0].mxu0
        %v3227 = vadd.f32 %v1072, %v3226
        %v3228 = vpop.f32.mrb[0].mxu0
        %v3229 = vadd.f32 %v1076, %v3228
        %3230 = vmatprep.mubr.bf16.mxu0 %v620
        %3231 = vmatmul.mubr.bf16.gmra.mrb[0].mxu0 %v619
        %v3232 = vpop.f32.mrb[0].mxu0
        %v3233 = vadd.f32 %v1072, %v3232
        %v3234 = vpop.f32.mrb[0].mxu0
        %v3235 = vadd.f32 %v1076, %v3234
        %v3236 = vpop.f32.mrb[0].mxu0
        %v3237 = vadd.f32 %v1072, %v3236
        %v3238 = vpop.f32.mrb[0].mxu0
        %v3239 = vadd.f32 %v1076, %v3238
        %3240 = vmatprep.mubr.bf16.mxu0 %v627
        %3241 = vmatmul.mubr.bf16.gmra.mrb[0].mxu0 %v626
        %v3242 = vpop.f32.mrb[0].mxu0
        %v3243 = vadd.f32 %v1072, %v3242
        %v3244 = vpop.f32.mrb[0].mxu0
        %v3245 = vadd.f32 %v1076, %v3244
        %v3246 = vpop.f32.mrb[0].mxu0
        %v3247 = vadd.f32 %v1072, %v3246
        %v3248 = vpop.f32.mrb[0].mxu0
        %v3249 = vadd.f32 %v1076, %v3248
        %3250 = vmatprep.mubr.bf16.mxu0 %v634
        %3251 = vmatmul.mubr.bf16.gmra.mrb[0].mxu0 %v633
        %v3252 = vpop.f32.mrb[0].mxu0
        %v3253 = vadd.f32 %v1072, %v3252
        %v3254 = vpop.f32.mrb[0].mxu0
        %v3255 = vadd.f32 %v1076, %v3254
        %v3256 = vpop.f32.mrb[0].mxu0
        %v3257 = vadd.f32 %v1072, %v3256
        %v3258 = vpop.f32.mrb[0].mxu0
        %v3259 = vadd.f32 %v1076, %v3258
        %3260 = vmatprep.mubr.bf16.mxu0 %v641
        %3261 = vmatmul.mubr.bf16.gmra.mrb[0].mxu0 %v640
        %v3262 = vpop.f32.mrb[0].mxu0
        %v3263 = vadd.f32 %v1072, %v3262
        %v3264 = vpop.f32.mrb[0].mxu0
        %v3265 = vadd.f32 %v1076, %v3264
        %v3266 = vpop.f32.mrb[0].mxu0
        %v3267 = vadd.f32 %v1072, %v3266
        %v3268 = vpop.f32.mrb[0].mxu0
        %v3269 = vadd.f32 %v1076, %v3268
        %3270 = vmatprep.mubr.bf16.mxu0 %v648
        %3271 = vmatmul.mubr.bf16.gmra.mrb[0].mxu0 %v647
        %v3272 = vpop.f32.mrb[0].mxu0
        %v3273 = vadd.f32 %v1072, %v3272
        %v3274 = vpop.f32.mrb[0].mxu0
        %v3275 = vadd.f32 %v1076, %v3274
        %v3276 = vpop.f32.mrb[0].mxu0
        %v3277 = vadd.f32 %v1072, %v3276
        %v3278 = vpop.f32.mrb[0].mxu0
        %v3279 = vadd.f32 %v1076, %v3278
        %3280 = vmatprep.mubr.bf16.mxu0 %v655
        %3281 = vmatmul.mubr.bf16.gmra.mrb[0].mxu0 %v654
        %v3282 = vpop.f32.mrb[0].mxu0
        %v3283 = vadd.f32 %v1072, %v3282
        %v3284 = vpop.f32.mrb[0].mxu0
        %v3285 = vadd.f32 %v1076, %v3284
        %v3286 = vpop.f32.mrb[0].mxu0
        %v3287 = vadd.f32 %v1072, %v3286
        %v3288 = vpop.f32.mrb[0].mxu0
        %v3289 = vadd.f32 %v1076, %v3288
        %3290 = vmatprep.mubr.bf16.mxu0 %v662
        %3291 = vmatmul.mubr.bf16.gmra.mrb[0].mxu0 %v661
        %v3292 = vpop.f32.mrb[0].mxu0
        %v3293 = vadd.f32 %v1072, %v3292
        %v3294 = vpop.f32.mrb[0].mxu0
        %v3295 = vadd.f32 %v1076, %v3294
        %v3296 = vpop.f32.mrb[0].mxu0
        %v3297 = vadd.f32 %v1072, %v3296
        %v3298 = vpop.f32.mrb[0].mxu0
        %v3299 = vadd.f32 %v1076, %v3298
        %3300 = vmatprep.mubr.bf16.mxu0 %v669
        %3301 = vmatmul.mubr.bf16.gmra.mrb[0].mxu0 %v668
        %v3302 = vpop.f32.mrb[0].mxu0
        %v3303 = vadd.f32 %v1072, %v3302
        %v3304 = vpop.f32.mrb[0].mxu0
        %v3305 = vadd.f32 %v1076, %v3304
        %v3306 = vpop.f32.mrb[0].mxu0
        %v3307 = vadd.f32 %v1072, %v3306
        %v3308 = vpop.f32.mrb[0].mxu0
        %v3309 = vadd.f32 %v1076, %v3308
        %3310 = vdwg.mxu0
        %3311 = vmatprep.subr.bf16.mxu0 %v2414
        %3312 = vmatpush1.bf16.msra.mxu0 %v2413
        %3313 = vmatprep.subr.bf16.mxu0 %v2422
        %3314 = vmatpush1.bf16.msra.mxu0 %v2421
        %3315 = vmatprep.subr.bf16.mxu0 %v2430
        %3316 = vmatpush1.bf16.msra.mxu0 %v2429
        %3317 = vmatprep.subr.bf16.mxu0 %v2438
        %3318 = vmatpush1.bf16.msra.mxu0 %v2437
        %3319 = vmatprep.subr.bf16.mxu0 %v2446
        %3320 = vmatpush1.bf16.msra.mxu0 %v2445
        %3321 = vmatprep.subr.bf16.mxu0 %v2454
        %3322 = vmatpush1.bf16.msra.mxu0 %v2453
        %3323 = vmatprep.subr.bf16.mxu0 %v2462
        %3324 = vmatpush1.bf16.msra.mxu0 %v2461
        %3325 = vmatprep.subr.bf16.mxu0 %v2470
        %3326 = vmatpush1.bf16.msra.mxu0 %v2469
        %3327 = vmatprep.subr.bf16.mxu0 %v2478
        %3328 = vmatpush1.bf16.msra.mxu0 %v2477
        %3329 = vmatprep.subr.bf16.mxu0 %v2486
        %3330 = vmatpush1.bf16.msra.mxu0 %v2485
        %3331 = vmatprep.subr.bf16.mxu0 %v2494
        %3332 = vmatpush1.bf16.msra.mxu0 %v2493
        %3333 = vmatprep.subr.bf16.mxu0 %v2502
        %3334 = vmatpush1.bf16.msra.mxu0 %v2501
        %3335 = vmatprep.subr.bf16.mxu0 %v2510
        %3336 = vmatpush1.bf16.msra.mxu0 %v2509
        %3337 = vmatprep.subr.bf16.mxu0 %v2518
        %3338 = vmatpush1.bf16.msra.mxu0 %v2517
        %3339 = vmatprep.subr.bf16.mxu0 %v2526
        %3340 = vmatpush1.bf16.msra.mxu0 %v2525
        %3341 = vmatprep.subr.bf16.mxu0 %v2534
        %3342 = vmatpush1.bf16.msra.mxu0 %v2533
        %3343 = vmatprep.mubr.bf16.mxu0 %v566
        %3344 = vmatmul.mubr.bf16.gmra.mrb[0].mxu0 %v565
        %v3345 = vpop.f32.mrb[0].mxu0
        %v3346 = vadd.f32 %v3153, %v3345
        %v3347 = vpop.f32.mrb[0].mxu0
        %v3348 = vadd.f32 %v3155, %v3347
        %v3349 = vpop.f32.mrb[0].mxu0
        %v3350 = vadd.f32 %v3157, %v3349
        %v3351 = vpop.f32.mrb[0].mxu0
        %v3352 = vadd.f32 %v3159, %v3351
        %3353 = vmatprep.mubr.bf16.mxu0 %v573
        %3354 = vmatmul.mubr.bf16.gmra.mrb[0].mxu0 %v572
        %v3355 = vpop.f32.mrb[0].mxu0
        %v3356 = vadd.f32 %v3163, %v3355
        %v3357 = vpop.f32.mrb[0].mxu0
        %v3358 = vadd.f32 %v3165, %v3357
        %v3359 = vpop.f32.mrb[0].mxu0
        %v3360 = vadd.f32 %v3167, %v3359
        %v3361 = vpop.f32.mrb[0].mxu0
        %v3362 = vadd.f32 %v3169, %v3361
        %3363 = vmatprep.mubr.bf16.mxu0 %v580
        %3364 = vmatmul.mubr.bf16.gmra.mrb[0].mxu0 %v579
        %v3365 = vpop.f32.mrb[0].mxu0
        %v3366 = vadd.f32 %v3173, %v3365
        %v3367 = vpop.f32.mrb[0].mxu0
        %v3368 = vadd.f32 %v3175, %v3367
        %v3369 = vpop.f32.mrb[0].mxu0
        %v3370 = vadd.f32 %v3177, %v3369
        %v3371 = vpop.f32.mrb[0].mxu0
        %v3372 = vadd.f32 %v3179, %v3371
        %3373 = vmatprep.mubr.bf16.mxu0 %v587
        %3374 = vmatmul.mubr.bf16.gmra.mrb[0].mxu0 %v586
        %v3375 = vpop.f32.mrb[0].mxu0
        %v3376 = vadd.f32 %v3183, %v3375
        %v3377 = vpop.f32.mrb[0].mxu0
        %v3378 = vadd.f32 %v3185, %v3377
        %v3379 = vpop.f32.mrb[0].mxu0
        %v3380 = vadd.f32 %v3187, %v3379
        %v3381 = vpop.f32.mrb[0].mxu0
        %v3382 = vadd.f32 %v3189, %v3381
        %3383 = vmatprep.mubr.bf16.mxu0 %v594
        %3384 = vmatmul.mubr.bf16.gmra.mrb[0].mxu0 %v593
        %v3385 = vpop.f32.mrb[0].mxu0
        %v3386 = vadd.f32 %v3193, %v3385
        %v3387 = vpop.f32.mrb[0].mxu0
        %v3388 = vadd.f32 %v3195, %v3387
        %v3389 = vpop.f32.mrb[0].mxu0
        %v3390 = vadd.f32 %v3197, %v3389
        %v3391 = vpop.f32.mrb[0].mxu0
        %v3392 = vadd.f32 %v3199, %v3391
        %3393 = vmatprep.mubr.bf16.mxu0 %v601
        %3394 = vmatmul.mubr.bf16.gmra.mrb[0].mxu0 %v600
        %v3395 = vpop.f32.mrb[0].mxu0
        %v3396 = vadd.f32 %v3203, %v3395
        %v3397 = vpop.f32.mrb[0].mxu0
        %v3398 = vadd.f32 %v3205, %v3397
        %v3399 = vpop.f32.mrb[0].mxu0
        %v3400 = vadd.f32 %v3207, %v3399
        %v3401 = vpop.f32.mrb[0].mxu0
        %v3402 = vadd.f32 %v3209, %v3401
        %3403 = vmatprep.mubr.bf16.mxu0 %v608
        %3404 = vmatmul.mubr.bf16.gmra.mrb[0].mxu0 %v607
        %v3405 = vpop.f32.mrb[0].mxu0
        %v3406 = vadd.f32 %v3213, %v3405
        %v3407 = vpop.f32.mrb[0].mxu0
        %v3408 = vadd.f32 %v3215, %v3407
        %v3409 = vpop.f32.mrb[0].mxu0
        %v3410 = vadd.f32 %v3217, %v3409
        %v3411 = vpop.f32.mrb[0].mxu0
        %v3412 = vadd.f32 %v3219, %v3411
        %3413 = vmatprep.mubr.bf16.mxu0 %v615
        %3414 = vmatmul.mubr.bf16.gmra.mrb[0].mxu0 %v614
        %v3415 = vpop.f32.mrb[0].mxu0
        %v3416 = vadd.f32 %v3223, %v3415
        %v3417 = vpop.f32.mrb[0].mxu0
        %v3418 = vadd.f32 %v3225, %v3417
        %v3419 = vpop.f32.mrb[0].mxu0
        %v3420 = vadd.f32 %v3227, %v3419
        %v3421 = vpop.f32.mrb[0].mxu0
        %v3422 = vadd.f32 %v3229, %v3421
        %3423 = vmatprep.mubr.bf16.mxu0 %v622
        %3424 = vmatmul.mubr.bf16.gmra.mrb[0].mxu0 %v621
        %v3425 = vpop.f32.mrb[0].mxu0
        %v3426 = vadd.f32 %v3233, %v3425
        %v3427 = vpop.f32.mrb[0].mxu0
        %v3428 = vadd.f32 %v3235, %v3427
        %v3429 = vpop.f32.mrb[0].mxu0
        %v3430 = vadd.f32 %v3237, %v3429
        %v3431 = vpop.f32.mrb[0].mxu0
        %v3432 = vadd.f32 %v3239, %v3431
        %3433 = vmatprep.mubr.bf16.mxu0 %v629
        %3434 = vmatmul.mubr.bf16.gmra.mrb[0].mxu0 %v628
        %v3435 = vpop.f32.mrb[0].mxu0
        %v3436 = vadd.f32 %v3243, %v3435
        %v3437 = vpop.f32.mrb[0].mxu0
        %v3438 = vadd.f32 %v3245, %v3437
        %v3439 = vpop.f32.mrb[0].mxu0
        %v3440 = vadd.f32 %v3247, %v3439
        %v3441 = vpop.f32.mrb[0].mxu0
        %v3442 = vadd.f32 %v3249, %v3441
        %3443 = vmatprep.mubr.bf16.mxu0 %v636
        %3444 = vmatmul.mubr.bf16.gmra.mrb[0].mxu0 %v635
        %v3445 = vpop.f32.mrb[0].mxu0
        %v3446 = vadd.f32 %v3253, %v3445
        %v3447 = vpop.f32.mrb[0].mxu0
        %v3448 = vadd.f32 %v3255, %v3447
        %v3449 = vpop.f32.mrb[0].mxu0
        %v3450 = vadd.f32 %v3257, %v3449
        %v3451 = vpop.f32.mrb[0].mxu0
        %v3452 = vadd.f32 %v3259, %v3451
        %3453 = vmatprep.mubr.bf16.mxu0 %v643
        %3454 = vmatmul.mubr.bf16.gmra.mrb[0].mxu0 %v642
        %v3455 = vpop.f32.mrb[0].mxu0
        %v3456 = vadd.f32 %v3263, %v3455
        %v3457 = vpop.f32.mrb[0].mxu0
        %v3458 = vadd.f32 %v3265, %v3457
        %v3459 = vpop.f32.mrb[0].mxu0
        %v3460 = vadd.f32 %v3267, %v3459
        %v3461 = vpop.f32.mrb[0].mxu0
        %v3462 = vadd.f32 %v3269, %v3461
        %3463 = vmatprep.mubr.bf16.mxu0 %v650
        %3464 = vmatmul.mubr.bf16.gmra.mrb[0].mxu0 %v649
        %v3465 = vpop.f32.mrb[0].mxu0
        %v3466 = vadd.f32 %v3273, %v3465
        %v3467 = vpop.f32.mrb[0].mxu0
        %v3468 = vadd.f32 %v3275, %v3467
        %v3469 = vpop.f32.mrb[0].mxu0
        %v3470 = vadd.f32 %v3277, %v3469
        %v3471 = vpop.f32.mrb[0].mxu0
        %v3472 = vadd.f32 %v3279, %v3471
        %3473 = vmatprep.mubr.bf16.mxu0 %v657
        %3474 = vmatmul.mubr.bf16.gmra.mrb[0].mxu0 %v656
        %v3475 = vpop.f32.mrb[0].mxu0
        %v3476 = vadd.f32 %v3283, %v3475
        %v3477 = vpop.f32.mrb[0].mxu0
        %v3478 = vadd.f32 %v3285, %v3477
        %v3479 = vpop.f32.mrb[0].mxu0
        %v3480 = vadd.f32 %v3287, %v3479
        %v3481 = vpop.f32.mrb[0].mxu0
        %v3482 = vadd.f32 %v3289, %v3481
        %3483 = vmatprep.mubr.bf16.mxu0 %v664
        %3484 = vmatmul.mubr.bf16.gmra.mrb[0].mxu0 %v663
        %v3485 = vpop.f32.mrb[0].mxu0
        %v3486 = vadd.f32 %v3293, %v3485
        %v3487 = vpop.f32.mrb[0].mxu0
        %v3488 = vadd.f32 %v3295, %v3487
        %v3489 = vpop.f32.mrb[0].mxu0
        %v3490 = vadd.f32 %v3297, %v3489
        %v3491 = vpop.f32.mrb[0].mxu0
        %v3492 = vadd.f32 %v3299, %v3491
        %3493 = vmatprep.mubr.bf16.mxu0 %v671
        %3494 = vmatmul.mubr.bf16.gmra.mrb[0].mxu0 %v670
        %v3495 = vpop.f32.mrb[0].mxu0
        %v3496 = vadd.f32 %v3303, %v3495
        %v3497 = vpop.f32.mrb[0].mxu0
        %v3498 = vadd.f32 %v3305, %v3497
        %v3499 = vpop.f32.mrb[0].mxu0
        %v3500 = vadd.f32 %v3307, %v3499
        %v3501 = vpop.f32.mrb[0].mxu0
        %v3502 = vadd.f32 %v3309, %v3501
        %3503 = vdwg.mxu0
        %3504 = vmatprep.subr.bf16.mxu0 %v2542
        %3505 = vmatpush1.bf16.msra.mxu0 %v2541
        %3506 = vmatprep.subr.bf16.mxu0 %v2550
        %3507 = vmatpush1.bf16.msra.mxu0 %v2549
        %3508 = vmatprep.subr.bf16.mxu0 %v2558
        %3509 = vmatpush1.bf16.msra.mxu0 %v2557
        %3510 = vmatprep.subr.bf16.mxu0 %v2566
        %3511 = vmatpush1.bf16.msra.mxu0 %v2565
        %3512 = vmatprep.subr.bf16.mxu0 %v2574
        %3513 = vmatpush1.bf16.msra.mxu0 %v2573
        %3514 = vmatprep.subr.bf16.mxu0 %v2582
        %3515 = vmatpush1.bf16.msra.mxu0 %v2581
        %3516 = vmatprep.subr.bf16.mxu0 %v2590
        %3517 = vmatpush1.bf16.msra.mxu0 %v2589
        %3518 = vmatprep.subr.bf16.mxu0 %v2598
        %3519 = vmatpush1.bf16.msra.mxu0 %v2597
        %3520 = vmatprep.subr.bf16.mxu0 %v2606
        %3521 = vmatpush1.bf16.msra.mxu0 %v2605
        %3522 = vmatprep.subr.bf16.mxu0 %v2614
        %3523 = vmatpush1.bf16.msra.mxu0 %v2613
        %3524 = vmatprep.subr.bf16.mxu0 %v2622
        %3525 = vmatpush1.bf16.msra.mxu0 %v2621
        %3526 = vmatprep.subr.bf16.mxu0 %v2630
        %3527 = vmatpush1.bf16.msra.mxu0 %v2629
        %3528 = vmatprep.subr.bf16.mxu0 %v2638
        %3529 = vmatpush1.bf16.msra.mxu0 %v2637
        %3530 = vmatprep.subr.bf16.mxu0 %v2646
        %3531 = vmatpush1.bf16.msra.mxu0 %v2645
        %3532 = vmatprep.subr.bf16.mxu0 %v2654
        %3533 = vmatpush1.bf16.msra.mxu0 %v2653
        %3534 = vmatprep.subr.bf16.mxu0 %v2662
        %3535 = vmatpush1.bf16.msra.mxu0 %v2661
        %3536 = vmatprep.mubr.bf16.mxu0 %v568
        %3537 = vmatmul.mubr.bf16.gmra.mrb[0].mxu0 %v567
        %v3538 = vpop.f32.mrb[0].mxu0
        %v3539 = vadd.f32 %v3346, %v3538
        %v3540 = vpop.f32.mrb[0].mxu0
        %v3541 = vadd.f32 %v3348, %v3540
        %v3542 = vpop.f32.mrb[0].mxu0
        %v3543 = vadd.f32 %v3350, %v3542
        %v3544 = vpop.f32.mrb[0].mxu0
        %v3545 = vadd.f32 %v3352, %v3544
        %3546 = vmatprep.mubr.bf16.mxu0 %v575
        %3547 = vmatmul.mubr.bf16.gmra.mrb[0].mxu0 %v574
        %v3548 = vpop.f32.mrb[0].mxu0
        %v3549 = vadd.f32 %v3356, %v3548
        %v3550 = vpop.f32.mrb[0].mxu0
        %v3551 = vadd.f32 %v3358, %v3550
        %v3552 = vpop.f32.mrb[0].mxu0
        %v3553 = vadd.f32 %v3360, %v3552
        %v3554 = vpop.f32.mrb[0].mxu0
        %v3555 = vadd.f32 %v3362, %v3554
        %3556 = vmatprep.mubr.bf16.mxu0 %v582
        %3557 = vmatmul.mubr.bf16.gmra.mrb[0].mxu0 %v581
        %v3558 = vpop.f32.mrb[0].mxu0
        %v3559 = vadd.f32 %v3366, %v3558
        %v3560 = vpop.f32.mrb[0].mxu0
        %v3561 = vadd.f32 %v3368, %v3560
        %v3562 = vpop.f32.mrb[0].mxu0
        %v3563 = vadd.f32 %v3370, %v3562
        %v3564 = vpop.f32.mrb[0].mxu0
        %v3565 = vadd.f32 %v3372, %v3564
        %3566 = vmatprep.mubr.bf16.mxu0 %v589
        %3567 = vmatmul.mubr.bf16.gmra.mrb[0].mxu0 %v588
        %v3568 = vpop.f32.mrb[0].mxu0
        %v3569 = vadd.f32 %v3376, %v3568
        %v3570 = vpop.f32.mrb[0].mxu0
        %v3571 = vadd.f32 %v3378, %v3570
        %v3572 = vpop.f32.mrb[0].mxu0
        %v3573 = vadd.f32 %v3380, %v3572
        %v3574 = vpop.f32.mrb[0].mxu0
        %v3575 = vadd.f32 %v3382, %v3574
        %3576 = vmatprep.mubr.bf16.mxu0 %v596
        %3577 = vmatmul.mubr.bf16.gmra.mrb[0].mxu0 %v595
        %v3578 = vpop.f32.mrb[0].mxu0
        %v3579 = vadd.f32 %v3386, %v3578
        %v3580 = vpop.f32.mrb[0].mxu0
        %v3581 = vadd.f32 %v3388, %v3580
        %v3582 = vpop.f32.mrb[0].mxu0
        %v3583 = vadd.f32 %v3390, %v3582
        %v3584 = vpop.f32.mrb[0].mxu0
        %v3585 = vadd.f32 %v3392, %v3584
        %3586 = vmatprep.mubr.bf16.mxu0 %v603
        %3587 = vmatmul.mubr.bf16.gmra.mrb[0].mxu0 %v602
        %v3588 = vpop.f32.mrb[0].mxu0
        %v3589 = vadd.f32 %v3396, %v3588
        %v3590 = vpop.f32.mrb[0].mxu0
        %v3591 = vadd.f32 %v3398, %v3590
        %v3592 = vpop.f32.mrb[0].mxu0
        %v3593 = vadd.f32 %v3400, %v3592
        %v3594 = vpop.f32.mrb[0].mxu0
        %v3595 = vadd.f32 %v3402, %v3594
        %3596 = vmatprep.mubr.bf16.mxu0 %v610
        %3597 = vmatmul.mubr.bf16.gmra.mrb[0].mxu0 %v609
        %v3598 = vpop.f32.mrb[0].mxu0
        %v3599 = vadd.f32 %v3406, %v3598
        %v3600 = vpop.f32.mrb[0].mxu0
        %v3601 = vadd.f32 %v3408, %v3600
        %v3602 = vpop.f32.mrb[0].mxu0
        %v3603 = vadd.f32 %v3410, %v3602
        %v3604 = vpop.f32.mrb[0].mxu0
        %v3605 = vadd.f32 %v3412, %v3604
        %3606 = vmatprep.mubr.bf16.mxu0 %v617
        %3607 = vmatmul.mubr.bf16.gmra.mrb[0].mxu0 %v616
        %v3608 = vpop.f32.mrb[0].mxu0
        %v3609 = vadd.f32 %v3416, %v3608
        %v3610 = vpop.f32.mrb[0].mxu0
        %v3611 = vadd.f32 %v3418, %v3610
        %v3612 = vpop.f32.mrb[0].mxu0
        %v3613 = vadd.f32 %v3420, %v3612
        %v3614 = vpop.f32.mrb[0].mxu0
        %v3615 = vadd.f32 %v3422, %v3614
        %3616 = vmatprep.mubr.bf16.mxu0 %v624
        %3617 = vmatmul.mubr.bf16.gmra.mrb[0].mxu0 %v623
        %v3618 = vpop.f32.mrb[0].mxu0
        %v3619 = vadd.f32 %v3426, %v3618
        %v3620 = vpop.f32.mrb[0].mxu0
        %v3621 = vadd.f32 %v3428, %v3620
        %v3622 = vpop.f32.mrb[0].mxu0
        %v3623 = vadd.f32 %v3430, %v3622
        %v3624 = vpop.f32.mrb[0].mxu0
        %v3625 = vadd.f32 %v3432, %v3624
        %3626 = vmatprep.mubr.bf16.mxu0 %v631
        %3627 = vmatmul.mubr.bf16.gmra.mrb[0].mxu0 %v630
        %v3628 = vpop.f32.mrb[0].mxu0
        %v3629 = vadd.f32 %v3436, %v3628
        %v3630 = vpop.f32.mrb[0].mxu0
        %v3631 = vadd.f32 %v3438, %v3630
        %v3632 = vpop.f32.mrb[0].mxu0
        %v3633 = vadd.f32 %v3440, %v3632
        %v3634 = vpop.f32.mrb[0].mxu0
        %v3635 = vadd.f32 %v3442, %v3634
        %3636 = vmatprep.mubr.bf16.mxu0 %v638
        %3637 = vmatmul.mubr.bf16.gmra.mrb[0].mxu0 %v637
        %v3638 = vpop.f32.mrb[0].mxu0
        %v3639 = vadd.f32 %v3446, %v3638
        %v3640 = vpop.f32.mrb[0].mxu0
        %v3641 = vadd.f32 %v3448, %v3640
        %v3642 = vpop.f32.mrb[0].mxu0
        %v3643 = vadd.f32 %v3450, %v3642
        %v3644 = vpop.f32.mrb[0].mxu0
        %v3645 = vadd.f32 %v3452, %v3644
        %3646 = vmatprep.mubr.bf16.mxu0 %v645
        %3647 = vmatmul.mubr.bf16.gmra.mrb[0].mxu0 %v644
        %v3648 = vpop.f32.mrb[0].mxu0
        %v3649 = vadd.f32 %v3456, %v3648
        %v3650 = vpop.f32.mrb[0].mxu0
        %v3651 = vadd.f32 %v3458, %v3650
        %v3652 = vpop.f32.mrb[0].mxu0
        %v3653 = vadd.f32 %v3460, %v3652
        %v3654 = vpop.f32.mrb[0].mxu0
        %v3655 = vadd.f32 %v3462, %v3654
        %3656 = vmatprep.mubr.bf16.mxu0 %v652
        %3657 = vmatmul.mubr.bf16.gmra.mrb[0].mxu0 %v651
        %v3658 = vpop.f32.mrb[0].mxu0
        %v3659 = vadd.f32 %v3466, %v3658
        %v3660 = vpop.f32.mrb[0].mxu0
        %v3661 = vadd.f32 %v3468, %v3660
        %v3662 = vpop.f32.mrb[0].mxu0
        %v3663 = vadd.f32 %v3470, %v3662
        %v3664 = vpop.f32.mrb[0].mxu0
        %v3665 = vadd.f32 %v3472, %v3664
        %3666 = vmatprep.mubr.bf16.mxu0 %v659
        %3667 = vmatmul.mubr.bf16.gmra.mrb[0].mxu0 %v658
        %v3668 = vpop.f32.mrb[0].mxu0
        %v3669 = vadd.f32 %v3476, %v3668
        %v3670 = vpop.f32.mrb[0].mxu0
        %v3671 = vadd.f32 %v3478, %v3670
        %v3672 = vpop.f32.mrb[0].mxu0
        %v3673 = vadd.f32 %v3480, %v3672
        %v3674 = vpop.f32.mrb[0].mxu0
        %v3675 = vadd.f32 %v3482, %v3674
        %3676 = vmatprep.mubr.bf16.mxu0 %v666
        %3677 = vmatmul.mubr.bf16.gmra.mrb[0].mxu0 %v665
        %v3678 = vpop.f32.mrb[0].mxu0
        %v3679 = vadd.f32 %v3486, %v3678
        %v3680 = vpop.f32.mrb[0].mxu0
        %v3681 = vadd.f32 %v3488, %v3680
        %v3682 = vpop.f32.mrb[0].mxu0
        %v3683 = vadd.f32 %v3490, %v3682
        %v3684 = vpop.f32.mrb[0].mxu0
        %v3685 = vadd.f32 %v3492, %v3684
        %3686 = vmatprep.mubr.bf16.mxu0 %v673
        %3687 = vmatmul.mubr.bf16.gmra.mrb[0].mxu0 %v672
        %v3688 = vpop.f32.mrb[0].mxu0
        %v3689 = vadd.f32 %v3496, %v3688
        %v3690 = vpop.f32.mrb[0].mxu0
        %v3691 = vadd.f32 %v3498, %v3690
        %v3692 = vpop.f32.mrb[0].mxu0
        %v3693 = vadd.f32 %v3500, %v3692
        %v3694 = vpop.f32.mrb[0].mxu0
        %v3695 = vadd.f32 %v3502, %v3694
        %3696 = vdwg.mxu0
        %3697 = vmatprep.subr.bf16.mxu0 %v2670
        %3698 = vmatpush1.bf16.msra.mxu0 %v2669
        %3699 = vmatprep.subr.bf16.mxu0 0
        %3700 = vmatpush1.bf16.msra.mxu0 0
        %3701 = vmatprep.subr.bf16.mxu0 0
        %3702 = vmatpush1.bf16.msra.mxu0 0
        %3703 = vmatprep.subr.bf16.mxu0 0
        %3704 = vmatpush1.bf16.msra.mxu0 0
        %3705 = vmatprep.subr.bf16.mxu0 0
        %3706 = vmatpush1.bf16.msra.mxu0 0
        %3707 = vmatprep.subr.bf16.mxu0 0
        %3708 = vmatpush1.bf16.msra.mxu0 0
        %3709 = vmatprep.subr.bf16.mxu0 0
        %3710 = vmatpush1.bf16.msra.mxu0 0
        %3711 = vmatprep.subr.bf16.mxu0 0
        %3712 = vmatpush1.bf16.msra.mxu0 0
        %3713 = vmatprep.subr.bf16.mxu0 0
        %3714 = vmatpush1.bf16.msra.mxu0 0
        %3715 = vmatprep.subr.bf16.mxu0 0
        %3716 = vmatpush1.bf16.msra.mxu0 0
        %3717 = vmatprep.subr.bf16.mxu0 0
        %3718 = vmatpush1.bf16.msra.mxu0 0
        %3719 = vmatprep.subr.bf16.mxu0 0
        %3720 = vmatpush1.bf16.msra.mxu0 0
        %3721 = vmatprep.subr.bf16.mxu0 0
        %3722 = vmatpush1.bf16.msra.mxu0 0
        %3723 = vmatprep.subr.bf16.mxu0 0
        %3724 = vmatpush1.bf16.msra.mxu0 0
        %3725 = vmatprep.subr.bf16.mxu0 0
        %3726 = vmatpush1.bf16.msra.mxu0 0
        %3727 = vmatprep.subr.bf16.mxu0 0
        %3728 = vmatpush1.bf16.msra.mxu0 0
        %3729 = vmatprep.mubr.bf16.mxu0 0
        %3730 = vmatmul.mubr.bf16.gmra.mrb[0].mxu0 %v3071
        %v3731 = vpop.f32.mrb[0].mxu0
        %v3732 = vadd.f32 %v3539, %v3731
        %v3733 = vpop.f32.mrb[0].mxu0
        %v3734 = vadd.f32 %v3541, %v3733
        %v3735 = vpop.f32.mrb[0].mxu0
        %v3736 = vadd.f32 %v3543, %v3735
        %v3737 = vpop.f32.mrb[0].mxu0
        %v3738 = vadd.f32 %v3545, %v3737
        %3739 = vmatprep.mubr.bf16.mxu0 0
        %3740 = vmatmul.mubr.bf16.gmra.mrb[0].mxu0 %v3074
        %v3741 = vpop.f32.mrb[0].mxu0
        %v3742 = vadd.f32 %v3549, %v3741
        %v3743 = vpop.f32.mrb[0].mxu0
        %v3744 = vadd.f32 %v3551, %v3743
        %v3745 = vpop.f32.mrb[0].mxu0
        %v3746 = vadd.f32 %v3553, %v3745
        %v3747 = vpop.f32.mrb[0].mxu0
        %v3748 = vadd.f32 %v3555, %v3747
        %3749 = vmatprep.mubr.bf16.mxu0 0
        %3750 = vmatmul.mubr.bf16.gmra.mrb[0].mxu0 %v3077
        %v3751 = vpop.f32.mrb[0].mxu0
        %v3752 = vadd.f32 %v3559, %v3751
        %v3753 = vpop.f32.mrb[0].mxu0
        %v3754 = vadd.f32 %v3561, %v3753
        %v3755 = vpop.f32.mrb[0].mxu0
        %v3756 = vadd.f32 %v3563, %v3755
        %v3757 = vpop.f32.mrb[0].mxu0
        %v3758 = vadd.f32 %v3565, %v3757
        %3759 = vmatprep.mubr.bf16.mxu0 0
        %3760 = vmatmul.mubr.bf16.gmra.mrb[0].mxu0 %v3080
        %v3761 = vpop.f32.mrb[0].mxu0
        %v3762 = vadd.f32 %v3569, %v3761
        %v3763 = vpop.f32.mrb[0].mxu0
        %v3764 = vadd.f32 %v3571, %v3763
        %v3765 = vpop.f32.mrb[0].mxu0
        %v3766 = vadd.f32 %v3573, %v3765
        %v3767 = vpop.f32.mrb[0].mxu0
        %v3768 = vadd.f32 %v3575, %v3767
        %3769 = vmatprep.mubr.bf16.mxu0 0
        %3770 = vmatmul.mubr.bf16.gmra.mrb[0].mxu0 %v3083
        %v3771 = vpop.f32.mrb[0].mxu0
        %v3772 = vadd.f32 %v3579, %v3771
        %v3773 = vpop.f32.mrb[0].mxu0
        %v3774 = vadd.f32 %v3581, %v3773
        %v3775 = vpop.f32.mrb[0].mxu0
        %v3776 = vadd.f32 %v3583, %v3775
        %v3777 = vpop.f32.mrb[0].mxu0
        %v3778 = vadd.f32 %v3585, %v3777
        %3779 = vmatprep.mubr.bf16.mxu0 0
        %3780 = vmatmul.mubr.bf16.gmra.mrb[0].mxu0 %v3086
        %v3781 = vpop.f32.mrb[0].mxu0
        %v3782 = vadd.f32 %v3589, %v3781
        %v3783 = vpop.f32.mrb[0].mxu0
        %v3784 = vadd.f32 %v3591, %v3783
        %v3785 = vpop.f32.mrb[0].mxu0
        %v3786 = vadd.f32 %v3593, %v3785
        %v3787 = vpop.f32.mrb[0].mxu0
        %v3788 = vadd.f32 %v3595, %v3787
        %3789 = vmatprep.mubr.bf16.mxu0 0
        %3790 = vmatmul.mubr.bf16.gmra.mrb[0].mxu0 %v3089
        %v3791 = vpop.f32.mrb[0].mxu0
        %v3792 = vadd.f32 %v3599, %v3791
        %v3793 = vpop.f32.mrb[0].mxu0
        %v3794 = vadd.f32 %v3601, %v3793
        %v3795 = vpop.f32.mrb[0].mxu0
        %v3796 = vadd.f32 %v3603, %v3795
        %v3797 = vpop.f32.mrb[0].mxu0
        %v3798 = vadd.f32 %v3605, %v3797
        %3799 = vmatprep.mubr.bf16.mxu0 0
        %3800 = vmatmul.mubr.bf16.gmra.mrb[0].mxu0 %v3092
        %v3801 = vpop.f32.mrb[0].mxu0
        %v3802 = vadd.f32 %v3609, %v3801
        %v3803 = vpop.f32.mrb[0].mxu0
        %v3804 = vadd.f32 %v3611, %v3803
        %v3805 = vpop.f32.mrb[0].mxu0
        %v3806 = vadd.f32 %v3613, %v3805
        %v3807 = vpop.f32.mrb[0].mxu0
        %v3808 = vadd.f32 %v3615, %v3807
        %3809 = vmatprep.mubr.bf16.mxu0 0
        %3810 = vmatmul.mubr.bf16.gmra.mrb[0].mxu0 %v3095
        %v3811 = vpop.f32.mrb[0].mxu0
        %v3812 = vadd.f32 %v3619, %v3811
        %v3813 = vpop.f32.mrb[0].mxu0
        %v3814 = vadd.f32 %v3621, %v3813
        %v3815 = vpop.f32.mrb[0].mxu0
        %v3816 = vadd.f32 %v3623, %v3815
        %v3817 = vpop.f32.mrb[0].mxu0
        %v3818 = vadd.f32 %v3625, %v3817
        %3819 = vmatprep.mubr.bf16.mxu0 0
        %3820 = vmatmul.mubr.bf16.gmra.mrb[0].mxu0 %v3098
        %v3821 = vpop.f32.mrb[0].mxu0
        %v3822 = vadd.f32 %v3629, %v3821
        %v3823 = vpop.f32.mrb[0].mxu0
        %v3824 = vadd.f32 %v3631, %v3823
        %v3825 = vpop.f32.mrb[0].mxu0
        %v3826 = vadd.f32 %v3633, %v3825
        %v3827 = vpop.f32.mrb[0].mxu0
        %v3828 = vadd.f32 %v3635, %v3827
        %3829 = vmatprep.mubr.bf16.mxu0 0
        %3830 = vmatmul.mubr.bf16.gmra.mrb[0].mxu0 %v3101
        %v3831 = vpop.f32.mrb[0].mxu0
        %v3832 = vadd.f32 %v3639, %v3831
        %v3833 = vpop.f32.mrb[0].mxu0
        %v3834 = vadd.f32 %v3641, %v3833
        %v3835 = vpop.f32.mrb[0].mxu0
        %v3836 = vadd.f32 %v3643, %v3835
        %v3837 = vpop.f32.mrb[0].mxu0
        %v3838 = vadd.f32 %v3645, %v3837
        %3839 = vmatprep.mubr.bf16.mxu0 0
        %3840 = vmatmul.mubr.bf16.gmra.mrb[0].mxu0 %v3104
        %v3841 = vpop.f32.mrb[0].mxu0
        %v3842 = vadd.f32 %v3649, %v3841
        %v3843 = vpop.f32.mrb[0].mxu0
        %v3844 = vadd.f32 %v3651, %v3843
        %v3845 = vpop.f32.mrb[0].mxu0
        %v3846 = vadd.f32 %v3653, %v3845
        %v3847 = vpop.f32.mrb[0].mxu0
        %v3848 = vadd.f32 %v3655, %v3847
        %3849 = vmatprep.mubr.bf16.mxu0 0
        %3850 = vmatmul.mubr.bf16.gmra.mrb[0].mxu0 %v3107
        %v3851 = vpop.f32.mrb[0].mxu0
        %v3852 = vadd.f32 %v3659, %v3851
        %v3853 = vpop.f32.mrb[0].mxu0
        %v3854 = vadd.f32 %v3661, %v3853
        %v3855 = vpop.f32.mrb[0].mxu0
        %v3856 = vadd.f32 %v3663, %v3855
        %v3857 = vpop.f32.mrb[0].mxu0
        %v3858 = vadd.f32 %v3665, %v3857
        %3859 = vmatprep.mubr.bf16.mxu0 0
        %3860 = vmatmul.mubr.bf16.gmra.mrb[0].mxu0 %v3110
        %v3861 = vpop.f32.mrb[0].mxu0
        %v3862 = vadd.f32 %v3669, %v3861
        %v3863 = vpop.f32.mrb[0].mxu0
        %v3864 = vadd.f32 %v3671, %v3863
        %v3865 = vpop.f32.mrb[0].mxu0
        %v3866 = vadd.f32 %v3673, %v3865
        %v3867 = vpop.f32.mrb[0].mxu0
        %v3868 = vadd.f32 %v3675, %v3867
        %3869 = vmatprep.mubr.bf16.mxu0 0
        %3870 = vmatmul.mubr.bf16.gmra.mrb[0].mxu0 %v3113
        %v3871 = vpop.f32.mrb[0].mxu0
        %v3872 = vadd.f32 %v3679, %v3871
        %v3873 = vpop.f32.mrb[0].mxu0
        %v3874 = vadd.f32 %v3681, %v3873
        %v3875 = vpop.f32.mrb[0].mxu0
        %v3876 = vadd.f32 %v3683, %v3875
        %v3877 = vpop.f32.mrb[0].mxu0
        %v3878 = vadd.f32 %v3685, %v3877
        %3879 = vmatprep.mubr.bf16.mxu0 0
        %3880 = vmatmul.mubr.bf16.gmra.mrb[0].mxu0 %v3116
        %v3881 = vpop.f32.mrb[0].mxu0
        %v3882 = vadd.f32 %v3689, %v3881
        %v3883 = vpop.f32.mrb[0].mxu0
        %v3884 = vadd.f32 %v3691, %v3883
        %v3885 = vpop.f32.mrb[0].mxu0
        %v3886 = vadd.f32 %v3693, %v3885
        %v3887 = vpop.f32.mrb[0].mxu0
        %v3888 = vadd.f32 %v3695, %v3887
        %3889 = vdwg.mxu0
        %3890 = vmatprep.subr.bf16.mxu0 %v2288
        %3891 = vmatpush1.bf16.msra.mxu0 %v2287
        %3892 = vmatprep.subr.bf16.mxu0 %v2296
        %3893 = vmatpush1.bf16.msra.mxu0 %v2295
        %3894 = vmatprep.subr.bf16.mxu0 %v2304
        %3895 = vmatpush1.bf16.msra.mxu0 %v2303
        %3896 = vmatprep.subr.bf16.mxu0 %v2312
        %3897 = vmatpush1.bf16.msra.mxu0 %v2311
        %3898 = vmatprep.subr.bf16.mxu0 %v2320
        %3899 = vmatpush1.bf16.msra.mxu0 %v2319
        %3900 = vmatprep.subr.bf16.mxu0 %v2328
        %3901 = vmatpush1.bf16.msra.mxu0 %v2327
        %3902 = vmatprep.subr.bf16.mxu0 %v2336
        %3903 = vmatpush1.bf16.msra.mxu0 %v2335
        %3904 = vmatprep.subr.bf16.mxu0 %v2344
        %3905 = vmatpush1.bf16.msra.mxu0 %v2343
        %3906 = vmatprep.subr.bf16.mxu0 %v2352
        %3907 = vmatpush1.bf16.msra.mxu0 %v2351
        %3908 = vmatprep.subr.bf16.mxu0 %v2360
        %3909 = vmatpush1.bf16.msra.mxu0 %v2359
        %3910 = vmatprep.subr.bf16.mxu0 %v2368
        %3911 = vmatpush1.bf16.msra.mxu0 %v2367
        %3912 = vmatprep.subr.bf16.mxu0 %v2376
        %3913 = vmatpush1.bf16.msra.mxu0 %v2375
        %3914 = vmatprep.subr.bf16.mxu0 %v2384
        %3915 = vmatpush1.bf16.msra.mxu0 %v2383
        %3916 = vmatprep.subr.bf16.mxu0 %v2392
        %3917 = vmatpush1.bf16.msra.mxu0 %v2391
        %3918 = vmatprep.subr.bf16.mxu0 %v2400
        %3919 = vmatpush1.bf16.msra.mxu0 %v2399
        %3920 = vmatprep.subr.bf16.mxu0 %v2408
        %3921 = vmatpush1.bf16.msra.mxu0 %v2407
        %3922 = vmatprep.mubr.bf16.mxu0 %v564
        %3923 = vmatmul.mubr.bf16.gmra.mrb[0].mxu0 %v563
        %v3924 = vpop.f32.mrb[0].mxu0
        %v3925 = vadd.f32 %v1080, %v3924
        %v3926 = vpop.f32.mrb[0].mxu0
        %v3927 = vadd.f32 %v1084, %v3926
        %v3928 = vpop.f32.mrb[0].mxu0
        %v3929 = vadd.f32 %v1080, %v3928
        %v3930 = vpop.f32.mrb[0].mxu0
        %v3931 = vadd.f32 %v1084, %v3930
        %3932 = vmatprep.mubr.bf16.mxu0 %v571
        %3933 = vmatmul.mubr.bf16.gmra.mrb[0].mxu0 %v570
        %v3934 = vpop.f32.mrb[0].mxu0
        %v3935 = vadd.f32 %v1080, %v3934
        %v3936 = vpop.f32.mrb[0].mxu0
        %v3937 = vadd.f32 %v1084, %v3936
        %v3938 = vpop.f32.mrb[0].mxu0
        %v3939 = vadd.f32 %v1080, %v3938
        %v3940 = vpop.f32.mrb[0].mxu0
        %v3941 = vadd.f32 %v1084, %v3940
        %3942 = vmatprep.mubr.bf16.mxu0 %v578
        %3943 = vmatmul.mubr.bf16.gmra.mrb[0].mxu0 %v577
        %v3944 = vpop.f32.mrb[0].mxu0
        %v3945 = vadd.f32 %v1080, %v3944
        %v3946 = vpop.f32.mrb[0].mxu0
        %v3947 = vadd.f32 %v1084, %v3946
        %v3948 = vpop.f32.mrb[0].mxu0
        %v3949 = vadd.f32 %v1080, %v3948
        %v3950 = vpop.f32.mrb[0].mxu0
        %v3951 = vadd.f32 %v1084, %v3950
        %3952 = vmatprep.mubr.bf16.mxu0 %v585
        %3953 = vmatmul.mubr.bf16.gmra.mrb[0].mxu0 %v584
        %v3954 = vpop.f32.mrb[0].mxu0
        %v3955 = vadd.f32 %v1080, %v3954
        %v3956 = vpop.f32.mrb[0].mxu0
        %v3957 = vadd.f32 %v1084, %v3956
        %v3958 = vpop.f32.mrb[0].mxu0
        %v3959 = vadd.f32 %v1080, %v3958
        %v3960 = vpop.f32.mrb[0].mxu0
        %v3961 = vadd.f32 %v1084, %v3960
        %3962 = vmatprep.mubr.bf16.mxu0 %v592
        %3963 = vmatmul.mubr.bf16.gmra.mrb[0].mxu0 %v591
        %v3964 = vpop.f32.mrb[0].mxu0
        %v3965 = vadd.f32 %v1080, %v3964
        %v3966 = vpop.f32.mrb[0].mxu0
        %v3967 = vadd.f32 %v1084, %v3966
        %v3968 = vpop.f32.mrb[0].mxu0
        %v3969 = vadd.f32 %v1080, %v3968
        %v3970 = vpop.f32.mrb[0].mxu0
        %v3971 = vadd.f32 %v1084, %v3970
        %3972 = vmatprep.mubr.bf16.mxu0 %v599
        %3973 = vmatmul.mubr.bf16.gmra.mrb[0].mxu0 %v598
        %v3974 = vpop.f32.mrb[0].mxu0
        %v3975 = vadd.f32 %v1080, %v3974
        %v3976 = vpop.f32.mrb[0].mxu0
        %v3977 = vadd.f32 %v1084, %v3976
        %v3978 = vpop.f32.mrb[0].mxu0
        %v3979 = vadd.f32 %v1080, %v3978
        %v3980 = vpop.f32.mrb[0].mxu0
        %v3981 = vadd.f32 %v1084, %v3980
        %3982 = vmatprep.mubr.bf16.mxu0 %v606
        %3983 = vmatmul.mubr.bf16.gmra.mrb[0].mxu0 %v605
        %v3984 = vpop.f32.mrb[0].mxu0
        %v3985 = vadd.f32 %v1080, %v3984
        %v3986 = vpop.f32.mrb[0].mxu0
        %v3987 = vadd.f32 %v1084, %v3986
        %v3988 = vpop.f32.mrb[0].mxu0
        %v3989 = vadd.f32 %v1080, %v3988
        %v3990 = vpop.f32.mrb[0].mxu0
        %v3991 = vadd.f32 %v1084, %v3990
        %3992 = vmatprep.mubr.bf16.mxu0 %v613
        %3993 = vmatmul.mubr.bf16.gmra.mrb[0].mxu0 %v612
        %v3994 = vpop.f32.mrb[0].mxu0
        %v3995 = vadd.f32 %v1080, %v3994
        %v3996 = vpop.f32.mrb[0].mxu0
        %v3997 = vadd.f32 %v1084, %v3996
        %v3998 = vpop.f32.mrb[0].mxu0
        %v3999 = vadd.f32 %v1080, %v3998
        %v4000 = vpop.f32.mrb[0].mxu0
        %v4001 = vadd.f32 %v1084, %v4000
        %4002 = vmatprep.mubr.bf16.mxu0 %v620
        %4003 = vmatmul.mubr.bf16.gmra.mrb[0].mxu0 %v619
        %v4004 = vpop.f32.mrb[0].mxu0
        %v4005 = vadd.f32 %v1080, %v4004
        %v4006 = vpop.f32.mrb[0].mxu0
        %v4007 = vadd.f32 %v1084, %v4006
        %v4008 = vpop.f32.mrb[0].mxu0
        %v4009 = vadd.f32 %v1080, %v4008
        %v4010 = vpop.f32.mrb[0].mxu0
        %v4011 = vadd.f32 %v1084, %v4010
        %4012 = vmatprep.mubr.bf16.mxu0 %v627
        %4013 = vmatmul.mubr.bf16.gmra.mrb[0].mxu0 %v626
        %v4014 = vpop.f32.mrb[0].mxu0
        %v4015 = vadd.f32 %v1080, %v4014
        %v4016 = vpop.f32.mrb[0].mxu0
        %v4017 = vadd.f32 %v1084, %v4016
        %v4018 = vpop.f32.mrb[0].mxu0
        %v4019 = vadd.f32 %v1080, %v4018
        %v4020 = vpop.f32.mrb[0].mxu0
        %v4021 = vadd.f32 %v1084, %v4020
        %4022 = vmatprep.mubr.bf16.mxu0 %v634
        %4023 = vmatmul.mubr.bf16.gmra.mrb[0].mxu0 %v633
        %v4024 = vpop.f32.mrb[0].mxu0
        %v4025 = vadd.f32 %v1080, %v4024
        %v4026 = vpop.f32.mrb[0].mxu0
        %v4027 = vadd.f32 %v1084, %v4026
        %v4028 = vpop.f32.mrb[0].mxu0
        %v4029 = vadd.f32 %v1080, %v4028
        %v4030 = vpop.f32.mrb[0].mxu0
        %v4031 = vadd.f32 %v1084, %v4030
        %4032 = vmatprep.mubr.bf16.mxu0 %v641
        %4033 = vmatmul.mubr.bf16.gmra.mrb[0].mxu0 %v640
        %v4034 = vpop.f32.mrb[0].mxu0
        %v4035 = vadd.f32 %v1080, %v4034
        %v4036 = vpop.f32.mrb[0].mxu0
        %v4037 = vadd.f32 %v1084, %v4036
        %v4038 = vpop.f32.mrb[0].mxu0
        %v4039 = vadd.f32 %v1080, %v4038
        %v4040 = vpop.f32.mrb[0].mxu0
        %v4041 = vadd.f32 %v1084, %v4040
        %4042 = vmatprep.mubr.bf16.mxu0 %v648
        %4043 = vmatmul.mubr.bf16.gmra.mrb[0].mxu0 %v647
        %v4044 = vpop.f32.mrb[0].mxu0
        %v4045 = vadd.f32 %v1080, %v4044
        %v4046 = vpop.f32.mrb[0].mxu0
        %v4047 = vadd.f32 %v1084, %v4046
        %v4048 = vpop.f32.mrb[0].mxu0
        %v4049 = vadd.f32 %v1080, %v4048
        %v4050 = vpop.f32.mrb[0].mxu0
        %v4051 = vadd.f32 %v1084, %v4050
        %4052 = vmatprep.mubr.bf16.mxu0 %v655
        %4053 = vmatmul.mubr.bf16.gmra.mrb[0].mxu0 %v654
        %v4054 = vpop.f32.mrb[0].mxu0
        %v4055 = vadd.f32 %v1080, %v4054
        %v4056 = vpop.f32.mrb[0].mxu0
        %v4057 = vadd.f32 %v1084, %v4056
        %v4058 = vpop.f32.mrb[0].mxu0
        %v4059 = vadd.f32 %v1080, %v4058
        %v4060 = vpop.f32.mrb[0].mxu0
        %v4061 = vadd.f32 %v1084, %v4060
        %4062 = vmatprep.mubr.bf16.mxu0 %v662
        %4063 = vmatmul.mubr.bf16.gmra.mrb[0].mxu0 %v661
        %v4064 = vpop.f32.mrb[0].mxu0
        %v4065 = vadd.f32 %v1080, %v4064
        %v4066 = vpop.f32.mrb[0].mxu0
        %v4067 = vadd.f32 %v1084, %v4066
        %v4068 = vpop.f32.mrb[0].mxu0
        %v4069 = vadd.f32 %v1080, %v4068
        %v4070 = vpop.f32.mrb[0].mxu0
        %v4071 = vadd.f32 %v1084, %v4070
        %4072 = vmatprep.mubr.bf16.mxu0 %v669
        %4073 = vmatmul.mubr.bf16.gmra.mrb[0].mxu0 %v668
        %v4074 = vpop.f32.mrb[0].mxu0
        %v4075 = vadd.f32 %v1080, %v4074
        %v4076 = vpop.f32.mrb[0].mxu0
        %v4077 = vadd.f32 %v1084, %v4076
        %v4078 = vpop.f32.mrb[0].mxu0
        %v4079 = vadd.f32 %v1080, %v4078
        %v4080 = vpop.f32.mrb[0].mxu0
        %v4081 = vadd.f32 %v1084, %v4080
        %4082 = vdwg.mxu0
        %4083 = vmatprep.subr.bf16.mxu0 %v2416
        %4084 = vmatpush1.bf16.msra.mxu0 %v2415
        %4085 = vmatprep.subr.bf16.mxu0 %v2424
        %4086 = vmatpush1.bf16.msra.mxu0 %v2423
        %4087 = vmatprep.subr.bf16.mxu0 %v2432
        %4088 = vmatpush1.bf16.msra.mxu0 %v2431
        %4089 = vmatprep.subr.bf16.mxu0 %v2440
        %4090 = vmatpush1.bf16.msra.mxu0 %v2439
        %4091 = vmatprep.subr.bf16.mxu0 %v2448
        %4092 = vmatpush1.bf16.msra.mxu0 %v2447
        %4093 = vmatprep.subr.bf16.mxu0 %v2456
        %4094 = vmatpush1.bf16.msra.mxu0 %v2455
        %4095 = vmatprep.subr.bf16.mxu0 %v2464
        %4096 = vmatpush1.bf16.msra.mxu0 %v2463
        %4097 = vmatprep.subr.bf16.mxu0 %v2472
        %4098 = vmatpush1.bf16.msra.mxu0 %v2471
        %4099 = vmatprep.subr.bf16.mxu0 %v2480
        %4100 = vmatpush1.bf16.msra.mxu0 %v2479
        %4101 = vmatprep.subr.bf16.mxu0 %v2488
        %4102 = vmatpush1.bf16.msra.mxu0 %v2487
        %4103 = vmatprep.subr.bf16.mxu0 %v2496
        %4104 = vmatpush1.bf16.msra.mxu0 %v2495
        %4105 = vmatprep.subr.bf16.mxu0 %v2504
        %4106 = vmatpush1.bf16.msra.mxu0 %v2503
        %4107 = vmatprep.subr.bf16.mxu0 %v2512
        %4108 = vmatpush1.bf16.msra.mxu0 %v2511
        %4109 = vmatprep.subr.bf16.mxu0 %v2520
        %4110 = vmatpush1.bf16.msra.mxu0 %v2519
        %4111 = vmatprep.subr.bf16.mxu0 %v2528
        %4112 = vmatpush1.bf16.msra.mxu0 %v2527
        %4113 = vmatprep.subr.bf16.mxu0 %v2536
        %4114 = vmatpush1.bf16.msra.mxu0 %v2535
        %4115 = vmatprep.mubr.bf16.mxu0 %v566
        %4116 = vmatmul.mubr.bf16.gmra.mrb[0].mxu0 %v565
        %v4117 = vpop.f32.mrb[0].mxu0
        %v4118 = vadd.f32 %v3925, %v4117
        %v4119 = vpop.f32.mrb[0].mxu0
        %v4120 = vadd.f32 %v3927, %v4119
        %v4121 = vpop.f32.mrb[0].mxu0
        %v4122 = vadd.f32 %v3929, %v4121
        %v4123 = vpop.f32.mrb[0].mxu0
        %v4124 = vadd.f32 %v3931, %v4123
        %4125 = vmatprep.mubr.bf16.mxu0 %v573
        %4126 = vmatmul.mubr.bf16.gmra.mrb[0].mxu0 %v572
        %v4127 = vpop.f32.mrb[0].mxu0
        %v4128 = vadd.f32 %v3935, %v4127
        %v4129 = vpop.f32.mrb[0].mxu0
        %v4130 = vadd.f32 %v3937, %v4129
        %v4131 = vpop.f32.mrb[0].mxu0
        %v4132 = vadd.f32 %v3939, %v4131
        %v4133 = vpop.f32.mrb[0].mxu0
        %v4134 = vadd.f32 %v3941, %v4133
        %4135 = vmatprep.mubr.bf16.mxu0 %v580
        %4136 = vmatmul.mubr.bf16.gmra.mrb[0].mxu0 %v579
        %v4137 = vpop.f32.mrb[0].mxu0
        %v4138 = vadd.f32 %v3945, %v4137
        %v4139 = vpop.f32.mrb[0].mxu0
        %v4140 = vadd.f32 %v3947, %v4139
        %v4141 = vpop.f32.mrb[0].mxu0
        %v4142 = vadd.f32 %v3949, %v4141
        %v4143 = vpop.f32.mrb[0].mxu0
        %v4144 = vadd.f32 %v3951, %v4143
        %4145 = vmatprep.mubr.bf16.mxu0 %v587
        %4146 = vmatmul.mubr.bf16.gmra.mrb[0].mxu0 %v586
        %v4147 = vpop.f32.mrb[0].mxu0
        %v4148 = vadd.f32 %v3955, %v4147
        %v4149 = vpop.f32.mrb[0].mxu0
        %v4150 = vadd.f32 %v3957, %v4149
        %v4151 = vpop.f32.mrb[0].mxu0
        %v4152 = vadd.f32 %v3959, %v4151
        %v4153 = vpop.f32.mrb[0].mxu0
        %v4154 = vadd.f32 %v3961, %v4153
        %4155 = vmatprep.mubr.bf16.mxu0 %v594
        %4156 = vmatmul.mubr.bf16.gmra.mrb[0].mxu0 %v593
        %v4157 = vpop.f32.mrb[0].mxu0
        %v4158 = vadd.f32 %v3965, %v4157
        %v4159 = vpop.f32.mrb[0].mxu0
        %v4160 = vadd.f32 %v3967, %v4159
        %v4161 = vpop.f32.mrb[0].mxu0
        %v4162 = vadd.f32 %v3969, %v4161
        %v4163 = vpop.f32.mrb[0].mxu0
        %v4164 = vadd.f32 %v3971, %v4163
        %4165 = vmatprep.mubr.bf16.mxu0 %v601
        %4166 = vmatmul.mubr.bf16.gmra.mrb[0].mxu0 %v600
        %v4167 = vpop.f32.mrb[0].mxu0
        %v4168 = vadd.f32 %v3975, %v4167
        %v4169 = vpop.f32.mrb[0].mxu0
        %v4170 = vadd.f32 %v3977, %v4169
        %v4171 = vpop.f32.mrb[0].mxu0
        %v4172 = vadd.f32 %v3979, %v4171
        %v4173 = vpop.f32.mrb[0].mxu0
        %v4174 = vadd.f32 %v3981, %v4173
        %4175 = vmatprep.mubr.bf16.mxu0 %v608
        %4176 = vmatmul.mubr.bf16.gmra.mrb[0].mxu0 %v607
        %v4177 = vpop.f32.mrb[0].mxu0
        %v4178 = vadd.f32 %v3985, %v4177
        %v4179 = vpop.f32.mrb[0].mxu0
        %v4180 = vadd.f32 %v3987, %v4179
        %v4181 = vpop.f32.mrb[0].mxu0
        %v4182 = vadd.f32 %v3989, %v4181
        %v4183 = vpop.f32.mrb[0].mxu0
        %v4184 = vadd.f32 %v3991, %v4183
        %4185 = vmatprep.mubr.bf16.mxu0 %v615
        %4186 = vmatmul.mubr.bf16.gmra.mrb[0].mxu0 %v614
        %v4187 = vpop.f32.mrb[0].mxu0
        %v4188 = vadd.f32 %v3995, %v4187
        %v4189 = vpop.f32.mrb[0].mxu0
        %v4190 = vadd.f32 %v3997, %v4189
        %v4191 = vpop.f32.mrb[0].mxu0
        %v4192 = vadd.f32 %v3999, %v4191
        %v4193 = vpop.f32.mrb[0].mxu0
        %v4194 = vadd.f32 %v4001, %v4193
        %4195 = vmatprep.mubr.bf16.mxu0 %v622
        %4196 = vmatmul.mubr.bf16.gmra.mrb[0].mxu0 %v621
        %v4197 = vpop.f32.mrb[0].mxu0
        %v4198 = vadd.f32 %v4005, %v4197
        %v4199 = vpop.f32.mrb[0].mxu0
        %v4200 = vadd.f32 %v4007, %v4199
        %v4201 = vpop.f32.mrb[0].mxu0
        %v4202 = vadd.f32 %v4009, %v4201
        %v4203 = vpop.f32.mrb[0].mxu0
        %v4204 = vadd.f32 %v4011, %v4203
        %4205 = vmatprep.mubr.bf16.mxu0 %v629
        %4206 = vmatmul.mubr.bf16.gmra.mrb[0].mxu0 %v628
        %v4207 = vpop.f32.mrb[0].mxu0
        %v4208 = vadd.f32 %v4015, %v4207
        %v4209 = vpop.f32.mrb[0].mxu0
        %v4210 = vadd.f32 %v4017, %v4209
        %v4211 = vpop.f32.mrb[0].mxu0
        %v4212 = vadd.f32 %v4019, %v4211
        %v4213 = vpop.f32.mrb[0].mxu0
        %v4214 = vadd.f32 %v4021, %v4213
        %4215 = vmatprep.mubr.bf16.mxu0 %v636
        %4216 = vmatmul.mubr.bf16.gmra.mrb[0].mxu0 %v635
        %v4217 = vpop.f32.mrb[0].mxu0
        %v4218 = vadd.f32 %v4025, %v4217
        %v4219 = vpop.f32.mrb[0].mxu0
        %v4220 = vadd.f32 %v4027, %v4219
        %v4221 = vpop.f32.mrb[0].mxu0
        %v4222 = vadd.f32 %v4029, %v4221
        %v4223 = vpop.f32.mrb[0].mxu0
        %v4224 = vadd.f32 %v4031, %v4223
        %4225 = vmatprep.mubr.bf16.mxu0 %v643
        %4226 = vmatmul.mubr.bf16.gmra.mrb[0].mxu0 %v642
        %v4227 = vpop.f32.mrb[0].mxu0
        %v4228 = vadd.f32 %v4035, %v4227
        %v4229 = vpop.f32.mrb[0].mxu0
        %v4230 = vadd.f32 %v4037, %v4229
        %v4231 = vpop.f32.mrb[0].mxu0
        %v4232 = vadd.f32 %v4039, %v4231
        %v4233 = vpop.f32.mrb[0].mxu0
        %v4234 = vadd.f32 %v4041, %v4233
        %4235 = vmatprep.mubr.bf16.mxu0 %v650
        %4236 = vmatmul.mubr.bf16.gmra.mrb[0].mxu0 %v649
        %v4237 = vpop.f32.mrb[0].mxu0
        %v4238 = vadd.f32 %v4045, %v4237
        %v4239 = vpop.f32.mrb[0].mxu0
        %v4240 = vadd.f32 %v4047, %v4239
        %v4241 = vpop.f32.mrb[0].mxu0
        %v4242 = vadd.f32 %v4049, %v4241
        %v4243 = vpop.f32.mrb[0].mxu0
        %v4244 = vadd.f32 %v4051, %v4243
        %4245 = vmatprep.mubr.bf16.mxu0 %v657
        %4246 = vmatmul.mubr.bf16.gmra.mrb[0].mxu0 %v656
        %v4247 = vpop.f32.mrb[0].mxu0
        %v4248 = vadd.f32 %v4055, %v4247
        %v4249 = vpop.f32.mrb[0].mxu0
        %v4250 = vadd.f32 %v4057, %v4249
        %v4251 = vpop.f32.mrb[0].mxu0
        %v4252 = vadd.f32 %v4059, %v4251
        %v4253 = vpop.f32.mrb[0].mxu0
        %v4254 = vadd.f32 %v4061, %v4253
        %4255 = vmatprep.mubr.bf16.mxu0 %v664
        %4256 = vmatmul.mubr.bf16.gmra.mrb[0].mxu0 %v663
        %v4257 = vpop.f32.mrb[0].mxu0
        %v4258 = vadd.f32 %v4065, %v4257
        %v4259 = vpop.f32.mrb[0].mxu0
        %v4260 = vadd.f32 %v4067, %v4259
        %v4261 = vpop.f32.mrb[0].mxu0
        %v4262 = vadd.f32 %v4069, %v4261
        %v4263 = vpop.f32.mrb[0].mxu0
        %v4264 = vadd.f32 %v4071, %v4263
        %4265 = vmatprep.mubr.bf16.mxu0 %v671
        %4266 = vmatmul.mubr.bf16.gmra.mrb[0].mxu0 %v670
        %v4267 = vpop.f32.mrb[0].mxu0
        %v4268 = vadd.f32 %v4075, %v4267
        %v4269 = vpop.f32.mrb[0].mxu0
        %v4270 = vadd.f32 %v4077, %v4269
        %v4271 = vpop.f32.mrb[0].mxu0
        %v4272 = vadd.f32 %v4079, %v4271
        %v4273 = vpop.f32.mrb[0].mxu0
        %v4274 = vadd.f32 %v4081, %v4273
        %4275 = vdwg.mxu0
        %4276 = vmatprep.subr.bf16.mxu0 %v2544
        %4277 = vmatpush1.bf16.msra.mxu0 %v2543
        %4278 = vmatprep.subr.bf16.mxu0 %v2552
        %4279 = vmatpush1.bf16.msra.mxu0 %v2551
        %4280 = vmatprep.subr.bf16.mxu0 %v2560
        %4281 = vmatpush1.bf16.msra.mxu0 %v2559
        %4282 = vmatprep.subr.bf16.mxu0 %v2568
        %4283 = vmatpush1.bf16.msra.mxu0 %v2567
        %4284 = vmatprep.subr.bf16.mxu0 %v2576
        %4285 = vmatpush1.bf16.msra.mxu0 %v2575
        %4286 = vmatprep.subr.bf16.mxu0 %v2584
        %4287 = vmatpush1.bf16.msra.mxu0 %v2583
        %4288 = vmatprep.subr.bf16.mxu0 %v2592
        %4289 = vmatpush1.bf16.msra.mxu0 %v2591
        %4290 = vmatprep.subr.bf16.mxu0 %v2600
        %4291 = vmatpush1.bf16.msra.mxu0 %v2599
        %4292 = vmatprep.subr.bf16.mxu0 %v2608
        %4293 = vmatpush1.bf16.msra.mxu0 %v2607
        %4294 = vmatprep.subr.bf16.mxu0 %v2616
        %4295 = vmatpush1.bf16.msra.mxu0 %v2615
        %4296 = vmatprep.subr.bf16.mxu0 %v2624
        %4297 = vmatpush1.bf16.msra.mxu0 %v2623
        %4298 = vmatprep.subr.bf16.mxu0 %v2632
        %4299 = vmatpush1.bf16.msra.mxu0 %v2631
        %4300 = vmatprep.subr.bf16.mxu0 %v2640
        %4301 = vmatpush1.bf16.msra.mxu0 %v2639
        %4302 = vmatprep.subr.bf16.mxu0 %v2648
        %4303 = vmatpush1.bf16.msra.mxu0 %v2647
        %4304 = vmatprep.subr.bf16.mxu0 %v2656
        %4305 = vmatpush1.bf16.msra.mxu0 %v2655
        %4306 = vmatprep.subr.bf16.mxu0 %v2664
        %4307 = vmatpush1.bf16.msra.mxu0 %v2663
        %4308 = vmatprep.mubr.bf16.mxu0 %v568
        %4309 = vmatmul.mubr.bf16.gmra.mrb[0].mxu0 %v567
        %v4310 = vpop.f32.mrb[0].mxu0
        %v4311 = vadd.f32 %v4118, %v4310
        %v4312 = vpop.f32.mrb[0].mxu0
        %v4313 = vadd.f32 %v4120, %v4312
        %v4314 = vpop.f32.mrb[0].mxu0
        %v4315 = vadd.f32 %v4122, %v4314
        %v4316 = vpop.f32.mrb[0].mxu0
        %v4317 = vadd.f32 %v4124, %v4316
        %4318 = vmatprep.mubr.bf16.mxu0 %v575
        %4319 = vmatmul.mubr.bf16.gmra.mrb[0].mxu0 %v574
        %v4320 = vpop.f32.mrb[0].mxu0
        %v4321 = vadd.f32 %v4128, %v4320
        %v4322 = vpop.f32.mrb[0].mxu0
        %v4323 = vadd.f32 %v4130, %v4322
        %v4324 = vpop.f32.mrb[0].mxu0
        %v4325 = vadd.f32 %v4132, %v4324
        %v4326 = vpop.f32.mrb[0].mxu0
        %v4327 = vadd.f32 %v4134, %v4326
        %4328 = vmatprep.mubr.bf16.mxu0 %v582
        %4329 = vmatmul.mubr.bf16.gmra.mrb[0].mxu0 %v581
        %v4330 = vpop.f32.mrb[0].mxu0
        %v4331 = vadd.f32 %v4138, %v4330
        %v4332 = vpop.f32.mrb[0].mxu0
        %v4333 = vadd.f32 %v4140, %v4332
        %v4334 = vpop.f32.mrb[0].mxu0
        %v4335 = vadd.f32 %v4142, %v4334
        %v4336 = vpop.f32.mrb[0].mxu0
        %v4337 = vadd.f32 %v4144, %v4336
        %4338 = vmatprep.mubr.bf16.mxu0 %v589
        %4339 = vmatmul.mubr.bf16.gmra.mrb[0].mxu0 %v588
        %v4340 = vpop.f32.mrb[0].mxu0
        %v4341 = vadd.f32 %v4148, %v4340
        %v4342 = vpop.f32.mrb[0].mxu0
        %v4343 = vadd.f32 %v4150, %v4342
        %v4344 = vpop.f32.mrb[0].mxu0
        %v4345 = vadd.f32 %v4152, %v4344
        %v4346 = vpop.f32.mrb[0].mxu0
        %v4347 = vadd.f32 %v4154, %v4346
        %4348 = vmatprep.mubr.bf16.mxu0 %v596
        %4349 = vmatmul.mubr.bf16.gmra.mrb[0].mxu0 %v595
        %v4350 = vpop.f32.mrb[0].mxu0
        %v4351 = vadd.f32 %v4158, %v4350
        %v4352 = vpop.f32.mrb[0].mxu0
        %v4353 = vadd.f32 %v4160, %v4352
        %v4354 = vpop.f32.mrb[0].mxu0
        %v4355 = vadd.f32 %v4162, %v4354
        %v4356 = vpop.f32.mrb[0].mxu0
        %v4357 = vadd.f32 %v4164, %v4356
        %4358 = vmatprep.mubr.bf16.mxu0 %v603
        %4359 = vmatmul.mubr.bf16.gmra.mrb[0].mxu0 %v602
        %v4360 = vpop.f32.mrb[0].mxu0
        %v4361 = vadd.f32 %v4168, %v4360
        %v4362 = vpop.f32.mrb[0].mxu0
        %v4363 = vadd.f32 %v4170, %v4362
        %v4364 = vpop.f32.mrb[0].mxu0
        %v4365 = vadd.f32 %v4172, %v4364
        %v4366 = vpop.f32.mrb[0].mxu0
        %v4367 = vadd.f32 %v4174, %v4366
        %4368 = vmatprep.mubr.bf16.mxu0 %v610
        %4369 = vmatmul.mubr.bf16.gmra.mrb[0].mxu0 %v609
        %v4370 = vpop.f32.mrb[0].mxu0
        %v4371 = vadd.f32 %v4178, %v4370
        %v4372 = vpop.f32.mrb[0].mxu0
        %v4373 = vadd.f32 %v4180, %v4372
        %v4374 = vpop.f32.mrb[0].mxu0
        %v4375 = vadd.f32 %v4182, %v4374
        %v4376 = vpop.f32.mrb[0].mxu0
        %v4377 = vadd.f32 %v4184, %v4376
        %4378 = vmatprep.mubr.bf16.mxu0 %v617
        %4379 = vmatmul.mubr.bf16.gmra.mrb[0].mxu0 %v616
        %v4380 = vpop.f32.mrb[0].mxu0
        %v4381 = vadd.f32 %v4188, %v4380
        %v4382 = vpop.f32.mrb[0].mxu0
        %v4383 = vadd.f32 %v4190, %v4382
        %v4384 = vpop.f32.mrb[0].mxu0
        %v4385 = vadd.f32 %v4192, %v4384
        %v4386 = vpop.f32.mrb[0].mxu0
        %v4387 = vadd.f32 %v4194, %v4386
        %4388 = vmatprep.mubr.bf16.mxu0 %v624
        %4389 = vmatmul.mubr.bf16.gmra.mrb[0].mxu0 %v623
        %v4390 = vpop.f32.mrb[0].mxu0
        %v4391 = vadd.f32 %v4198, %v4390
        %v4392 = vpop.f32.mrb[0].mxu0
        %v4393 = vadd.f32 %v4200, %v4392
        %v4394 = vpop.f32.mrb[0].mxu0
        %v4395 = vadd.f32 %v4202, %v4394
        %v4396 = vpop.f32.mrb[0].mxu0
        %v4397 = vadd.f32 %v4204, %v4396
        %4398 = vmatprep.mubr.bf16.mxu0 %v631
        %4399 = vmatmul.mubr.bf16.gmra.mrb[0].mxu0 %v630
        %v4400 = vpop.f32.mrb[0].mxu0
        %v4401 = vadd.f32 %v4208, %v4400
        %v4402 = vpop.f32.mrb[0].mxu0
        %v4403 = vadd.f32 %v4210, %v4402
        %v4404 = vpop.f32.mrb[0].mxu0
        %v4405 = vadd.f32 %v4212, %v4404
        %v4406 = vpop.f32.mrb[0].mxu0
        %v4407 = vadd.f32 %v4214, %v4406
        %4408 = vmatprep.mubr.bf16.mxu0 %v638
        %4409 = vmatmul.mubr.bf16.gmra.mrb[0].mxu0 %v637
        %v4410 = vpop.f32.mrb[0].mxu0
        %v4411 = vadd.f32 %v4218, %v4410
        %v4412 = vpop.f32.mrb[0].mxu0
        %v4413 = vadd.f32 %v4220, %v4412
        %v4414 = vpop.f32.mrb[0].mxu0
        %v4415 = vadd.f32 %v4222, %v4414
        %v4416 = vpop.f32.mrb[0].mxu0
        %v4417 = vadd.f32 %v4224, %v4416
        %4418 = vmatprep.mubr.bf16.mxu0 %v645
        %4419 = vmatmul.mubr.bf16.gmra.mrb[0].mxu0 %v644
        %v4420 = vpop.f32.mrb[0].mxu0
        %v4421 = vadd.f32 %v4228, %v4420
        %v4422 = vpop.f32.mrb[0].mxu0
        %v4423 = vadd.f32 %v4230, %v4422
        %v4424 = vpop.f32.mrb[0].mxu0
        %v4425 = vadd.f32 %v4232, %v4424
        %v4426 = vpop.f32.mrb[0].mxu0
        %v4427 = vadd.f32 %v4234, %v4426
        %4428 = vmatprep.mubr.bf16.mxu0 %v652
        %4429 = vmatmul.mubr.bf16.gmra.mrb[0].mxu0 %v651
        %v4430 = vpop.f32.mrb[0].mxu0
        %v4431 = vadd.f32 %v4238, %v4430
        %v4432 = vpop.f32.mrb[0].mxu0
        %v4433 = vadd.f32 %v4240, %v4432
        %v4434 = vpop.f32.mrb[0].mxu0
        %v4435 = vadd.f32 %v4242, %v4434
        %v4436 = vpop.f32.mrb[0].mxu0
        %v4437 = vadd.f32 %v4244, %v4436
        %4438 = vmatprep.mubr.bf16.mxu0 %v659
        %4439 = vmatmul.mubr.bf16.gmra.mrb[0].mxu0 %v658
        %v4440 = vpop.f32.mrb[0].mxu0
        %v4441 = vadd.f32 %v4248, %v4440
        %v4442 = vpop.f32.mrb[0].mxu0
        %v4443 = vadd.f32 %v4250, %v4442
        %v4444 = vpop.f32.mrb[0].mxu0
        %v4445 = vadd.f32 %v4252, %v4444
        %v4446 = vpop.f32.mrb[0].mxu0
        %v4447 = vadd.f32 %v4254, %v4446
        %4448 = vmatprep.mubr.bf16.mxu0 %v666
        %4449 = vmatmul.mubr.bf16.gmra.mrb[0].mxu0 %v665
        %v4450 = vpop.f32.mrb[0].mxu0
        %v4451 = vadd.f32 %v4258, %v4450
        %v4452 = vpop.f32.mrb[0].mxu0
        %v4453 = vadd.f32 %v4260, %v4452
        %v4454 = vpop.f32.mrb[0].mxu0
        %v4455 = vadd.f32 %v4262, %v4454
        %v4456 = vpop.f32.mrb[0].mxu0
        %v4457 = vadd.f32 %v4264, %v4456
        %4458 = vmatprep.mubr.bf16.mxu0 %v673
        %4459 = vmatmul.mubr.bf16.gmra.mrb[0].mxu0 %v672
        %v4460 = vpop.f32.mrb[0].mxu0
        %v4461 = vadd.f32 %v4268, %v4460
        %v4462 = vpop.f32.mrb[0].mxu0
        %v4463 = vadd.f32 %v4270, %v4462
        %v4464 = vpop.f32.mrb[0].mxu0
        %v4465 = vadd.f32 %v4272, %v4464
        %v4466 = vpop.f32.mrb[0].mxu0
        %v4467 = vadd.f32 %v4274, %v4466
        %4468 = vdwg.mxu0
        %4469 = vmatprep.subr.bf16.mxu0 %v2672
        %4470 = vmatpush1.bf16.msra.mxu0 %v2671
        %4471 = vmatprep.subr.bf16.mxu0 0
        %4472 = vmatpush1.bf16.msra.mxu0 0
        %4473 = vmatprep.subr.bf16.mxu0 0
        %4474 = vmatpush1.bf16.msra.mxu0 0
        %4475 = vmatprep.subr.bf16.mxu0 0
        %4476 = vmatpush1.bf16.msra.mxu0 0
        %4477 = vmatprep.subr.bf16.mxu0 0
        %4478 = vmatpush1.bf16.msra.mxu0 0
        %4479 = vmatprep.subr.bf16.mxu0 0
        %4480 = vmatpush1.bf16.msra.mxu0 0
        %4481 = vmatprep.subr.bf16.mxu0 0
        %4482 = vmatpush1.bf16.msra.mxu0 0
        %4483 = vmatprep.subr.bf16.mxu0 0
        %4484 = vmatpush1.bf16.msra.mxu0 0
        %4485 = vmatprep.subr.bf16.mxu0 0
        %4486 = vmatpush1.bf16.msra.mxu0 0
        %4487 = vmatprep.subr.bf16.mxu0 0
        %4488 = vmatpush1.bf16.msra.mxu0 0
        %4489 = vmatprep.subr.bf16.mxu0 0
        %4490 = vmatpush1.bf16.msra.mxu0 0
        %4491 = vmatprep.subr.bf16.mxu0 0
        %4492 = vmatpush1.bf16.msra.mxu0 0
        %4493 = vmatprep.subr.bf16.mxu0 0
        %4494 = vmatpush1.bf16.msra.mxu0 0
        %4495 = vmatprep.subr.bf16.mxu0 0
        %4496 = vmatpush1.bf16.msra.mxu0 0
        %4497 = vmatprep.subr.bf16.mxu0 0
        %4498 = vmatpush1.bf16.msra.mxu0 0
        %4499 = vmatprep.subr.bf16.mxu0 0
        %4500 = vmatpush1.bf16.msra.mxu0 0
        %4501 = vmatprep.mubr.bf16.mxu0 0
        %4502 = vmatmul.mubr.bf16.gmra.mrb[0].mxu0 %v3071
        %v4503 = vpop.f32.mrb[0].mxu0
        %v4504 = vadd.f32 %v4311, %v4503
        %v4505 = vpop.f32.mrb[0].mxu0
        %v4506 = vadd.f32 %v4313, %v4505
        %v4507 = vpop.f32.mrb[0].mxu0
        %v4508 = vadd.f32 %v4315, %v4507
        %v4509 = vpop.f32.mrb[0].mxu0
        %v4510 = vadd.f32 %v4317, %v4509
        %4511 = vmatprep.mubr.bf16.mxu0 0
        %4512 = vmatmul.mubr.bf16.gmra.mrb[0].mxu0 %v3074
        %v4513 = vpop.f32.mrb[0].mxu0
        %v4514 = vadd.f32 %v4321, %v4513
        %v4515 = vpop.f32.mrb[0].mxu0
        %v4516 = vadd.f32 %v4323, %v4515
        %v4517 = vpop.f32.mrb[0].mxu0
        %v4518 = vadd.f32 %v4325, %v4517
        %v4519 = vpop.f32.mrb[0].mxu0
        %v4520 = vadd.f32 %v4327, %v4519
        %4521 = vmatprep.mubr.bf16.mxu0 0
        %4522 = vmatmul.mubr.bf16.gmra.mrb[0].mxu0 %v3077
        %v4523 = vpop.f32.mrb[0].mxu0
        %v4524 = vadd.f32 %v4331, %v4523
        %v4525 = vpop.f32.mrb[0].mxu0
        %v4526 = vadd.f32 %v4333, %v4525
        %v4527 = vpop.f32.mrb[0].mxu0
        %v4528 = vadd.f32 %v4335, %v4527
        %v4529 = vpop.f32.mrb[0].mxu0
        %v4530 = vadd.f32 %v4337, %v4529
        %4531 = vmatprep.mubr.bf16.mxu0 0
        %4532 = vmatmul.mubr.bf16.gmra.mrb[0].mxu0 %v3080
        %v4533 = vpop.f32.mrb[0].mxu0
        %v4534 = vadd.f32 %v4341, %v4533
        %v4535 = vpop.f32.mrb[0].mxu0
        %v4536 = vadd.f32 %v4343, %v4535
        %v4537 = vpop.f32.mrb[0].mxu0
        %v4538 = vadd.f32 %v4345, %v4537
        %v4539 = vpop.f32.mrb[0].mxu0
        %v4540 = vadd.f32 %v4347, %v4539
        %4541 = vmatprep.mubr.bf16.mxu0 0
        %4542 = vmatmul.mubr.bf16.gmra.mrb[0].mxu0 %v3083
        %v4543 = vpop.f32.mrb[0].mxu0
        %v4544 = vadd.f32 %v4351, %v4543
        %v4545 = vpop.f32.mrb[0].mxu0
        %v4546 = vadd.f32 %v4353, %v4545
        %v4547 = vpop.f32.mrb[0].mxu0
        %v4548 = vadd.f32 %v4355, %v4547
        %v4549 = vpop.f32.mrb[0].mxu0
        %v4550 = vadd.f32 %v4357, %v4549
        %4551 = vmatprep.mubr.bf16.mxu0 0
        %4552 = vmatmul.mubr.bf16.gmra.mrb[0].mxu0 %v3086
        %v4553 = vpop.f32.mrb[0].mxu0
        %v4554 = vadd.f32 %v4361, %v4553
        %v4555 = vpop.f32.mrb[0].mxu0
        %v4556 = vadd.f32 %v4363, %v4555
        %v4557 = vpop.f32.mrb[0].mxu0
        %v4558 = vadd.f32 %v4365, %v4557
        %v4559 = vpop.f32.mrb[0].mxu0
        %v4560 = vadd.f32 %v4367, %v4559
        %4561 = vmatprep.mubr.bf16.mxu0 0
        %4562 = vmatmul.mubr.bf16.gmra.mrb[0].mxu0 %v3089
        %v4563 = vpop.f32.mrb[0].mxu0
        %v4564 = vadd.f32 %v4371, %v4563
        %v4565 = vpop.f32.mrb[0].mxu0
        %v4566 = vadd.f32 %v4373, %v4565
        %v4567 = vpop.f32.mrb[0].mxu0
        %v4568 = vadd.f32 %v4375, %v4567
        %v4569 = vpop.f32.mrb[0].mxu0
        %v4570 = vadd.f32 %v4377, %v4569
        %4571 = vmatprep.mubr.bf16.mxu0 0
        %4572 = vmatmul.mubr.bf16.gmra.mrb[0].mxu0 %v3092
        %v4573 = vpop.f32.mrb[0].mxu0
        %v4574 = vadd.f32 %v4381, %v4573
        %v4575 = vpop.f32.mrb[0].mxu0
        %v4576 = vadd.f32 %v4383, %v4575
        %v4577 = vpop.f32.mrb[0].mxu0
        %v4578 = vadd.f32 %v4385, %v4577
        %v4579 = vpop.f32.mrb[0].mxu0
        %v4580 = vadd.f32 %v4387, %v4579
        %4581 = vmatprep.mubr.bf16.mxu0 0
        %4582 = vmatmul.mubr.bf16.gmra.mrb[0].mxu0 %v3095
        %v4583 = vpop.f32.mrb[0].mxu0
        %v4584 = vadd.f32 %v4391, %v4583
        %v4585 = vpop.f32.mrb[0].mxu0
        %v4586 = vadd.f32 %v4393, %v4585
        %v4587 = vpop.f32.mrb[0].mxu0
        %v4588 = vadd.f32 %v4395, %v4587
        %v4589 = vpop.f32.mrb[0].mxu0
        %v4590 = vadd.f32 %v4397, %v4589
        %4591 = vmatprep.mubr.bf16.mxu0 0
        %4592 = vmatmul.mubr.bf16.gmra.mrb[0].mxu0 %v3098
        %v4593 = vpop.f32.mrb[0].mxu0
        %v4594 = vadd.f32 %v4401, %v4593
        %v4595 = vpop.f32.mrb[0].mxu0
        %v4596 = vadd.f32 %v4403, %v4595
        %v4597 = vpop.f32.mrb[0].mxu0
        %v4598 = vadd.f32 %v4405, %v4597
        %v4599 = vpop.f32.mrb[0].mxu0
        %v4600 = vadd.f32 %v4407, %v4599
        %4601 = vmatprep.mubr.bf16.mxu0 0
        %4602 = vmatmul.mubr.bf16.gmra.mrb[0].mxu0 %v3101
        %v4603 = vpop.f32.mrb[0].mxu0
        %v4604 = vadd.f32 %v4411, %v4603
        %v4605 = vpop.f32.mrb[0].mxu0
        %v4606 = vadd.f32 %v4413, %v4605
        %v4607 = vpop.f32.mrb[0].mxu0
        %v4608 = vadd.f32 %v4415, %v4607
        %v4609 = vpop.f32.mrb[0].mxu0
        %v4610 = vadd.f32 %v4417, %v4609
        %4611 = vmatprep.mubr.bf16.mxu0 0
        %4612 = vmatmul.mubr.bf16.gmra.mrb[0].mxu0 %v3104
        %v4613 = vpop.f32.mrb[0].mxu0
        %v4614 = vadd.f32 %v4421, %v4613
        %v4615 = vpop.f32.mrb[0].mxu0
        %v4616 = vadd.f32 %v4423, %v4615
        %v4617 = vpop.f32.mrb[0].mxu0
        %v4618 = vadd.f32 %v4425, %v4617
        %v4619 = vpop.f32.mrb[0].mxu0
        %v4620 = vadd.f32 %v4427, %v4619
        %4621 = vmatprep.mubr.bf16.mxu0 0
        %4622 = vmatmul.mubr.bf16.gmra.mrb[0].mxu0 %v3107
        %v4623 = vpop.f32.mrb[0].mxu0
        %v4624 = vadd.f32 %v4431, %v4623
        %v4625 = vpop.f32.mrb[0].mxu0
        %v4626 = vadd.f32 %v4433, %v4625
        %v4627 = vpop.f32.mrb[0].mxu0
        %v4628 = vadd.f32 %v4435, %v4627
        %v4629 = vpop.f32.mrb[0].mxu0
        %v4630 = vadd.f32 %v4437, %v4629
        %4631 = vmatprep.mubr.bf16.mxu0 0
        %4632 = vmatmul.mubr.bf16.gmra.mrb[0].mxu0 %v3110
        %v4633 = vpop.f32.mrb[0].mxu0
        %v4634 = vadd.f32 %v4441, %v4633
        %v4635 = vpop.f32.mrb[0].mxu0
        %v4636 = vadd.f32 %v4443, %v4635
        %v4637 = vpop.f32.mrb[0].mxu0
        %v4638 = vadd.f32 %v4445, %v4637
        %v4639 = vpop.f32.mrb[0].mxu0
        %v4640 = vadd.f32 %v4447, %v4639
        %4641 = vmatprep.mubr.bf16.mxu0 0
        %4642 = vmatmul.mubr.bf16.gmra.mrb[0].mxu0 %v3113
        %v4643 = vpop.f32.mrb[0].mxu0
        %v4644 = vadd.f32 %v4451, %v4643
        %v4645 = vpop.f32.mrb[0].mxu0
        %v4646 = vadd.f32 %v4453, %v4645
        %v4647 = vpop.f32.mrb[0].mxu0
        %v4648 = vadd.f32 %v4455, %v4647
        %v4649 = vpop.f32.mrb[0].mxu0
        %v4650 = vadd.f32 %v4457, %v4649
        %4651 = vmatprep.mubr.bf16.mxu0 0
        %4652 = vmatmul.mubr.bf16.gmra.mrb[0].mxu0 %v3116
        %v4653 = vpop.f32.mrb[0].mxu0
        %v4654 = vadd.f32 %v4461, %v4653
        %v4655 = vpop.f32.mrb[0].mxu0
        %v4656 = vadd.f32 %v4463, %v4655
        %v4657 = vpop.f32.mrb[0].mxu0
        %v4658 = vadd.f32 %v4465, %v4657
        %v4659 = vpop.f32.mrb[0].mxu0
        %v4660 = vadd.f32 %v4467, %v4659
        %4661 = vdwg.mxu0
        %4662 = vmatprep.subr.bf16.mxu0 %v2290
        %4663 = vmatpush1.bf16.msra.mxu0 %v2289
        %4664 = vmatprep.subr.bf16.mxu0 %v2298
        %4665 = vmatpush1.bf16.msra.mxu0 %v2297
        %4666 = vmatprep.subr.bf16.mxu0 %v2306
        %4667 = vmatpush1.bf16.msra.mxu0 %v2305
        %4668 = vmatprep.subr.bf16.mxu0 %v2314
        %4669 = vmatpush1.bf16.msra.mxu0 %v2313
        %4670 = vmatprep.subr.bf16.mxu0 %v2322
        %4671 = vmatpush1.bf16.msra.mxu0 %v2321
        %4672 = vmatprep.subr.bf16.mxu0 %v2330
        %4673 = vmatpush1.bf16.msra.mxu0 %v2329
        %4674 = vmatprep.subr.bf16.mxu0 %v2338
        %4675 = vmatpush1.bf16.msra.mxu0 %v2337
        %4676 = vmatprep.subr.bf16.mxu0 %v2346
        %4677 = vmatpush1.bf16.msra.mxu0 %v2345
        %4678 = vmatprep.subr.bf16.mxu0 %v2354
        %4679 = vmatpush1.bf16.msra.mxu0 %v2353
        %4680 = vmatprep.subr.bf16.mxu0 %v2362
        %4681 = vmatpush1.bf16.msra.mxu0 %v2361
        %4682 = vmatprep.subr.bf16.mxu0 %v2370
        %4683 = vmatpush1.bf16.msra.mxu0 %v2369
        %4684 = vmatprep.subr.bf16.mxu0 %v2378
        %4685 = vmatpush1.bf16.msra.mxu0 %v2377
        %4686 = vmatprep.subr.bf16.mxu0 %v2386
        %4687 = vmatpush1.bf16.msra.mxu0 %v2385
        %4688 = vmatprep.subr.bf16.mxu0 %v2394
        %4689 = vmatpush1.bf16.msra.mxu0 %v2393
        %4690 = vmatprep.subr.bf16.mxu0 %v2402
        %4691 = vmatpush1.bf16.msra.mxu0 %v2401
        %4692 = vmatprep.subr.bf16.mxu0 %v2410
        %4693 = vmatpush1.bf16.msra.mxu0 %v2409
        %4694 = vmatprep.mubr.bf16.mxu0 %v564
        %4695 = vmatmul.mubr.bf16.gmra.mrb[0].mxu0 %v563
        %v4696 = vpop.f32.mrb[0].mxu0
        %v4697 = vadd.f32 %v1088, %v4696
        %v4698 = vpop.f32.mrb[0].mxu0
        %v4699 = vadd.f32 %v1092, %v4698
        %v4700 = vpop.f32.mrb[0].mxu0
        %v4701 = vadd.f32 %v1088, %v4700
        %v4702 = vpop.f32.mrb[0].mxu0
        %v4703 = vadd.f32 %v1092, %v4702
        %4704 = vmatprep.mubr.bf16.mxu0 %v571
        %4705 = vmatmul.mubr.bf16.gmra.mrb[0].mxu0 %v570
        %v4706 = vpop.f32.mrb[0].mxu0
        %v4707 = vadd.f32 %v1088, %v4706
        %v4708 = vpop.f32.mrb[0].mxu0
        %v4709 = vadd.f32 %v1092, %v4708
        %v4710 = vpop.f32.mrb[0].mxu0
        %v4711 = vadd.f32 %v1088, %v4710
        %v4712 = vpop.f32.mrb[0].mxu0
        %v4713 = vadd.f32 %v1092, %v4712
        %4714 = vmatprep.mubr.bf16.mxu0 %v578
        %4715 = vmatmul.mubr.bf16.gmra.mrb[0].mxu0 %v577
        %v4716 = vpop.f32.mrb[0].mxu0
        %v4717 = vadd.f32 %v1088, %v4716
        %v4718 = vpop.f32.mrb[0].mxu0
        %v4719 = vadd.f32 %v1092, %v4718
        %v4720 = vpop.f32.mrb[0].mxu0
        %v4721 = vadd.f32 %v1088, %v4720
        %v4722 = vpop.f32.mrb[0].mxu0
        %v4723 = vadd.f32 %v1092, %v4722
        %4724 = vmatprep.mubr.bf16.mxu0 %v585
        %4725 = vmatmul.mubr.bf16.gmra.mrb[0].mxu0 %v584
        %v4726 = vpop.f32.mrb[0].mxu0
        %v4727 = vadd.f32 %v1088, %v4726
        %v4728 = vpop.f32.mrb[0].mxu0
        %v4729 = vadd.f32 %v1092, %v4728
        %v4730 = vpop.f32.mrb[0].mxu0
        %v4731 = vadd.f32 %v1088, %v4730
        %v4732 = vpop.f32.mrb[0].mxu0
        %v4733 = vadd.f32 %v1092, %v4732
        %4734 = vmatprep.mubr.bf16.mxu0 %v592
        %4735 = vmatmul.mubr.bf16.gmra.mrb[0].mxu0 %v591
        %v4736 = vpop.f32.mrb[0].mxu0
        %v4737 = vadd.f32 %v1088, %v4736
        %v4738 = vpop.f32.mrb[0].mxu0
        %v4739 = vadd.f32 %v1092, %v4738
        %v4740 = vpop.f32.mrb[0].mxu0
        %v4741 = vadd.f32 %v1088, %v4740
        %v4742 = vpop.f32.mrb[0].mxu0
        %v4743 = vadd.f32 %v1092, %v4742
        %4744 = vmatprep.mubr.bf16.mxu0 %v599
        %4745 = vmatmul.mubr.bf16.gmra.mrb[0].mxu0 %v598
        %v4746 = vpop.f32.mrb[0].mxu0
        %v4747 = vadd.f32 %v1088, %v4746
        %v4748 = vpop.f32.mrb[0].mxu0
        %v4749 = vadd.f32 %v1092, %v4748
        %v4750 = vpop.f32.mrb[0].mxu0
        %v4751 = vadd.f32 %v1088, %v4750
        %v4752 = vpop.f32.mrb[0].mxu0
        %v4753 = vadd.f32 %v1092, %v4752
        %4754 = vmatprep.mubr.bf16.mxu0 %v606
        %4755 = vmatmul.mubr.bf16.gmra.mrb[0].mxu0 %v605
        %v4756 = vpop.f32.mrb[0].mxu0
        %v4757 = vadd.f32 %v1088, %v4756
        %v4758 = vpop.f32.mrb[0].mxu0
        %v4759 = vadd.f32 %v1092, %v4758
        %v4760 = vpop.f32.mrb[0].mxu0
        %v4761 = vadd.f32 %v1088, %v4760
        %v4762 = vpop.f32.mrb[0].mxu0
        %v4763 = vadd.f32 %v1092, %v4762
        %4764 = vmatprep.mubr.bf16.mxu0 %v613
        %4765 = vmatmul.mubr.bf16.gmra.mrb[0].mxu0 %v612
        %v4766 = vpop.f32.mrb[0].mxu0
        %v4767 = vadd.f32 %v1088, %v4766
        %v4768 = vpop.f32.mrb[0].mxu0
        %v4769 = vadd.f32 %v1092, %v4768
        %v4770 = vpop.f32.mrb[0].mxu0
        %v4771 = vadd.f32 %v1088, %v4770
        %v4772 = vpop.f32.mrb[0].mxu0
        %v4773 = vadd.f32 %v1092, %v4772
        %4774 = vmatprep.mubr.bf16.mxu0 %v620
        %4775 = vmatmul.mubr.bf16.gmra.mrb[0].mxu0 %v619
        %v4776 = vpop.f32.mrb[0].mxu0
        %v4777 = vadd.f32 %v1088, %v4776
        %v4778 = vpop.f32.mrb[0].mxu0
        %v4779 = vadd.f32 %v1092, %v4778
        %v4780 = vpop.f32.mrb[0].mxu0
        %v4781 = vadd.f32 %v1088, %v4780
        %v4782 = vpop.f32.mrb[0].mxu0
        %v4783 = vadd.f32 %v1092, %v4782
        %4784 = vmatprep.mubr.bf16.mxu0 %v627
        %4785 = vmatmul.mubr.bf16.gmra.mrb[0].mxu0 %v626
        %v4786 = vpop.f32.mrb[0].mxu0
        %v4787 = vadd.f32 %v1088, %v4786
        %v4788 = vpop.f32.mrb[0].mxu0
        %v4789 = vadd.f32 %v1092, %v4788
        %v4790 = vpop.f32.mrb[0].mxu0
        %v4791 = vadd.f32 %v1088, %v4790
        %v4792 = vpop.f32.mrb[0].mxu0
        %v4793 = vadd.f32 %v1092, %v4792
        %4794 = vmatprep.mubr.bf16.mxu0 %v634
        %4795 = vmatmul.mubr.bf16.gmra.mrb[0].mxu0 %v633
        %v4796 = vpop.f32.mrb[0].mxu0
        %v4797 = vadd.f32 %v1088, %v4796
        %v4798 = vpop.f32.mrb[0].mxu0
        %v4799 = vadd.f32 %v1092, %v4798
        %v4800 = vpop.f32.mrb[0].mxu0
        %v4801 = vadd.f32 %v1088, %v4800
        %v4802 = vpop.f32.mrb[0].mxu0
        %v4803 = vadd.f32 %v1092, %v4802
        %4804 = vmatprep.mubr.bf16.mxu0 %v641
        %4805 = vmatmul.mubr.bf16.gmra.mrb[0].mxu0 %v640
        %v4806 = vpop.f32.mrb[0].mxu0
        %v4807 = vadd.f32 %v1088, %v4806
        %v4808 = vpop.f32.mrb[0].mxu0
        %v4809 = vadd.f32 %v1092, %v4808
        %v4810 = vpop.f32.mrb[0].mxu0
        %v4811 = vadd.f32 %v1088, %v4810
        %v4812 = vpop.f32.mrb[0].mxu0
        %v4813 = vadd.f32 %v1092, %v4812
        %4814 = vmatprep.mubr.bf16.mxu0 %v648
        %4815 = vmatmul.mubr.bf16.gmra.mrb[0].mxu0 %v647
        %v4816 = vpop.f32.mrb[0].mxu0
        %v4817 = vadd.f32 %v1088, %v4816
        %v4818 = vpop.f32.mrb[0].mxu0
        %v4819 = vadd.f32 %v1092, %v4818
        %v4820 = vpop.f32.mrb[0].mxu0
        %v4821 = vadd.f32 %v1088, %v4820
        %v4822 = vpop.f32.mrb[0].mxu0
        %v4823 = vadd.f32 %v1092, %v4822
        %4824 = vmatprep.mubr.bf16.mxu0 %v655
        %4825 = vmatmul.mubr.bf16.gmra.mrb[0].mxu0 %v654
        %v4826 = vpop.f32.mrb[0].mxu0
        %v4827 = vadd.f32 %v1088, %v4826
        %v4828 = vpop.f32.mrb[0].mxu0
        %v4829 = vadd.f32 %v1092, %v4828
        %v4830 = vpop.f32.mrb[0].mxu0
        %v4831 = vadd.f32 %v1088, %v4830
        %v4832 = vpop.f32.mrb[0].mxu0
        %v4833 = vadd.f32 %v1092, %v4832
        %4834 = vmatprep.mubr.bf16.mxu0 %v662
        %4835 = vmatmul.mubr.bf16.gmra.mrb[0].mxu0 %v661
        %v4836 = vpop.f32.mrb[0].mxu0
        %v4837 = vadd.f32 %v1088, %v4836
        %v4838 = vpop.f32.mrb[0].mxu0
        %v4839 = vadd.f32 %v1092, %v4838
        %v4840 = vpop.f32.mrb[0].mxu0
        %v4841 = vadd.f32 %v1088, %v4840
        %v4842 = vpop.f32.mrb[0].mxu0
        %v4843 = vadd.f32 %v1092, %v4842
        %4844 = vmatprep.mubr.bf16.mxu0 %v669
        %4845 = vmatmul.mubr.bf16.gmra.mrb[0].mxu0 %v668
        %v4846 = vpop.f32.mrb[0].mxu0
        %v4847 = vadd.f32 %v1088, %v4846
        %v4848 = vpop.f32.mrb[0].mxu0
        %v4849 = vadd.f32 %v1092, %v4848
        %v4850 = vpop.f32.mrb[0].mxu0
        %v4851 = vadd.f32 %v1088, %v4850
        %v4852 = vpop.f32.mrb[0].mxu0
        %v4853 = vadd.f32 %v1092, %v4852
        %4854 = vdwg.mxu0
        %4855 = vmatprep.subr.bf16.mxu0 %v2418
        %4856 = vmatpush1.bf16.msra.mxu0 %v2417
        %4857 = vmatprep.subr.bf16.mxu0 %v2426
        %4858 = vmatpush1.bf16.msra.mxu0 %v2425
        %4859 = vmatprep.subr.bf16.mxu0 %v2434
        %4860 = vmatpush1.bf16.msra.mxu0 %v2433
        %4861 = vmatprep.subr.bf16.mxu0 %v2442
        %4862 = vmatpush1.bf16.msra.mxu0 %v2441
        %4863 = vmatprep.subr.bf16.mxu0 %v2450
        %4864 = vmatpush1.bf16.msra.mxu0 %v2449
        %4865 = vmatprep.subr.bf16.mxu0 %v2458
        %4866 = vmatpush1.bf16.msra.mxu0 %v2457
        %4867 = vmatprep.subr.bf16.mxu0 %v2466
        %4868 = vmatpush1.bf16.msra.mxu0 %v2465
        %4869 = vmatprep.subr.bf16.mxu0 %v2474
        %4870 = vmatpush1.bf16.msra.mxu0 %v2473
        %4871 = vmatprep.subr.bf16.mxu0 %v2482
        %4872 = vmatpush1.bf16.msra.mxu0 %v2481
        %4873 = vmatprep.subr.bf16.mxu0 %v2490
        %4874 = vmatpush1.bf16.msra.mxu0 %v2489
        %4875 = vmatprep.subr.bf16.mxu0 %v2498
        %4876 = vmatpush1.bf16.msra.mxu0 %v2497
        %4877 = vmatprep.subr.bf16.mxu0 %v2506
        %4878 = vmatpush1.bf16.msra.mxu0 %v2505
        %4879 = vmatprep.subr.bf16.mxu0 %v2514
        %4880 = vmatpush1.bf16.msra.mxu0 %v2513
        %4881 = vmatprep.subr.bf16.mxu0 %v2522
        %4882 = vmatpush1.bf16.msra.mxu0 %v2521
        %4883 = vmatprep.subr.bf16.mxu0 %v2530
        %4884 = vmatpush1.bf16.msra.mxu0 %v2529
        %4885 = vmatprep.subr.bf16.mxu0 %v2538
        %4886 = vmatpush1.bf16.msra.mxu0 %v2537
        %4887 = vmatprep.mubr.bf16.mxu0 %v566
        %4888 = vmatmul.mubr.bf16.gmra.mrb[0].mxu0 %v565
        %v4889 = vpop.f32.mrb[0].mxu0
        %v4890 = vadd.f32 %v4697, %v4889
        %v4891 = vpop.f32.mrb[0].mxu0
        %v4892 = vadd.f32 %v4699, %v4891
        %v4893 = vpop.f32.mrb[0].mxu0
        %v4894 = vadd.f32 %v4701, %v4893
        %v4895 = vpop.f32.mrb[0].mxu0
        %v4896 = vadd.f32 %v4703, %v4895
        %4897 = vmatprep.mubr.bf16.mxu0 %v573
        %4898 = vmatmul.mubr.bf16.gmra.mrb[0].mxu0 %v572
        %v4899 = vpop.f32.mrb[0].mxu0
        %v4900 = vadd.f32 %v4707, %v4899
        %v4901 = vpop.f32.mrb[0].mxu0
        %v4902 = vadd.f32 %v4709, %v4901
        %v4903 = vpop.f32.mrb[0].mxu0
        %v4904 = vadd.f32 %v4711, %v4903
        %v4905 = vpop.f32.mrb[0].mxu0
        %v4906 = vadd.f32 %v4713, %v4905
        %4907 = vmatprep.mubr.bf16.mxu0 %v580
        %4908 = vmatmul.mubr.bf16.gmra.mrb[0].mxu0 %v579
        %v4909 = vpop.f32.mrb[0].mxu0
        %v4910 = vadd.f32 %v4717, %v4909
        %v4911 = vpop.f32.mrb[0].mxu0
        %v4912 = vadd.f32 %v4719, %v4911
        %v4913 = vpop.f32.mrb[0].mxu0
        %v4914 = vadd.f32 %v4721, %v4913
        %v4915 = vpop.f32.mrb[0].mxu0
        %v4916 = vadd.f32 %v4723, %v4915
        %4917 = vmatprep.mubr.bf16.mxu0 %v587
        %4918 = vmatmul.mubr.bf16.gmra.mrb[0].mxu0 %v586
        %v4919 = vpop.f32.mrb[0].mxu0
        %v4920 = vadd.f32 %v4727, %v4919
        %v4921 = vpop.f32.mrb[0].mxu0
        %v4922 = vadd.f32 %v4729, %v4921
        %v4923 = vpop.f32.mrb[0].mxu0
        %v4924 = vadd.f32 %v4731, %v4923
        %v4925 = vpop.f32.mrb[0].mxu0
        %v4926 = vadd.f32 %v4733, %v4925
        %4927 = vmatprep.mubr.bf16.mxu0 %v594
        %4928 = vmatmul.mubr.bf16.gmra.mrb[0].mxu0 %v593
        %v4929 = vpop.f32.mrb[0].mxu0
        %v4930 = vadd.f32 %v4737, %v4929
        %v4931 = vpop.f32.mrb[0].mxu0
        %v4932 = vadd.f32 %v4739, %v4931
        %v4933 = vpop.f32.mrb[0].mxu0
        %v4934 = vadd.f32 %v4741, %v4933
        %v4935 = vpop.f32.mrb[0].mxu0
        %v4936 = vadd.f32 %v4743, %v4935
        %4937 = vmatprep.mubr.bf16.mxu0 %v601
        %4938 = vmatmul.mubr.bf16.gmra.mrb[0].mxu0 %v600
        %v4939 = vpop.f32.mrb[0].mxu0
        %v4940 = vadd.f32 %v4747, %v4939
        %v4941 = vpop.f32.mrb[0].mxu0
        %v4942 = vadd.f32 %v4749, %v4941
        %v4943 = vpop.f32.mrb[0].mxu0
        %v4944 = vadd.f32 %v4751, %v4943
        %v4945 = vpop.f32.mrb[0].mxu0
        %v4946 = vadd.f32 %v4753, %v4945
        %4947 = vmatprep.mubr.bf16.mxu0 %v608
        %4948 = vmatmul.mubr.bf16.gmra.mrb[0].mxu0 %v607
        %v4949 = vpop.f32.mrb[0].mxu0
        %v4950 = vadd.f32 %v4757, %v4949
        %v4951 = vpop.f32.mrb[0].mxu0
        %v4952 = vadd.f32 %v4759, %v4951
        %v4953 = vpop.f32.mrb[0].mxu0
        %v4954 = vadd.f32 %v4761, %v4953
        %v4955 = vpop.f32.mrb[0].mxu0
        %v4956 = vadd.f32 %v4763, %v4955
        %4957 = vmatprep.mubr.bf16.mxu0 %v615
        %4958 = vmatmul.mubr.bf16.gmra.mrb[0].mxu0 %v614
        %v4959 = vpop.f32.mrb[0].mxu0
        %v4960 = vadd.f32 %v4767, %v4959
        %v4961 = vpop.f32.mrb[0].mxu0
        %v4962 = vadd.f32 %v4769, %v4961
        %v4963 = vpop.f32.mrb[0].mxu0
        %v4964 = vadd.f32 %v4771, %v4963
        %v4965 = vpop.f32.mrb[0].mxu0
        %v4966 = vadd.f32 %v4773, %v4965
        %4967 = vmatprep.mubr.bf16.mxu0 %v622
        %4968 = vmatmul.mubr.bf16.gmra.mrb[0].mxu0 %v621
        %v4969 = vpop.f32.mrb[0].mxu0
        %v4970 = vadd.f32 %v4777, %v4969
        %v4971 = vpop.f32.mrb[0].mxu0
        %v4972 = vadd.f32 %v4779, %v4971
        %v4973 = vpop.f32.mrb[0].mxu0
        %v4974 = vadd.f32 %v4781, %v4973
        %v4975 = vpop.f32.mrb[0].mxu0
        %v4976 = vadd.f32 %v4783, %v4975
        %4977 = vmatprep.mubr.bf16.mxu0 %v629
        %4978 = vmatmul.mubr.bf16.gmra.mrb[0].mxu0 %v628
        %v4979 = vpop.f32.mrb[0].mxu0
        %v4980 = vadd.f32 %v4787, %v4979
        %v4981 = vpop.f32.mrb[0].mxu0
        %v4982 = vadd.f32 %v4789, %v4981
        %v4983 = vpop.f32.mrb[0].mxu0
        %v4984 = vadd.f32 %v4791, %v4983
        %v4985 = vpop.f32.mrb[0].mxu0
        %v4986 = vadd.f32 %v4793, %v4985
        %4987 = vmatprep.mubr.bf16.mxu0 %v636
        %4988 = vmatmul.mubr.bf16.gmra.mrb[0].mxu0 %v635
        %v4989 = vpop.f32.mrb[0].mxu0
        %v4990 = vadd.f32 %v4797, %v4989
        %v4991 = vpop.f32.mrb[0].mxu0
        %v4992 = vadd.f32 %v4799, %v4991
        %v4993 = vpop.f32.mrb[0].mxu0
        %v4994 = vadd.f32 %v4801, %v4993
        %v4995 = vpop.f32.mrb[0].mxu0
        %v4996 = vadd.f32 %v4803, %v4995
        %4997 = vmatprep.mubr.bf16.mxu0 %v643
        %4998 = vmatmul.mubr.bf16.gmra.mrb[0].mxu0 %v642
        %v4999 = vpop.f32.mrb[0].mxu0
        %v5000 = vadd.f32 %v4807, %v4999
        %v5001 = vpop.f32.mrb[0].mxu0
        %v5002 = vadd.f32 %v4809, %v5001
        %v5003 = vpop.f32.mrb[0].mxu0
        %v5004 = vadd.f32 %v4811, %v5003
        %v5005 = vpop.f32.mrb[0].mxu0
        %v5006 = vadd.f32 %v4813, %v5005
        %5007 = vmatprep.mubr.bf16.mxu0 %v650
        %5008 = vmatmul.mubr.bf16.gmra.mrb[0].mxu0 %v649
        %v5009 = vpop.f32.mrb[0].mxu0
        %v5010 = vadd.f32 %v4817, %v5009
        %v5011 = vpop.f32.mrb[0].mxu0
        %v5012 = vadd.f32 %v4819, %v5011
        %v5013 = vpop.f32.mrb[0].mxu0
        %v5014 = vadd.f32 %v4821, %v5013
        %v5015 = vpop.f32.mrb[0].mxu0
        %v5016 = vadd.f32 %v4823, %v5015
        %5017 = vmatprep.mubr.bf16.mxu0 %v657
        %5018 = vmatmul.mubr.bf16.gmra.mrb[0].mxu0 %v656
        %v5019 = vpop.f32.mrb[0].mxu0
        %v5020 = vadd.f32 %v4827, %v5019
        %v5021 = vpop.f32.mrb[0].mxu0
        %v5022 = vadd.f32 %v4829, %v5021
        %v5023 = vpop.f32.mrb[0].mxu0
        %v5024 = vadd.f32 %v4831, %v5023
        %v5025 = vpop.f32.mrb[0].mxu0
        %v5026 = vadd.f32 %v4833, %v5025
        %5027 = vmatprep.mubr.bf16.mxu0 %v664
        %5028 = vmatmul.mubr.bf16.gmra.mrb[0].mxu0 %v663
        %v5029 = vpop.f32.mrb[0].mxu0
        %v5030 = vadd.f32 %v4837, %v5029
        %v5031 = vpop.f32.mrb[0].mxu0
        %v5032 = vadd.f32 %v4839, %v5031
        %v5033 = vpop.f32.mrb[0].mxu0
        %v5034 = vadd.f32 %v4841, %v5033
        %v5035 = vpop.f32.mrb[0].mxu0
        %v5036 = vadd.f32 %v4843, %v5035
        %5037 = vmatprep.mubr.bf16.mxu0 %v671
        %5038 = vmatmul.mubr.bf16.gmra.mrb[0].mxu0 %v670
        %v5039 = vpop.f32.mrb[0].mxu0
        %v5040 = vadd.f32 %v4847, %v5039
        %v5041 = vpop.f32.mrb[0].mxu0
        %v5042 = vadd.f32 %v4849, %v5041
        %v5043 = vpop.f32.mrb[0].mxu0
        %v5044 = vadd.f32 %v4851, %v5043
        %v5045 = vpop.f32.mrb[0].mxu0
        %v5046 = vadd.f32 %v4853, %v5045
        %5047 = vdwg.mxu0
        %5048 = vmatprep.subr.bf16.mxu0 %v2546
        %5049 = vmatpush1.bf16.msra.mxu0 %v2545
        %5050 = vmatprep.subr.bf16.mxu0 %v2554
        %5051 = vmatpush1.bf16.msra.mxu0 %v2553
        %5052 = vmatprep.subr.bf16.mxu0 %v2562
        %5053 = vmatpush1.bf16.msra.mxu0 %v2561
        %5054 = vmatprep.subr.bf16.mxu0 %v2570
        %5055 = vmatpush1.bf16.msra.mxu0 %v2569
        %5056 = vmatprep.subr.bf16.mxu0 %v2578
        %5057 = vmatpush1.bf16.msra.mxu0 %v2577
        %5058 = vmatprep.subr.bf16.mxu0 %v2586
        %5059 = vmatpush1.bf16.msra.mxu0 %v2585
        %5060 = vmatprep.subr.bf16.mxu0 %v2594
        %5061 = vmatpush1.bf16.msra.mxu0 %v2593
        %5062 = vmatprep.subr.bf16.mxu0 %v2602
        %5063 = vmatpush1.bf16.msra.mxu0 %v2601
        %5064 = vmatprep.subr.bf16.mxu0 %v2610
        %5065 = vmatpush1.bf16.msra.mxu0 %v2609
        %5066 = vmatprep.subr.bf16.mxu0 %v2618
        %5067 = vmatpush1.bf16.msra.mxu0 %v2617
        %5068 = vmatprep.subr.bf16.mxu0 %v2626
        %5069 = vmatpush1.bf16.msra.mxu0 %v2625
        %5070 = vmatprep.subr.bf16.mxu0 %v2634
        %5071 = vmatpush1.bf16.msra.mxu0 %v2633
        %5072 = vmatprep.subr.bf16.mxu0 %v2642
        %5073 = vmatpush1.bf16.msra.mxu0 %v2641
        %5074 = vmatprep.subr.bf16.mxu0 %v2650
        %5075 = vmatpush1.bf16.msra.mxu0 %v2649
        %5076 = vmatprep.subr.bf16.mxu0 %v2658
        %5077 = vmatpush1.bf16.msra.mxu0 %v2657
        %5078 = vmatprep.subr.bf16.mxu0 %v2666
        %5079 = vmatpush1.bf16.msra.mxu0 %v2665
        %5080 = vmatprep.mubr.bf16.mxu0 %v568
        %5081 = vmatmul.mubr.bf16.gmra.mrb[0].mxu0 %v567
        %v5082 = vpop.f32.mrb[0].mxu0
        %v5083 = vadd.f32 %v4890, %v5082
        %v5084 = vpop.f32.mrb[0].mxu0
        %v5085 = vadd.f32 %v4892, %v5084
        %v5086 = vpop.f32.mrb[0].mxu0
        %v5087 = vadd.f32 %v4894, %v5086
        %v5088 = vpop.f32.mrb[0].mxu0
        %v5089 = vadd.f32 %v4896, %v5088
        %5090 = vmatprep.mubr.bf16.mxu0 %v575
        %5091 = vmatmul.mubr.bf16.gmra.mrb[0].mxu0 %v574
        %v5092 = vpop.f32.mrb[0].mxu0
        %v5093 = vadd.f32 %v4900, %v5092
        %v5094 = vpop.f32.mrb[0].mxu0
        %v5095 = vadd.f32 %v4902, %v5094
        %v5096 = vpop.f32.mrb[0].mxu0
        %v5097 = vadd.f32 %v4904, %v5096
        %v5098 = vpop.f32.mrb[0].mxu0
        %v5099 = vadd.f32 %v4906, %v5098
        %5100 = vmatprep.mubr.bf16.mxu0 %v582
        %5101 = vmatmul.mubr.bf16.gmra.mrb[0].mxu0 %v581
        %v5102 = vpop.f32.mrb[0].mxu0
        %v5103 = vadd.f32 %v4910, %v5102
        %v5104 = vpop.f32.mrb[0].mxu0
        %v5105 = vadd.f32 %v4912, %v5104
        %v5106 = vpop.f32.mrb[0].mxu0
        %v5107 = vadd.f32 %v4914, %v5106
        %v5108 = vpop.f32.mrb[0].mxu0
        %v5109 = vadd.f32 %v4916, %v5108
        %5110 = vmatprep.mubr.bf16.mxu0 %v589
        %5111 = vmatmul.mubr.bf16.gmra.mrb[0].mxu0 %v588
        %v5112 = vpop.f32.mrb[0].mxu0
        %v5113 = vadd.f32 %v4920, %v5112
        %v5114 = vpop.f32.mrb[0].mxu0
        %v5115 = vadd.f32 %v4922, %v5114
        %v5116 = vpop.f32.mrb[0].mxu0
        %v5117 = vadd.f32 %v4924, %v5116
        %v5118 = vpop.f32.mrb[0].mxu0
        %v5119 = vadd.f32 %v4926, %v5118
        %5120 = vmatprep.mubr.bf16.mxu0 %v596
        %5121 = vmatmul.mubr.bf16.gmra.mrb[0].mxu0 %v595
        %v5122 = vpop.f32.mrb[0].mxu0
        %v5123 = vadd.f32 %v4930, %v5122
        %v5124 = vpop.f32.mrb[0].mxu0
        %v5125 = vadd.f32 %v4932, %v5124
        %v5126 = vpop.f32.mrb[0].mxu0
        %v5127 = vadd.f32 %v4934, %v5126
        %v5128 = vpop.f32.mrb[0].mxu0
        %v5129 = vadd.f32 %v4936, %v5128
        %5130 = vmatprep.mubr.bf16.mxu0 %v603
        %5131 = vmatmul.mubr.bf16.gmra.mrb[0].mxu0 %v602
        %v5132 = vpop.f32.mrb[0].mxu0
        %v5133 = vadd.f32 %v4940, %v5132
        %v5134 = vpop.f32.mrb[0].mxu0
        %v5135 = vadd.f32 %v4942, %v5134
        %v5136 = vpop.f32.mrb[0].mxu0
        %v5137 = vadd.f32 %v4944, %v5136
        %v5138 = vpop.f32.mrb[0].mxu0
        %v5139 = vadd.f32 %v4946, %v5138
        %5140 = vmatprep.mubr.bf16.mxu0 %v610
        %5141 = vmatmul.mubr.bf16.gmra.mrb[0].mxu0 %v609
        %v5142 = vpop.f32.mrb[0].mxu0
        %v5143 = vadd.f32 %v4950, %v5142
        %v5144 = vpop.f32.mrb[0].mxu0
        %v5145 = vadd.f32 %v4952, %v5144
        %v5146 = vpop.f32.mrb[0].mxu0
        %v5147 = vadd.f32 %v4954, %v5146
        %v5148 = vpop.f32.mrb[0].mxu0
        %v5149 = vadd.f32 %v4956, %v5148
        %5150 = vmatprep.mubr.bf16.mxu0 %v617
        %5151 = vmatmul.mubr.bf16.gmra.mrb[0].mxu0 %v616
        %v5152 = vpop.f32.mrb[0].mxu0
        %v5153 = vadd.f32 %v4960, %v5152
        %v5154 = vpop.f32.mrb[0].mxu0
        %v5155 = vadd.f32 %v4962, %v5154
        %v5156 = vpop.f32.mrb[0].mxu0
        %v5157 = vadd.f32 %v4964, %v5156
        %v5158 = vpop.f32.mrb[0].mxu0
        %v5159 = vadd.f32 %v4966, %v5158
        %5160 = vmatprep.mubr.bf16.mxu0 %v624
        %5161 = vmatmul.mubr.bf16.gmra.mrb[0].mxu0 %v623
        %v5162 = vpop.f32.mrb[0].mxu0
        %v5163 = vadd.f32 %v4970, %v5162
        %v5164 = vpop.f32.mrb[0].mxu0
        %v5165 = vadd.f32 %v4972, %v5164
        %v5166 = vpop.f32.mrb[0].mxu0
        %v5167 = vadd.f32 %v4974, %v5166
        %v5168 = vpop.f32.mrb[0].mxu0
        %v5169 = vadd.f32 %v4976, %v5168
        %5170 = vmatprep.mubr.bf16.mxu0 %v631
        %5171 = vmatmul.mubr.bf16.gmra.mrb[0].mxu0 %v630
        %v5172 = vpop.f32.mrb[0].mxu0
        %v5173 = vadd.f32 %v4980, %v5172
        %v5174 = vpop.f32.mrb[0].mxu0
        %v5175 = vadd.f32 %v4982, %v5174
        %v5176 = vpop.f32.mrb[0].mxu0
        %v5177 = vadd.f32 %v4984, %v5176
        %v5178 = vpop.f32.mrb[0].mxu0
        %v5179 = vadd.f32 %v4986, %v5178
        %5180 = vmatprep.mubr.bf16.mxu0 %v638
        %5181 = vmatmul.mubr.bf16.gmra.mrb[0].mxu0 %v637
        %v5182 = vpop.f32.mrb[0].mxu0
        %v5183 = vadd.f32 %v4990, %v5182
        %v5184 = vpop.f32.mrb[0].mxu0
        %v5185 = vadd.f32 %v4992, %v5184
        %v5186 = vpop.f32.mrb[0].mxu0
        %v5187 = vadd.f32 %v4994, %v5186
        %v5188 = vpop.f32.mrb[0].mxu0
        %v5189 = vadd.f32 %v4996, %v5188
        %5190 = vmatprep.mubr.bf16.mxu0 %v645
        %5191 = vmatmul.mubr.bf16.gmra.mrb[0].mxu0 %v644
        %v5192 = vpop.f32.mrb[0].mxu0
        %v5193 = vadd.f32 %v5000, %v5192
        %v5194 = vpop.f32.mrb[0].mxu0
        %v5195 = vadd.f32 %v5002, %v5194
        %v5196 = vpop.f32.mrb[0].mxu0
        %v5197 = vadd.f32 %v5004, %v5196
        %v5198 = vpop.f32.mrb[0].mxu0
        %v5199 = vadd.f32 %v5006, %v5198
        %5200 = vmatprep.mubr.bf16.mxu0 %v652
        %5201 = vmatmul.mubr.bf16.gmra.mrb[0].mxu0 %v651
        %v5202 = vpop.f32.mrb[0].mxu0
        %v5203 = vadd.f32 %v5010, %v5202
        %v5204 = vpop.f32.mrb[0].mxu0
        %v5205 = vadd.f32 %v5012, %v5204
        %v5206 = vpop.f32.mrb[0].mxu0
        %v5207 = vadd.f32 %v5014, %v5206
        %v5208 = vpop.f32.mrb[0].mxu0
        %v5209 = vadd.f32 %v5016, %v5208
        %5210 = vmatprep.mubr.bf16.mxu0 %v659
        %5211 = vmatmul.mubr.bf16.gmra.mrb[0].mxu0 %v658
        %v5212 = vpop.f32.mrb[0].mxu0
        %v5213 = vadd.f32 %v5020, %v5212
        %v5214 = vpop.f32.mrb[0].mxu0
        %v5215 = vadd.f32 %v5022, %v5214
        %v5216 = vpop.f32.mrb[0].mxu0
        %v5217 = vadd.f32 %v5024, %v5216
        %v5218 = vpop.f32.mrb[0].mxu0
        %v5219 = vadd.f32 %v5026, %v5218
        %5220 = vmatprep.mubr.bf16.mxu0 %v666
        %5221 = vmatmul.mubr.bf16.gmra.mrb[0].mxu0 %v665
        %v5222 = vpop.f32.mrb[0].mxu0
        %v5223 = vadd.f32 %v5030, %v5222
        %v5224 = vpop.f32.mrb[0].mxu0
        %v5225 = vadd.f32 %v5032, %v5224
        %v5226 = vpop.f32.mrb[0].mxu0
        %v5227 = vadd.f32 %v5034, %v5226
        %v5228 = vpop.f32.mrb[0].mxu0
        %v5229 = vadd.f32 %v5036, %v5228
        %5230 = vmatprep.mubr.bf16.mxu0 %v673
        %5231 = vmatmul.mubr.bf16.gmra.mrb[0].mxu0 %v672
        %v5232 = vpop.f32.mrb[0].mxu0
        %v5233 = vadd.f32 %v5040, %v5232
        %v5234 = vpop.f32.mrb[0].mxu0
        %v5235 = vadd.f32 %v5042, %v5234
        %v5236 = vpop.f32.mrb[0].mxu0
        %v5237 = vadd.f32 %v5044, %v5236
        %v5238 = vpop.f32.mrb[0].mxu0
        %v5239 = vadd.f32 %v5046, %v5238
        %5240 = vdwg.mxu0
        %5241 = vmatprep.subr.bf16.mxu0 %v2674
        %5242 = vmatpush1.bf16.msra.mxu0 %v2673
        %5243 = vmatprep.subr.bf16.mxu0 0
        %5244 = vmatpush1.bf16.msra.mxu0 0
        %5245 = vmatprep.subr.bf16.mxu0 0
        %5246 = vmatpush1.bf16.msra.mxu0 0
        %5247 = vmatprep.subr.bf16.mxu0 0
        %5248 = vmatpush1.bf16.msra.mxu0 0
        %5249 = vmatprep.subr.bf16.mxu0 0
        %5250 = vmatpush1.bf16.msra.mxu0 0
        %5251 = vmatprep.subr.bf16.mxu0 0
        %5252 = vmatpush1.bf16.msra.mxu0 0
        %5253 = vmatprep.subr.bf16.mxu0 0
        %5254 = vmatpush1.bf16.msra.mxu0 0
        %5255 = vmatprep.subr.bf16.mxu0 0
        %5256 = vmatpush1.bf16.msra.mxu0 0
        %5257 = vmatprep.subr.bf16.mxu0 0
        %5258 = vmatpush1.bf16.msra.mxu0 0
        %5259 = vmatprep.subr.bf16.mxu0 0
        %5260 = vmatpush1.bf16.msra.mxu0 0
        %5261 = vmatprep.subr.bf16.mxu0 0
        %5262 = vmatpush1.bf16.msra.mxu0 0
        %5263 = vmatprep.subr.bf16.mxu0 0
        %5264 = vmatpush1.bf16.msra.mxu0 0
        %5265 = vmatprep.subr.bf16.mxu0 0
        %5266 = vmatpush1.bf16.msra.mxu0 0
        %5267 = vmatprep.subr.bf16.mxu0 0
        %5268 = vmatpush1.bf16.msra.mxu0 0
        %5269 = vmatprep.subr.bf16.mxu0 0
        %5270 = vmatpush1.bf16.msra.mxu0 0
        %5271 = vmatprep.subr.bf16.mxu0 0
        %5272 = vmatpush1.bf16.msra.mxu0 0
        %5273 = vmatprep.mubr.bf16.mxu0 0
        %5274 = vmatmul.mubr.bf16.gmra.mrb[0].mxu0 %v3071
        %v5275 = vpop.f32.mrb[0].mxu0
        %v5276 = vadd.f32 %v5083, %v5275
        %v5277 = vpop.f32.mrb[0].mxu0
        %v5278 = vadd.f32 %v5085, %v5277
        %v5279 = vpop.f32.mrb[0].mxu0
        %v5280 = vadd.f32 %v5087, %v5279
        %v5281 = vpop.f32.mrb[0].mxu0
        %v5282 = vadd.f32 %v5089, %v5281
        %5283 = vmatprep.mubr.bf16.mxu0 0
        %5284 = vmatmul.mubr.bf16.gmra.mrb[0].mxu0 %v3074
        %v5285 = vpop.f32.mrb[0].mxu0
        %v5286 = vadd.f32 %v5093, %v5285
        %v5287 = vpop.f32.mrb[0].mxu0
        %v5288 = vadd.f32 %v5095, %v5287
        %v5289 = vpop.f32.mrb[0].mxu0
        %v5290 = vadd.f32 %v5097, %v5289
        %v5291 = vpop.f32.mrb[0].mxu0
        %v5292 = vadd.f32 %v5099, %v5291
        %5293 = vmatprep.mubr.bf16.mxu0 0
        %5294 = vmatmul.mubr.bf16.gmra.mrb[0].mxu0 %v3077
        %v5295 = vpop.f32.mrb[0].mxu0
        %v5296 = vadd.f32 %v5103, %v5295
        %v5297 = vpop.f32.mrb[0].mxu0
        %v5298 = vadd.f32 %v5105, %v5297
        %v5299 = vpop.f32.mrb[0].mxu0
        %v5300 = vadd.f32 %v5107, %v5299
        %v5301 = vpop.f32.mrb[0].mxu0
        %v5302 = vadd.f32 %v5109, %v5301
        %5303 = vmatprep.mubr.bf16.mxu0 0
        %5304 = vmatmul.mubr.bf16.gmra.mrb[0].mxu0 %v3080
        %v5305 = vpop.f32.mrb[0].mxu0
        %v5306 = vadd.f32 %v5113, %v5305
        %v5307 = vpop.f32.mrb[0].mxu0
        %v5308 = vadd.f32 %v5115, %v5307
        %v5309 = vpop.f32.mrb[0].mxu0
        %v5310 = vadd.f32 %v5117, %v5309
        %v5311 = vpop.f32.mrb[0].mxu0
        %v5312 = vadd.f32 %v5119, %v5311
        %5313 = vmatprep.mubr.bf16.mxu0 0
        %5314 = vmatmul.mubr.bf16.gmra.mrb[0].mxu0 %v3083
        %v5315 = vpop.f32.mrb[0].mxu0
        %v5316 = vadd.f32 %v5123, %v5315
        %v5317 = vpop.f32.mrb[0].mxu0
        %v5318 = vadd.f32 %v5125, %v5317
        %v5319 = vpop.f32.mrb[0].mxu0
        %v5320 = vadd.f32 %v5127, %v5319
        %v5321 = vpop.f32.mrb[0].mxu0
        %v5322 = vadd.f32 %v5129, %v5321
        %5323 = vmatprep.mubr.bf16.mxu0 0
        %5324 = vmatmul.mubr.bf16.gmra.mrb[0].mxu0 %v3086
        %v5325 = vpop.f32.mrb[0].mxu0
        %v5326 = vadd.f32 %v5133, %v5325
        %v5327 = vpop.f32.mrb[0].mxu0
        %v5328 = vadd.f32 %v5135, %v5327
        %v5329 = vpop.f32.mrb[0].mxu0
        %v5330 = vadd.f32 %v5137, %v5329
        %v5331 = vpop.f32.mrb[0].mxu0
        %v5332 = vadd.f32 %v5139, %v5331
        %5333 = vmatprep.mubr.bf16.mxu0 0
        %5334 = vmatmul.mubr.bf16.gmra.mrb[0].mxu0 %v3089
        %v5335 = vpop.f32.mrb[0].mxu0
        %v5336 = vadd.f32 %v5143, %v5335
        %v5337 = vpop.f32.mrb[0].mxu0
        %v5338 = vadd.f32 %v5145, %v5337
        %v5339 = vpop.f32.mrb[0].mxu0
        %v5340 = vadd.f32 %v5147, %v5339
        %v5341 = vpop.f32.mrb[0].mxu0
        %v5342 = vadd.f32 %v5149, %v5341
        %5343 = vmatprep.mubr.bf16.mxu0 0
        %5344 = vmatmul.mubr.bf16.gmra.mrb[0].mxu0 %v3092
        %v5345 = vpop.f32.mrb[0].mxu0
        %v5346 = vadd.f32 %v5153, %v5345
        %v5347 = vpop.f32.mrb[0].mxu0
        %v5348 = vadd.f32 %v5155, %v5347
        %v5349 = vpop.f32.mrb[0].mxu0
        %v5350 = vadd.f32 %v5157, %v5349
        %v5351 = vpop.f32.mrb[0].mxu0
        %v5352 = vadd.f32 %v5159, %v5351
        %5353 = vmatprep.mubr.bf16.mxu0 0
        %5354 = vmatmul.mubr.bf16.gmra.mrb[0].mxu0 %v3095
        %v5355 = vpop.f32.mrb[0].mxu0
        %v5356 = vadd.f32 %v5163, %v5355
        %v5357 = vpop.f32.mrb[0].mxu0
        %v5358 = vadd.f32 %v5165, %v5357
        %v5359 = vpop.f32.mrb[0].mxu0
        %v5360 = vadd.f32 %v5167, %v5359
        %v5361 = vpop.f32.mrb[0].mxu0
        %v5362 = vadd.f32 %v5169, %v5361
        %5363 = vmatprep.mubr.bf16.mxu0 0
        %5364 = vmatmul.mubr.bf16.gmra.mrb[0].mxu0 %v3098
        %v5365 = vpop.f32.mrb[0].mxu0
        %v5366 = vadd.f32 %v5173, %v5365
        %v5367 = vpop.f32.mrb[0].mxu0
        %v5368 = vadd.f32 %v5175, %v5367
        %v5369 = vpop.f32.mrb[0].mxu0
        %v5370 = vadd.f32 %v5177, %v5369
        %v5371 = vpop.f32.mrb[0].mxu0
        %v5372 = vadd.f32 %v5179, %v5371
        %5373 = vmatprep.mubr.bf16.mxu0 0
        %5374 = vmatmul.mubr.bf16.gmra.mrb[0].mxu0 %v3101
        %v5375 = vpop.f32.mrb[0].mxu0
        %v5376 = vadd.f32 %v5183, %v5375
        %v5377 = vpop.f32.mrb[0].mxu0
        %v5378 = vadd.f32 %v5185, %v5377
        %v5379 = vpop.f32.mrb[0].mxu0
        %v5380 = vadd.f32 %v5187, %v5379
        %v5381 = vpop.f32.mrb[0].mxu0
        %v5382 = vadd.f32 %v5189, %v5381
        %5383 = vmatprep.mubr.bf16.mxu0 0
        %5384 = vmatmul.mubr.bf16.gmra.mrb[0].mxu0 %v3104
        %v5385 = vpop.f32.mrb[0].mxu0
        %v5386 = vadd.f32 %v5193, %v5385
        %v5387 = vpop.f32.mrb[0].mxu0
        %v5388 = vadd.f32 %v5195, %v5387
        %v5389 = vpop.f32.mrb[0].mxu0
        %v5390 = vadd.f32 %v5197, %v5389
        %v5391 = vpop.f32.mrb[0].mxu0
        %v5392 = vadd.f32 %v5199, %v5391
        %5393 = vmatprep.mubr.bf16.mxu0 0
        %5394 = vmatmul.mubr.bf16.gmra.mrb[0].mxu0 %v3107
        %v5395 = vpop.f32.mrb[0].mxu0
        %v5396 = vadd.f32 %v5203, %v5395
        %v5397 = vpop.f32.mrb[0].mxu0
        %v5398 = vadd.f32 %v5205, %v5397
        %v5399 = vpop.f32.mrb[0].mxu0
        %v5400 = vadd.f32 %v5207, %v5399
        %v5401 = vpop.f32.mrb[0].mxu0
        %v5402 = vadd.f32 %v5209, %v5401
        %5403 = vmatprep.mubr.bf16.mxu0 0
        %5404 = vmatmul.mubr.bf16.gmra.mrb[0].mxu0 %v3110
        %v5405 = vpop.f32.mrb[0].mxu0
        %v5406 = vadd.f32 %v5213, %v5405
        %v5407 = vpop.f32.mrb[0].mxu0
        %v5408 = vadd.f32 %v5215, %v5407
        %v5409 = vpop.f32.mrb[0].mxu0
        %v5410 = vadd.f32 %v5217, %v5409
        %v5411 = vpop.f32.mrb[0].mxu0
        %v5412 = vadd.f32 %v5219, %v5411
        %5413 = vmatprep.mubr.bf16.mxu0 0
        %5414 = vmatmul.mubr.bf16.gmra.mrb[0].mxu0 %v3113
        %v5415 = vpop.f32.mrb[0].mxu0
        %v5416 = vadd.f32 %v5223, %v5415
        %v5417 = vpop.f32.mrb[0].mxu0
        %v5418 = vadd.f32 %v5225, %v5417
        %v5419 = vpop.f32.mrb[0].mxu0
        %v5420 = vadd.f32 %v5227, %v5419
        %v5421 = vpop.f32.mrb[0].mxu0
        %v5422 = vadd.f32 %v5229, %v5421
        %5423 = vmatprep.mubr.bf16.mxu0 0
        %5424 = vmatmul.mubr.bf16.gmra.mrb[0].mxu0 %v3116
        %v5425 = vpop.f32.mrb[0].mxu0
        %v5426 = vadd.f32 %v5233, %v5425
        %v5427 = vpop.f32.mrb[0].mxu0
        %v5428 = vadd.f32 %v5235, %v5427
        %v5429 = vpop.f32.mrb[0].mxu0
        %v5430 = vadd.f32 %v5237, %v5429
        %v5431 = vpop.f32.mrb[0].mxu0
        %v5432 = vadd.f32 %v5239, %v5431
        %5433 = vdwg.mxu0
        %5434 = vmatprep.subr.bf16.mxu0 %v2292
        %5435 = vmatpush1.bf16.msra.mxu0 %v2291
        %5436 = vmatprep.subr.bf16.mxu0 %v2300
        %5437 = vmatpush1.bf16.msra.mxu0 %v2299
        %5438 = vmatprep.subr.bf16.mxu0 %v2308
        %5439 = vmatpush1.bf16.msra.mxu0 %v2307
        %5440 = vmatprep.subr.bf16.mxu0 %v2316
        %5441 = vmatpush1.bf16.msra.mxu0 %v2315
        %5442 = vmatprep.subr.bf16.mxu0 %v2324
        %5443 = vmatpush1.bf16.msra.mxu0 %v2323
        %5444 = vmatprep.subr.bf16.mxu0 %v2332
        %5445 = vmatpush1.bf16.msra.mxu0 %v2331
        %5446 = vmatprep.subr.bf16.mxu0 %v2340
        %5447 = vmatpush1.bf16.msra.mxu0 %v2339
        %5448 = vmatprep.subr.bf16.mxu0 %v2348
        %5449 = vmatpush1.bf16.msra.mxu0 %v2347
        %5450 = vmatprep.subr.bf16.mxu0 %v2356
        %5451 = vmatpush1.bf16.msra.mxu0 %v2355
        %5452 = vmatprep.subr.bf16.mxu0 %v2364
        %5453 = vmatpush1.bf16.msra.mxu0 %v2363
        %5454 = vmatprep.subr.bf16.mxu0 %v2372
        %5455 = vmatpush1.bf16.msra.mxu0 %v2371
        %5456 = vmatprep.subr.bf16.mxu0 %v2380
        %5457 = vmatpush1.bf16.msra.mxu0 %v2379
        %5458 = vmatprep.subr.bf16.mxu0 %v2388
        %5459 = vmatpush1.bf16.msra.mxu0 %v2387
        %5460 = vmatprep.subr.bf16.mxu0 %v2396
        %5461 = vmatpush1.bf16.msra.mxu0 %v2395
        %5462 = vmatprep.subr.bf16.mxu0 %v2404
        %5463 = vmatpush1.bf16.msra.mxu0 %v2403
        %5464 = vmatprep.subr.bf16.mxu0 %v2412
        %5465 = vmatpush1.bf16.msra.mxu0 %v2411
        %5466 = vmatprep.mubr.bf16.mxu0 %v564
        %5467 = vmatmul.mubr.bf16.gmra.mrb[0].mxu0 %v563
        %v5468 = vpop.f32.mrb[0].mxu0
        %v5469 = vadd.f32 %v1096, %v5468
        %v5470 = vpop.f32.mrb[0].mxu0
        %v5471 = vadd.f32 %v1100, %v5470
        %v5472 = vpop.f32.mrb[0].mxu0
        %v5473 = vadd.f32 %v1096, %v5472
        %v5474 = vpop.f32.mrb[0].mxu0
        %v5475 = vadd.f32 %v1100, %v5474
        %5476 = vmatprep.mubr.bf16.mxu0 %v571
        %5477 = vmatmul.mubr.bf16.gmra.mrb[0].mxu0 %v570
        %v5478 = vpop.f32.mrb[0].mxu0
        %v5479 = vadd.f32 %v1096, %v5478
        %v5480 = vpop.f32.mrb[0].mxu0
        %v5481 = vadd.f32 %v1100, %v5480
        %v5482 = vpop.f32.mrb[0].mxu0
        %v5483 = vadd.f32 %v1096, %v5482
        %v5484 = vpop.f32.mrb[0].mxu0
        %v5485 = vadd.f32 %v1100, %v5484
        %5486 = vmatprep.mubr.bf16.mxu0 %v578
        %5487 = vmatmul.mubr.bf16.gmra.mrb[0].mxu0 %v577
        %v5488 = vpop.f32.mrb[0].mxu0
        %v5489 = vadd.f32 %v1096, %v5488
        %v5490 = vpop.f32.mrb[0].mxu0
        %v5491 = vadd.f32 %v1100, %v5490
        %v5492 = vpop.f32.mrb[0].mxu0
        %v5493 = vadd.f32 %v1096, %v5492
        %v5494 = vpop.f32.mrb[0].mxu0
        %v5495 = vadd.f32 %v1100, %v5494
        %5496 = vmatprep.mubr.bf16.mxu0 %v585
        %5497 = vmatmul.mubr.bf16.gmra.mrb[0].mxu0 %v584
        %v5498 = vpop.f32.mrb[0].mxu0
        %v5499 = vadd.f32 %v1096, %v5498
        %v5500 = vpop.f32.mrb[0].mxu0
        %v5501 = vadd.f32 %v1100, %v5500
        %v5502 = vpop.f32.mrb[0].mxu0
        %v5503 = vadd.f32 %v1096, %v5502
        %v5504 = vpop.f32.mrb[0].mxu0
        %v5505 = vadd.f32 %v1100, %v5504
        %5506 = vmatprep.mubr.bf16.mxu0 %v592
        %5507 = vmatmul.mubr.bf16.gmra.mrb[0].mxu0 %v591
        %v5508 = vpop.f32.mrb[0].mxu0
        %v5509 = vadd.f32 %v1096, %v5508
        %v5510 = vpop.f32.mrb[0].mxu0
        %v5511 = vadd.f32 %v1100, %v5510
        %v5512 = vpop.f32.mrb[0].mxu0
        %v5513 = vadd.f32 %v1096, %v5512
        %v5514 = vpop.f32.mrb[0].mxu0
        %v5515 = vadd.f32 %v1100, %v5514
        %5516 = vmatprep.mubr.bf16.mxu0 %v599
        %5517 = vmatmul.mubr.bf16.gmra.mrb[0].mxu0 %v598
        %v5518 = vpop.f32.mrb[0].mxu0
        %v5519 = vadd.f32 %v1096, %v5518
        %v5520 = vpop.f32.mrb[0].mxu0
        %v5521 = vadd.f32 %v1100, %v5520
        %v5522 = vpop.f32.mrb[0].mxu0
        %v5523 = vadd.f32 %v1096, %v5522
        %v5524 = vpop.f32.mrb[0].mxu0
        %v5525 = vadd.f32 %v1100, %v5524
        %5526 = vmatprep.mubr.bf16.mxu0 %v606
        %5527 = vmatmul.mubr.bf16.gmra.mrb[0].mxu0 %v605
        %v5528 = vpop.f32.mrb[0].mxu0
        %v5529 = vadd.f32 %v1096, %v5528
        %v5530 = vpop.f32.mrb[0].mxu0
        %v5531 = vadd.f32 %v1100, %v5530
        %v5532 = vpop.f32.mrb[0].mxu0
        %v5533 = vadd.f32 %v1096, %v5532
        %v5534 = vpop.f32.mrb[0].mxu0
        %v5535 = vadd.f32 %v1100, %v5534
        %5536 = vmatprep.mubr.bf16.mxu0 %v613
        %5537 = vmatmul.mubr.bf16.gmra.mrb[0].mxu0 %v612
        %v5538 = vpop.f32.mrb[0].mxu0
        %v5539 = vadd.f32 %v1096, %v5538
        %v5540 = vpop.f32.mrb[0].mxu0
        %v5541 = vadd.f32 %v1100, %v5540
        %v5542 = vpop.f32.mrb[0].mxu0
        %v5543 = vadd.f32 %v1096, %v5542
        %v5544 = vpop.f32.mrb[0].mxu0
        %v5545 = vadd.f32 %v1100, %v5544
        %5546 = vmatprep.mubr.bf16.mxu0 %v620
        %5547 = vmatmul.mubr.bf16.gmra.mrb[0].mxu0 %v619
        %v5548 = vpop.f32.mrb[0].mxu0
        %v5549 = vadd.f32 %v1096, %v5548
        %v5550 = vpop.f32.mrb[0].mxu0
        %v5551 = vadd.f32 %v1100, %v5550
        %v5552 = vpop.f32.mrb[0].mxu0
        %v5553 = vadd.f32 %v1096, %v5552
        %v5554 = vpop.f32.mrb[0].mxu0
        %v5555 = vadd.f32 %v1100, %v5554
        %5556 = vmatprep.mubr.bf16.mxu0 %v627
        %5557 = vmatmul.mubr.bf16.gmra.mrb[0].mxu0 %v626
        %v5558 = vpop.f32.mrb[0].mxu0
        %v5559 = vadd.f32 %v1096, %v5558
        %v5560 = vpop.f32.mrb[0].mxu0
        %v5561 = vadd.f32 %v1100, %v5560
        %v5562 = vpop.f32.mrb[0].mxu0
        %v5563 = vadd.f32 %v1096, %v5562
        %v5564 = vpop.f32.mrb[0].mxu0
        %v5565 = vadd.f32 %v1100, %v5564
        %5566 = vmatprep.mubr.bf16.mxu0 %v634
        %5567 = vmatmul.mubr.bf16.gmra.mrb[0].mxu0 %v633
        %v5568 = vpop.f32.mrb[0].mxu0
        %v5569 = vadd.f32 %v1096, %v5568
        %v5570 = vpop.f32.mrb[0].mxu0
        %v5571 = vadd.f32 %v1100, %v5570
        %v5572 = vpop.f32.mrb[0].mxu0
        %v5573 = vadd.f32 %v1096, %v5572
        %v5574 = vpop.f32.mrb[0].mxu0
        %v5575 = vadd.f32 %v1100, %v5574
        %5576 = vmatprep.mubr.bf16.mxu0 %v641
        %5577 = vmatmul.mubr.bf16.gmra.mrb[0].mxu0 %v640
        %v5578 = vpop.f32.mrb[0].mxu0
        %v5579 = vadd.f32 %v1096, %v5578
        %v5580 = vpop.f32.mrb[0].mxu0
        %v5581 = vadd.f32 %v1100, %v5580
        %v5582 = vpop.f32.mrb[0].mxu0
        %v5583 = vadd.f32 %v1096, %v5582
        %v5584 = vpop.f32.mrb[0].mxu0
        %v5585 = vadd.f32 %v1100, %v5584
        %5586 = vmatprep.mubr.bf16.mxu0 %v648
        %5587 = vmatmul.mubr.bf16.gmra.mrb[0].mxu0 %v647
        %v5588 = vpop.f32.mrb[0].mxu0
        %v5589 = vadd.f32 %v1096, %v5588
        %v5590 = vpop.f32.mrb[0].mxu0
        %v5591 = vadd.f32 %v1100, %v5590
        %v5592 = vpop.f32.mrb[0].mxu0
        %v5593 = vadd.f32 %v1096, %v5592
        %v5594 = vpop.f32.mrb[0].mxu0
        %v5595 = vadd.f32 %v1100, %v5594
        %5596 = vmatprep.mubr.bf16.mxu0 %v655
        %5597 = vmatmul.mubr.bf16.gmra.mrb[0].mxu0 %v654
        %v5598 = vpop.f32.mrb[0].mxu0
        %v5599 = vadd.f32 %v1096, %v5598
        %v5600 = vpop.f32.mrb[0].mxu0
        %v5601 = vadd.f32 %v1100, %v5600
        %v5602 = vpop.f32.mrb[0].mxu0
        %v5603 = vadd.f32 %v1096, %v5602
        %v5604 = vpop.f32.mrb[0].mxu0
        %v5605 = vadd.f32 %v1100, %v5604
        %5606 = vmatprep.mubr.bf16.mxu0 %v662
        %5607 = vmatmul.mubr.bf16.gmra.mrb[0].mxu0 %v661
        %v5608 = vpop.f32.mrb[0].mxu0
        %v5609 = vadd.f32 %v1096, %v5608
        %v5610 = vpop.f32.mrb[0].mxu0
        %v5611 = vadd.f32 %v1100, %v5610
        %v5612 = vpop.f32.mrb[0].mxu0
        %v5613 = vadd.f32 %v1096, %v5612
        %v5614 = vpop.f32.mrb[0].mxu0
        %v5615 = vadd.f32 %v1100, %v5614
        %5616 = vmatprep.mubr.bf16.mxu0 %v669
        %5617 = vmatmul.mubr.bf16.gmra.mrb[0].mxu0 %v668
        %v5618 = vpop.f32.mrb[0].mxu0
        %v5619 = vadd.f32 %v1096, %v5618
        %v5620 = vpop.f32.mrb[0].mxu0
        %v5621 = vadd.f32 %v1100, %v5620
        %v5622 = vpop.f32.mrb[0].mxu0
        %v5623 = vadd.f32 %v1096, %v5622
        %v5624 = vpop.f32.mrb[0].mxu0
        %v5625 = vadd.f32 %v1100, %v5624
        %5626 = vdwg.mxu0
        %5627 = vmatprep.subr.bf16.mxu0 %v2420
        %5628 = vmatpush1.bf16.msra.mxu0 %v2419
        %5629 = vmatprep.subr.bf16.mxu0 %v2428
        %5630 = vmatpush1.bf16.msra.mxu0 %v2427
        %5631 = vmatprep.subr.bf16.mxu0 %v2436
        %5632 = vmatpush1.bf16.msra.mxu0 %v2435
        %5633 = vmatprep.subr.bf16.mxu0 %v2444
        %5634 = vmatpush1.bf16.msra.mxu0 %v2443
        %5635 = vmatprep.subr.bf16.mxu0 %v2452
        %5636 = vmatpush1.bf16.msra.mxu0 %v2451
        %5637 = vmatprep.subr.bf16.mxu0 %v2460
        %5638 = vmatpush1.bf16.msra.mxu0 %v2459
        %5639 = vmatprep.subr.bf16.mxu0 %v2468
        %5640 = vmatpush1.bf16.msra.mxu0 %v2467
        %5641 = vmatprep.subr.bf16.mxu0 %v2476
        %5642 = vmatpush1.bf16.msra.mxu0 %v2475
        %5643 = vmatprep.subr.bf16.mxu0 %v2484
        %5644 = vmatpush1.bf16.msra.mxu0 %v2483
        %5645 = vmatprep.subr.bf16.mxu0 %v2492
        %5646 = vmatpush1.bf16.msra.mxu0 %v2491
        %5647 = vmatprep.subr.bf16.mxu0 %v2500
        %5648 = vmatpush1.bf16.msra.mxu0 %v2499
        %5649 = vmatprep.subr.bf16.mxu0 %v2508
        %5650 = vmatpush1.bf16.msra.mxu0 %v2507
        %5651 = vmatprep.subr.bf16.mxu0 %v2516
        %5652 = vmatpush1.bf16.msra.mxu0 %v2515
        %5653 = vmatprep.subr.bf16.mxu0 %v2524
        %5654 = vmatpush1.bf16.msra.mxu0 %v2523
        %5655 = vmatprep.subr.bf16.mxu0 %v2532
        %5656 = vmatpush1.bf16.msra.mxu0 %v2531
        %5657 = vmatprep.subr.bf16.mxu0 %v2540
        %5658 = vmatpush1.bf16.msra.mxu0 %v2539
        %5659 = vmatprep.mubr.bf16.mxu0 %v566
        %5660 = vmatmul.mubr.bf16.gmra.mrb[0].mxu0 %v565
        %v5661 = vpop.f32.mrb[0].mxu0
        %v5662 = vadd.f32 %v5469, %v5661
        %v5663 = vpop.f32.mrb[0].mxu0
        %v5664 = vadd.f32 %v5471, %v5663
        %v5665 = vpop.f32.mrb[0].mxu0
        %v5666 = vadd.f32 %v5473, %v5665
        %v5667 = vpop.f32.mrb[0].mxu0
        %v5668 = vadd.f32 %v5475, %v5667
        %5669 = vmatprep.mubr.bf16.mxu0 %v573
        %5670 = vmatmul.mubr.bf16.gmra.mrb[0].mxu0 %v572
        %v5671 = vpop.f32.mrb[0].mxu0
        %v5672 = vadd.f32 %v5479, %v5671
        %v5673 = vpop.f32.mrb[0].mxu0
        %v5674 = vadd.f32 %v5481, %v5673
        %v5675 = vpop.f32.mrb[0].mxu0
        %v5676 = vadd.f32 %v5483, %v5675
        %v5677 = vpop.f32.mrb[0].mxu0
        %v5678 = vadd.f32 %v5485, %v5677
        %5679 = vmatprep.mubr.bf16.mxu0 %v580
        %5680 = vmatmul.mubr.bf16.gmra.mrb[0].mxu0 %v579
        %v5681 = vpop.f32.mrb[0].mxu0
        %v5682 = vadd.f32 %v5489, %v5681
        %v5683 = vpop.f32.mrb[0].mxu0
        %v5684 = vadd.f32 %v5491, %v5683
        %v5685 = vpop.f32.mrb[0].mxu0
        %v5686 = vadd.f32 %v5493, %v5685
        %v5687 = vpop.f32.mrb[0].mxu0
        %v5688 = vadd.f32 %v5495, %v5687
        %5689 = vmatprep.mubr.bf16.mxu0 %v587
        %5690 = vmatmul.mubr.bf16.gmra.mrb[0].mxu0 %v586
        %v5691 = vpop.f32.mrb[0].mxu0
        %v5692 = vadd.f32 %v5499, %v5691
        %v5693 = vpop.f32.mrb[0].mxu0
        %v5694 = vadd.f32 %v5501, %v5693
        %v5695 = vpop.f32.mrb[0].mxu0
        %v5696 = vadd.f32 %v5503, %v5695
        %v5697 = vpop.f32.mrb[0].mxu0
        %v5698 = vadd.f32 %v5505, %v5697
        %5699 = vmatprep.mubr.bf16.mxu0 %v594
        %5700 = vmatmul.mubr.bf16.gmra.mrb[0].mxu0 %v593
        %v5701 = vpop.f32.mrb[0].mxu0
        %v5702 = vadd.f32 %v5509, %v5701
        %v5703 = vpop.f32.mrb[0].mxu0
        %v5704 = vadd.f32 %v5511, %v5703
        %v5705 = vpop.f32.mrb[0].mxu0
        %v5706 = vadd.f32 %v5513, %v5705
        %v5707 = vpop.f32.mrb[0].mxu0
        %v5708 = vadd.f32 %v5515, %v5707
        %5709 = vmatprep.mubr.bf16.mxu0 %v601
        %5710 = vmatmul.mubr.bf16.gmra.mrb[0].mxu0 %v600
        %v5711 = vpop.f32.mrb[0].mxu0
        %v5712 = vadd.f32 %v5519, %v5711
        %v5713 = vpop.f32.mrb[0].mxu0
        %v5714 = vadd.f32 %v5521, %v5713
        %v5715 = vpop.f32.mrb[0].mxu0
        %v5716 = vadd.f32 %v5523, %v5715
        %v5717 = vpop.f32.mrb[0].mxu0
        %v5718 = vadd.f32 %v5525, %v5717
        %5719 = vmatprep.mubr.bf16.mxu0 %v608
        %5720 = vmatmul.mubr.bf16.gmra.mrb[0].mxu0 %v607
        %v5721 = vpop.f32.mrb[0].mxu0
        %v5722 = vadd.f32 %v5529, %v5721
        %v5723 = vpop.f32.mrb[0].mxu0
        %v5724 = vadd.f32 %v5531, %v5723
        %v5725 = vpop.f32.mrb[0].mxu0
        %v5726 = vadd.f32 %v5533, %v5725
        %v5727 = vpop.f32.mrb[0].mxu0
        %v5728 = vadd.f32 %v5535, %v5727
        %5729 = vmatprep.mubr.bf16.mxu0 %v615
        %5730 = vmatmul.mubr.bf16.gmra.mrb[0].mxu0 %v614
        %v5731 = vpop.f32.mrb[0].mxu0
        %v5732 = vadd.f32 %v5539, %v5731
        %v5733 = vpop.f32.mrb[0].mxu0
        %v5734 = vadd.f32 %v5541, %v5733
        %v5735 = vpop.f32.mrb[0].mxu0
        %v5736 = vadd.f32 %v5543, %v5735
        %v5737 = vpop.f32.mrb[0].mxu0
        %v5738 = vadd.f32 %v5545, %v5737
        %5739 = vmatprep.mubr.bf16.mxu0 %v622
        %5740 = vmatmul.mubr.bf16.gmra.mrb[0].mxu0 %v621
        %v5741 = vpop.f32.mrb[0].mxu0
        %v5742 = vadd.f32 %v5549, %v5741
        %v5743 = vpop.f32.mrb[0].mxu0
        %v5744 = vadd.f32 %v5551, %v5743
        %v5745 = vpop.f32.mrb[0].mxu0
        %v5746 = vadd.f32 %v5553, %v5745
        %v5747 = vpop.f32.mrb[0].mxu0
        %v5748 = vadd.f32 %v5555, %v5747
        %5749 = vmatprep.mubr.bf16.mxu0 %v629
        %5750 = vmatmul.mubr.bf16.gmra.mrb[0].mxu0 %v628
        %v5751 = vpop.f32.mrb[0].mxu0
        %v5752 = vadd.f32 %v5559, %v5751
        %v5753 = vpop.f32.mrb[0].mxu0
        %v5754 = vadd.f32 %v5561, %v5753
        %v5755 = vpop.f32.mrb[0].mxu0
        %v5756 = vadd.f32 %v5563, %v5755
        %v5757 = vpop.f32.mrb[0].mxu0
        %v5758 = vadd.f32 %v5565, %v5757
        %5759 = vmatprep.mubr.bf16.mxu0 %v636
        %5760 = vmatmul.mubr.bf16.gmra.mrb[0].mxu0 %v635
        %v5761 = vpop.f32.mrb[0].mxu0
        %v5762 = vadd.f32 %v5569, %v5761
        %v5763 = vpop.f32.mrb[0].mxu0
        %v5764 = vadd.f32 %v5571, %v5763
        %v5765 = vpop.f32.mrb[0].mxu0
        %v5766 = vadd.f32 %v5573, %v5765
        %v5767 = vpop.f32.mrb[0].mxu0
        %v5768 = vadd.f32 %v5575, %v5767
        %5769 = vmatprep.mubr.bf16.mxu0 %v643
        %5770 = vmatmul.mubr.bf16.gmra.mrb[0].mxu0 %v642
        %v5771 = vpop.f32.mrb[0].mxu0
        %v5772 = vadd.f32 %v5579, %v5771
        %v5773 = vpop.f32.mrb[0].mxu0
        %v5774 = vadd.f32 %v5581, %v5773
        %v5775 = vpop.f32.mrb[0].mxu0
        %v5776 = vadd.f32 %v5583, %v5775
        %v5777 = vpop.f32.mrb[0].mxu0
        %v5778 = vadd.f32 %v5585, %v5777
        %5779 = vmatprep.mubr.bf16.mxu0 %v650
        %5780 = vmatmul.mubr.bf16.gmra.mrb[0].mxu0 %v649
        %v5781 = vpop.f32.mrb[0].mxu0
        %v5782 = vadd.f32 %v5589, %v5781
        %v5783 = vpop.f32.mrb[0].mxu0
        %v5784 = vadd.f32 %v5591, %v5783
        %v5785 = vpop.f32.mrb[0].mxu0
        %v5786 = vadd.f32 %v5593, %v5785
        %v5787 = vpop.f32.mrb[0].mxu0
        %v5788 = vadd.f32 %v5595, %v5787
        %5789 = vmatprep.mubr.bf16.mxu0 %v657
        %5790 = vmatmul.mubr.bf16.gmra.mrb[0].mxu0 %v656
        %v5791 = vpop.f32.mrb[0].mxu0
        %v5792 = vadd.f32 %v5599, %v5791
        %v5793 = vpop.f32.mrb[0].mxu0
        %v5794 = vadd.f32 %v5601, %v5793
        %v5795 = vpop.f32.mrb[0].mxu0
        %v5796 = vadd.f32 %v5603, %v5795
        %v5797 = vpop.f32.mrb[0].mxu0
        %v5798 = vadd.f32 %v5605, %v5797
        %5799 = vmatprep.mubr.bf16.mxu0 %v664
        %5800 = vmatmul.mubr.bf16.gmra.mrb[0].mxu0 %v663
        %v5801 = vpop.f32.mrb[0].mxu0
        %v5802 = vadd.f32 %v5609, %v5801
        %v5803 = vpop.f32.mrb[0].mxu0
        %v5804 = vadd.f32 %v5611, %v5803
        %v5805 = vpop.f32.mrb[0].mxu0
        %v5806 = vadd.f32 %v5613, %v5805
        %v5807 = vpop.f32.mrb[0].mxu0
        %v5808 = vadd.f32 %v5615, %v5807
        %5809 = vmatprep.mubr.bf16.mxu0 %v671
        %5810 = vmatmul.mubr.bf16.gmra.mrb[0].mxu0 %v670
        %v5811 = vpop.f32.mrb[0].mxu0
        %v5812 = vadd.f32 %v5619, %v5811
        %v5813 = vpop.f32.mrb[0].mxu0
        %v5814 = vadd.f32 %v5621, %v5813
        %v5815 = vpop.f32.mrb[0].mxu0
        %v5816 = vadd.f32 %v5623, %v5815
        %v5817 = vpop.f32.mrb[0].mxu0
        %v5818 = vadd.f32 %v5625, %v5817
        %5819 = vdwg.mxu0
        %5820 = vmatprep.subr.bf16.mxu0 %v2548
        %5821 = vmatpush1.bf16.msra.mxu0 %v2547
        %5822 = vmatprep.subr.bf16.mxu0 %v2556
        %5823 = vmatpush1.bf16.msra.mxu0 %v2555
        %5824 = vmatprep.subr.bf16.mxu0 %v2564
        %5825 = vmatpush1.bf16.msra.mxu0 %v2563
        %5826 = vmatprep.subr.bf16.mxu0 %v2572
        %5827 = vmatpush1.bf16.msra.mxu0 %v2571
        %5828 = vmatprep.subr.bf16.mxu0 %v2580
        %5829 = vmatpush1.bf16.msra.mxu0 %v2579
        %5830 = vmatprep.subr.bf16.mxu0 %v2588
        %5831 = vmatpush1.bf16.msra.mxu0 %v2587
        %5832 = vmatprep.subr.bf16.mxu0 %v2596
        %5833 = vmatpush1.bf16.msra.mxu0 %v2595
        %5834 = vmatprep.subr.bf16.mxu0 %v2604
        %5835 = vmatpush1.bf16.msra.mxu0 %v2603
        %5836 = vmatprep.subr.bf16.mxu0 %v2612
        %5837 = vmatpush1.bf16.msra.mxu0 %v2611
        %5838 = vmatprep.subr.bf16.mxu0 %v2620
        %5839 = vmatpush1.bf16.msra.mxu0 %v2619
        %5840 = vmatprep.subr.bf16.mxu0 %v2628
        %5841 = vmatpush1.bf16.msra.mxu0 %v2627
        %5842 = vmatprep.subr.bf16.mxu0 %v2636
        %5843 = vmatpush1.bf16.msra.mxu0 %v2635
        %5844 = vmatprep.subr.bf16.mxu0 %v2644
        %5845 = vmatpush1.bf16.msra.mxu0 %v2643
        %5846 = vmatprep.subr.bf16.mxu0 %v2652
        %5847 = vmatpush1.bf16.msra.mxu0 %v2651
        %5848 = vmatprep.subr.bf16.mxu0 %v2660
        %5849 = vmatpush1.bf16.msra.mxu0 %v2659
        %5850 = vmatprep.subr.bf16.mxu0 %v2668
        %5851 = vmatpush1.bf16.msra.mxu0 %v2667
        %5852 = vmatprep.mubr.bf16.mxu0 %v568
        %5853 = vmatmul.mubr.bf16.gmra.mrb[0].mxu0 %v567
        %v5854 = vpop.f32.mrb[0].mxu0
        %v5855 = vadd.f32 %v5662, %v5854
        %v5856 = vpop.f32.mrb[0].mxu0
        %v5857 = vadd.f32 %v5664, %v5856
        %v5858 = vpop.f32.mrb[0].mxu0
        %v5859 = vadd.f32 %v5666, %v5858
        %v5860 = vpop.f32.mrb[0].mxu0
        %v5861 = vadd.f32 %v5668, %v5860
        %5862 = vmatprep.mubr.bf16.mxu0 %v575
        %5863 = vmatmul.mubr.bf16.gmra.mrb[0].mxu0 %v574
        %v5864 = vpop.f32.mrb[0].mxu0
        %v5865 = vadd.f32 %v5672, %v5864
        %v5866 = vpop.f32.mrb[0].mxu0
        %v5867 = vadd.f32 %v5674, %v5866
        %v5868 = vpop.f32.mrb[0].mxu0
        %v5869 = vadd.f32 %v5676, %v5868
        %v5870 = vpop.f32.mrb[0].mxu0
        %v5871 = vadd.f32 %v5678, %v5870
        %5872 = vmatprep.mubr.bf16.mxu0 %v582
        %5873 = vmatmul.mubr.bf16.gmra.mrb[0].mxu0 %v581
        %v5874 = vpop.f32.mrb[0].mxu0
        %v5875 = vadd.f32 %v5682, %v5874
        %v5876 = vpop.f32.mrb[0].mxu0
        %v5877 = vadd.f32 %v5684, %v5876
        %v5878 = vpop.f32.mrb[0].mxu0
        %v5879 = vadd.f32 %v5686, %v5878
        %v5880 = vpop.f32.mrb[0].mxu0
        %v5881 = vadd.f32 %v5688, %v5880
        %5882 = vmatprep.mubr.bf16.mxu0 %v589
        %5883 = vmatmul.mubr.bf16.gmra.mrb[0].mxu0 %v588
        %v5884 = vpop.f32.mrb[0].mxu0
        %v5885 = vadd.f32 %v5692, %v5884
        %v5886 = vpop.f32.mrb[0].mxu0
        %v5887 = vadd.f32 %v5694, %v5886
        %v5888 = vpop.f32.mrb[0].mxu0
        %v5889 = vadd.f32 %v5696, %v5888
        %v5890 = vpop.f32.mrb[0].mxu0
        %v5891 = vadd.f32 %v5698, %v5890
        %5892 = vmatprep.mubr.bf16.mxu0 %v596
        %5893 = vmatmul.mubr.bf16.gmra.mrb[0].mxu0 %v595
        %v5894 = vpop.f32.mrb[0].mxu0
        %v5895 = vadd.f32 %v5702, %v5894
        %v5896 = vpop.f32.mrb[0].mxu0
        %v5897 = vadd.f32 %v5704, %v5896
        %v5898 = vpop.f32.mrb[0].mxu0
        %v5899 = vadd.f32 %v5706, %v5898
        %v5900 = vpop.f32.mrb[0].mxu0
        %v5901 = vadd.f32 %v5708, %v5900
        %5902 = vmatprep.mubr.bf16.mxu0 %v603
        %5903 = vmatmul.mubr.bf16.gmra.mrb[0].mxu0 %v602
        %v5904 = vpop.f32.mrb[0].mxu0
        %v5905 = vadd.f32 %v5712, %v5904
        %v5906 = vpop.f32.mrb[0].mxu0
        %v5907 = vadd.f32 %v5714, %v5906
        %v5908 = vpop.f32.mrb[0].mxu0
        %v5909 = vadd.f32 %v5716, %v5908
        %v5910 = vpop.f32.mrb[0].mxu0
        %v5911 = vadd.f32 %v5718, %v5910
        %5912 = vmatprep.mubr.bf16.mxu0 %v610
        %5913 = vmatmul.mubr.bf16.gmra.mrb[0].mxu0 %v609
        %v5914 = vpop.f32.mrb[0].mxu0
        %v5915 = vadd.f32 %v5722, %v5914
        %v5916 = vpop.f32.mrb[0].mxu0
        %v5917 = vadd.f32 %v5724, %v5916
        %v5918 = vpop.f32.mrb[0].mxu0
        %v5919 = vadd.f32 %v5726, %v5918
        %v5920 = vpop.f32.mrb[0].mxu0
        %v5921 = vadd.f32 %v5728, %v5920
        %5922 = vmatprep.mubr.bf16.mxu0 %v617
        %5923 = vmatmul.mubr.bf16.gmra.mrb[0].mxu0 %v616
        %v5924 = vpop.f32.mrb[0].mxu0
        %v5925 = vadd.f32 %v5732, %v5924
        %v5926 = vpop.f32.mrb[0].mxu0
        %v5927 = vadd.f32 %v5734, %v5926
        %v5928 = vpop.f32.mrb[0].mxu0
        %v5929 = vadd.f32 %v5736, %v5928
        %v5930 = vpop.f32.mrb[0].mxu0
        %v5931 = vadd.f32 %v5738, %v5930
        %5932 = vmatprep.mubr.bf16.mxu0 %v624
        %5933 = vmatmul.mubr.bf16.gmra.mrb[0].mxu0 %v623
        %v5934 = vpop.f32.mrb[0].mxu0
        %v5935 = vadd.f32 %v5742, %v5934
        %v5936 = vpop.f32.mrb[0].mxu0
        %v5937 = vadd.f32 %v5744, %v5936
        %v5938 = vpop.f32.mrb[0].mxu0
        %v5939 = vadd.f32 %v5746, %v5938
        %v5940 = vpop.f32.mrb[0].mxu0
        %v5941 = vadd.f32 %v5748, %v5940
        %5942 = vmatprep.mubr.bf16.mxu0 %v631
        %5943 = vmatmul.mubr.bf16.gmra.mrb[0].mxu0 %v630
        %v5944 = vpop.f32.mrb[0].mxu0
        %v5945 = vadd.f32 %v5752, %v5944
        %v5946 = vpop.f32.mrb[0].mxu0
        %v5947 = vadd.f32 %v5754, %v5946
        %v5948 = vpop.f32.mrb[0].mxu0
        %v5949 = vadd.f32 %v5756, %v5948
        %v5950 = vpop.f32.mrb[0].mxu0
        %v5951 = vadd.f32 %v5758, %v5950
        %5952 = vmatprep.mubr.bf16.mxu0 %v638
        %5953 = vmatmul.mubr.bf16.gmra.mrb[0].mxu0 %v637
        %v5954 = vpop.f32.mrb[0].mxu0
        %v5955 = vadd.f32 %v5762, %v5954
        %v5956 = vpop.f32.mrb[0].mxu0
        %v5957 = vadd.f32 %v5764, %v5956
        %v5958 = vpop.f32.mrb[0].mxu0
        %v5959 = vadd.f32 %v5766, %v5958
        %v5960 = vpop.f32.mrb[0].mxu0
        %v5961 = vadd.f32 %v5768, %v5960
        %5962 = vmatprep.mubr.bf16.mxu0 %v645
        %5963 = vmatmul.mubr.bf16.gmra.mrb[0].mxu0 %v644
        %v5964 = vpop.f32.mrb[0].mxu0
        %v5965 = vadd.f32 %v5772, %v5964
        %v5966 = vpop.f32.mrb[0].mxu0
        %v5967 = vadd.f32 %v5774, %v5966
        %v5968 = vpop.f32.mrb[0].mxu0
        %v5969 = vadd.f32 %v5776, %v5968
        %v5970 = vpop.f32.mrb[0].mxu0
        %v5971 = vadd.f32 %v5778, %v5970
        %5972 = vmatprep.mubr.bf16.mxu0 %v652
        %5973 = vmatmul.mubr.bf16.gmra.mrb[0].mxu0 %v651
        %v5974 = vpop.f32.mrb[0].mxu0
        %v5975 = vadd.f32 %v5782, %v5974
        %v5976 = vpop.f32.mrb[0].mxu0
        %v5977 = vadd.f32 %v5784, %v5976
        %v5978 = vpop.f32.mrb[0].mxu0
        %v5979 = vadd.f32 %v5786, %v5978
        %v5980 = vpop.f32.mrb[0].mxu0
        %v5981 = vadd.f32 %v5788, %v5980
        %5982 = vmatprep.mubr.bf16.mxu0 %v659
        %5983 = vmatmul.mubr.bf16.gmra.mrb[0].mxu0 %v658
        %v5984 = vpop.f32.mrb[0].mxu0
        %v5985 = vadd.f32 %v5792, %v5984
        %v5986 = vpop.f32.mrb[0].mxu0
        %v5987 = vadd.f32 %v5794, %v5986
        %v5988 = vpop.f32.mrb[0].mxu0
        %v5989 = vadd.f32 %v5796, %v5988
        %v5990 = vpop.f32.mrb[0].mxu0
        %v5991 = vadd.f32 %v5798, %v5990
        %5992 = vmatprep.mubr.bf16.mxu0 %v666
        %5993 = vmatmul.mubr.bf16.gmra.mrb[0].mxu0 %v665
        %v5994 = vpop.f32.mrb[0].mxu0
        %v5995 = vadd.f32 %v5802, %v5994
        %v5996 = vpop.f32.mrb[0].mxu0
        %v5997 = vadd.f32 %v5804, %v5996
        %v5998 = vpop.f32.mrb[0].mxu0
        %v5999 = vadd.f32 %v5806, %v5998
        %v6000 = vpop.f32.mrb[0].mxu0
        %v6001 = vadd.f32 %v5808, %v6000
        %6002 = vmatprep.mubr.bf16.mxu0 %v673
        %6003 = vmatmul.mubr.bf16.gmra.mrb[0].mxu0 %v672
        %v6004 = vpop.f32.mrb[0].mxu0
        %v6005 = vadd.f32 %v5812, %v6004
        %v6006 = vpop.f32.mrb[0].mxu0
        %v6007 = vadd.f32 %v5814, %v6006
        %v6008 = vpop.f32.mrb[0].mxu0
        %v6009 = vadd.f32 %v5816, %v6008
        %v6010 = vpop.f32.mrb[0].mxu0
        %v6011 = vadd.f32 %v5818, %v6010
        %6012 = vdwg.mxu0
        %6013 = vmatprep.subr.bf16.mxu0 %v2676
        %6014 = vmatpush1.bf16.msra.mxu0 %v2675
        %6015 = vmatprep.subr.bf16.mxu0 0
        %6016 = vmatpush1.bf16.msra.mxu0 0
        %6017 = vmatprep.subr.bf16.mxu0 0
        %6018 = vmatpush1.bf16.msra.mxu0 0
        %6019 = vmatprep.subr.bf16.mxu0 0
        %6020 = vmatpush1.bf16.msra.mxu0 0
        %6021 = vmatprep.subr.bf16.mxu0 0
        %6022 = vmatpush1.bf16.msra.mxu0 0
        %6023 = vmatprep.subr.bf16.mxu0 0
        %6024 = vmatpush1.bf16.msra.mxu0 0
        %6025 = vmatprep.subr.bf16.mxu0 0
        %6026 = vmatpush1.bf16.msra.mxu0 0
        %6027 = vmatprep.subr.bf16.mxu0 0
        %6028 = vmatpush1.bf16.msra.mxu0 0
        %6029 = vmatprep.subr.bf16.mxu0 0
        %6030 = vmatpush1.bf16.msra.mxu0 0
        %6031 = vmatprep.subr.bf16.mxu0 0
        %6032 = vmatpush1.bf16.msra.mxu0 0
        %6033 = vmatprep.subr.bf16.mxu0 0
        %6034 = vmatpush1.bf16.msra.mxu0 0
        %6035 = vmatprep.subr.bf16.mxu0 0
        %6036 = vmatpush1.bf16.msra.mxu0 0
        %6037 = vmatprep.subr.bf16.mxu0 0
        %6038 = vmatpush1.bf16.msra.mxu0 0
        %6039 = vmatprep.subr.bf16.mxu0 0
        %6040 = vmatpush1.bf16.msra.mxu0 0
        %6041 = vmatprep.subr.bf16.mxu0 0
        %6042 = vmatpush1.bf16.msra.mxu0 0
        %6043 = vmatprep.subr.bf16.mxu0 0
        %6044 = vmatpush1.bf16.msra.mxu0 0
        %6045 = vmatprep.mubr.bf16.mxu0 0
        %6046 = vmatmul.mubr.bf16.gmra.mrb[0].mxu0 %v3071
        %v6047 = vpop.f32.mrb[0].mxu0
        %v6048 = vadd.f32 %v5855, %v6047
        %v6049 = vpop.f32.mrb[0].mxu0
        %v6050 = vadd.f32 %v5857, %v6049
        %v6051 = vpop.f32.mrb[0].mxu0
        %v6052 = vadd.f32 %v5859, %v6051
        %v6053 = vpop.f32.mrb[0].mxu0
        %v6054 = vadd.f32 %v5861, %v6053
        %6055 = vmatprep.mubr.bf16.mxu0 0
        %6056 = vmatmul.mubr.bf16.gmra.mrb[0].mxu0 %v3074
        %v6057 = vpop.f32.mrb[0].mxu0
        %v6058 = vadd.f32 %v5865, %v6057
        %v6059 = vpop.f32.mrb[0].mxu0
        %v6060 = vadd.f32 %v5867, %v6059
        %v6061 = vpop.f32.mrb[0].mxu0
        %v6062 = vadd.f32 %v5869, %v6061
        %v6063 = vpop.f32.mrb[0].mxu0
        %v6064 = vadd.f32 %v5871, %v6063
        %6065 = vmatprep.mubr.bf16.mxu0 0
        %6066 = vmatmul.mubr.bf16.gmra.mrb[0].mxu0 %v3077
        %v6067 = vpop.f32.mrb[0].mxu0
        %v6068 = vadd.f32 %v5875, %v6067
        %v6069 = vpop.f32.mrb[0].mxu0
        %v6070 = vadd.f32 %v5877, %v6069
        %v6071 = vpop.f32.mrb[0].mxu0
        %v6072 = vadd.f32 %v5879, %v6071
        %v6073 = vpop.f32.mrb[0].mxu0
        %v6074 = vadd.f32 %v5881, %v6073
        %6075 = vmatprep.mubr.bf16.mxu0 0
        %6076 = vmatmul.mubr.bf16.gmra.mrb[0].mxu0 %v3080
        %v6077 = vpop.f32.mrb[0].mxu0
        %v6078 = vadd.f32 %v5885, %v6077
        %v6079 = vpop.f32.mrb[0].mxu0
        %v6080 = vadd.f32 %v5887, %v6079
        %v6081 = vpop.f32.mrb[0].mxu0
        %v6082 = vadd.f32 %v5889, %v6081
        %v6083 = vpop.f32.mrb[0].mxu0
        %v6084 = vadd.f32 %v5891, %v6083
        %6085 = vmatprep.mubr.bf16.mxu0 0
        %6086 = vmatmul.mubr.bf16.gmra.mrb[0].mxu0 %v3083
        %v6087 = vpop.f32.mrb[0].mxu0
        %v6088 = vadd.f32 %v5895, %v6087
        %v6089 = vpop.f32.mrb[0].mxu0
        %v6090 = vadd.f32 %v5897, %v6089
        %v6091 = vpop.f32.mrb[0].mxu0
        %v6092 = vadd.f32 %v5899, %v6091
        %v6093 = vpop.f32.mrb[0].mxu0
        %v6094 = vadd.f32 %v5901, %v6093
        %6095 = vmatprep.mubr.bf16.mxu0 0
        %6096 = vmatmul.mubr.bf16.gmra.mrb[0].mxu0 %v3086
        %v6097 = vpop.f32.mrb[0].mxu0
        %v6098 = vadd.f32 %v5905, %v6097
        %v6099 = vpop.f32.mrb[0].mxu0
        %v6100 = vadd.f32 %v5907, %v6099
        %v6101 = vpop.f32.mrb[0].mxu0
        %v6102 = vadd.f32 %v5909, %v6101
        %v6103 = vpop.f32.mrb[0].mxu0
        %v6104 = vadd.f32 %v5911, %v6103
        %6105 = vmatprep.mubr.bf16.mxu0 0
        %6106 = vmatmul.mubr.bf16.gmra.mrb[0].mxu0 %v3089
        %v6107 = vpop.f32.mrb[0].mxu0
        %v6108 = vadd.f32 %v5915, %v6107
        %v6109 = vpop.f32.mrb[0].mxu0
        %v6110 = vadd.f32 %v5917, %v6109
        %v6111 = vpop.f32.mrb[0].mxu0
        %v6112 = vadd.f32 %v5919, %v6111
        %v6113 = vpop.f32.mrb[0].mxu0
        %v6114 = vadd.f32 %v5921, %v6113
        %6115 = vmatprep.mubr.bf16.mxu0 0
        %6116 = vmatmul.mubr.bf16.gmra.mrb[0].mxu0 %v3092
        %v6117 = vpop.f32.mrb[0].mxu0
        %v6118 = vadd.f32 %v5925, %v6117
        %v6119 = vpop.f32.mrb[0].mxu0
        %v6120 = vadd.f32 %v5927, %v6119
        %v6121 = vpop.f32.mrb[0].mxu0
        %v6122 = vadd.f32 %v5929, %v6121
        %v6123 = vpop.f32.mrb[0].mxu0
        %v6124 = vadd.f32 %v5931, %v6123
        %6125 = vmatprep.mubr.bf16.mxu0 0
        %6126 = vmatmul.mubr.bf16.gmra.mrb[0].mxu0 %v3095
        %v6127 = vpop.f32.mrb[0].mxu0
        %v6128 = vadd.f32 %v5935, %v6127
        %v6129 = vpop.f32.mrb[0].mxu0
        %v6130 = vadd.f32 %v5937, %v6129
        %v6131 = vpop.f32.mrb[0].mxu0
        %v6132 = vadd.f32 %v5939, %v6131
        %v6133 = vpop.f32.mrb[0].mxu0
        %v6134 = vadd.f32 %v5941, %v6133
        %6135 = vmatprep.mubr.bf16.mxu0 0
        %6136 = vmatmul.mubr.bf16.gmra.mrb[0].mxu0 %v3098
        %v6137 = vpop.f32.mrb[0].mxu0
        %v6138 = vadd.f32 %v5945, %v6137
        %v6139 = vpop.f32.mrb[0].mxu0
        %v6140 = vadd.f32 %v5947, %v6139
        %v6141 = vpop.f32.mrb[0].mxu0
        %v6142 = vadd.f32 %v5949, %v6141
        %v6143 = vpop.f32.mrb[0].mxu0
        %v6144 = vadd.f32 %v5951, %v6143
        %6145 = vmatprep.mubr.bf16.mxu0 0
        %6146 = vmatmul.mubr.bf16.gmra.mrb[0].mxu0 %v3101
        %v6147 = vpop.f32.mrb[0].mxu0
        %v6148 = vadd.f32 %v5955, %v6147
        %v6149 = vpop.f32.mrb[0].mxu0
        %v6150 = vadd.f32 %v5957, %v6149
        %v6151 = vpop.f32.mrb[0].mxu0
        %v6152 = vadd.f32 %v5959, %v6151
        %v6153 = vpop.f32.mrb[0].mxu0
        %v6154 = vadd.f32 %v5961, %v6153
        %6155 = vmatprep.mubr.bf16.mxu0 0
        %6156 = vmatmul.mubr.bf16.gmra.mrb[0].mxu0 %v3104
        %v6157 = vpop.f32.mrb[0].mxu0
        %v6158 = vadd.f32 %v5965, %v6157
        %v6159 = vpop.f32.mrb[0].mxu0
        %v6160 = vadd.f32 %v5967, %v6159
        %v6161 = vpop.f32.mrb[0].mxu0
        %v6162 = vadd.f32 %v5969, %v6161
        %v6163 = vpop.f32.mrb[0].mxu0
        %v6164 = vadd.f32 %v5971, %v6163
        %6165 = vmatprep.mubr.bf16.mxu0 0
        %6166 = vmatmul.mubr.bf16.gmra.mrb[0].mxu0 %v3107
        %v6167 = vpop.f32.mrb[0].mxu0
        %v6168 = vadd.f32 %v5975, %v6167
        %v6169 = vpop.f32.mrb[0].mxu0
        %v6170 = vadd.f32 %v5977, %v6169
        %v6171 = vpop.f32.mrb[0].mxu0
        %v6172 = vadd.f32 %v5979, %v6171
        %v6173 = vpop.f32.mrb[0].mxu0
        %v6174 = vadd.f32 %v5981, %v6173
        %6175 = vmatprep.mubr.bf16.mxu0 0
        %6176 = vmatmul.mubr.bf16.gmra.mrb[0].mxu0 %v3110
        %v6177 = vpop.f32.mrb[0].mxu0
        %v6178 = vadd.f32 %v5985, %v6177
        %v6179 = vpop.f32.mrb[0].mxu0
        %v6180 = vadd.f32 %v5987, %v6179
        %v6181 = vpop.f32.mrb[0].mxu0
        %v6182 = vadd.f32 %v5989, %v6181
        %v6183 = vpop.f32.mrb[0].mxu0
        %v6184 = vadd.f32 %v5991, %v6183
        %6185 = vmatprep.mubr.bf16.mxu0 0
        %6186 = vmatmul.mubr.bf16.gmra.mrb[0].mxu0 %v3113
        %v6187 = vpop.f32.mrb[0].mxu0
        %v6188 = vadd.f32 %v5995, %v6187
        %v6189 = vpop.f32.mrb[0].mxu0
        %v6190 = vadd.f32 %v5997, %v6189
        %v6191 = vpop.f32.mrb[0].mxu0
        %v6192 = vadd.f32 %v5999, %v6191
        %v6193 = vpop.f32.mrb[0].mxu0
        %v6194 = vadd.f32 %v6001, %v6193
        %6195 = vmatprep.mubr.bf16.mxu0 0
        %6196 = vmatmul.mubr.bf16.gmra.mrb[0].mxu0 %v3116
        %v6197 = vpop.f32.mrb[0].mxu0
        %v6198 = vadd.f32 %v6005, %v6197
        %v6199 = vpop.f32.mrb[0].mxu0
        %v6200 = vadd.f32 %v6007, %v6199
        %v6201 = vpop.f32.mrb[0].mxu0
        %v6202 = vadd.f32 %v6009, %v6201
        %v6203 = vpop.f32.mrb[0].mxu0
        %v6204 = vadd.f32 %v6011, %v6203
        %6205 = vdwg.mxu0
        %vm6206 = vcmp.gt.f32.partialorder %v3732, 0.0
        %vm6207 = vcmp.gt.f32.partialorder %v3734, 0.0
        %vm6208 = vcmp.gt.f32.partialorder %v4504, 0.0
        %vm6209 = vcmp.gt.f32.partialorder %v4506, 0.0
        %vm6210 = vcmp.gt.f32.partialorder %v5276, 0.0
        %vm6211 = vcmp.gt.f32.partialorder %v5278, 0.0
        %vm6212 = vcmp.gt.f32.partialorder %v6048, 0.0
        %vm6213 = vcmp.gt.f32.partialorder %v6050, 0.0
        %vm6214 = vcmp.gt.f32.partialorder %v3736, 0.0
        %vm6215 = vcmp.gt.f32.partialorder %v3738, 0.0
        %vm6216 = vcmp.gt.f32.partialorder %v4508, 0.0
        %vm6217 = vcmp.gt.f32.partialorder %v4510, 0.0
        %vm6218 = vcmp.gt.f32.partialorder %v5280, 0.0
        %vm6219 = vcmp.gt.f32.partialorder %v5282, 0.0
        %vm6220 = vcmp.gt.f32.partialorder %v6052, 0.0
        %vm6221 = vcmp.gt.f32.partialorder %v6054, 0.0
        %vm6222 = vcmp.gt.f32.partialorder %v3742, 0.0
        %vm6223 = vcmp.gt.f32.partialorder %v3744, 0.0
        %vm6224 = vcmp.gt.f32.partialorder %v4514, 0.0
        %vm6225 = vcmp.gt.f32.partialorder %v4516, 0.0
        %vm6226 = vcmp.gt.f32.partialorder %v5286, 0.0
        %vm6227 = vcmp.gt.f32.partialorder %v5288, 0.0
        %vm6228 = vcmp.gt.f32.partialorder %v6058, 0.0
        %vm6229 = vcmp.gt.f32.partialorder %v6060, 0.0
        %vm6230 = vcmp.gt.f32.partialorder %v3746, 0.0
        %vm6231 = vcmp.gt.f32.partialorder %v3748, 0.0
        %vm6232 = vcmp.gt.f32.partialorder %v4518, 0.0
        %vm6233 = vcmp.gt.f32.partialorder %v4520, 0.0
        %vm6234 = vcmp.gt.f32.partialorder %v5290, 0.0
        %vm6235 = vcmp.gt.f32.partialorder %v5292, 0.0
        %vm6236 = vcmp.gt.f32.partialorder %v6062, 0.0
        %vm6237 = vcmp.gt.f32.partialorder %v6064, 0.0
        %vm6238 = vcmp.gt.f32.partialorder %v3752, 0.0
        %vm6239 = vcmp.gt.f32.partialorder %v3754, 0.0
        %vm6240 = vcmp.gt.f32.partialorder %v4524, 0.0
        %vm6241 = vcmp.gt.f32.partialorder %v4526, 0.0
        %vm6242 = vcmp.gt.f32.partialorder %v5296, 0.0
        %vm6243 = vcmp.gt.f32.partialorder %v5298, 0.0
        %vm6244 = vcmp.gt.f32.partialorder %v6068, 0.0
        %vm6245 = vcmp.gt.f32.partialorder %v6070, 0.0
        %vm6246 = vcmp.gt.f32.partialorder %v3756, 0.0
        %vm6247 = vcmp.gt.f32.partialorder %v3758, 0.0
        %vm6248 = vcmp.gt.f32.partialorder %v4528, 0.0
        %vm6249 = vcmp.gt.f32.partialorder %v4530, 0.0
        %vm6250 = vcmp.gt.f32.partialorder %v5300, 0.0
        %vm6251 = vcmp.gt.f32.partialorder %v5302, 0.0
        %vm6252 = vcmp.gt.f32.partialorder %v6072, 0.0
        %vm6253 = vcmp.gt.f32.partialorder %v6074, 0.0
        %vm6254 = vcmp.gt.f32.partialorder %v3762, 0.0
        %vm6255 = vcmp.gt.f32.partialorder %v3764, 0.0
        %vm6256 = vcmp.gt.f32.partialorder %v4534, 0.0
        %vm6257 = vcmp.gt.f32.partialorder %v4536, 0.0
        %vm6258 = vcmp.gt.f32.partialorder %v5306, 0.0
        %vm6259 = vcmp.gt.f32.partialorder %v5308, 0.0
        %vm6260 = vcmp.gt.f32.partialorder %v6078, 0.0
        %vm6261 = vcmp.gt.f32.partialorder %v6080, 0.0
        %vm6262 = vcmp.gt.f32.partialorder %v3766, 0.0
        %vm6263 = vcmp.gt.f32.partialorder %v3768, 0.0
        %vm6264 = vcmp.gt.f32.partialorder %v4538, 0.0
        %vm6265 = vcmp.gt.f32.partialorder %v4540, 0.0
        %vm6266 = vcmp.gt.f32.partialorder %v5310, 0.0
        %vm6267 = vcmp.gt.f32.partialorder %v5312, 0.0
        %vm6268 = vcmp.gt.f32.partialorder %v6082, 0.0
        %vm6269 = vcmp.gt.f32.partialorder %v6084, 0.0
        %vm6270 = vcmp.gt.f32.partialorder %v3772, 0.0
        %vm6271 = vcmp.gt.f32.partialorder %v3774, 0.0
        %vm6272 = vcmp.gt.f32.partialorder %v4544, 0.0
        %vm6273 = vcmp.gt.f32.partialorder %v4546, 0.0
        %vm6274 = vcmp.gt.f32.partialorder %v5316, 0.0
        %vm6275 = vcmp.gt.f32.partialorder %v5318, 0.0
        %vm6276 = vcmp.gt.f32.partialorder %v6088, 0.0
        %vm6277 = vcmp.gt.f32.partialorder %v6090, 0.0
        %vm6278 = vcmp.gt.f32.partialorder %v3776, 0.0
        %vm6279 = vcmp.gt.f32.partialorder %v3778, 0.0
        %vm6280 = vcmp.gt.f32.partialorder %v4548, 0.0
        %vm6281 = vcmp.gt.f32.partialorder %v4550, 0.0
        %vm6282 = vcmp.gt.f32.partialorder %v5320, 0.0
        %vm6283 = vcmp.gt.f32.partialorder %v5322, 0.0
        %vm6284 = vcmp.gt.f32.partialorder %v6092, 0.0
        %vm6285 = vcmp.gt.f32.partialorder %v6094, 0.0
        %vm6286 = vcmp.gt.f32.partialorder %v3782, 0.0
        %vm6287 = vcmp.gt.f32.partialorder %v3784, 0.0
        %vm6288 = vcmp.gt.f32.partialorder %v4554, 0.0
        %vm6289 = vcmp.gt.f32.partialorder %v4556, 0.0
        %vm6290 = vcmp.gt.f32.partialorder %v5326, 0.0
        %vm6291 = vcmp.gt.f32.partialorder %v5328, 0.0
        %vm6292 = vcmp.gt.f32.partialorder %v6098, 0.0
        %vm6293 = vcmp.gt.f32.partialorder %v6100, 0.0
        %vm6294 = vcmp.gt.f32.partialorder %v3786, 0.0
        %vm6295 = vcmp.gt.f32.partialorder %v3788, 0.0
        %vm6296 = vcmp.gt.f32.partialorder %v4558, 0.0
        %vm6297 = vcmp.gt.f32.partialorder %v4560, 0.0
        %vm6298 = vcmp.gt.f32.partialorder %v5330, 0.0
        %vm6299 = vcmp.gt.f32.partialorder %v5332, 0.0
        %vm6300 = vcmp.gt.f32.partialorder %v6102, 0.0
        %vm6301 = vcmp.gt.f32.partialorder %v6104, 0.0
        %vm6302 = vcmp.gt.f32.partialorder %v3792, 0.0
        %vm6303 = vcmp.gt.f32.partialorder %v3794, 0.0
        %vm6304 = vcmp.gt.f32.partialorder %v4564, 0.0
        %vm6305 = vcmp.gt.f32.partialorder %v4566, 0.0
        %vm6306 = vcmp.gt.f32.partialorder %v5336, 0.0
        %vm6307 = vcmp.gt.f32.partialorder %v5338, 0.0
        %vm6308 = vcmp.gt.f32.partialorder %v6108, 0.0
        %vm6309 = vcmp.gt.f32.partialorder %v6110, 0.0
        %vm6310 = vcmp.gt.f32.partialorder %v3796, 0.0
        %vm6311 = vcmp.gt.f32.partialorder %v3798, 0.0
        %vm6312 = vcmp.gt.f32.partialorder %v4568, 0.0
        %vm6313 = vcmp.gt.f32.partialorder %v4570, 0.0
        %vm6314 = vcmp.gt.f32.partialorder %v5340, 0.0
        %vm6315 = vcmp.gt.f32.partialorder %v5342, 0.0
        %vm6316 = vcmp.gt.f32.partialorder %v6112, 0.0
        %vm6317 = vcmp.gt.f32.partialorder %v6114, 0.0
        %vm6318 = vcmp.gt.f32.partialorder %v3802, 0.0
        %vm6319 = vcmp.gt.f32.partialorder %v3804, 0.0
        %vm6320 = vcmp.gt.f32.partialorder %v4574, 0.0
        %vm6321 = vcmp.gt.f32.partialorder %v4576, 0.0
        %vm6322 = vcmp.gt.f32.partialorder %v5346, 0.0
        %vm6323 = vcmp.gt.f32.partialorder %v5348, 0.0
        %vm6324 = vcmp.gt.f32.partialorder %v6118, 0.0
        %vm6325 = vcmp.gt.f32.partialorder %v6120, 0.0
        %vm6326 = vcmp.gt.f32.partialorder %v3806, 0.0
        %vm6327 = vcmp.gt.f32.partialorder %v3808, 0.0
        %vm6328 = vcmp.gt.f32.partialorder %v4578, 0.0
        %vm6329 = vcmp.gt.f32.partialorder %v4580, 0.0
        %vm6330 = vcmp.gt.f32.partialorder %v5350, 0.0
        %vm6331 = vcmp.gt.f32.partialorder %v5352, 0.0
        %vm6332 = vcmp.gt.f32.partialorder %v6122, 0.0
        %vm6333 = vcmp.gt.f32.partialorder %v6124, 0.0
        %vm6334 = vcmp.gt.f32.partialorder %v3812, 0.0
        %vm6335 = vcmp.gt.f32.partialorder %v3814, 0.0
        %vm6336 = vcmp.gt.f32.partialorder %v4584, 0.0
        %vm6337 = vcmp.gt.f32.partialorder %v4586, 0.0
        %vm6338 = vcmp.gt.f32.partialorder %v5356, 0.0
        %vm6339 = vcmp.gt.f32.partialorder %v5358, 0.0
        %vm6340 = vcmp.gt.f32.partialorder %v6128, 0.0
        %vm6341 = vcmp.gt.f32.partialorder %v6130, 0.0
        %vm6342 = vcmp.gt.f32.partialorder %v3816, 0.0
        %vm6343 = vcmp.gt.f32.partialorder %v3818, 0.0
        %vm6344 = vcmp.gt.f32.partialorder %v4588, 0.0
        %vm6345 = vcmp.gt.f32.partialorder %v4590, 0.0
        %vm6346 = vcmp.gt.f32.partialorder %v5360, 0.0
        %vm6347 = vcmp.gt.f32.partialorder %v5362, 0.0
        %vm6348 = vcmp.gt.f32.partialorder %v6132, 0.0
        %vm6349 = vcmp.gt.f32.partialorder %v6134, 0.0
        %vm6350 = vcmp.gt.f32.partialorder %v3822, 0.0
        %vm6351 = vcmp.gt.f32.partialorder %v3824, 0.0
        %vm6352 = vcmp.gt.f32.partialorder %v4594, 0.0
        %vm6353 = vcmp.gt.f32.partialorder %v4596, 0.0
        %vm6354 = vcmp.gt.f32.partialorder %v5366, 0.0
        %vm6355 = vcmp.gt.f32.partialorder %v5368, 0.0
        %vm6356 = vcmp.gt.f32.partialorder %v6138, 0.0
        %vm6357 = vcmp.gt.f32.partialorder %v6140, 0.0
        %vm6358 = vcmp.gt.f32.partialorder %v3826, 0.0
        %vm6359 = vcmp.gt.f32.partialorder %v3828, 0.0
        %vm6360 = vcmp.gt.f32.partialorder %v4598, 0.0
        %vm6361 = vcmp.gt.f32.partialorder %v4600, 0.0
        %vm6362 = vcmp.gt.f32.partialorder %v5370, 0.0
        %vm6363 = vcmp.gt.f32.partialorder %v5372, 0.0
        %vm6364 = vcmp.gt.f32.partialorder %v6142, 0.0
        %vm6365 = vcmp.gt.f32.partialorder %v6144, 0.0
        %vm6366 = vcmp.gt.f32.partialorder %v3832, 0.0
        %vm6367 = vcmp.gt.f32.partialorder %v3834, 0.0
        %vm6368 = vcmp.gt.f32.partialorder %v4604, 0.0
        %vm6369 = vcmp.gt.f32.partialorder %v4606, 0.0
        %vm6370 = vcmp.gt.f32.partialorder %v5376, 0.0
        %vm6371 = vcmp.gt.f32.partialorder %v5378, 0.0
        %vm6372 = vcmp.gt.f32.partialorder %v6148, 0.0
        %vm6373 = vcmp.gt.f32.partialorder %v6150, 0.0
        %vm6374 = vcmp.gt.f32.partialorder %v3836, 0.0
        %vm6375 = vcmp.gt.f32.partialorder %v3838, 0.0
        %vm6376 = vcmp.gt.f32.partialorder %v4608, 0.0
        %vm6377 = vcmp.gt.f32.partialorder %v4610, 0.0
        %vm6378 = vcmp.gt.f32.partialorder %v5380, 0.0
        %vm6379 = vcmp.gt.f32.partialorder %v5382, 0.0
        %vm6380 = vcmp.gt.f32.partialorder %v6152, 0.0
        %vm6381 = vcmp.gt.f32.partialorder %v6154, 0.0
        %vm6382 = vcmp.gt.f32.partialorder %v3842, 0.0
        %vm6383 = vcmp.gt.f32.partialorder %v3844, 0.0
        %vm6384 = vcmp.gt.f32.partialorder %v4614, 0.0
        %vm6385 = vcmp.gt.f32.partialorder %v4616, 0.0
        %vm6386 = vcmp.gt.f32.partialorder %v5386, 0.0
        %vm6387 = vcmp.gt.f32.partialorder %v5388, 0.0
        %vm6388 = vcmp.gt.f32.partialorder %v6158, 0.0
        %vm6389 = vcmp.gt.f32.partialorder %v6160, 0.0
        %vm6390 = vcmp.gt.f32.partialorder %v3846, 0.0
        %vm6391 = vcmp.gt.f32.partialorder %v3848, 0.0
        %vm6392 = vcmp.gt.f32.partialorder %v4618, 0.0
        %vm6393 = vcmp.gt.f32.partialorder %v4620, 0.0
        %vm6394 = vcmp.gt.f32.partialorder %v5390, 0.0
        %vm6395 = vcmp.gt.f32.partialorder %v5392, 0.0
        %vm6396 = vcmp.gt.f32.partialorder %v6162, 0.0
        %vm6397 = vcmp.gt.f32.partialorder %v6164, 0.0
        %vm6398 = vcmp.gt.f32.partialorder %v3852, 0.0
        %vm6399 = vcmp.gt.f32.partialorder %v3854, 0.0
        %vm6400 = vcmp.gt.f32.partialorder %v4624, 0.0
        %vm6401 = vcmp.gt.f32.partialorder %v4626, 0.0
        %vm6402 = vcmp.gt.f32.partialorder %v5396, 0.0
        %vm6403 = vcmp.gt.f32.partialorder %v5398, 0.0
        %vm6404 = vcmp.gt.f32.partialorder %v6168, 0.0
        %vm6405 = vcmp.gt.f32.partialorder %v6170, 0.0
        %vm6406 = vcmp.gt.f32.partialorder %v3856, 0.0
        %vm6407 = vcmp.gt.f32.partialorder %v3858, 0.0
        %vm6408 = vcmp.gt.f32.partialorder %v4628, 0.0
        %vm6409 = vcmp.gt.f32.partialorder %v4630, 0.0
        %vm6410 = vcmp.gt.f32.partialorder %v5400, 0.0
        %vm6411 = vcmp.gt.f32.partialorder %v5402, 0.0
        %vm6412 = vcmp.gt.f32.partialorder %v6172, 0.0
        %vm6413 = vcmp.gt.f32.partialorder %v6174, 0.0
        %vm6414 = vcmp.gt.f32.partialorder %v3862, 0.0
        %vm6415 = vcmp.gt.f32.partialorder %v3864, 0.0
        %vm6416 = vcmp.gt.f32.partialorder %v4634, 0.0
        %vm6417 = vcmp.gt.f32.partialorder %v4636, 0.0
        %vm6418 = vcmp.gt.f32.partialorder %v5406, 0.0
        %vm6419 = vcmp.gt.f32.partialorder %v5408, 0.0
        %vm6420 = vcmp.gt.f32.partialorder %v6178, 0.0
        %vm6421 = vcmp.gt.f32.partialorder %v6180, 0.0
        %vm6422 = vcmp.gt.f32.partialorder %v3866, 0.0
        %vm6423 = vcmp.gt.f32.partialorder %v3868, 0.0
        %vm6424 = vcmp.gt.f32.partialorder %v4638, 0.0
        %vm6425 = vcmp.gt.f32.partialorder %v4640, 0.0
        %vm6426 = vcmp.gt.f32.partialorder %v5410, 0.0
        %vm6427 = vcmp.gt.f32.partialorder %v5412, 0.0
        %vm6428 = vcmp.gt.f32.partialorder %v6182, 0.0
        %vm6429 = vcmp.gt.f32.partialorder %v6184, 0.0
        %vm6430 = vcmp.gt.f32.partialorder %v3872, 0.0
        %vm6431 = vcmp.gt.f32.partialorder %v3874, 0.0
        %vm6432 = vcmp.gt.f32.partialorder %v4644, 0.0
        %vm6433 = vcmp.gt.f32.partialorder %v4646, 0.0
        %vm6434 = vcmp.gt.f32.partialorder %v5416, 0.0
        %vm6435 = vcmp.gt.f32.partialorder %v5418, 0.0
        %vm6436 = vcmp.gt.f32.partialorder %v6188, 0.0
        %vm6437 = vcmp.gt.f32.partialorder %v6190, 0.0
        %vm6438 = vcmp.gt.f32.partialorder %v3876, 0.0
        %vm6439 = vcmp.gt.f32.partialorder %v3878, 0.0
        %vm6440 = vcmp.gt.f32.partialorder %v4648, 0.0
        %vm6441 = vcmp.gt.f32.partialorder %v4650, 0.0
        %vm6442 = vcmp.gt.f32.partialorder %v5420, 0.0
        %vm6443 = vcmp.gt.f32.partialorder %v5422, 0.0
        %vm6444 = vcmp.gt.f32.partialorder %v6192, 0.0
        %vm6445 = vcmp.gt.f32.partialorder %v6194, 0.0
        %vm6446 = vcmp.gt.f32.partialorder %v3882, 0.0
        %vm6447 = vcmp.gt.f32.partialorder %v3884, 0.0
        %vm6448 = vcmp.gt.f32.partialorder %v4654, 0.0
        %vm6449 = vcmp.gt.f32.partialorder %v4656, 0.0
        %vm6450 = vcmp.gt.f32.partialorder %v5426, 0.0
        %vm6451 = vcmp.gt.f32.partialorder %v5428, 0.0
        %vm6452 = vcmp.gt.f32.partialorder %v6198, 0.0
        %vm6453 = vcmp.gt.f32.partialorder %v6200, 0.0
        %vm6454 = vcmp.gt.f32.partialorder %v3886, 0.0
        %vm6455 = vcmp.gt.f32.partialorder %v3888, 0.0
        %vm6456 = vcmp.gt.f32.partialorder %v4658, 0.0
        %vm6457 = vcmp.gt.f32.partialorder %v4660, 0.0
        %vm6458 = vcmp.gt.f32.partialorder %v5430, 0.0
        %vm6459 = vcmp.gt.f32.partialorder %v5432, 0.0
        %vm6460 = vcmp.gt.f32.partialorder %v6202, 0.0
        %vm6461 = vcmp.gt.f32.partialorder %v6204, 0.0
        %v6462 = vmul.f32 %v3732, 0.2
        %v6463 = vmul.f32 %v3734, 0.2
        %v6464 = vmul.f32 %v4504, 0.2
        %v6465 = vmul.f32 %v4506, 0.2
        %v6466 = vmul.f32 %v5276, 0.2
        %v6467 = vmul.f32 %v5278, 0.2
        %v6468 = vmul.f32 %v6048, 0.2
        %v6469 = vmul.f32 %v6050, 0.2
        %v6470 = vmul.f32 %v3736, 0.2
        %v6471 = vmul.f32 %v3738, 0.2
        %v6472 = vmul.f32 %v4508, 0.2
        %v6473 = vmul.f32 %v4510, 0.2
        %v6474 = vmul.f32 %v5280, 0.2
        %v6475 = vmul.f32 %v5282, 0.2
        %v6476 = vmul.f32 %v6052, 0.2
        %v6477 = vmul.f32 %v6054, 0.2
        %v6478 = vmul.f32 %v3742, 0.2
        %v6479 = vmul.f32 %v3744, 0.2
        %v6480 = vmul.f32 %v4514, 0.2
        %v6481 = vmul.f32 %v4516, 0.2
        %v6482 = vmul.f32 %v5286, 0.2
        %v6483 = vmul.f32 %v5288, 0.2
        %v6484 = vmul.f32 %v6058, 0.2
        %v6485 = vmul.f32 %v6060, 0.2
        %v6486 = vmul.f32 %v3746, 0.2
        %v6487 = vmul.f32 %v3748, 0.2
        %v6488 = vmul.f32 %v4518, 0.2
        %v6489 = vmul.f32 %v4520, 0.2
        %v6490 = vmul.f32 %v5290, 0.2
        %v6491 = vmul.f32 %v5292, 0.2
        %v6492 = vmul.f32 %v6062, 0.2
        %v6493 = vmul.f32 %v6064, 0.2
        %v6494 = vmul.f32 %v3752, 0.2
        %v6495 = vmul.f32 %v3754, 0.2
        %v6496 = vmul.f32 %v4524, 0.2
        %v6497 = vmul.f32 %v4526, 0.2
        %v6498 = vmul.f32 %v5296, 0.2
        %v6499 = vmul.f32 %v5298, 0.2
        %v6500 = vmul.f32 %v6068, 0.2
        %v6501 = vmul.f32 %v6070, 0.2
        %v6502 = vmul.f32 %v3756, 0.2
        %v6503 = vmul.f32 %v3758, 0.2
        %v6504 = vmul.f32 %v4528, 0.2
        %v6505 = vmul.f32 %v4530, 0.2
        %v6506 = vmul.f32 %v5300, 0.2
        %v6507 = vmul.f32 %v5302, 0.2
        %v6508 = vmul.f32 %v6072, 0.2
        %v6509 = vmul.f32 %v6074, 0.2
        %v6510 = vmul.f32 %v3762, 0.2
        %v6511 = vmul.f32 %v3764, 0.2
        %v6512 = vmul.f32 %v4534, 0.2
        %v6513 = vmul.f32 %v4536, 0.2
        %v6514 = vmul.f32 %v5306, 0.2
        %v6515 = vmul.f32 %v5308, 0.2
        %v6516 = vmul.f32 %v6078, 0.2
        %v6517 = vmul.f32 %v6080, 0.2
        %v6518 = vmul.f32 %v3766, 0.2
        %v6519 = vmul.f32 %v3768, 0.2
        %v6520 = vmul.f32 %v4538, 0.2
        %v6521 = vmul.f32 %v4540, 0.2
        %v6522 = vmul.f32 %v5310, 0.2
        %v6523 = vmul.f32 %v5312, 0.2
        %v6524 = vmul.f32 %v6082, 0.2
        %v6525 = vmul.f32 %v6084, 0.2
        %v6526 = vmul.f32 %v3772, 0.2
        %v6527 = vmul.f32 %v3774, 0.2
        %v6528 = vmul.f32 %v4544, 0.2
        %v6529 = vmul.f32 %v4546, 0.2
        %v6530 = vmul.f32 %v5316, 0.2
        %v6531 = vmul.f32 %v5318, 0.2
        %v6532 = vmul.f32 %v6088, 0.2
        %v6533 = vmul.f32 %v6090, 0.2
        %v6534 = vmul.f32 %v3776, 0.2
        %v6535 = vmul.f32 %v3778, 0.2
        %v6536 = vmul.f32 %v4548, 0.2
        %v6537 = vmul.f32 %v4550, 0.2
        %v6538 = vmul.f32 %v5320, 0.2
        %v6539 = vmul.f32 %v5322, 0.2
        %v6540 = vmul.f32 %v6092, 0.2
        %v6541 = vmul.f32 %v6094, 0.2
        %v6542 = vmul.f32 %v3782, 0.2
        %v6543 = vmul.f32 %v3784, 0.2
        %v6544 = vmul.f32 %v4554, 0.2
        %v6545 = vmul.f32 %v4556, 0.2
        %v6546 = vmul.f32 %v5326, 0.2
        %v6547 = vmul.f32 %v5328, 0.2
        %v6548 = vmul.f32 %v6098, 0.2
        %v6549 = vmul.f32 %v6100, 0.2
        %v6550 = vmul.f32 %v3786, 0.2
        %v6551 = vmul.f32 %v3788, 0.2
        %v6552 = vmul.f32 %v4558, 0.2
        %v6553 = vmul.f32 %v4560, 0.2
        %v6554 = vmul.f32 %v5330, 0.2
        %v6555 = vmul.f32 %v5332, 0.2
        %v6556 = vmul.f32 %v6102, 0.2
        %v6557 = vmul.f32 %v6104, 0.2
        %v6558 = vmul.f32 %v3792, 0.2
        %v6559 = vmul.f32 %v3794, 0.2
        %v6560 = vmul.f32 %v4564, 0.2
        %v6561 = vmul.f32 %v4566, 0.2
        %v6562 = vmul.f32 %v5336, 0.2
        %v6563 = vmul.f32 %v5338, 0.2
        %v6564 = vmul.f32 %v6108, 0.2
        %v6565 = vmul.f32 %v6110, 0.2
        %v6566 = vmul.f32 %v3796, 0.2
        %v6567 = vmul.f32 %v3798, 0.2
        %v6568 = vmul.f32 %v4568, 0.2
        %v6569 = vmul.f32 %v4570, 0.2
        %v6570 = vmul.f32 %v5340, 0.2
        %v6571 = vmul.f32 %v5342, 0.2
        %v6572 = vmul.f32 %v6112, 0.2
        %v6573 = vmul.f32 %v6114, 0.2
        %v6574 = vmul.f32 %v3802, 0.2
        %v6575 = vmul.f32 %v3804, 0.2
        %v6576 = vmul.f32 %v4574, 0.2
        %v6577 = vmul.f32 %v4576, 0.2
        %v6578 = vmul.f32 %v5346, 0.2
        %v6579 = vmul.f32 %v5348, 0.2
        %v6580 = vmul.f32 %v6118, 0.2
        %v6581 = vmul.f32 %v6120, 0.2
        %v6582 = vmul.f32 %v3806, 0.2
        %v6583 = vmul.f32 %v3808, 0.2
        %v6584 = vmul.f32 %v4578, 0.2
        %v6585 = vmul.f32 %v4580, 0.2
        %v6586 = vmul.f32 %v5350, 0.2
        %v6587 = vmul.f32 %v5352, 0.2
        %v6588 = vmul.f32 %v6122, 0.2
        %v6589 = vmul.f32 %v6124, 0.2
        %v6590 = vmul.f32 %v3812, 0.2
        %v6591 = vmul.f32 %v3814, 0.2
        %v6592 = vmul.f32 %v4584, 0.2
        %v6593 = vmul.f32 %v4586, 0.2
        %v6594 = vmul.f32 %v5356, 0.2
        %v6595 = vmul.f32 %v5358, 0.2
        %v6596 = vmul.f32 %v6128, 0.2
        %v6597 = vmul.f32 %v6130, 0.2
        %v6598 = vmul.f32 %v3816, 0.2
        %v6599 = vmul.f32 %v3818, 0.2
        %v6600 = vmul.f32 %v4588, 0.2
        %v6601 = vmul.f32 %v4590, 0.2
        %v6602 = vmul.f32 %v5360, 0.2
        %v6603 = vmul.f32 %v5362, 0.2
        %v6604 = vmul.f32 %v6132, 0.2
        %v6605 = vmul.f32 %v6134, 0.2
        %v6606 = vmul.f32 %v3822, 0.2
        %v6607 = vmul.f32 %v3824, 0.2
        %v6608 = vmul.f32 %v4594, 0.2
        %v6609 = vmul.f32 %v4596, 0.2
        %v6610 = vmul.f32 %v5366, 0.2
        %v6611 = vmul.f32 %v5368, 0.2
        %v6612 = vmul.f32 %v6138, 0.2
        %v6613 = vmul.f32 %v6140, 0.2
        %v6614 = vmul.f32 %v3826, 0.2
        %v6615 = vmul.f32 %v3828, 0.2
        %v6616 = vmul.f32 %v4598, 0.2
        %v6617 = vmul.f32 %v4600, 0.2
        %v6618 = vmul.f32 %v5370, 0.2
        %v6619 = vmul.f32 %v5372, 0.2
        %v6620 = vmul.f32 %v6142, 0.2
        %v6621 = vmul.f32 %v6144, 0.2
        %v6622 = vmul.f32 %v3832, 0.2
        %v6623 = vmul.f32 %v3834, 0.2
        %v6624 = vmul.f32 %v4604, 0.2
        %v6625 = vmul.f32 %v4606, 0.2
        %v6626 = vmul.f32 %v5376, 0.2
        %v6627 = vmul.f32 %v5378, 0.2
        %v6628 = vmul.f32 %v6148, 0.2
        %v6629 = vmul.f32 %v6150, 0.2
        %v6630 = vmul.f32 %v3836, 0.2
        %v6631 = vmul.f32 %v3838, 0.2
        %v6632 = vmul.f32 %v4608, 0.2
        %v6633 = vmul.f32 %v4610, 0.2
        %v6634 = vmul.f32 %v5380, 0.2
        %v6635 = vmul.f32 %v5382, 0.2
        %v6636 = vmul.f32 %v6152, 0.2
        %v6637 = vmul.f32 %v6154, 0.2
        %v6638 = vmul.f32 %v3842, 0.2
        %v6639 = vmul.f32 %v3844, 0.2
        %v6640 = vmul.f32 %v4614, 0.2
        %v6641 = vmul.f32 %v4616, 0.2
        %v6642 = vmul.f32 %v5386, 0.2
        %v6643 = vmul.f32 %v5388, 0.2
        %v6644 = vmul.f32 %v6158, 0.2
        %v6645 = vmul.f32 %v6160, 0.2
        %v6646 = vmul.f32 %v3846, 0.2
        %v6647 = vmul.f32 %v3848, 0.2
        %v6648 = vmul.f32 %v4618, 0.2
        %v6649 = vmul.f32 %v4620, 0.2
        %v6650 = vmul.f32 %v5390, 0.2
        %v6651 = vmul.f32 %v5392, 0.2
        %v6652 = vmul.f32 %v6162, 0.2
        %v6653 = vmul.f32 %v6164, 0.2
        %v6654 = vmul.f32 %v3852, 0.2
        %v6655 = vmul.f32 %v3854, 0.2
        %v6656 = vmul.f32 %v4624, 0.2
        %v6657 = vmul.f32 %v4626, 0.2
        %v6658 = vmul.f32 %v5396, 0.2
        %v6659 = vmul.f32 %v5398, 0.2
        %v6660 = vmul.f32 %v6168, 0.2
        %v6661 = vmul.f32 %v6170, 0.2
        %v6662 = vmul.f32 %v3856, 0.2
        %v6663 = vmul.f32 %v3858, 0.2
        %v6664 = vmul.f32 %v4628, 0.2
        %v6665 = vmul.f32 %v4630, 0.2
        %v6666 = vmul.f32 %v5400, 0.2
        %v6667 = vmul.f32 %v5402, 0.2
        %v6668 = vmul.f32 %v6172, 0.2
        %v6669 = vmul.f32 %v6174, 0.2
        %v6670 = vmul.f32 %v3862, 0.2
        %v6671 = vmul.f32 %v3864, 0.2
        %v6672 = vmul.f32 %v4634, 0.2
        %v6673 = vmul.f32 %v4636, 0.2
        %v6674 = vmul.f32 %v5406, 0.2
        %v6675 = vmul.f32 %v5408, 0.2
        %v6676 = vmul.f32 %v6178, 0.2
        %v6677 = vmul.f32 %v6180, 0.2
        %v6678 = vmul.f32 %v3866, 0.2
        %v6679 = vmul.f32 %v3868, 0.2
        %v6680 = vmul.f32 %v4638, 0.2
        %v6681 = vmul.f32 %v4640, 0.2
        %v6682 = vmul.f32 %v5410, 0.2
        %v6683 = vmul.f32 %v5412, 0.2
        %v6684 = vmul.f32 %v6182, 0.2
        %v6685 = vmul.f32 %v6184, 0.2
        %v6686 = vmul.f32 %v3872, 0.2
        %v6687 = vmul.f32 %v3874, 0.2
        %v6688 = vmul.f32 %v4644, 0.2
        %v6689 = vmul.f32 %v4646, 0.2
        %v6690 = vmul.f32 %v5416, 0.2
        %v6691 = vmul.f32 %v5418, 0.2
        %v6692 = vmul.f32 %v6188, 0.2
        %v6693 = vmul.f32 %v6190, 0.2
        %v6694 = vmul.f32 %v3876, 0.2
        %v6695 = vmul.f32 %v3878, 0.2
        %v6696 = vmul.f32 %v4648, 0.2
        %v6697 = vmul.f32 %v4650, 0.2
        %v6698 = vmul.f32 %v5420, 0.2
        %v6699 = vmul.f32 %v5422, 0.2
        %v6700 = vmul.f32 %v6192, 0.2
        %v6701 = vmul.f32 %v6194, 0.2
        %v6702 = vmul.f32 %v3882, 0.2
        %v6703 = vmul.f32 %v3884, 0.2
        %v6704 = vmul.f32 %v4654, 0.2
        %v6705 = vmul.f32 %v4656, 0.2
        %v6706 = vmul.f32 %v5426, 0.2
        %v6707 = vmul.f32 %v5428, 0.2
        %v6708 = vmul.f32 %v6198, 0.2
        %v6709 = vmul.f32 %v6200, 0.2
        %v6710 = vmul.f32 %v3886, 0.2
        %v6711 = vmul.f32 %v3888, 0.2
        %v6712 = vmul.f32 %v4658, 0.2
        %v6713 = vmul.f32 %v4660, 0.2
        %v6714 = vmul.f32 %v5430, 0.2
        %v6715 = vmul.f32 %v5432, 0.2
        %v6716 = vmul.f32 %v6202, 0.2
        %v6717 = vmul.f32 %v6204, 0.2
        %v6718 = vsel %vm6206, %v3732, %v6462
        %v6719 = vsel %vm6207, %v3734, %v6463
        %v6720 = vsel %vm6208, %v4504, %v6464
        %v6721 = vsel %vm6209, %v4506, %v6465
        %v6722 = vsel %vm6210, %v5276, %v6466
        %v6723 = vsel %vm6211, %v5278, %v6467
        %v6724 = vsel %vm6212, %v6048, %v6468
        %v6725 = vsel %vm6213, %v6050, %v6469
        %v6726 = vsel %vm6214, %v3736, %v6470
        %v6727 = vsel %vm6215, %v3738, %v6471
        %v6728 = vsel %vm6216, %v4508, %v6472
        %v6729 = vsel %vm6217, %v4510, %v6473
        %v6730 = vsel %vm6218, %v5280, %v6474
        %v6731 = vsel %vm6219, %v5282, %v6475
        %v6732 = vsel %vm6220, %v6052, %v6476
        %v6733 = vsel %vm6221, %v6054, %v6477
        %v6734 = vsel %vm6222, %v3742, %v6478
        %v6735 = vsel %vm6223, %v3744, %v6479
        %v6736 = vsel %vm6224, %v4514, %v6480
        %v6737 = vsel %vm6225, %v4516, %v6481
        %v6738 = vsel %vm6226, %v5286, %v6482
        %v6739 = vsel %vm6227, %v5288, %v6483
        %v6740 = vsel %vm6228, %v6058, %v6484
        %v6741 = vsel %vm6229, %v6060, %v6485
        %v6742 = vsel %vm6230, %v3746, %v6486
        %v6743 = vsel %vm6231, %v3748, %v6487
        %v6744 = vsel %vm6232, %v4518, %v6488
        %v6745 = vsel %vm6233, %v4520, %v6489
        %v6746 = vsel %vm6234, %v5290, %v6490
        %v6747 = vsel %vm6235, %v5292, %v6491
        %v6748 = vsel %vm6236, %v6062, %v6492
        %v6749 = vsel %vm6237, %v6064, %v6493
        %v6750 = vsel %vm6238, %v3752, %v6494
        %v6751 = vsel %vm6239, %v3754, %v6495
        %v6752 = vsel %vm6240, %v4524, %v6496
        %v6753 = vsel %vm6241, %v4526, %v6497
        %v6754 = vsel %vm6242, %v5296, %v6498
        %v6755 = vsel %vm6243, %v5298, %v6499
        %v6756 = vsel %vm6244, %v6068, %v6500
        %v6757 = vsel %vm6245, %v6070, %v6501
        %v6758 = vsel %vm6246, %v3756, %v6502
        %v6759 = vsel %vm6247, %v3758, %v6503
        %v6760 = vsel %vm6248, %v4528, %v6504
        %v6761 = vsel %vm6249, %v4530, %v6505
        %v6762 = vsel %vm6250, %v5300, %v6506
        %v6763 = vsel %vm6251, %v5302, %v6507
        %v6764 = vsel %vm6252, %v6072, %v6508
        %v6765 = vsel %vm6253, %v6074, %v6509
        %v6766 = vsel %vm6254, %v3762, %v6510
        %v6767 = vsel %vm6255, %v3764, %v6511
        %v6768 = vsel %vm6256, %v4534, %v6512
        %v6769 = vsel %vm6257, %v4536, %v6513
        %v6770 = vsel %vm6258, %v5306, %v6514
        %v6771 = vsel %vm6259, %v5308, %v6515
        %v6772 = vsel %vm6260, %v6078, %v6516
        %v6773 = vsel %vm6261, %v6080, %v6517
        %v6774 = vsel %vm6262, %v3766, %v6518
        %v6775 = vsel %vm6263, %v3768, %v6519
        %v6776 = vsel %vm6264, %v4538, %v6520
        %v6777 = vsel %vm6265, %v4540, %v6521
        %v6778 = vsel %vm6266, %v5310, %v6522
        %v6779 = vsel %vm6267, %v5312, %v6523
        %v6780 = vsel %vm6268, %v6082, %v6524
        %v6781 = vsel %vm6269, %v6084, %v6525
        %v6782 = vsel %vm6270, %v3772, %v6526
        %v6783 = vsel %vm6271, %v3774, %v6527
        %v6784 = vsel %vm6272, %v4544, %v6528
        %v6785 = vsel %vm6273, %v4546, %v6529
        %v6786 = vsel %vm6274, %v5316, %v6530
        %v6787 = vsel %vm6275, %v5318, %v6531
        %v6788 = vsel %vm6276, %v6088, %v6532
        %v6789 = vsel %vm6277, %v6090, %v6533
        %v6790 = vsel %vm6278, %v3776, %v6534
        %v6791 = vsel %vm6279, %v3778, %v6535
        %v6792 = vsel %vm6280, %v4548, %v6536
        %v6793 = vsel %vm6281, %v4550, %v6537
        %v6794 = vsel %vm6282, %v5320, %v6538
        %v6795 = vsel %vm6283, %v5322, %v6539
        %v6796 = vsel %vm6284, %v6092, %v6540
        %v6797 = vsel %vm6285, %v6094, %v6541
        %v6798 = vsel %vm6286, %v3782, %v6542
        %v6799 = vsel %vm6287, %v3784, %v6543
        %v6800 = vsel %vm6288, %v4554, %v6544
        %v6801 = vsel %vm6289, %v4556, %v6545
        %v6802 = vsel %vm6290, %v5326, %v6546
        %v6803 = vsel %vm6291, %v5328, %v6547
        %v6804 = vsel %vm6292, %v6098, %v6548
        %v6805 = vsel %vm6293, %v6100, %v6549
        %v6806 = vsel %vm6294, %v3786, %v6550
        %v6807 = vsel %vm6295, %v3788, %v6551
        %v6808 = vsel %vm6296, %v4558, %v6552
        %v6809 = vsel %vm6297, %v4560, %v6553
        %v6810 = vsel %vm6298, %v5330, %v6554
        %v6811 = vsel %vm6299, %v5332, %v6555
        %v6812 = vsel %vm6300, %v6102, %v6556
        %v6813 = vsel %vm6301, %v6104, %v6557
        %v6814 = vsel %vm6302, %v3792, %v6558
        %v6815 = vsel %vm6303, %v3794, %v6559
        %v6816 = vsel %vm6304, %v4564, %v6560
        %v6817 = vsel %vm6305, %v4566, %v6561
        %v6818 = vsel %vm6306, %v5336, %v6562
        %v6819 = vsel %vm6307, %v5338, %v6563
        %v6820 = vsel %vm6308, %v6108, %v6564
        %v6821 = vsel %vm6309, %v6110, %v6565
        %v6822 = vsel %vm6310, %v3796, %v6566
        %v6823 = vsel %vm6311, %v3798, %v6567
        %v6824 = vsel %vm6312, %v4568, %v6568
        %v6825 = vsel %vm6313, %v4570, %v6569
        %v6826 = vsel %vm6314, %v5340, %v6570
        %v6827 = vsel %vm6315, %v5342, %v6571
        %v6828 = vsel %vm6316, %v6112, %v6572
        %v6829 = vsel %vm6317, %v6114, %v6573
        %v6830 = vsel %vm6318, %v3802, %v6574
        %v6831 = vsel %vm6319, %v3804, %v6575
        %v6832 = vsel %vm6320, %v4574, %v6576
        %v6833 = vsel %vm6321, %v4576, %v6577
        %v6834 = vsel %vm6322, %v5346, %v6578
        %v6835 = vsel %vm6323, %v5348, %v6579
        %v6836 = vsel %vm6324, %v6118, %v6580
        %v6837 = vsel %vm6325, %v6120, %v6581
        %v6838 = vsel %vm6326, %v3806, %v6582
        %v6839 = vsel %vm6327, %v3808, %v6583
        %v6840 = vsel %vm6328, %v4578, %v6584
        %v6841 = vsel %vm6329, %v4580, %v6585
        %v6842 = vsel %vm6330, %v5350, %v6586
        %v6843 = vsel %vm6331, %v5352, %v6587
        %v6844 = vsel %vm6332, %v6122, %v6588
        %v6845 = vsel %vm6333, %v6124, %v6589
        %v6846 = vsel %vm6334, %v3812, %v6590
        %v6847 = vsel %vm6335, %v3814, %v6591
        %v6848 = vsel %vm6336, %v4584, %v6592
        %v6849 = vsel %vm6337, %v4586, %v6593
        %v6850 = vsel %vm6338, %v5356, %v6594
        %v6851 = vsel %vm6339, %v5358, %v6595
        %v6852 = vsel %vm6340, %v6128, %v6596
        %v6853 = vsel %vm6341, %v6130, %v6597
        %v6854 = vsel %vm6342, %v3816, %v6598
        %v6855 = vsel %vm6343, %v3818, %v6599
        %v6856 = vsel %vm6344, %v4588, %v6600
        %v6857 = vsel %vm6345, %v4590, %v6601
        %v6858 = vsel %vm6346, %v5360, %v6602
        %v6859 = vsel %vm6347, %v5362, %v6603
        %v6860 = vsel %vm6348, %v6132, %v6604
        %v6861 = vsel %vm6349, %v6134, %v6605
        %v6862 = vsel %vm6350, %v3822, %v6606
        %v6863 = vsel %vm6351, %v3824, %v6607
        %v6864 = vsel %vm6352, %v4594, %v6608
        %v6865 = vsel %vm6353, %v4596, %v6609
        %v6866 = vsel %vm6354, %v5366, %v6610
        %v6867 = vsel %vm6355, %v5368, %v6611
        %v6868 = vsel %vm6356, %v6138, %v6612
        %v6869 = vsel %vm6357, %v6140, %v6613
        %v6870 = vsel %vm6358, %v3826, %v6614
        %v6871 = vsel %vm6359, %v3828, %v6615
        %v6872 = vsel %vm6360, %v4598, %v6616
        %v6873 = vsel %vm6361, %v4600, %v6617
        %v6874 = vsel %vm6362, %v5370, %v6618
        %v6875 = vsel %vm6363, %v5372, %v6619
        %v6876 = vsel %vm6364, %v6142, %v6620
        %v6877 = vsel %vm6365, %v6144, %v6621
        %v6878 = vsel %vm6366, %v3832, %v6622
        %v6879 = vsel %vm6367, %v3834, %v6623
        %v6880 = vsel %vm6368, %v4604, %v6624
        %v6881 = vsel %vm6369, %v4606, %v6625
        %v6882 = vsel %vm6370, %v5376, %v6626
        %v6883 = vsel %vm6371, %v5378, %v6627
        %v6884 = vsel %vm6372, %v6148, %v6628
        %v6885 = vsel %vm6373, %v6150, %v6629
        %v6886 = vsel %vm6374, %v3836, %v6630
        %v6887 = vsel %vm6375, %v3838, %v6631
        %v6888 = vsel %vm6376, %v4608, %v6632
        %v6889 = vsel %vm6377, %v4610, %v6633
        %v6890 = vsel %vm6378, %v5380, %v6634
        %v6891 = vsel %vm6379, %v5382, %v6635
        %v6892 = vsel %vm6380, %v6152, %v6636
        %v6893 = vsel %vm6381, %v6154, %v6637
        %v6894 = vsel %vm6382, %v3842, %v6638
        %v6895 = vsel %vm6383, %v3844, %v6639
        %v6896 = vsel %vm6384, %v4614, %v6640
        %v6897 = vsel %vm6385, %v4616, %v6641
        %v6898 = vsel %vm6386, %v5386, %v6642
        %v6899 = vsel %vm6387, %v5388, %v6643
        %v6900 = vsel %vm6388, %v6158, %v6644
        %v6901 = vsel %vm6389, %v6160, %v6645
        %v6902 = vsel %vm6390, %v3846, %v6646
        %v6903 = vsel %vm6391, %v3848, %v6647
        %v6904 = vsel %vm6392, %v4618, %v6648
        %v6905 = vsel %vm6393, %v4620, %v6649
        %v6906 = vsel %vm6394, %v5390, %v6650
        %v6907 = vsel %vm6395, %v5392, %v6651
        %v6908 = vsel %vm6396, %v6162, %v6652
        %v6909 = vsel %vm6397, %v6164, %v6653
        %v6910 = vsel %vm6398, %v3852, %v6654
        %v6911 = vsel %vm6399, %v3854, %v6655
        %v6912 = vsel %vm6400, %v4624, %v6656
        %v6913 = vsel %vm6401, %v4626, %v6657
        %v6914 = vsel %vm6402, %v5396, %v6658
        %v6915 = vsel %vm6403, %v5398, %v6659
        %v6916 = vsel %vm6404, %v6168, %v6660
        %v6917 = vsel %vm6405, %v6170, %v6661
        %v6918 = vsel %vm6406, %v3856, %v6662
        %v6919 = vsel %vm6407, %v3858, %v6663
        %v6920 = vsel %vm6408, %v4628, %v6664
        %v6921 = vsel %vm6409, %v4630, %v6665
        %v6922 = vsel %vm6410, %v5400, %v6666
        %v6923 = vsel %vm6411, %v5402, %v6667
        %v6924 = vsel %vm6412, %v6172, %v6668
        %v6925 = vsel %vm6413, %v6174, %v6669
        %v6926 = vsel %vm6414, %v3862, %v6670
        %v6927 = vsel %vm6415, %v3864, %v6671
        %v6928 = vsel %vm6416, %v4634, %v6672
        %v6929 = vsel %vm6417, %v4636, %v6673
        %v6930 = vsel %vm6418, %v5406, %v6674
        %v6931 = vsel %vm6419, %v5408, %v6675
        %v6932 = vsel %vm6420, %v6178, %v6676
        %v6933 = vsel %vm6421, %v6180, %v6677
        %v6934 = vsel %vm6422, %v3866, %v6678
        %v6935 = vsel %vm6423, %v3868, %v6679
        %v6936 = vsel %vm6424, %v4638, %v6680
        %v6937 = vsel %vm6425, %v4640, %v6681
        %v6938 = vsel %vm6426, %v5410, %v6682
        %v6939 = vsel %vm6427, %v5412, %v6683
        %v6940 = vsel %vm6428, %v6182, %v6684
        %v6941 = vsel %vm6429, %v6184, %v6685
        %v6942 = vsel %vm6430, %v3872, %v6686
        %v6943 = vsel %vm6431, %v3874, %v6687
        %v6944 = vsel %vm6432, %v4644, %v6688
        %v6945 = vsel %vm6433, %v4646, %v6689
        %v6946 = vsel %vm6434, %v5416, %v6690
        %v6947 = vsel %vm6435, %v5418, %v6691
        %v6948 = vsel %vm6436, %v6188, %v6692
        %v6949 = vsel %vm6437, %v6190, %v6693
        %v6950 = vsel %vm6438, %v3876, %v6694
        %v6951 = vsel %vm6439, %v3878, %v6695
        %v6952 = vsel %vm6440, %v4648, %v6696
        %v6953 = vsel %vm6441, %v4650, %v6697
        %v6954 = vsel %vm6442, %v5420, %v6698
        %v6955 = vsel %vm6443, %v5422, %v6699
        %v6956 = vsel %vm6444, %v6192, %v6700
        %v6957 = vsel %vm6445, %v6194, %v6701
        %v6958 = vsel %vm6446, %v3882, %v6702
        %v6959 = vsel %vm6447, %v3884, %v6703
        %v6960 = vsel %vm6448, %v4654, %v6704
        %v6961 = vsel %vm6449, %v4656, %v6705
        %v6962 = vsel %vm6450, %v5426, %v6706
        %v6963 = vsel %vm6451, %v5428, %v6707
        %v6964 = vsel %vm6452, %v6198, %v6708
        %v6965 = vsel %vm6453, %v6200, %v6709
        %v6966 = vsel %vm6454, %v3886, %v6710
        %v6967 = vsel %vm6455, %v3888, %v6711
        %v6968 = vsel %vm6456, %v4658, %v6712
        %v6969 = vsel %vm6457, %v4660, %v6713
        %v6970 = vsel %vm6458, %v5430, %v6714
        %v6971 = vsel %vm6459, %v5432, %v6715
        %v6972 = vsel %vm6460, %v6202, %v6716
        %v6973 = vsel %vm6461, %v6204, %v6717
        %v6974 = vpack.c.bf16 %v6726, %v6718
        %v6975 = vpack.c.bf16 %v6727, %v6719
        %v6976 = vpack.c.bf16 %v6728, %v6720
        %v6977 = vpack.c.bf16 %v6729, %v6721
        %v6978 = vpack.c.bf16 %v6730, %v6722
        %v6979 = vpack.c.bf16 %v6731, %v6723
        %v6980 = vpack.c.bf16 %v6732, %v6724
        %v6981 = vpack.c.bf16 %v6733, %v6725
        %v6982 = vpack.c.bf16 %v6742, %v6734
        %v6983 = vpack.c.bf16 %v6743, %v6735
        %v6984 = vpack.c.bf16 %v6744, %v6736
        %v6985 = vpack.c.bf16 %v6745, %v6737
        %v6986 = vpack.c.bf16 %v6746, %v6738
        %v6987 = vpack.c.bf16 %v6747, %v6739
        %v6988 = vpack.c.bf16 %v6748, %v6740
        %v6989 = vpack.c.bf16 %v6749, %v6741
        %v6990 = vpack.c.bf16 %v6758, %v6750
        %v6991 = vpack.c.bf16 %v6759, %v6751
        %v6992 = vpack.c.bf16 %v6760, %v6752
        %v6993 = vpack.c.bf16 %v6761, %v6753
        %v6994 = vpack.c.bf16 %v6762, %v6754
        %v6995 = vpack.c.bf16 %v6763, %v6755
        %v6996 = vpack.c.bf16 %v6764, %v6756
        %v6997 = vpack.c.bf16 %v6765, %v6757
        %v6998 = vpack.c.bf16 %v6774, %v6766
        %v6999 = vpack.c.bf16 %v6775, %v6767
        %v7000 = vpack.c.bf16 %v6776, %v6768
        %v7001 = vpack.c.bf16 %v6777, %v6769
        %v7002 = vpack.c.bf16 %v6778, %v6770
        %v7003 = vpack.c.bf16 %v6779, %v6771
        %v7004 = vpack.c.bf16 %v6780, %v6772
        %v7005 = vpack.c.bf16 %v6781, %v6773
        %v7006 = vpack.c.bf16 %v6790, %v6782
        %v7007 = vpack.c.bf16 %v6791, %v6783
        %v7008 = vpack.c.bf16 %v6792, %v6784
        %v7009 = vpack.c.bf16 %v6793, %v6785
        %v7010 = vpack.c.bf16 %v6794, %v6786
        %v7011 = vpack.c.bf16 %v6795, %v6787
        %v7012 = vpack.c.bf16 %v6796, %v6788
        %v7013 = vpack.c.bf16 %v6797, %v6789
        %v7014 = vpack.c.bf16 %v6806, %v6798
        %v7015 = vpack.c.bf16 %v6807, %v6799
        %v7016 = vpack.c.bf16 %v6808, %v6800
        %v7017 = vpack.c.bf16 %v6809, %v6801
        %v7018 = vpack.c.bf16 %v6810, %v6802
        %v7019 = vpack.c.bf16 %v6811, %v6803
        %v7020 = vpack.c.bf16 %v6812, %v6804
        %v7021 = vpack.c.bf16 %v6813, %v6805
        %v7022 = vpack.c.bf16 %v6822, %v6814
        %v7023 = vpack.c.bf16 %v6823, %v6815
        %v7024 = vpack.c.bf16 %v6824, %v6816
        %v7025 = vpack.c.bf16 %v6825, %v6817
        %v7026 = vpack.c.bf16 %v6826, %v6818
        %v7027 = vpack.c.bf16 %v6827, %v6819
        %v7028 = vpack.c.bf16 %v6828, %v6820
        %v7029 = vpack.c.bf16 %v6829, %v6821
        %v7030 = vpack.c.bf16 %v6838, %v6830
        %v7031 = vpack.c.bf16 %v6839, %v6831
        %v7032 = vpack.c.bf16 %v6840, %v6832
        %v7033 = vpack.c.bf16 %v6841, %v6833
        %v7034 = vpack.c.bf16 %v6842, %v6834
        %v7035 = vpack.c.bf16 %v6843, %v6835
        %v7036 = vpack.c.bf16 %v6844, %v6836
        %v7037 = vpack.c.bf16 %v6845, %v6837
        %v7038 = vpack.c.bf16 %v6854, %v6846
        %v7039 = vpack.c.bf16 %v6855, %v6847
        %v7040 = vpack.c.bf16 %v6856, %v6848
        %v7041 = vpack.c.bf16 %v6857, %v6849
        %v7042 = vpack.c.bf16 %v6858, %v6850
        %v7043 = vpack.c.bf16 %v6859, %v6851
        %v7044 = vpack.c.bf16 %v6860, %v6852
        %v7045 = vpack.c.bf16 %v6861, %v6853
        %v7046 = vpack.c.bf16 %v6870, %v6862
        %v7047 = vpack.c.bf16 %v6871, %v6863
        %v7048 = vpack.c.bf16 %v6872, %v6864
        %v7049 = vpack.c.bf16 %v6873, %v6865
        %v7050 = vpack.c.bf16 %v6874, %v6866
        %v7051 = vpack.c.bf16 %v6875, %v6867
        %v7052 = vpack.c.bf16 %v6876, %v6868
        %v7053 = vpack.c.bf16 %v6877, %v6869
        %v7054 = vpack.c.bf16 %v6886, %v6878
        %v7055 = vpack.c.bf16 %v6887, %v6879
        %v7056 = vpack.c.bf16 %v6888, %v6880
        %v7057 = vpack.c.bf16 %v6889, %v6881
        %v7058 = vpack.c.bf16 %v6890, %v6882
        %v7059 = vpack.c.bf16 %v6891, %v6883
        %v7060 = vpack.c.bf16 %v6892, %v6884
        %v7061 = vpack.c.bf16 %v6893, %v6885
        %v7062 = vpack.c.bf16 %v6902, %v6894
        %v7063 = vpack.c.bf16 %v6903, %v6895
        %v7064 = vpack.c.bf16 %v6904, %v6896
        %v7065 = vpack.c.bf16 %v6905, %v6897
        %v7066 = vpack.c.bf16 %v6906, %v6898
        %v7067 = vpack.c.bf16 %v6907, %v6899
        %v7068 = vpack.c.bf16 %v6908, %v6900
        %v7069 = vpack.c.bf16 %v6909, %v6901
        %v7070 = vpack.c.bf16 %v6918, %v6910
        %v7071 = vpack.c.bf16 %v6919, %v6911
        %v7072 = vpack.c.bf16 %v6920, %v6912
        %v7073 = vpack.c.bf16 %v6921, %v6913
        %v7074 = vpack.c.bf16 %v6922, %v6914
        %v7075 = vpack.c.bf16 %v6923, %v6915
        %v7076 = vpack.c.bf16 %v6924, %v6916
        %v7077 = vpack.c.bf16 %v6925, %v6917
        %v7078 = vpack.c.bf16 %v6934, %v6926
        %v7079 = vpack.c.bf16 %v6935, %v6927
        %v7080 = vpack.c.bf16 %v6936, %v6928
        %v7081 = vpack.c.bf16 %v6937, %v6929
        %v7082 = vpack.c.bf16 %v6938, %v6930
        %v7083 = vpack.c.bf16 %v6939, %v6931
        %v7084 = vpack.c.bf16 %v6940, %v6932
        %v7085 = vpack.c.bf16 %v6941, %v6933
        %v7086 = vpack.c.bf16 %v6950, %v6942
        %v7087 = vpack.c.bf16 %v6951, %v6943
        %v7088 = vpack.c.bf16 %v6952, %v6944
        %v7089 = vpack.c.bf16 %v6953, %v6945
        %v7090 = vpack.c.bf16 %v6954, %v6946
        %v7091 = vpack.c.bf16 %v6955, %v6947
        %v7092 = vpack.c.bf16 %v6956, %v6948
        %v7093 = vpack.c.bf16 %v6957, %v6949
        %v7094 = vpack.c.bf16 %v6966, %v6958
        %v7095 = vpack.c.bf16 %v6967, %v6959
        %v7096 = vpack.c.bf16 %v6968, %v6960
        %v7097 = vpack.c.bf16 %v6969, %v6961
        %v7098 = vpack.c.bf16 %v6970, %v6962
        %v7099 = vpack.c.bf16 %v6971, %v6963
        %v7100 = vpack.c.bf16 %v6972, %v6964
        %v7101 = vpack.c.bf16 %v6973, %v6965
        %v7102 = vld [vmem:[%s3] sm:$0xff]
        %v7103 = vld [vmem:[%s3 + $0x8] sm:$0xff]
        %v7104 = vld [vmem:[%s3 + $0x10] sm:$0xff]
        %v7105 = vld [vmem:[%s3 + $0x18] sm:$0xff]
        %v7106 = vld [vmem:[%s3 + $0x20] sm:$0xff]
        %v7107 = vld [vmem:[%s3 + $0x28] sm:$0xff]
        %v7108 = vld [vmem:[%s3 + $0x30] sm:$0xff]
        %v7109 = vld [vmem:[%s3 + $0x38] sm:$0xff]
        %v7110 = vld [vmem:[%s3 + $0x40] sm:$0xff]
        %v7111 = vld [vmem:[%s3 + $0x48] sm:$0xff]
        %v7112 = vld [vmem:[%s3 + $0x50] sm:$0xff]
        %v7113 = vld [vmem:[%s3 + $0x58] sm:$0xff]
        %v7114 = vld [vmem:[%s3 + $0x60] sm:$0xff]
        %v7115 = vld [vmem:[%s3 + $0x68] sm:$0xff]
        %v7116 = vld [vmem:[%s3 + $0x70] sm:$0xff]
        %v7117 = vld [vmem:[%s3 + $0x78] sm:$0xff]
        %v7118 = vld [vmem:[%s3 + $0x80] sm:$0xff]
        %v7119 = vld [vmem:[%s3 + $0x88] sm:$0xff]
        %v7120 = vld [vmem:[%s3 + $0x90] sm:$0xff]
        %v7121 = vld [vmem:[%s3 + $0x98] sm:$0xff]
        %v7122 = vld [vmem:[%s3 + $0xa0] sm:$0xff]
        %v7123 = vld [vmem:[%s3 + $0xa8] sm:$0xff]
        %v7124 = vld [vmem:[%s3 + $0xb0] sm:$0xff]
        %v7125 = vld [vmem:[%s3 + $0xb8] sm:$0xff]
        %v7126 = vld [vmem:[%s3 + $0xc0] sm:$0xff]
        %v7127 = vld [vmem:[%s3 + $0xc8] sm:$0xff]
        %v7128 = vld [vmem:[%s3 + $0xd0] sm:$0xff]
        %v7129 = vld [vmem:[%s3 + $0xd8] sm:$0xff]
        %v7130 = vld [vmem:[%s3 + $0xe0] sm:$0xff]
        %v7131 = vld [vmem:[%s3 + $0xe8] sm:$0xff]
        %v7132 = vld [vmem:[%s3 + $0xf0] sm:$0xff]
        %v7133 = vld [vmem:[%s3 + $0xf8] sm:$0xff]
        %v7134 = vld [vmem:[%s3 + $0x100] sm:$0xff]
        %v7135 = vld [vmem:[%s3 + $0x108] sm:$0xff]
        %v7136 = vld [vmem:[%s3 + $0x110] sm:$0xff]
        %v7137 = vld [vmem:[%s3 + $0x118] sm:$0xff]
        %v7138 = vld [vmem:[%s3 + $0x120] sm:$0xff]
        %v7139 = vld [vmem:[%s3 + $0x128] sm:$0xff]
        %v7140 = vld [vmem:[%s3 + $0x130] sm:$0xff]
        %v7141 = vld [vmem:[%s3 + $0x138] sm:$0xff]
        %v7142 = vld [vmem:[%s3 + $0x140] sm:$0xff]
        %v7143 = vld [vmem:[%s3 + $0x148] sm:$0xff]
        %v7144 = vld [vmem:[%s3 + $0x150] sm:$0xff]
        %v7145 = vld [vmem:[%s3 + $0x158] sm:$0xff]
        %v7146 = vld [vmem:[%s3 + $0x160] sm:$0xff]
        %v7147 = vld [vmem:[%s3 + $0x168] sm:$0xff]
        %v7148 = vld [vmem:[%s3 + $0x170] sm:$0xff]
        %v7149 = vld [vmem:[%s3 + $0x178] sm:$0xff]
        %v7150 = vld [vmem:[%s3 + $0x180] sm:$0xff]
        %v7151 = vld [vmem:[%s3 + $0x188] sm:$0xff]
        %v7152 = vld [vmem:[%s3 + $0x190] sm:$0xff]
        %v7153 = vld [vmem:[%s3 + $0x198] sm:$0xff]
        %v7154 = vld [vmem:[%s3 + $0x1a0] sm:$0xff]
        %v7155 = vld [vmem:[%s3 + $0x1a8] sm:$0xff]
        %v7156 = vld [vmem:[%s3 + $0x1b0] sm:$0xff]
        %v7157 = vld [vmem:[%s3 + $0x1b8] sm:$0xff]
        %v7158 = vld [vmem:[%s3 + $0x1c0] sm:$0xff]
        %v7159 = vld [vmem:[%s3 + $0x1c8] sm:$0xff]
        %v7160 = vld [vmem:[%s3 + $0x1d0] sm:$0xff]
        %v7161 = vld [vmem:[%s3 + $0x1d8] sm:$0xff]
        %v7162 = vld [vmem:[%s3 + $0x1e0] sm:$0xff]
        %v7163 = vld [vmem:[%s3 + $0x1e8] sm:$0xff]
        %v7164 = vld [vmem:[%s3 + $0x1f0] sm:$0xff]
        %v7165 = vld [vmem:[%s3 + $0x1f8] sm:$0xff]
        %v7166 = vld [vmem:[%s3 + $0x200] sm:$0xff]
        %v7167 = vld [vmem:[%s3 + $0x208] sm:$0xff]
        %v7168 = vld [vmem:[%s3 + $0x210] sm:$0xff]
        %v7169 = vld [vmem:[%s3 + $0x218] sm:$0xff]
        %v7170 = vld [vmem:[%s3 + $0x220] sm:$0xff]
        %v7171 = vld [vmem:[%s3 + $0x228] sm:$0xff]
        %v7172 = vld [vmem:[%s3 + $0x230] sm:$0xff]
        %v7173 = vld [vmem:[%s3 + $0x238] sm:$0xff]
        %v7174 = vld [vmem:[%s3 + $0x240] sm:$0xff]
        %v7175 = vld [vmem:[%s3 + $0x248] sm:$0xff]
        %v7176 = vld [vmem:[%s3 + $0x250] sm:$0xff]
        %v7177 = vld [vmem:[%s3 + $0x258] sm:$0xff]
        %v7178 = vld [vmem:[%s3 + $0x260] sm:$0xff]
        %v7179 = vld [vmem:[%s3 + $0x268] sm:$0xff]
        %v7180 = vld [vmem:[%s3 + $0x270] sm:$0xff]
        %v7181 = vld [vmem:[%s3 + $0x278] sm:$0xff]
        %v7182 = vld [vmem:[%s3 + $0x280] sm:$0xff]
        %v7183 = vld [vmem:[%s3 + $0x288] sm:$0xff]
        %v7184 = vld [vmem:[%s3 + $0x290] sm:$0xff]
        %v7185 = vld [vmem:[%s3 + $0x298] sm:$0xff]
        %v7186 = vld [vmem:[%s3 + $0x2a0] sm:$0xff]
        %v7187 = vld [vmem:[%s3 + $0x2a8] sm:$0xff]
        %v7188 = vld [vmem:[%s3 + $0x2b0] sm:$0xff]
        %v7189 = vld [vmem:[%s3 + $0x2b8] sm:$0xff]
        %v7190 = vld [vmem:[%s3 + $0x2c0] sm:$0xff]
        %v7191 = vld [vmem:[%s3 + $0x2c8] sm:$0xff]
        %v7192 = vld [vmem:[%s3 + $0x2d0] sm:$0xff]
        %v7193 = vld [vmem:[%s3 + $0x2d8] sm:$0xff]
        %v7194 = vld [vmem:[%s3 + $0x2e0] sm:$0xff]
        %v7195 = vld [vmem:[%s3 + $0x2e8] sm:$0xff]
        %v7196 = vld [vmem:[%s3 + $0x2f0] sm:$0xff]
        %v7197 = vld [vmem:[%s3 + $0x2f8] sm:$0xff]
        %v7198 = vld [vmem:[%s3 + $0x300] sm:$0xff]
        %v7199 = vld [vmem:[%s3 + $0x308] sm:$0xff]
        %v7200 = vld [vmem:[%s3 + $0x310] sm:$0xff]
        %v7201 = vld [vmem:[%s3 + $0x318] sm:$0xff]
        %v7202 = vld [vmem:[%s3 + $0x320] sm:$0xff]
        %v7203 = vld [vmem:[%s3 + $0x328] sm:$0xff]
        %v7204 = vld [vmem:[%s3 + $0x330] sm:$0xff]
        %v7205 = vld [vmem:[%s3 + $0x338] sm:$0xff]
        %v7206 = vld [vmem:[%s3 + $0x340] sm:$0xff]
        %v7207 = vld [vmem:[%s3 + $0x348] sm:$0xff]
        %v7208 = vld [vmem:[%s3 + $0x350] sm:$0xff]
        %v7209 = vld [vmem:[%s3 + $0x358] sm:$0xff]
        %v7210 = vld [vmem:[%s3 + $0x360] sm:$0xff]
        %v7211 = vld [vmem:[%s3 + $0x368] sm:$0xff]
        %v7212 = vld [vmem:[%s3 + $0x370] sm:$0xff]
        %v7213 = vld [vmem:[%s3 + $0x378] sm:$0xff]
        %v7214 = vld [vmem:[%s3 + $0x380] sm:$0xff]
        %v7215 = vld [vmem:[%s3 + $0x388] sm:$0xff]
        %v7216 = vld [vmem:[%s3 + $0x390] sm:$0xff]
        %v7217 = vld [vmem:[%s3 + $0x398] sm:$0xff]
        %v7218 = vld [vmem:[%s3 + $0x3a0] sm:$0xff]
        %v7219 = vld [vmem:[%s3 + $0x3a8] sm:$0xff]
        %v7220 = vld [vmem:[%s3 + $0x3b0] sm:$0xff]
        %v7221 = vld [vmem:[%s3 + $0x3b8] sm:$0xff]
        %v7222 = vld [vmem:[%s3 + $0x3c0] sm:$0xff]
        %v7223 = vld [vmem:[%s3 + $0x3c8] sm:$0xff]
        %v7224 = vld [vmem:[%s3 + $0x3d0] sm:$0xff]
        %v7225 = vld [vmem:[%s3 + $0x3d8] sm:$0xff]
        %v7226 = vld [vmem:[%s3 + $0x3e0] sm:$0xff]
        %v7227 = vld [vmem:[%s3 + $0x3e8] sm:$0xff]
        %v7228 = vld [vmem:[%s3 + $0x3f0] sm:$0xff]
        %v7229 = vld [vmem:[%s3 + $0x3f8] sm:$0xff]
        %v7230 = vld [vmem:[%s3 + $0x400] sm:$0xff]
        %v7231 = vld [vmem:[%s3 + $0x408] sm:$0xff]
        %v7232 = vld [vmem:[%s3 + $0x410] sm:$0xff]
        %v7233 = vld [vmem:[%s3 + $0x418] sm:$0xff]
        %v7234 = vld [vmem:[%s3 + $0x420] sm:$0xff]
        %v7235 = vld [vmem:[%s3 + $0x428] sm:$0xff]
        %v7236 = vld [vmem:[%s3 + $0x430] sm:$0xff]
        %v7237 = vld [vmem:[%s3 + $0x438] sm:$0xff]
        %v7238 = vld [vmem:[%s3 + $0x440] sm:$0xff]
        %v7239 = vld [vmem:[%s3 + $0x448] sm:$0xff]
        %v7240 = vld [vmem:[%s3 + $0x450] sm:$0xff]
        %v7241 = vld [vmem:[%s3 + $0x458] sm:$0xff]
        %v7242 = vld [vmem:[%s3 + $0x460] sm:$0xff]
        %v7243 = vld [vmem:[%s3 + $0x468] sm:$0xff]
        %v7244 = vld [vmem:[%s3 + $0x470] sm:$0xff]
        %v7245 = vld [vmem:[%s3 + $0x478] sm:$0xff]
        %v7246 = vld [vmem:[%s3 + $0x480] sm:$0xff]
        %v7247 = vld [vmem:[%s3 + $0x488] sm:$0xff]
        %v7248 = vld [vmem:[%s3 + $0x490] sm:$0xff]
        %v7249 = vld [vmem:[%s3 + $0x498] sm:$0xff]
        %v7250 = vld [vmem:[%s3 + $0x4a0] sm:$0xff]
        %v7251 = vld [vmem:[%s3 + $0x4a8] sm:$0xff]
        %v7252 = vld [vmem:[%s3 + $0x4b0] sm:$0xff]
        %v7253 = vld [vmem:[%s3 + $0x4b8] sm:$0xff]
        %v7254 = vld [vmem:[%s3 + $0x4c0] sm:$0xff]
        %v7255 = vld [vmem:[%s3 + $0x4c8] sm:$0xff]
        %v7256 = vld [vmem:[%s3 + $0x4d0] sm:$0xff]
        %v7257 = vld [vmem:[%s3 + $0x4d8] sm:$0xff]
        %v7258 = vld [vmem:[%s3 + $0x4e0] sm:$0xff]
        %v7259 = vld [vmem:[%s3 + $0x4e8] sm:$0xff]
        %v7260 = vld [vmem:[%s3 + $0x4f0] sm:$0xff]
        %v7261 = vld [vmem:[%s3 + $0x4f8] sm:$0xff]
        %v7262 = vld [vmem:[%s3 + $0x500] sm:$0xff]
        %v7263 = vld [vmem:[%s3 + $0x508] sm:$0xff]
        %v7264 = vld [vmem:[%s3 + $0x510] sm:$0xff]
        %v7265 = vld [vmem:[%s3 + $0x518] sm:$0xff]
        %v7266 = vld [vmem:[%s3 + $0x520] sm:$0xff]
        %v7267 = vld [vmem:[%s3 + $0x528] sm:$0xff]
        %v7268 = vld [vmem:[%s3 + $0x530] sm:$0xff]
        %v7269 = vld [vmem:[%s3 + $0x538] sm:$0xff]
        %v7270 = vld [vmem:[%s3 + $0x540] sm:$0xff]
        %v7271 = vld [vmem:[%s3 + $0x548] sm:$0xff]
        %v7272 = vld [vmem:[%s3 + $0x550] sm:$0xff]
        %v7273 = vld [vmem:[%s3 + $0x558] sm:$0xff]
        %v7274 = vld [vmem:[%s3 + $0x560] sm:$0xff]
        %v7275 = vld [vmem:[%s3 + $0x568] sm:$0xff]
        %v7276 = vld [vmem:[%s3 + $0x570] sm:$0xff]
        %v7277 = vld [vmem:[%s3 + $0x578] sm:$0xff]
        %v7278 = vld [vmem:[%s3 + $0x580] sm:$0xff]
        %v7279 = vld [vmem:[%s3 + $0x588] sm:$0xff]
        %v7280 = vld [vmem:[%s3 + $0x590] sm:$0xff]
        %v7281 = vld [vmem:[%s3 + $0x598] sm:$0xff]
        %v7282 = vld [vmem:[%s3 + $0x5a0] sm:$0xff]
        %v7283 = vld [vmem:[%s3 + $0x5a8] sm:$0xff]
        %v7284 = vld [vmem:[%s3 + $0x5b0] sm:$0xff]
        %v7285 = vld [vmem:[%s3 + $0x5b8] sm:$0xff]
        %v7286 = vld [vmem:[%s3 + $0x5c0] sm:$0xff]
        %v7287 = vld [vmem:[%s3 + $0x5c8] sm:$0xff]
        %v7288 = vld [vmem:[%s3 + $0x5d0] sm:$0xff]
        %v7289 = vld [vmem:[%s3 + $0x5d8] sm:$0xff]
        %v7290 = vld [vmem:[%s3 + $0x5e0] sm:$0xff]
        %v7291 = vld [vmem:[%s3 + $0x5e8] sm:$0xff]
        %v7292 = vld [vmem:[%s3 + $0x5f0] sm:$0xff]
        %v7293 = vld [vmem:[%s3 + $0x5f8] sm:$0xff]
        %v7294 = vld [vmem:[%s3 + $0x600] sm:$0xff]
        %v7295 = vld [vmem:[%s3 + $0x608] sm:$0xff]
        %v7296 = vld [vmem:[%s3 + $0x610] sm:$0xff]
        %v7297 = vld [vmem:[%s3 + $0x618] sm:$0xff]
        %v7298 = vld [vmem:[%s3 + $0x620] sm:$0xff]
        %v7299 = vld [vmem:[%s3 + $0x628] sm:$0xff]
        %v7300 = vld [vmem:[%s3 + $0x630] sm:$0xff]
        %v7301 = vld [vmem:[%s3 + $0x638] sm:$0xff]
        %v7302 = vld [vmem:[%s3 + $0x640] sm:$0xff]
        %v7303 = vld [vmem:[%s3 + $0x648] sm:$0xff]
        %v7304 = vld [vmem:[%s3 + $0x650] sm:$0xff]
        %v7305 = vld [vmem:[%s3 + $0x658] sm:$0xff]
        %v7306 = vld [vmem:[%s3 + $0x660] sm:$0xff]
        %v7307 = vld [vmem:[%s3 + $0x668] sm:$0xff]
        %v7308 = vld [vmem:[%s3 + $0x670] sm:$0xff]
        %v7309 = vld [vmem:[%s3 + $0x678] sm:$0xff]
        %v7310 = vld [vmem:[%s3 + $0x680] sm:$0xff]
        %v7311 = vld [vmem:[%s3 + $0x688] sm:$0xff]
        %v7312 = vld [vmem:[%s3 + $0x690] sm:$0xff]
        %v7313 = vld [vmem:[%s3 + $0x698] sm:$0xff]
        %v7314 = vld [vmem:[%s3 + $0x6a0] sm:$0xff]
        %v7315 = vld [vmem:[%s3 + $0x6a8] sm:$0xff]
        %v7316 = vld [vmem:[%s3 + $0x6b0] sm:$0xff]
        %v7317 = vld [vmem:[%s3 + $0x6b8] sm:$0xff]
        %v7318 = vld [vmem:[%s3 + $0x6c0] sm:$0xff]
        %v7319 = vld [vmem:[%s3 + $0x6c8] sm:$0xff]
        %v7320 = vld [vmem:[%s3 + $0x6d0] sm:$0xff]
        %v7321 = vld [vmem:[%s3 + $0x6d8] sm:$0xff]
        %v7322 = vld [vmem:[%s3 + $0x6e0] sm:$0xff]
        %v7323 = vld [vmem:[%s3 + $0x6e8] sm:$0xff]
        %v7324 = vld [vmem:[%s3 + $0x6f0] sm:$0xff]
        %v7325 = vld [vmem:[%s3 + $0x6f8] sm:$0xff]
        %v7326 = vld [vmem:[%s3 + $0x700] sm:$0xff]
        %v7327 = vld [vmem:[%s3 + $0x708] sm:$0xff]
        %v7328 = vld [vmem:[%s3 + $0x710] sm:$0xff]
        %v7329 = vld [vmem:[%s3 + $0x718] sm:$0xff]
        %v7330 = vld [vmem:[%s3 + $0x720] sm:$0xff]
        %v7331 = vld [vmem:[%s3 + $0x728] sm:$0xff]
        %v7332 = vld [vmem:[%s3 + $0x730] sm:$0xff]
        %v7333 = vld [vmem:[%s3 + $0x738] sm:$0xff]
        %v7334 = vld [vmem:[%s3 + $0x740] sm:$0xff]
        %v7335 = vld [vmem:[%s3 + $0x748] sm:$0xff]
        %v7336 = vld [vmem:[%s3 + $0x750] sm:$0xff]
        %v7337 = vld [vmem:[%s3 + $0x758] sm:$0xff]
        %v7338 = vld [vmem:[%s3 + $0x760] sm:$0xff]
        %v7339 = vld [vmem:[%s3 + $0x768] sm:$0xff]
        %v7340 = vld [vmem:[%s3 + $0x770] sm:$0xff]
        %v7341 = vld [vmem:[%s3 + $0x778] sm:$0xff]
        %v7342 = vld [vmem:[%s3 + $0x780] sm:$0xff]
        %v7343 = vld [vmem:[%s3 + $0x788] sm:$0xff]
        %v7344 = vld [vmem:[%s3 + $0x790] sm:$0xff]
        %v7345 = vld [vmem:[%s3 + $0x798] sm:$0xff]
        %v7346 = vld [vmem:[%s3 + $0x7a0] sm:$0xff]
        %v7347 = vld [vmem:[%s3 + $0x7a8] sm:$0xff]
        %v7348 = vld [vmem:[%s3 + $0x7b0] sm:$0xff]
        %v7349 = vld [vmem:[%s3 + $0x7b8] sm:$0xff]
        %v7350 = vld [vmem:[%s3 + $0x7c0] sm:$0xff]
        %v7351 = vld [vmem:[%s3 + $0x7c8] sm:$0xff]
        %v7352 = vld [vmem:[%s3 + $0x7d0] sm:$0xff]
        %v7353 = vld [vmem:[%s3 + $0x7d8] sm:$0xff]
        %v7354 = vld [vmem:[%s3 + $0x7e0] sm:$0xff]
        %v7355 = vld [vmem:[%s3 + $0x7e8] sm:$0xff]
        %v7356 = vld [vmem:[%s3 + $0x7f0] sm:$0xff]
        %v7357 = vld [vmem:[%s3 + $0x7f8] sm:$0xff]
        %v7358 = vld [vmem:[%s4] sm:$0xf]
        %v7360 = vlaneseq
        %v7361 = vshrl.u32 %v7360, 7
        %v7362 = vsub.s32 0, %v7361
        %v7363 = vrot.slane %v7358, %v7362
        %v7364 = vlaneseq
        %v7365 = vshrl.u32 %v7364, 7
        %v7366 = vsub.s32 1, %v7365
        %v7367 = vrot.slane %v7358, %v7366
        %v7368 = vlaneseq
        %v7369 = vshrl.u32 %v7368, 7
        %v7370 = vsub.s32 2, %v7369
        %v7371 = vrot.slane %v7358, %v7370
        %v7372 = vlaneseq
        %v7373 = vshrl.u32 %v7372, 7
        %v7374 = vsub.s32 3, %v7373
        %v7375 = vrot.slane %v7358, %v7374
        %v7636 = vunpack.c.l.b16 %v7102
        %v7637 = vunpack.c.h.b16 %v7102
        %v7638 = vunpack.c.l.b16 %v7103
        %v7639 = vunpack.c.h.b16 %v7103
        %v7640 = vunpack.c.l.b16 %v7104
        %v7641 = vunpack.c.h.b16 %v7104
        %v7642 = vunpack.c.l.b16 %v7105
        %v7643 = vunpack.c.h.b16 %v7105
        %v7644 = vunpack.c.l.b16 %v7106
        %v7645 = vunpack.c.h.b16 %v7106
        %v7646 = vunpack.c.l.b16 %v7107
        %v7647 = vunpack.c.h.b16 %v7107
        %v7648 = vunpack.c.l.b16 %v7108
        %v7649 = vunpack.c.h.b16 %v7108
        %v7650 = vunpack.c.l.b16 %v7109
        %v7651 = vunpack.c.h.b16 %v7109
        %v7652 = vunpack.c.l.b16 %v7110
        %v7653 = vunpack.c.h.b16 %v7110
        %v7654 = vunpack.c.l.b16 %v7111
        %v7655 = vunpack.c.h.b16 %v7111
        %v7656 = vunpack.c.l.b16 %v7112
        %v7657 = vunpack.c.h.b16 %v7112
        %v7658 = vunpack.c.l.b16 %v7113
        %v7659 = vunpack.c.h.b16 %v7113
        %v7660 = vunpack.c.l.b16 %v7114
        %v7661 = vunpack.c.h.b16 %v7114
        %v7662 = vunpack.c.l.b16 %v7115
        %v7663 = vunpack.c.h.b16 %v7115
        %v7664 = vunpack.c.l.b16 %v7116
        %v7665 = vunpack.c.h.b16 %v7116
        %v7666 = vunpack.c.l.b16 %v7117
        %v7667 = vunpack.c.h.b16 %v7117
        %v7668 = vunpack.c.l.b16 %v7118
        %v7669 = vunpack.c.h.b16 %v7118
        %v7670 = vunpack.c.l.b16 %v7119
        %v7671 = vunpack.c.h.b16 %v7119
        %v7672 = vunpack.c.l.b16 %v7120
        %v7673 = vunpack.c.h.b16 %v7120
        %v7674 = vunpack.c.l.b16 %v7121
        %v7675 = vunpack.c.h.b16 %v7121
        %v7676 = vunpack.c.l.b16 %v7122
        %v7677 = vunpack.c.h.b16 %v7122
        %v7678 = vunpack.c.l.b16 %v7123
        %v7679 = vunpack.c.h.b16 %v7123
        %v7680 = vunpack.c.l.b16 %v7124
        %v7681 = vunpack.c.h.b16 %v7124
        %v7682 = vunpack.c.l.b16 %v7125
        %v7683 = vunpack.c.h.b16 %v7125
        %v7684 = vunpack.c.l.b16 %v7126
        %v7685 = vunpack.c.h.b16 %v7126
        %v7686 = vunpack.c.l.b16 %v7127
        %v7687 = vunpack.c.h.b16 %v7127
        %v7688 = vunpack.c.l.b16 %v7128
        %v7689 = vunpack.c.h.b16 %v7128
        %v7690 = vunpack.c.l.b16 %v7129
        %v7691 = vunpack.c.h.b16 %v7129
        %v7692 = vunpack.c.l.b16 %v7130
        %v7693 = vunpack.c.h.b16 %v7130
        %v7694 = vunpack.c.l.b16 %v7131
        %v7695 = vunpack.c.h.b16 %v7131
        %v7696 = vunpack.c.l.b16 %v7132
        %v7697 = vunpack.c.h.b16 %v7132
        %v7698 = vunpack.c.l.b16 %v7133
        %v7699 = vunpack.c.h.b16 %v7133
        %v7700 = vunpack.c.l.b16 %v7134
        %v7701 = vunpack.c.h.b16 %v7134
        %v7702 = vunpack.c.l.b16 %v7135
        %v7703 = vunpack.c.h.b16 %v7135
        %v7704 = vunpack.c.l.b16 %v7136
        %v7705 = vunpack.c.h.b16 %v7136
        %v7706 = vunpack.c.l.b16 %v7137
        %v7707 = vunpack.c.h.b16 %v7137
        %v7708 = vunpack.c.l.b16 %v7138
        %v7709 = vunpack.c.h.b16 %v7138
        %v7710 = vunpack.c.l.b16 %v7139
        %v7711 = vunpack.c.h.b16 %v7139
        %v7712 = vunpack.c.l.b16 %v7140
        %v7713 = vunpack.c.h.b16 %v7140
        %v7714 = vunpack.c.l.b16 %v7141
        %v7715 = vunpack.c.h.b16 %v7141
        %v7716 = vunpack.c.l.b16 %v7142
        %v7717 = vunpack.c.h.b16 %v7142
        %v7718 = vunpack.c.l.b16 %v7143
        %v7719 = vunpack.c.h.b16 %v7143
        %v7720 = vunpack.c.l.b16 %v7144
        %v7721 = vunpack.c.h.b16 %v7144
        %v7722 = vunpack.c.l.b16 %v7145
        %v7723 = vunpack.c.h.b16 %v7145
        %v7724 = vunpack.c.l.b16 %v7146
        %v7725 = vunpack.c.h.b16 %v7146
        %v7726 = vunpack.c.l.b16 %v7147
        %v7727 = vunpack.c.h.b16 %v7147
        %v7728 = vunpack.c.l.b16 %v7148
        %v7729 = vunpack.c.h.b16 %v7148
        %v7730 = vunpack.c.l.b16 %v7149
        %v7731 = vunpack.c.h.b16 %v7149
        %v7732 = vunpack.c.l.b16 %v7150
        %v7733 = vunpack.c.h.b16 %v7150
        %v7734 = vunpack.c.l.b16 %v7151
        %v7735 = vunpack.c.h.b16 %v7151
        %v7736 = vunpack.c.l.b16 %v7152
        %v7737 = vunpack.c.h.b16 %v7152
        %v7738 = vunpack.c.l.b16 %v7153
        %v7739 = vunpack.c.h.b16 %v7153
        %v7740 = vunpack.c.l.b16 %v7154
        %v7741 = vunpack.c.h.b16 %v7154
        %v7742 = vunpack.c.l.b16 %v7155
        %v7743 = vunpack.c.h.b16 %v7155
        %v7744 = vunpack.c.l.b16 %v7156
        %v7745 = vunpack.c.h.b16 %v7156
        %v7746 = vunpack.c.l.b16 %v7157
        %v7747 = vunpack.c.h.b16 %v7157
        %v7748 = vunpack.c.l.b16 %v7158
        %v7749 = vunpack.c.h.b16 %v7158
        %v7750 = vunpack.c.l.b16 %v7159
        %v7751 = vunpack.c.h.b16 %v7159
        %v7752 = vunpack.c.l.b16 %v7160
        %v7753 = vunpack.c.h.b16 %v7160
        %v7754 = vunpack.c.l.b16 %v7161
        %v7755 = vunpack.c.h.b16 %v7161
        %v7756 = vunpack.c.l.b16 %v7162
        %v7757 = vunpack.c.h.b16 %v7162
        %v7758 = vunpack.c.l.b16 %v7163
        %v7759 = vunpack.c.h.b16 %v7163
        %v7760 = vunpack.c.l.b16 %v7164
        %v7761 = vunpack.c.h.b16 %v7164
        %v7762 = vunpack.c.l.b16 %v7165
        %v7763 = vunpack.c.h.b16 %v7165
        %v7764 = vunpack.c.l.b16 %v7166
        %v7765 = vunpack.c.h.b16 %v7166
        %v7766 = vunpack.c.l.b16 %v7167
        %v7767 = vunpack.c.h.b16 %v7167
        %v7768 = vunpack.c.l.b16 %v7168
        %v7769 = vunpack.c.h.b16 %v7168
        %v7770 = vunpack.c.l.b16 %v7169
        %v7771 = vunpack.c.h.b16 %v7169
        %v7772 = vunpack.c.l.b16 %v7170
        %v7773 = vunpack.c.h.b16 %v7170
        %v7774 = vunpack.c.l.b16 %v7171
        %v7775 = vunpack.c.h.b16 %v7171
        %v7776 = vunpack.c.l.b16 %v7172
        %v7777 = vunpack.c.h.b16 %v7172
        %v7778 = vunpack.c.l.b16 %v7173
        %v7779 = vunpack.c.h.b16 %v7173
        %v7780 = vunpack.c.l.b16 %v7174
        %v7781 = vunpack.c.h.b16 %v7174
        %v7782 = vunpack.c.l.b16 %v7175
        %v7783 = vunpack.c.h.b16 %v7175
        %v7784 = vunpack.c.l.b16 %v7176
        %v7785 = vunpack.c.h.b16 %v7176
        %v7786 = vunpack.c.l.b16 %v7177
        %v7787 = vunpack.c.h.b16 %v7177
        %v7788 = vunpack.c.l.b16 %v7178
        %v7789 = vunpack.c.h.b16 %v7178
        %v7790 = vunpack.c.l.b16 %v7179
        %v7791 = vunpack.c.h.b16 %v7179
        %v7792 = vunpack.c.l.b16 %v7180
        %v7793 = vunpack.c.h.b16 %v7180
        %v7794 = vunpack.c.l.b16 %v7181
        %v7795 = vunpack.c.h.b16 %v7181
        %v7796 = vunpack.c.l.b16 %v7182
        %v7797 = vunpack.c.h.b16 %v7182
        %v7798 = vunpack.c.l.b16 %v7183
        %v7799 = vunpack.c.h.b16 %v7183
        %v7800 = vunpack.c.l.b16 %v7184
        %v7801 = vunpack.c.h.b16 %v7184
        %v7802 = vunpack.c.l.b16 %v7185
        %v7803 = vunpack.c.h.b16 %v7185
        %v7804 = vunpack.c.l.b16 %v7186
        %v7805 = vunpack.c.h.b16 %v7186
        %v7806 = vunpack.c.l.b16 %v7187
        %v7807 = vunpack.c.h.b16 %v7187
        %v7808 = vunpack.c.l.b16 %v7188
        %v7809 = vunpack.c.h.b16 %v7188
        %v7810 = vunpack.c.l.b16 %v7189
        %v7811 = vunpack.c.h.b16 %v7189
        %v7812 = vunpack.c.l.b16 %v7190
        %v7813 = vunpack.c.h.b16 %v7190
        %v7814 = vunpack.c.l.b16 %v7191
        %v7815 = vunpack.c.h.b16 %v7191
        %v7816 = vunpack.c.l.b16 %v7192
        %v7817 = vunpack.c.h.b16 %v7192
        %v7818 = vunpack.c.l.b16 %v7193
        %v7819 = vunpack.c.h.b16 %v7193
        %v7820 = vunpack.c.l.b16 %v7194
        %v7821 = vunpack.c.h.b16 %v7194
        %v7822 = vunpack.c.l.b16 %v7195
        %v7823 = vunpack.c.h.b16 %v7195
        %v7824 = vunpack.c.l.b16 %v7196
        %v7825 = vunpack.c.h.b16 %v7196
        %v7826 = vunpack.c.l.b16 %v7197
        %v7827 = vunpack.c.h.b16 %v7197
        %v7828 = vunpack.c.l.b16 %v7198
        %v7829 = vunpack.c.h.b16 %v7198
        %v7830 = vunpack.c.l.b16 %v7199
        %v7831 = vunpack.c.h.b16 %v7199
        %v7832 = vunpack.c.l.b16 %v7200
        %v7833 = vunpack.c.h.b16 %v7200
        %v7834 = vunpack.c.l.b16 %v7201
        %v7835 = vunpack.c.h.b16 %v7201
        %v7836 = vunpack.c.l.b16 %v7202
        %v7837 = vunpack.c.h.b16 %v7202
        %v7838 = vunpack.c.l.b16 %v7203
        %v7839 = vunpack.c.h.b16 %v7203
        %v7840 = vunpack.c.l.b16 %v7204
        %v7841 = vunpack.c.h.b16 %v7204
        %v7842 = vunpack.c.l.b16 %v7205
        %v7843 = vunpack.c.h.b16 %v7205
        %v7844 = vunpack.c.l.b16 %v7206
        %v7845 = vunpack.c.h.b16 %v7206
        %v7846 = vunpack.c.l.b16 %v7207
        %v7847 = vunpack.c.h.b16 %v7207
        %v7848 = vunpack.c.l.b16 %v7208
        %v7849 = vunpack.c.h.b16 %v7208
        %v7850 = vunpack.c.l.b16 %v7209
        %v7851 = vunpack.c.h.b16 %v7209
        %v7852 = vunpack.c.l.b16 %v7210
        %v7853 = vunpack.c.h.b16 %v7210
        %v7854 = vunpack.c.l.b16 %v7211
        %v7855 = vunpack.c.h.b16 %v7211
        %v7856 = vunpack.c.l.b16 %v7212
        %v7857 = vunpack.c.h.b16 %v7212
        %v7858 = vunpack.c.l.b16 %v7213
        %v7859 = vunpack.c.h.b16 %v7213
        %v7860 = vunpack.c.l.b16 %v7214
        %v7861 = vunpack.c.h.b16 %v7214
        %v7862 = vunpack.c.l.b16 %v7215
        %v7863 = vunpack.c.h.b16 %v7215
        %v7864 = vunpack.c.l.b16 %v7216
        %v7865 = vunpack.c.h.b16 %v7216
        %v7866 = vunpack.c.l.b16 %v7217
        %v7867 = vunpack.c.h.b16 %v7217
        %v7868 = vunpack.c.l.b16 %v7218
        %v7869 = vunpack.c.h.b16 %v7218
        %v7870 = vunpack.c.l.b16 %v7219
        %v7871 = vunpack.c.h.b16 %v7219
        %v7872 = vunpack.c.l.b16 %v7220
        %v7873 = vunpack.c.h.b16 %v7220
        %v7874 = vunpack.c.l.b16 %v7221
        %v7875 = vunpack.c.h.b16 %v7221
        %v7876 = vunpack.c.l.b16 %v7222
        %v7877 = vunpack.c.h.b16 %v7222
        %v7878 = vunpack.c.l.b16 %v7223
        %v7879 = vunpack.c.h.b16 %v7223
        %v7880 = vunpack.c.l.b16 %v7224
        %v7881 = vunpack.c.h.b16 %v7224
        %v7882 = vunpack.c.l.b16 %v7225
        %v7883 = vunpack.c.h.b16 %v7225
        %v7884 = vunpack.c.l.b16 %v7226
        %v7885 = vunpack.c.h.b16 %v7226
        %v7886 = vunpack.c.l.b16 %v7227
        %v7887 = vunpack.c.h.b16 %v7227
        %v7888 = vunpack.c.l.b16 %v7228
        %v7889 = vunpack.c.h.b16 %v7228
        %v7890 = vunpack.c.l.b16 %v7229
        %v7891 = vunpack.c.h.b16 %v7229
        %v7892 = vunpack.c.l.b16 %v7230
        %v7893 = vunpack.c.h.b16 %v7230
        %v7894 = vunpack.c.l.b16 %v7231
        %v7895 = vunpack.c.h.b16 %v7231
        %v7896 = vunpack.c.l.b16 %v7232
        %v7897 = vunpack.c.h.b16 %v7232
        %v7898 = vunpack.c.l.b16 %v7233
        %v7899 = vunpack.c.h.b16 %v7233
        %v7900 = vunpack.c.l.b16 %v7234
        %v7901 = vunpack.c.h.b16 %v7234
        %v7902 = vunpack.c.l.b16 %v7235
        %v7903 = vunpack.c.h.b16 %v7235
        %v7904 = vunpack.c.l.b16 %v7236
        %v7905 = vunpack.c.h.b16 %v7236
        %v7906 = vunpack.c.l.b16 %v7237
        %v7907 = vunpack.c.h.b16 %v7237
        %v7908 = vunpack.c.l.b16 %v7238
        %v7909 = vunpack.c.h.b16 %v7238
        %v7910 = vunpack.c.l.b16 %v7239
        %v7911 = vunpack.c.h.b16 %v7239
        %v7912 = vunpack.c.l.b16 %v7240
        %v7913 = vunpack.c.h.b16 %v7240
        %v7914 = vunpack.c.l.b16 %v7241
        %v7915 = vunpack.c.h.b16 %v7241
        %v7916 = vunpack.c.l.b16 %v7242
        %v7917 = vunpack.c.h.b16 %v7242
        %v7918 = vunpack.c.l.b16 %v7243
        %v7919 = vunpack.c.h.b16 %v7243
        %v7920 = vunpack.c.l.b16 %v7244
        %v7921 = vunpack.c.h.b16 %v7244
        %v7922 = vunpack.c.l.b16 %v7245
        %v7923 = vunpack.c.h.b16 %v7245
        %v7924 = vunpack.c.l.b16 %v7246
        %v7925 = vunpack.c.h.b16 %v7246
        %v7926 = vunpack.c.l.b16 %v7247
        %v7927 = vunpack.c.h.b16 %v7247
        %v7928 = vunpack.c.l.b16 %v7248
        %v7929 = vunpack.c.h.b16 %v7248
        %v7930 = vunpack.c.l.b16 %v7249
        %v7931 = vunpack.c.h.b16 %v7249
        %v7932 = vunpack.c.l.b16 %v7250
        %v7933 = vunpack.c.h.b16 %v7250
        %v7934 = vunpack.c.l.b16 %v7251
        %v7935 = vunpack.c.h.b16 %v7251
        %v7936 = vunpack.c.l.b16 %v7252
        %v7937 = vunpack.c.h.b16 %v7252
        %v7938 = vunpack.c.l.b16 %v7253
        %v7939 = vunpack.c.h.b16 %v7253
        %v7940 = vunpack.c.l.b16 %v7254
        %v7941 = vunpack.c.h.b16 %v7254
        %v7942 = vunpack.c.l.b16 %v7255
        %v7943 = vunpack.c.h.b16 %v7255
        %v7944 = vunpack.c.l.b16 %v7256
        %v7945 = vunpack.c.h.b16 %v7256
        %v7946 = vunpack.c.l.b16 %v7257
        %v7947 = vunpack.c.h.b16 %v7257
        %v7948 = vunpack.c.l.b16 %v7258
        %v7949 = vunpack.c.h.b16 %v7258
        %v7950 = vunpack.c.l.b16 %v7259
        %v7951 = vunpack.c.h.b16 %v7259
        %v7952 = vunpack.c.l.b16 %v7260
        %v7953 = vunpack.c.h.b16 %v7260
        %v7954 = vunpack.c.l.b16 %v7261
        %v7955 = vunpack.c.h.b16 %v7261
        %v7956 = vunpack.c.l.b16 %v7262
        %v7957 = vunpack.c.h.b16 %v7262
        %v7958 = vunpack.c.l.b16 %v7263
        %v7959 = vunpack.c.h.b16 %v7263
        %v7960 = vunpack.c.l.b16 %v7264
        %v7961 = vunpack.c.h.b16 %v7264
        %v7962 = vunpack.c.l.b16 %v7265
        %v7963 = vunpack.c.h.b16 %v7265
        %v7964 = vunpack.c.l.b16 %v7266
        %v7965 = vunpack.c.h.b16 %v7266
        %v7966 = vunpack.c.l.b16 %v7267
        %v7967 = vunpack.c.h.b16 %v7267
        %v7968 = vunpack.c.l.b16 %v7268
        %v7969 = vunpack.c.h.b16 %v7268
        %v7970 = vunpack.c.l.b16 %v7269
        %v7971 = vunpack.c.h.b16 %v7269
        %v7972 = vunpack.c.l.b16 %v7270
        %v7973 = vunpack.c.h.b16 %v7270
        %v7974 = vunpack.c.l.b16 %v7271
        %v7975 = vunpack.c.h.b16 %v7271
        %v7976 = vunpack.c.l.b16 %v7272
        %v7977 = vunpack.c.h.b16 %v7272
        %v7978 = vunpack.c.l.b16 %v7273
        %v7979 = vunpack.c.h.b16 %v7273
        %v7980 = vunpack.c.l.b16 %v7274
        %v7981 = vunpack.c.h.b16 %v7274
        %v7982 = vunpack.c.l.b16 %v7275
        %v7983 = vunpack.c.h.b16 %v7275
        %v7984 = vunpack.c.l.b16 %v7276
        %v7985 = vunpack.c.h.b16 %v7276
        %v7986 = vunpack.c.l.b16 %v7277
        %v7987 = vunpack.c.h.b16 %v7277
        %v7988 = vunpack.c.l.b16 %v7278
        %v7989 = vunpack.c.h.b16 %v7278
        %v7990 = vunpack.c.l.b16 %v7279
        %v7991 = vunpack.c.h.b16 %v7279
        %v7992 = vunpack.c.l.b16 %v7280
        %v7993 = vunpack.c.h.b16 %v7280
        %v7994 = vunpack.c.l.b16 %v7281
        %v7995 = vunpack.c.h.b16 %v7281
        %v7996 = vunpack.c.l.b16 %v7282
        %v7997 = vunpack.c.h.b16 %v7282
        %v7998 = vunpack.c.l.b16 %v7283
        %v7999 = vunpack.c.h.b16 %v7283
        %v8000 = vunpack.c.l.b16 %v7284
        %v8001 = vunpack.c.h.b16 %v7284
        %v8002 = vunpack.c.l.b16 %v7285
        %v8003 = vunpack.c.h.b16 %v7285
        %v8004 = vunpack.c.l.b16 %v7286
        %v8005 = vunpack.c.h.b16 %v7286
        %v8006 = vunpack.c.l.b16 %v7287
        %v8007 = vunpack.c.h.b16 %v7287
        %v8008 = vunpack.c.l.b16 %v7288
        %v8009 = vunpack.c.h.b16 %v7288
        %v8010 = vunpack.c.l.b16 %v7289
        %v8011 = vunpack.c.h.b16 %v7289
        %v8012 = vunpack.c.l.b16 %v7290
        %v8013 = vunpack.c.h.b16 %v7290
        %v8014 = vunpack.c.l.b16 %v7291
        %v8015 = vunpack.c.h.b16 %v7291
        %v8016 = vunpack.c.l.b16 %v7292
        %v8017 = vunpack.c.h.b16 %v7292
        %v8018 = vunpack.c.l.b16 %v7293
        %v8019 = vunpack.c.h.b16 %v7293
        %v8020 = vunpack.c.l.b16 %v7294
        %v8021 = vunpack.c.h.b16 %v7294
        %v8022 = vunpack.c.l.b16 %v7295
        %v8023 = vunpack.c.h.b16 %v7295
        %v8024 = vunpack.c.l.b16 %v7296
        %v8025 = vunpack.c.h.b16 %v7296
        %v8026 = vunpack.c.l.b16 %v7297
        %v8027 = vunpack.c.h.b16 %v7297
        %v8028 = vunpack.c.l.b16 %v7298
        %v8029 = vunpack.c.h.b16 %v7298
        %v8030 = vunpack.c.l.b16 %v7299
        %v8031 = vunpack.c.h.b16 %v7299
        %v8032 = vunpack.c.l.b16 %v7300
        %v8033 = vunpack.c.h.b16 %v7300
        %v8034 = vunpack.c.l.b16 %v7301
        %v8035 = vunpack.c.h.b16 %v7301
        %v8036 = vunpack.c.l.b16 %v7302
        %v8037 = vunpack.c.h.b16 %v7302
        %v8038 = vunpack.c.l.b16 %v7303
        %v8039 = vunpack.c.h.b16 %v7303
        %v8040 = vunpack.c.l.b16 %v7304
        %v8041 = vunpack.c.h.b16 %v7304
        %v8042 = vunpack.c.l.b16 %v7305
        %v8043 = vunpack.c.h.b16 %v7305
        %v8044 = vunpack.c.l.b16 %v7306
        %v8045 = vunpack.c.h.b16 %v7306
        %v8046 = vunpack.c.l.b16 %v7307
        %v8047 = vunpack.c.h.b16 %v7307
        %v8048 = vunpack.c.l.b16 %v7308
        %v8049 = vunpack.c.h.b16 %v7308
        %v8050 = vunpack.c.l.b16 %v7309
        %v8051 = vunpack.c.h.b16 %v7309
        %v8052 = vunpack.c.l.b16 %v7310
        %v8053 = vunpack.c.h.b16 %v7310
        %v8054 = vunpack.c.l.b16 %v7311
        %v8055 = vunpack.c.h.b16 %v7311
        %v8056 = vunpack.c.l.b16 %v7312
        %v8057 = vunpack.c.h.b16 %v7312
        %v8058 = vunpack.c.l.b16 %v7313
        %v8059 = vunpack.c.h.b16 %v7313
        %v8060 = vunpack.c.l.b16 %v7314
        %v8061 = vunpack.c.h.b16 %v7314
        %v8062 = vunpack.c.l.b16 %v7315
        %v8063 = vunpack.c.h.b16 %v7315
        %v8064 = vunpack.c.l.b16 %v7316
        %v8065 = vunpack.c.h.b16 %v7316
        %v8066 = vunpack.c.l.b16 %v7317
        %v8067 = vunpack.c.h.b16 %v7317
        %v8068 = vunpack.c.l.b16 %v7318
        %v8069 = vunpack.c.h.b16 %v7318
        %v8070 = vunpack.c.l.b16 %v7319
        %v8071 = vunpack.c.h.b16 %v7319
        %v8072 = vunpack.c.l.b16 %v7320
        %v8073 = vunpack.c.h.b16 %v7320
        %v8074 = vunpack.c.l.b16 %v7321
        %v8075 = vunpack.c.h.b16 %v7321
        %v8076 = vunpack.c.l.b16 %v7322
        %v8077 = vunpack.c.h.b16 %v7322
        %v8078 = vunpack.c.l.b16 %v7323
        %v8079 = vunpack.c.h.b16 %v7323
        %v8080 = vunpack.c.l.b16 %v7324
        %v8081 = vunpack.c.h.b16 %v7324
        %v8082 = vunpack.c.l.b16 %v7325
        %v8083 = vunpack.c.h.b16 %v7325
        %v8084 = vunpack.c.l.b16 %v7326
        %v8085 = vunpack.c.h.b16 %v7326
        %v8086 = vunpack.c.l.b16 %v7327
        %v8087 = vunpack.c.h.b16 %v7327
        %v8088 = vunpack.c.l.b16 %v7328
        %v8089 = vunpack.c.h.b16 %v7328
        %v8090 = vunpack.c.l.b16 %v7329
        %v8091 = vunpack.c.h.b16 %v7329
        %v8092 = vunpack.c.l.b16 %v7330
        %v8093 = vunpack.c.h.b16 %v7330
        %v8094 = vunpack.c.l.b16 %v7331
        %v8095 = vunpack.c.h.b16 %v7331
        %v8096 = vunpack.c.l.b16 %v7332
        %v8097 = vunpack.c.h.b16 %v7332
        %v8098 = vunpack.c.l.b16 %v7333
        %v8099 = vunpack.c.h.b16 %v7333
        %v8100 = vunpack.c.l.b16 %v7334
        %v8101 = vunpack.c.h.b16 %v7334
        %v8102 = vunpack.c.l.b16 %v7335
        %v8103 = vunpack.c.h.b16 %v7335
        %v8104 = vunpack.c.l.b16 %v7336
        %v8105 = vunpack.c.h.b16 %v7336
        %v8106 = vunpack.c.l.b16 %v7337
        %v8107 = vunpack.c.h.b16 %v7337
        %v8108 = vunpack.c.l.b16 %v7338
        %v8109 = vunpack.c.h.b16 %v7338
        %v8110 = vunpack.c.l.b16 %v7339
        %v8111 = vunpack.c.h.b16 %v7339
        %v8112 = vunpack.c.l.b16 %v7340
        %v8113 = vunpack.c.h.b16 %v7340
        %v8114 = vunpack.c.l.b16 %v7341
        %v8115 = vunpack.c.h.b16 %v7341
        %v8116 = vunpack.c.l.b16 %v7342
        %v8117 = vunpack.c.h.b16 %v7342
        %v8118 = vunpack.c.l.b16 %v7343
        %v8119 = vunpack.c.h.b16 %v7343
        %v8120 = vunpack.c.l.b16 %v7344
        %v8121 = vunpack.c.h.b16 %v7344
        %v8122 = vunpack.c.l.b16 %v7345
        %v8123 = vunpack.c.h.b16 %v7345
        %v8124 = vunpack.c.l.b16 %v7346
        %v8125 = vunpack.c.h.b16 %v7346
        %v8126 = vunpack.c.l.b16 %v7347
        %v8127 = vunpack.c.h.b16 %v7347
        %v8128 = vunpack.c.l.b16 %v7348
        %v8129 = vunpack.c.h.b16 %v7348
        %v8130 = vunpack.c.l.b16 %v7349
        %v8131 = vunpack.c.h.b16 %v7349
        %v8132 = vunpack.c.l.b16 %v7350
        %v8133 = vunpack.c.h.b16 %v7350
        %v8134 = vunpack.c.l.b16 %v7351
        %v8135 = vunpack.c.h.b16 %v7351
        %v8136 = vunpack.c.l.b16 %v7352
        %v8137 = vunpack.c.h.b16 %v7352
        %v8138 = vunpack.c.l.b16 %v7353
        %v8139 = vunpack.c.h.b16 %v7353
        %v8140 = vunpack.c.l.b16 %v7354
        %v8141 = vunpack.c.h.b16 %v7354
        %v8142 = vunpack.c.l.b16 %v7355
        %v8143 = vunpack.c.h.b16 %v7355
        %v8144 = vunpack.c.l.b16 %v7356
        %v8145 = vunpack.c.h.b16 %v7356
        %v8146 = vunpack.c.l.b16 %v7357
        %v8147 = vunpack.c.h.b16 %v7357
        %v8148 = vpack.c.b16 %v7640, %v7636
        %v8149 = vpack.c.b16 %v7641, %v7637
        %v8150 = vpack.c.b16 %v7642, %v7638
        %v8151 = vpack.c.b16 %v7643, %v7639
        %v8152 = vpack.c.b16 %v7648, %v7644
        %v8153 = vpack.c.b16 %v7649, %v7645
        %v8154 = vpack.c.b16 %v7650, %v7646
        %v8155 = vpack.c.b16 %v7651, %v7647
        %v8156 = vpack.c.b16 %v7656, %v7652
        %v8157 = vpack.c.b16 %v7657, %v7653
        %v8158 = vpack.c.b16 %v7658, %v7654
        %v8159 = vpack.c.b16 %v7659, %v7655
        %v8160 = vpack.c.b16 %v7664, %v7660
        %v8161 = vpack.c.b16 %v7665, %v7661
        %v8162 = vpack.c.b16 %v7666, %v7662
        %v8163 = vpack.c.b16 %v7667, %v7663
        %v8164 = vpack.c.b16 %v7672, %v7668
        %v8165 = vpack.c.b16 %v7673, %v7669
        %v8166 = vpack.c.b16 %v7674, %v7670
        %v8167 = vpack.c.b16 %v7675, %v7671
        %v8168 = vpack.c.b16 %v7680, %v7676
        %v8169 = vpack.c.b16 %v7681, %v7677
        %v8170 = vpack.c.b16 %v7682, %v7678
        %v8171 = vpack.c.b16 %v7683, %v7679
        %v8172 = vpack.c.b16 %v7688, %v7684
        %v8173 = vpack.c.b16 %v7689, %v7685
        %v8174 = vpack.c.b16 %v7690, %v7686
        %v8175 = vpack.c.b16 %v7691, %v7687
        %v8176 = vpack.c.b16 %v7696, %v7692
        %v8177 = vpack.c.b16 %v7697, %v7693
        %v8178 = vpack.c.b16 %v7698, %v7694
        %v8179 = vpack.c.b16 %v7699, %v7695
        %v8180 = vpack.c.b16 %v7704, %v7700
        %v8181 = vpack.c.b16 %v7705, %v7701
        %v8182 = vpack.c.b16 %v7706, %v7702
        %v8183 = vpack.c.b16 %v7707, %v7703
        %v8184 = vpack.c.b16 %v7712, %v7708
        %v8185 = vpack.c.b16 %v7713, %v7709
        %v8186 = vpack.c.b16 %v7714, %v7710
        %v8187 = vpack.c.b16 %v7715, %v7711
        %v8188 = vpack.c.b16 %v7720, %v7716
        %v8189 = vpack.c.b16 %v7721, %v7717
        %v8190 = vpack.c.b16 %v7722, %v7718
        %v8191 = vpack.c.b16 %v7723, %v7719
        %v8192 = vpack.c.b16 %v7728, %v7724
        %v8193 = vpack.c.b16 %v7729, %v7725
        %v8194 = vpack.c.b16 %v7730, %v7726
        %v8195 = vpack.c.b16 %v7731, %v7727
        %v8196 = vpack.c.b16 %v7736, %v7732
        %v8197 = vpack.c.b16 %v7737, %v7733
        %v8198 = vpack.c.b16 %v7738, %v7734
        %v8199 = vpack.c.b16 %v7739, %v7735
        %v8200 = vpack.c.b16 %v7744, %v7740
        %v8201 = vpack.c.b16 %v7745, %v7741
        %v8202 = vpack.c.b16 %v7746, %v7742
        %v8203 = vpack.c.b16 %v7747, %v7743
        %v8204 = vpack.c.b16 %v7752, %v7748
        %v8205 = vpack.c.b16 %v7753, %v7749
        %v8206 = vpack.c.b16 %v7754, %v7750
        %v8207 = vpack.c.b16 %v7755, %v7751
        %v8208 = vpack.c.b16 %v7760, %v7756
        %v8209 = vpack.c.b16 %v7761, %v7757
        %v8210 = vpack.c.b16 %v7762, %v7758
        %v8211 = vpack.c.b16 %v7763, %v7759
        %v8212 = vpack.c.b16 %v7768, %v7764
        %v8213 = vpack.c.b16 %v7769, %v7765
        %v8214 = vpack.c.b16 %v7770, %v7766
        %v8215 = vpack.c.b16 %v7771, %v7767
        %v8216 = vpack.c.b16 %v7776, %v7772
        %v8217 = vpack.c.b16 %v7777, %v7773
        %v8218 = vpack.c.b16 %v7778, %v7774
        %v8219 = vpack.c.b16 %v7779, %v7775
        %v8220 = vpack.c.b16 %v7784, %v7780
        %v8221 = vpack.c.b16 %v7785, %v7781
        %v8222 = vpack.c.b16 %v7786, %v7782
        %v8223 = vpack.c.b16 %v7787, %v7783
        %v8224 = vpack.c.b16 %v7792, %v7788
        %v8225 = vpack.c.b16 %v7793, %v7789
        %v8226 = vpack.c.b16 %v7794, %v7790
        %v8227 = vpack.c.b16 %v7795, %v7791
        %v8228 = vpack.c.b16 %v7800, %v7796
        %v8229 = vpack.c.b16 %v7801, %v7797
        %v8230 = vpack.c.b16 %v7802, %v7798
        %v8231 = vpack.c.b16 %v7803, %v7799
        %v8232 = vpack.c.b16 %v7808, %v7804
        %v8233 = vpack.c.b16 %v7809, %v7805
        %v8234 = vpack.c.b16 %v7810, %v7806
        %v8235 = vpack.c.b16 %v7811, %v7807
        %v8236 = vpack.c.b16 %v7816, %v7812
        %v8237 = vpack.c.b16 %v7817, %v7813
        %v8238 = vpack.c.b16 %v7818, %v7814
        %v8239 = vpack.c.b16 %v7819, %v7815
        %v8240 = vpack.c.b16 %v7824, %v7820
        %v8241 = vpack.c.b16 %v7825, %v7821
        %v8242 = vpack.c.b16 %v7826, %v7822
        %v8243 = vpack.c.b16 %v7827, %v7823
        %v8244 = vpack.c.b16 %v7832, %v7828
        %v8245 = vpack.c.b16 %v7833, %v7829
        %v8246 = vpack.c.b16 %v7834, %v7830
        %v8247 = vpack.c.b16 %v7835, %v7831
        %v8248 = vpack.c.b16 %v7840, %v7836
        %v8249 = vpack.c.b16 %v7841, %v7837
        %v8250 = vpack.c.b16 %v7842, %v7838
        %v8251 = vpack.c.b16 %v7843, %v7839
        %v8252 = vpack.c.b16 %v7848, %v7844
        %v8253 = vpack.c.b16 %v7849, %v7845
        %v8254 = vpack.c.b16 %v7850, %v7846
        %v8255 = vpack.c.b16 %v7851, %v7847
        %v8256 = vpack.c.b16 %v7856, %v7852
        %v8257 = vpack.c.b16 %v7857, %v7853
        %v8258 = vpack.c.b16 %v7858, %v7854
        %v8259 = vpack.c.b16 %v7859, %v7855
        %v8260 = vpack.c.b16 %v7864, %v7860
        %v8261 = vpack.c.b16 %v7865, %v7861
        %v8262 = vpack.c.b16 %v7866, %v7862
        %v8263 = vpack.c.b16 %v7867, %v7863
        %v8264 = vpack.c.b16 %v7872, %v7868
        %v8265 = vpack.c.b16 %v7873, %v7869
        %v8266 = vpack.c.b16 %v7874, %v7870
        %v8267 = vpack.c.b16 %v7875, %v7871
        %v8268 = vpack.c.b16 %v7880, %v7876
        %v8269 = vpack.c.b16 %v7881, %v7877
        %v8270 = vpack.c.b16 %v7882, %v7878
        %v8271 = vpack.c.b16 %v7883, %v7879
        %v8272 = vpack.c.b16 %v7888, %v7884
        %v8273 = vpack.c.b16 %v7889, %v7885
        %v8274 = vpack.c.b16 %v7890, %v7886
        %v8275 = vpack.c.b16 %v7891, %v7887
        %v8276 = vpack.c.b16 %v7896, %v7892
        %v8277 = vpack.c.b16 %v7897, %v7893
        %v8278 = vpack.c.b16 %v7898, %v7894
        %v8279 = vpack.c.b16 %v7899, %v7895
        %v8280 = vpack.c.b16 %v7904, %v7900
        %v8281 = vpack.c.b16 %v7905, %v7901
        %v8282 = vpack.c.b16 %v7906, %v7902
        %v8283 = vpack.c.b16 %v7907, %v7903
        %v8284 = vpack.c.b16 %v7912, %v7908
        %v8285 = vpack.c.b16 %v7913, %v7909
        %v8286 = vpack.c.b16 %v7914, %v7910
        %v8287 = vpack.c.b16 %v7915, %v7911
        %v8288 = vpack.c.b16 %v7920, %v7916
        %v8289 = vpack.c.b16 %v7921, %v7917
        %v8290 = vpack.c.b16 %v7922, %v7918
        %v8291 = vpack.c.b16 %v7923, %v7919
        %v8292 = vpack.c.b16 %v7928, %v7924
        %v8293 = vpack.c.b16 %v7929, %v7925
        %v8294 = vpack.c.b16 %v7930, %v7926
        %v8295 = vpack.c.b16 %v7931, %v7927
        %v8296 = vpack.c.b16 %v7936, %v7932
        %v8297 = vpack.c.b16 %v7937, %v7933
        %v8298 = vpack.c.b16 %v7938, %v7934
        %v8299 = vpack.c.b16 %v7939, %v7935
        %v8300 = vpack.c.b16 %v7944, %v7940
        %v8301 = vpack.c.b16 %v7945, %v7941
        %v8302 = vpack.c.b16 %v7946, %v7942
        %v8303 = vpack.c.b16 %v7947, %v7943
        %v8304 = vpack.c.b16 %v7952, %v7948
        %v8305 = vpack.c.b16 %v7953, %v7949
        %v8306 = vpack.c.b16 %v7954, %v7950
        %v8307 = vpack.c.b16 %v7955, %v7951
        %v8308 = vpack.c.b16 %v7960, %v7956
        %v8309 = vpack.c.b16 %v7961, %v7957
        %v8310 = vpack.c.b16 %v7962, %v7958
        %v8311 = vpack.c.b16 %v7963, %v7959
        %v8312 = vpack.c.b16 %v7968, %v7964
        %v8313 = vpack.c.b16 %v7969, %v7965
        %v8314 = vpack.c.b16 %v7970, %v7966
        %v8315 = vpack.c.b16 %v7971, %v7967
        %v8316 = vpack.c.b16 %v7976, %v7972
        %v8317 = vpack.c.b16 %v7977, %v7973
        %v8318 = vpack.c.b16 %v7978, %v7974
        %v8319 = vpack.c.b16 %v7979, %v7975
        %v8320 = vpack.c.b16 %v7984, %v7980
        %v8321 = vpack.c.b16 %v7985, %v7981
        %v8322 = vpack.c.b16 %v7986, %v7982
        %v8323 = vpack.c.b16 %v7987, %v7983
        %v8324 = vpack.c.b16 %v7992, %v7988
        %v8325 = vpack.c.b16 %v7993, %v7989
        %v8326 = vpack.c.b16 %v7994, %v7990
        %v8327 = vpack.c.b16 %v7995, %v7991
        %v8328 = vpack.c.b16 %v8000, %v7996
        %v8329 = vpack.c.b16 %v8001, %v7997
        %v8330 = vpack.c.b16 %v8002, %v7998
        %v8331 = vpack.c.b16 %v8003, %v7999
        %v8332 = vpack.c.b16 %v8008, %v8004
        %v8333 = vpack.c.b16 %v8009, %v8005
        %v8334 = vpack.c.b16 %v8010, %v8006
        %v8335 = vpack.c.b16 %v8011, %v8007
        %v8336 = vpack.c.b16 %v8016, %v8012
        %v8337 = vpack.c.b16 %v8017, %v8013
        %v8338 = vpack.c.b16 %v8018, %v8014
        %v8339 = vpack.c.b16 %v8019, %v8015
        %v8340 = vpack.c.b16 %v8024, %v8020
        %v8341 = vpack.c.b16 %v8025, %v8021
        %v8342 = vpack.c.b16 %v8026, %v8022
        %v8343 = vpack.c.b16 %v8027, %v8023
        %v8344 = vpack.c.b16 %v8032, %v8028
        %v8345 = vpack.c.b16 %v8033, %v8029
        %v8346 = vpack.c.b16 %v8034, %v8030
        %v8347 = vpack.c.b16 %v8035, %v8031
        %v8348 = vpack.c.b16 %v8040, %v8036
        %v8349 = vpack.c.b16 %v8041, %v8037
        %v8350 = vpack.c.b16 %v8042, %v8038
        %v8351 = vpack.c.b16 %v8043, %v8039
        %v8352 = vpack.c.b16 %v8048, %v8044
        %v8353 = vpack.c.b16 %v8049, %v8045
        %v8354 = vpack.c.b16 %v8050, %v8046
        %v8355 = vpack.c.b16 %v8051, %v8047
        %v8356 = vpack.c.b16 %v8056, %v8052
        %v8357 = vpack.c.b16 %v8057, %v8053
        %v8358 = vpack.c.b16 %v8058, %v8054
        %v8359 = vpack.c.b16 %v8059, %v8055
        %v8360 = vpack.c.b16 %v8064, %v8060
        %v8361 = vpack.c.b16 %v8065, %v8061
        %v8362 = vpack.c.b16 %v8066, %v8062
        %v8363 = vpack.c.b16 %v8067, %v8063
        %v8364 = vpack.c.b16 %v8072, %v8068
        %v8365 = vpack.c.b16 %v8073, %v8069
        %v8366 = vpack.c.b16 %v8074, %v8070
        %v8367 = vpack.c.b16 %v8075, %v8071
        %v8368 = vpack.c.b16 %v8080, %v8076
        %v8369 = vpack.c.b16 %v8081, %v8077
        %v8370 = vpack.c.b16 %v8082, %v8078
        %v8371 = vpack.c.b16 %v8083, %v8079
        %v8372 = vpack.c.b16 %v8088, %v8084
        %v8373 = vpack.c.b16 %v8089, %v8085
        %v8374 = vpack.c.b16 %v8090, %v8086
        %v8375 = vpack.c.b16 %v8091, %v8087
        %v8376 = vpack.c.b16 %v8096, %v8092
        %v8377 = vpack.c.b16 %v8097, %v8093
        %v8378 = vpack.c.b16 %v8098, %v8094
        %v8379 = vpack.c.b16 %v8099, %v8095
        %v8380 = vpack.c.b16 %v8104, %v8100
        %v8381 = vpack.c.b16 %v8105, %v8101
        %v8382 = vpack.c.b16 %v8106, %v8102
        %v8383 = vpack.c.b16 %v8107, %v8103
        %v8384 = vpack.c.b16 %v8112, %v8108
        %v8385 = vpack.c.b16 %v8113, %v8109
        %v8386 = vpack.c.b16 %v8114, %v8110
        %v8387 = vpack.c.b16 %v8115, %v8111
        %v8388 = vpack.c.b16 %v8120, %v8116
        %v8389 = vpack.c.b16 %v8121, %v8117
        %v8390 = vpack.c.b16 %v8122, %v8118
        %v8391 = vpack.c.b16 %v8123, %v8119
        %v8392 = vpack.c.b16 %v8128, %v8124
        %v8393 = vpack.c.b16 %v8129, %v8125
        %v8394 = vpack.c.b16 %v8130, %v8126
        %v8395 = vpack.c.b16 %v8131, %v8127
        %v8396 = vpack.c.b16 %v8136, %v8132
        %v8397 = vpack.c.b16 %v8137, %v8133
        %v8398 = vpack.c.b16 %v8138, %v8134
        %v8399 = vpack.c.b16 %v8139, %v8135
        %v8400 = vpack.c.b16 %v8144, %v8140
        %v8401 = vpack.c.b16 %v8145, %v8141
        %v8402 = vpack.c.b16 %v8146, %v8142
        %v8403 = vpack.c.b16 %v8147, %v8143
        %8660 = vmatprep.subr.bf16.mxu0 %v8149
        %8661 = vmatpush1.bf16.msra.mxu0 %v8148
        %8662 = vmatprep.subr.bf16.mxu0 %v8153
        %8663 = vmatpush1.bf16.msra.mxu0 %v8152
        %8664 = vmatprep.subr.bf16.mxu0 %v8157
        %8665 = vmatpush1.bf16.msra.mxu0 %v8156
        %8666 = vmatprep.subr.bf16.mxu0 %v8161
        %8667 = vmatpush1.bf16.msra.mxu0 %v8160
        %8668 = vmatprep.subr.bf16.mxu0 %v8165
        %8669 = vmatpush1.bf16.msra.mxu0 %v8164
        %8670 = vmatprep.subr.bf16.mxu0 %v8169
        %8671 = vmatpush1.bf16.msra.mxu0 %v8168
        %8672 = vmatprep.subr.bf16.mxu0 %v8173
        %8673 = vmatpush1.bf16.msra.mxu0 %v8172
        %8674 = vmatprep.subr.bf16.mxu0 %v8177
        %8675 = vmatpush1.bf16.msra.mxu0 %v8176
        %8676 = vmatprep.subr.bf16.mxu0 %v8181
        %8677 = vmatpush1.bf16.msra.mxu0 %v8180
        %8678 = vmatprep.subr.bf16.mxu0 %v8185
        %8679 = vmatpush1.bf16.msra.mxu0 %v8184
        %8680 = vmatprep.subr.bf16.mxu0 %v8189
        %8681 = vmatpush1.bf16.msra.mxu0 %v8188
        %8682 = vmatprep.subr.bf16.mxu0 %v8193
        %8683 = vmatpush1.bf16.msra.mxu0 %v8192
        %8684 = vmatprep.subr.bf16.mxu0 %v8197
        %8685 = vmatpush1.bf16.msra.mxu0 %v8196
        %8686 = vmatprep.subr.bf16.mxu0 %v8201
        %8687 = vmatpush1.bf16.msra.mxu0 %v8200
        %8688 = vmatprep.subr.bf16.mxu0 %v8205
        %8689 = vmatpush1.bf16.msra.mxu0 %v8204
        %8690 = vmatprep.subr.bf16.mxu0 %v8209
        %8691 = vmatpush1.bf16.msra.mxu0 %v8208
        %8692 = vmatprep.mubr.bf16.mxu0 %v6975
        %8693 = vmatmul.mubr.bf16.gmra.mrb[0].mxu0 %v6974
        %v8694 = vpop.f32.mrb[0].mxu0
        %v8695 = vadd.f32 %v7363, %v8694
        %v8696 = vpop.f32.mrb[0].mxu0
        %v8697 = vadd.f32 %v7367, %v8696
        %v8698 = vpop.f32.mrb[0].mxu0
        %v8699 = vadd.f32 %v7363, %v8698
        %v8700 = vpop.f32.mrb[0].mxu0
        %v8701 = vadd.f32 %v7367, %v8700
        %8702 = vmatprep.mubr.bf16.mxu0 %v6983
        %8703 = vmatmul.mubr.bf16.gmra.mrb[0].mxu0 %v6982
        %v8704 = vpop.f32.mrb[0].mxu0
        %v8705 = vadd.f32 %v7363, %v8704
        %v8706 = vpop.f32.mrb[0].mxu0
        %v8707 = vadd.f32 %v7367, %v8706
        %v8708 = vpop.f32.mrb[0].mxu0
        %v8709 = vadd.f32 %v7363, %v8708
        %v8710 = vpop.f32.mrb[0].mxu0
        %v8711 = vadd.f32 %v7367, %v8710
        %8712 = vmatprep.mubr.bf16.mxu0 %v6991
        %8713 = vmatmul.mubr.bf16.gmra.mrb[0].mxu0 %v6990
        %v8714 = vpop.f32.mrb[0].mxu0
        %v8715 = vadd.f32 %v7363, %v8714
        %v8716 = vpop.f32.mrb[0].mxu0
        %v8717 = vadd.f32 %v7367, %v8716
        %v8718 = vpop.f32.mrb[0].mxu0
        %v8719 = vadd.f32 %v7363, %v8718
        %v8720 = vpop.f32.mrb[0].mxu0
        %v8721 = vadd.f32 %v7367, %v8720
        %8722 = vmatprep.mubr.bf16.mxu0 %v6999
        %8723 = vmatmul.mubr.bf16.gmra.mrb[0].mxu0 %v6998
        %v8724 = vpop.f32.mrb[0].mxu0
        %v8725 = vadd.f32 %v7363, %v8724
        %v8726 = vpop.f32.mrb[0].mxu0
        %v8727 = vadd.f32 %v7367, %v8726
        %v8728 = vpop.f32.mrb[0].mxu0
        %v8729 = vadd.f32 %v7363, %v8728
        %v8730 = vpop.f32.mrb[0].mxu0
        %v8731 = vadd.f32 %v7367, %v8730
        %8732 = vmatprep.mubr.bf16.mxu0 %v7007
        %8733 = vmatmul.mubr.bf16.gmra.mrb[0].mxu0 %v7006
        %v8734 = vpop.f32.mrb[0].mxu0
        %v8735 = vadd.f32 %v7363, %v8734
        %v8736 = vpop.f32.mrb[0].mxu0
        %v8737 = vadd.f32 %v7367, %v8736
        %v8738 = vpop.f32.mrb[0].mxu0
        %v8739 = vadd.f32 %v7363, %v8738
        %v8740 = vpop.f32.mrb[0].mxu0
        %v8741 = vadd.f32 %v7367, %v8740
        %8742 = vmatprep.mubr.bf16.mxu0 %v7015
        %8743 = vmatmul.mubr.bf16.gmra.mrb[0].mxu0 %v7014
        %v8744 = vpop.f32.mrb[0].mxu0
        %v8745 = vadd.f32 %v7363, %v8744
        %v8746 = vpop.f32.mrb[0].mxu0
        %v8747 = vadd.f32 %v7367, %v8746
        %v8748 = vpop.f32.mrb[0].mxu0
        %v8749 = vadd.f32 %v7363, %v8748
        %v8750 = vpop.f32.mrb[0].mxu0
        %v8751 = vadd.f32 %v7367, %v8750
        %8752 = vmatprep.mubr.bf16.mxu0 %v7023
        %8753 = vmatmul.mubr.bf16.gmra.mrb[0].mxu0 %v7022
        %v8754 = vpop.f32.mrb[0].mxu0
        %v8755 = vadd.f32 %v7363, %v8754
        %v8756 = vpop.f32.mrb[0].mxu0
        %v8757 = vadd.f32 %v7367, %v8756
        %v8758 = vpop.f32.mrb[0].mxu0
        %v8759 = vadd.f32 %v7363, %v8758
        %v8760 = vpop.f32.mrb[0].mxu0
        %v8761 = vadd.f32 %v7367, %v8760
        %8762 = vmatprep.mubr.bf16.mxu0 %v7031
        %8763 = vmatmul.mubr.bf16.gmra.mrb[0].mxu0 %v7030
        %v8764 = vpop.f32.mrb[0].mxu0
        %v8765 = vadd.f32 %v7363, %v8764
        %v8766 = vpop.f32.mrb[0].mxu0
        %v8767 = vadd.f32 %v7367, %v8766
        %v8768 = vpop.f32.mrb[0].mxu0
        %v8769 = vadd.f32 %v7363, %v8768
        %v8770 = vpop.f32.mrb[0].mxu0
        %v8771 = vadd.f32 %v7367, %v8770
        %8772 = vmatprep.mubr.bf16.mxu0 %v7039
        %8773 = vmatmul.mubr.bf16.gmra.mrb[0].mxu0 %v7038
        %v8774 = vpop.f32.mrb[0].mxu0
        %v8775 = vadd.f32 %v7363, %v8774
        %v8776 = vpop.f32.mrb[0].mxu0
        %v8777 = vadd.f32 %v7367, %v8776
        %v8778 = vpop.f32.mrb[0].mxu0
        %v8779 = vadd.f32 %v7363, %v8778
        %v8780 = vpop.f32.mrb[0].mxu0
        %v8781 = vadd.f32 %v7367, %v8780
        %8782 = vmatprep.mubr.bf16.mxu0 %v7047
        %8783 = vmatmul.mubr.bf16.gmra.mrb[0].mxu0 %v7046
        %v8784 = vpop.f32.mrb[0].mxu0
        %v8785 = vadd.f32 %v7363, %v8784
        %v8786 = vpop.f32.mrb[0].mxu0
        %v8787 = vadd.f32 %v7367, %v8786
        %v8788 = vpop.f32.mrb[0].mxu0
        %v8789 = vadd.f32 %v7363, %v8788
        %v8790 = vpop.f32.mrb[0].mxu0
        %v8791 = vadd.f32 %v7367, %v8790
        %8792 = vmatprep.mubr.bf16.mxu0 %v7055
        %8793 = vmatmul.mubr.bf16.gmra.mrb[0].mxu0 %v7054
        %v8794 = vpop.f32.mrb[0].mxu0
        %v8795 = vadd.f32 %v7363, %v8794
        %v8796 = vpop.f32.mrb[0].mxu0
        %v8797 = vadd.f32 %v7367, %v8796
        %v8798 = vpop.f32.mrb[0].mxu0
        %v8799 = vadd.f32 %v7363, %v8798
        %v8800 = vpop.f32.mrb[0].mxu0
        %v8801 = vadd.f32 %v7367, %v8800
        %8802 = vmatprep.mubr.bf16.mxu0 %v7063
        %8803 = vmatmul.mubr.bf16.gmra.mrb[0].mxu0 %v7062
        %v8804 = vpop.f32.mrb[0].mxu0
        %v8805 = vadd.f32 %v7363, %v8804
        %v8806 = vpop.f32.mrb[0].mxu0
        %v8807 = vadd.f32 %v7367, %v8806
        %v8808 = vpop.f32.mrb[0].mxu0
        %v8809 = vadd.f32 %v7363, %v8808
        %v8810 = vpop.f32.mrb[0].mxu0
        %v8811 = vadd.f32 %v7367, %v8810
        %8812 = vmatprep.mubr.bf16.mxu0 %v7071
        %8813 = vmatmul.mubr.bf16.gmra.mrb[0].mxu0 %v7070
        %v8814 = vpop.f32.mrb[0].mxu0
        %v8815 = vadd.f32 %v7363, %v8814
        %v8816 = vpop.f32.mrb[0].mxu0
        %v8817 = vadd.f32 %v7367, %v8816
        %v8818 = vpop.f32.mrb[0].mxu0
        %v8819 = vadd.f32 %v7363, %v8818
        %v8820 = vpop.f32.mrb[0].mxu0
        %v8821 = vadd.f32 %v7367, %v8820
        %8822 = vmatprep.mubr.bf16.mxu0 %v7079
        %8823 = vmatmul.mubr.bf16.gmra.mrb[0].mxu0 %v7078
        %v8824 = vpop.f32.mrb[0].mxu0
        %v8825 = vadd.f32 %v7363, %v8824
        %v8826 = vpop.f32.mrb[0].mxu0
        %v8827 = vadd.f32 %v7367, %v8826
        %v8828 = vpop.f32.mrb[0].mxu0
        %v8829 = vadd.f32 %v7363, %v8828
        %v8830 = vpop.f32.mrb[0].mxu0
        %v8831 = vadd.f32 %v7367, %v8830
        %8832 = vmatprep.mubr.bf16.mxu0 %v7087
        %8833 = vmatmul.mubr.bf16.gmra.mrb[0].mxu0 %v7086
        %v8834 = vpop.f32.mrb[0].mxu0
        %v8835 = vadd.f32 %v7363, %v8834
        %v8836 = vpop.f32.mrb[0].mxu0
        %v8837 = vadd.f32 %v7367, %v8836
        %v8838 = vpop.f32.mrb[0].mxu0
        %v8839 = vadd.f32 %v7363, %v8838
        %v8840 = vpop.f32.mrb[0].mxu0
        %v8841 = vadd.f32 %v7367, %v8840
        %8842 = vmatprep.mubr.bf16.mxu0 %v7095
        %8843 = vmatmul.mubr.bf16.gmra.mrb[0].mxu0 %v7094
        %v8844 = vpop.f32.mrb[0].mxu0
        %v8845 = vadd.f32 %v7363, %v8844
        %v8846 = vpop.f32.mrb[0].mxu0
        %v8847 = vadd.f32 %v7367, %v8846
        %v8848 = vpop.f32.mrb[0].mxu0
        %v8849 = vadd.f32 %v7363, %v8848
        %v8850 = vpop.f32.mrb[0].mxu0
        %v8851 = vadd.f32 %v7367, %v8850
        %8852 = vdwg.mxu0
        %8853 = vmatprep.subr.bf16.mxu0 %v8213
        %8854 = vmatpush1.bf16.msra.mxu0 %v8212
        %8855 = vmatprep.subr.bf16.mxu0 %v8217
        %8856 = vmatpush1.bf16.msra.mxu0 %v8216
        %8857 = vmatprep.subr.bf16.mxu0 %v8221
        %8858 = vmatpush1.bf16.msra.mxu0 %v8220
        %8859 = vmatprep.subr.bf16.mxu0 %v8225
        %8860 = vmatpush1.bf16.msra.mxu0 %v8224
        %8861 = vmatprep.subr.bf16.mxu0 %v8229
        %8862 = vmatpush1.bf16.msra.mxu0 %v8228
        %8863 = vmatprep.subr.bf16.mxu0 %v8233
        %8864 = vmatpush1.bf16.msra.mxu0 %v8232
        %8865 = vmatprep.subr.bf16.mxu0 %v8237
        %8866 = vmatpush1.bf16.msra.mxu0 %v8236
        %8867 = vmatprep.subr.bf16.mxu0 %v8241
        %8868 = vmatpush1.bf16.msra.mxu0 %v8240
        %8869 = vmatprep.subr.bf16.mxu0 %v8245
        %8870 = vmatpush1.bf16.msra.mxu0 %v8244
        %8871 = vmatprep.subr.bf16.mxu0 %v8249
        %8872 = vmatpush1.bf16.msra.mxu0 %v8248
        %8873 = vmatprep.subr.bf16.mxu0 %v8253
        %8874 = vmatpush1.bf16.msra.mxu0 %v8252
        %8875 = vmatprep.subr.bf16.mxu0 %v8257
        %8876 = vmatpush1.bf16.msra.mxu0 %v8256
        %8877 = vmatprep.subr.bf16.mxu0 %v8261
        %8878 = vmatpush1.bf16.msra.mxu0 %v8260
        %8879 = vmatprep.subr.bf16.mxu0 %v8265
        %8880 = vmatpush1.bf16.msra.mxu0 %v8264
        %8881 = vmatprep.subr.bf16.mxu0 %v8269
        %8882 = vmatpush1.bf16.msra.mxu0 %v8268
        %8883 = vmatprep.subr.bf16.mxu0 %v8273
        %8884 = vmatpush1.bf16.msra.mxu0 %v8272
        %8885 = vmatprep.mubr.bf16.mxu0 %v6977
        %8886 = vmatmul.mubr.bf16.gmra.mrb[0].mxu0 %v6976
        %v8887 = vpop.f32.mrb[0].mxu0
        %v8888 = vadd.f32 %v8695, %v8887
        %v8889 = vpop.f32.mrb[0].mxu0
        %v8890 = vadd.f32 %v8697, %v8889
        %v8891 = vpop.f32.mrb[0].mxu0
        %v8892 = vadd.f32 %v8699, %v8891
        %v8893 = vpop.f32.mrb[0].mxu0
        %v8894 = vadd.f32 %v8701, %v8893
        %8895 = vmatprep.mubr.bf16.mxu0 %v6985
        %8896 = vmatmul.mubr.bf16.gmra.mrb[0].mxu0 %v6984
        %v8897 = vpop.f32.mrb[0].mxu0
        %v8898 = vadd.f32 %v8705, %v8897
        %v8899 = vpop.f32.mrb[0].mxu0
        %v8900 = vadd.f32 %v8707, %v8899
        %v8901 = vpop.f32.mrb[0].mxu0
        %v8902 = vadd.f32 %v8709, %v8901
        %v8903 = vpop.f32.mrb[0].mxu0
        %v8904 = vadd.f32 %v8711, %v8903
        %8905 = vmatprep.mubr.bf16.mxu0 %v6993
        %8906 = vmatmul.mubr.bf16.gmra.mrb[0].mxu0 %v6992
        %v8907 = vpop.f32.mrb[0].mxu0
        %v8908 = vadd.f32 %v8715, %v8907
        %v8909 = vpop.f32.mrb[0].mxu0
        %v8910 = vadd.f32 %v8717, %v8909
        %v8911 = vpop.f32.mrb[0].mxu0
        %v8912 = vadd.f32 %v8719, %v8911
        %v8913 = vpop.f32.mrb[0].mxu0
        %v8914 = vadd.f32 %v8721, %v8913
        %8915 = vmatprep.mubr.bf16.mxu0 %v7001
        %8916 = vmatmul.mubr.bf16.gmra.mrb[0].mxu0 %v7000
        %v8917 = vpop.f32.mrb[0].mxu0
        %v8918 = vadd.f32 %v8725, %v8917
        %v8919 = vpop.f32.mrb[0].mxu0
        %v8920 = vadd.f32 %v8727, %v8919
        %v8921 = vpop.f32.mrb[0].mxu0
        %v8922 = vadd.f32 %v8729, %v8921
        %v8923 = vpop.f32.mrb[0].mxu0
        %v8924 = vadd.f32 %v8731, %v8923
        %8925 = vmatprep.mubr.bf16.mxu0 %v7009
        %8926 = vmatmul.mubr.bf16.gmra.mrb[0].mxu0 %v7008
        %v8927 = vpop.f32.mrb[0].mxu0
        %v8928 = vadd.f32 %v8735, %v8927
        %v8929 = vpop.f32.mrb[0].mxu0
        %v8930 = vadd.f32 %v8737, %v8929
        %v8931 = vpop.f32.mrb[0].mxu0
        %v8932 = vadd.f32 %v8739, %v8931
        %v8933 = vpop.f32.mrb[0].mxu0
        %v8934 = vadd.f32 %v8741, %v8933
        %8935 = vmatprep.mubr.bf16.mxu0 %v7017
        %8936 = vmatmul.mubr.bf16.gmra.mrb[0].mxu0 %v7016
        %v8937 = vpop.f32.mrb[0].mxu0
        %v8938 = vadd.f32 %v8745, %v8937
        %v8939 = vpop.f32.mrb[0].mxu0
        %v8940 = vadd.f32 %v8747, %v8939
        %v8941 = vpop.f32.mrb[0].mxu0
        %v8942 = vadd.f32 %v8749, %v8941
        %v8943 = vpop.f32.mrb[0].mxu0
        %v8944 = vadd.f32 %v8751, %v8943
        %8945 = vmatprep.mubr.bf16.mxu0 %v7025
        %8946 = vmatmul.mubr.bf16.gmra.mrb[0].mxu0 %v7024
        %v8947 = vpop.f32.mrb[0].mxu0
        %v8948 = vadd.f32 %v8755, %v8947
        %v8949 = vpop.f32.mrb[0].mxu0
        %v8950 = vadd.f32 %v8757, %v8949
        %v8951 = vpop.f32.mrb[0].mxu0
        %v8952 = vadd.f32 %v8759, %v8951
        %v8953 = vpop.f32.mrb[0].mxu0
        %v8954 = vadd.f32 %v8761, %v8953
        %8955 = vmatprep.mubr.bf16.mxu0 %v7033
        %8956 = vmatmul.mubr.bf16.gmra.mrb[0].mxu0 %v7032
        %v8957 = vpop.f32.mrb[0].mxu0
        %v8958 = vadd.f32 %v8765, %v8957
        %v8959 = vpop.f32.mrb[0].mxu0
        %v8960 = vadd.f32 %v8767, %v8959
        %v8961 = vpop.f32.mrb[0].mxu0
        %v8962 = vadd.f32 %v8769, %v8961
        %v8963 = vpop.f32.mrb[0].mxu0
        %v8964 = vadd.f32 %v8771, %v8963
        %8965 = vmatprep.mubr.bf16.mxu0 %v7041
        %8966 = vmatmul.mubr.bf16.gmra.mrb[0].mxu0 %v7040
        %v8967 = vpop.f32.mrb[0].mxu0
        %v8968 = vadd.f32 %v8775, %v8967
        %v8969 = vpop.f32.mrb[0].mxu0
        %v8970 = vadd.f32 %v8777, %v8969
        %v8971 = vpop.f32.mrb[0].mxu0
        %v8972 = vadd.f32 %v8779, %v8971
        %v8973 = vpop.f32.mrb[0].mxu0
        %v8974 = vadd.f32 %v8781, %v8973
        %8975 = vmatprep.mubr.bf16.mxu0 %v7049
        %8976 = vmatmul.mubr.bf16.gmra.mrb[0].mxu0 %v7048
        %v8977 = vpop.f32.mrb[0].mxu0
        %v8978 = vadd.f32 %v8785, %v8977
        %v8979 = vpop.f32.mrb[0].mxu0
        %v8980 = vadd.f32 %v8787, %v8979
        %v8981 = vpop.f32.mrb[0].mxu0
        %v8982 = vadd.f32 %v8789, %v8981
        %v8983 = vpop.f32.mrb[0].mxu0
        %v8984 = vadd.f32 %v8791, %v8983
        %8985 = vmatprep.mubr.bf16.mxu0 %v7057
        %8986 = vmatmul.mubr.bf16.gmra.mrb[0].mxu0 %v7056
        %v8987 = vpop.f32.mrb[0].mxu0
        %v8988 = vadd.f32 %v8795, %v8987
        %v8989 = vpop.f32.mrb[0].mxu0
        %v8990 = vadd.f32 %v8797, %v8989
        %v8991 = vpop.f32.mrb[0].mxu0
        %v8992 = vadd.f32 %v8799, %v8991
        %v8993 = vpop.f32.mrb[0].mxu0
        %v8994 = vadd.f32 %v8801, %v8993
        %8995 = vmatprep.mubr.bf16.mxu0 %v7065
        %8996 = vmatmul.mubr.bf16.gmra.mrb[0].mxu0 %v7064
        %v8997 = vpop.f32.mrb[0].mxu0
        %v8998 = vadd.f32 %v8805, %v8997
        %v8999 = vpop.f32.mrb[0].mxu0
        %v9000 = vadd.f32 %v8807, %v8999
        %v9001 = vpop.f32.mrb[0].mxu0
        %v9002 = vadd.f32 %v8809, %v9001
        %v9003 = vpop.f32.mrb[0].mxu0
        %v9004 = vadd.f32 %v8811, %v9003
        %9005 = vmatprep.mubr.bf16.mxu0 %v7073
        %9006 = vmatmul.mubr.bf16.gmra.mrb[0].mxu0 %v7072
        %v9007 = vpop.f32.mrb[0].mxu0
        %v9008 = vadd.f32 %v8815, %v9007
        %v9009 = vpop.f32.mrb[0].mxu0
        %v9010 = vadd.f32 %v8817, %v9009
        %v9011 = vpop.f32.mrb[0].mxu0
        %v9012 = vadd.f32 %v8819, %v9011
        %v9013 = vpop.f32.mrb[0].mxu0
        %v9014 = vadd.f32 %v8821, %v9013
        %9015 = vmatprep.mubr.bf16.mxu0 %v7081
        %9016 = vmatmul.mubr.bf16.gmra.mrb[0].mxu0 %v7080
        %v9017 = vpop.f32.mrb[0].mxu0
        %v9018 = vadd.f32 %v8825, %v9017
        %v9019 = vpop.f32.mrb[0].mxu0
        %v9020 = vadd.f32 %v8827, %v9019
        %v9021 = vpop.f32.mrb[0].mxu0
        %v9022 = vadd.f32 %v8829, %v9021
        %v9023 = vpop.f32.mrb[0].mxu0
        %v9024 = vadd.f32 %v8831, %v9023
        %9025 = vmatprep.mubr.bf16.mxu0 %v7089
        %9026 = vmatmul.mubr.bf16.gmra.mrb[0].mxu0 %v7088
        %v9027 = vpop.f32.mrb[0].mxu0
        %v9028 = vadd.f32 %v8835, %v9027
        %v9029 = vpop.f32.mrb[0].mxu0
        %v9030 = vadd.f32 %v8837, %v9029
        %v9031 = vpop.f32.mrb[0].mxu0
        %v9032 = vadd.f32 %v8839, %v9031
        %v9033 = vpop.f32.mrb[0].mxu0
        %v9034 = vadd.f32 %v8841, %v9033
        %9035 = vmatprep.mubr.bf16.mxu0 %v7097
        %9036 = vmatmul.mubr.bf16.gmra.mrb[0].mxu0 %v7096
        %v9037 = vpop.f32.mrb[0].mxu0
        %v9038 = vadd.f32 %v8845, %v9037
        %v9039 = vpop.f32.mrb[0].mxu0
        %v9040 = vadd.f32 %v8847, %v9039
        %v9041 = vpop.f32.mrb[0].mxu0
        %v9042 = vadd.f32 %v8849, %v9041
        %v9043 = vpop.f32.mrb[0].mxu0
        %v9044 = vadd.f32 %v8851, %v9043
        %9045 = vdwg.mxu0
        %9046 = vmatprep.subr.bf16.mxu0 %v8277
        %9047 = vmatpush1.bf16.msra.mxu0 %v8276
        %9048 = vmatprep.subr.bf16.mxu0 %v8281
        %9049 = vmatpush1.bf16.msra.mxu0 %v8280
        %9050 = vmatprep.subr.bf16.mxu0 %v8285
        %9051 = vmatpush1.bf16.msra.mxu0 %v8284
        %9052 = vmatprep.subr.bf16.mxu0 %v8289
        %9053 = vmatpush1.bf16.msra.mxu0 %v8288
        %9054 = vmatprep.subr.bf16.mxu0 %v8293
        %9055 = vmatpush1.bf16.msra.mxu0 %v8292
        %9056 = vmatprep.subr.bf16.mxu0 %v8297
        %9057 = vmatpush1.bf16.msra.mxu0 %v8296
        %9058 = vmatprep.subr.bf16.mxu0 %v8301
        %9059 = vmatpush1.bf16.msra.mxu0 %v8300
        %9060 = vmatprep.subr.bf16.mxu0 %v8305
        %9061 = vmatpush1.bf16.msra.mxu0 %v8304
        %9062 = vmatprep.subr.bf16.mxu0 %v8309
        %9063 = vmatpush1.bf16.msra.mxu0 %v8308
        %9064 = vmatprep.subr.bf16.mxu0 %v8313
        %9065 = vmatpush1.bf16.msra.mxu0 %v8312
        %9066 = vmatprep.subr.bf16.mxu0 %v8317
        %9067 = vmatpush1.bf16.msra.mxu0 %v8316
        %9068 = vmatprep.subr.bf16.mxu0 %v8321
        %9069 = vmatpush1.bf16.msra.mxu0 %v8320
        %9070 = vmatprep.subr.bf16.mxu0 %v8325
        %9071 = vmatpush1.bf16.msra.mxu0 %v8324
        %9072 = vmatprep.subr.bf16.mxu0 %v8329
        %9073 = vmatpush1.bf16.msra.mxu0 %v8328
        %9074 = vmatprep.subr.bf16.mxu0 %v8333
        %9075 = vmatpush1.bf16.msra.mxu0 %v8332
        %9076 = vmatprep.subr.bf16.mxu0 %v8337
        %9077 = vmatpush1.bf16.msra.mxu0 %v8336
        %9078 = vmatprep.mubr.bf16.mxu0 %v6979
        %9079 = vmatmul.mubr.bf16.gmra.mrb[0].mxu0 %v6978
        %v9080 = vpop.f32.mrb[0].mxu0
        %v9081 = vadd.f32 %v8888, %v9080
        %v9082 = vpop.f32.mrb[0].mxu0
        %v9083 = vadd.f32 %v8890, %v9082
        %v9084 = vpop.f32.mrb[0].mxu0
        %v9085 = vadd.f32 %v8892, %v9084
        %v9086 = vpop.f32.mrb[0].mxu0
        %v9087 = vadd.f32 %v8894, %v9086
        %9088 = vmatprep.mubr.bf16.mxu0 %v6987
        %9089 = vmatmul.mubr.bf16.gmra.mrb[0].mxu0 %v6986
        %v9090 = vpop.f32.mrb[0].mxu0
        %v9091 = vadd.f32 %v8898, %v9090
        %v9092 = vpop.f32.mrb[0].mxu0
        %v9093 = vadd.f32 %v8900, %v9092
        %v9094 = vpop.f32.mrb[0].mxu0
        %v9095 = vadd.f32 %v8902, %v9094
        %v9096 = vpop.f32.mrb[0].mxu0
        %v9097 = vadd.f32 %v8904, %v9096
        %9098 = vmatprep.mubr.bf16.mxu0 %v6995
        %9099 = vmatmul.mubr.bf16.gmra.mrb[0].mxu0 %v6994
        %v9100 = vpop.f32.mrb[0].mxu0
        %v9101 = vadd.f32 %v8908, %v9100
        %v9102 = vpop.f32.mrb[0].mxu0
        %v9103 = vadd.f32 %v8910, %v9102
        %v9104 = vpop.f32.mrb[0].mxu0
        %v9105 = vadd.f32 %v8912, %v9104
        %v9106 = vpop.f32.mrb[0].mxu0
        %v9107 = vadd.f32 %v8914, %v9106
        %9108 = vmatprep.mubr.bf16.mxu0 %v7003
        %9109 = vmatmul.mubr.bf16.gmra.mrb[0].mxu0 %v7002
        %v9110 = vpop.f32.mrb[0].mxu0
        %v9111 = vadd.f32 %v8918, %v9110
        %v9112 = vpop.f32.mrb[0].mxu0
        %v9113 = vadd.f32 %v8920, %v9112
        %v9114 = vpop.f32.mrb[0].mxu0
        %v9115 = vadd.f32 %v8922, %v9114
        %v9116 = vpop.f32.mrb[0].mxu0
        %v9117 = vadd.f32 %v8924, %v9116
        %9118 = vmatprep.mubr.bf16.mxu0 %v7011
        %9119 = vmatmul.mubr.bf16.gmra.mrb[0].mxu0 %v7010
        %v9120 = vpop.f32.mrb[0].mxu0
        %v9121 = vadd.f32 %v8928, %v9120
        %v9122 = vpop.f32.mrb[0].mxu0
        %v9123 = vadd.f32 %v8930, %v9122
        %v9124 = vpop.f32.mrb[0].mxu0
        %v9125 = vadd.f32 %v8932, %v9124
        %v9126 = vpop.f32.mrb[0].mxu0
        %v9127 = vadd.f32 %v8934, %v9126
        %9128 = vmatprep.mubr.bf16.mxu0 %v7019
        %9129 = vmatmul.mubr.bf16.gmra.mrb[0].mxu0 %v7018
        %v9130 = vpop.f32.mrb[0].mxu0
        %v9131 = vadd.f32 %v8938, %v9130
        %v9132 = vpop.f32.mrb[0].mxu0
        %v9133 = vadd.f32 %v8940, %v9132
        %v9134 = vpop.f32.mrb[0].mxu0
        %v9135 = vadd.f32 %v8942, %v9134
        %v9136 = vpop.f32.mrb[0].mxu0
        %v9137 = vadd.f32 %v8944, %v9136
        %9138 = vmatprep.mubr.bf16.mxu0 %v7027
        %9139 = vmatmul.mubr.bf16.gmra.mrb[0].mxu0 %v7026
        %v9140 = vpop.f32.mrb[0].mxu0
        %v9141 = vadd.f32 %v8948, %v9140
        %v9142 = vpop.f32.mrb[0].mxu0
        %v9143 = vadd.f32 %v8950, %v9142
        %v9144 = vpop.f32.mrb[0].mxu0
        %v9145 = vadd.f32 %v8952, %v9144
        %v9146 = vpop.f32.mrb[0].mxu0
        %v9147 = vadd.f32 %v8954, %v9146
        %9148 = vmatprep.mubr.bf16.mxu0 %v7035
        %9149 = vmatmul.mubr.bf16.gmra.mrb[0].mxu0 %v7034
        %v9150 = vpop.f32.mrb[0].mxu0
        %v9151 = vadd.f32 %v8958, %v9150
        %v9152 = vpop.f32.mrb[0].mxu0
        %v9153 = vadd.f32 %v8960, %v9152
        %v9154 = vpop.f32.mrb[0].mxu0
        %v9155 = vadd.f32 %v8962, %v9154
        %v9156 = vpop.f32.mrb[0].mxu0
        %v9157 = vadd.f32 %v8964, %v9156
        %9158 = vmatprep.mubr.bf16.mxu0 %v7043
        %9159 = vmatmul.mubr.bf16.gmra.mrb[0].mxu0 %v7042
        %v9160 = vpop.f32.mrb[0].mxu0
        %v9161 = vadd.f32 %v8968, %v9160
        %v9162 = vpop.f32.mrb[0].mxu0
        %v9163 = vadd.f32 %v8970, %v9162
        %v9164 = vpop.f32.mrb[0].mxu0
        %v9165 = vadd.f32 %v8972, %v9164
        %v9166 = vpop.f32.mrb[0].mxu0
        %v9167 = vadd.f32 %v8974, %v9166
        %9168 = vmatprep.mubr.bf16.mxu0 %v7051
        %9169 = vmatmul.mubr.bf16.gmra.mrb[0].mxu0 %v7050
        %v9170 = vpop.f32.mrb[0].mxu0
        %v9171 = vadd.f32 %v8978, %v9170
        %v9172 = vpop.f32.mrb[0].mxu0
        %v9173 = vadd.f32 %v8980, %v9172
        %v9174 = vpop.f32.mrb[0].mxu0
        %v9175 = vadd.f32 %v8982, %v9174
        %v9176 = vpop.f32.mrb[0].mxu0
        %v9177 = vadd.f32 %v8984, %v9176
        %9178 = vmatprep.mubr.bf16.mxu0 %v7059
        %9179 = vmatmul.mubr.bf16.gmra.mrb[0].mxu0 %v7058
        %v9180 = vpop.f32.mrb[0].mxu0
        %v9181 = vadd.f32 %v8988, %v9180
        %v9182 = vpop.f32.mrb[0].mxu0
        %v9183 = vadd.f32 %v8990, %v9182
        %v9184 = vpop.f32.mrb[0].mxu0
        %v9185 = vadd.f32 %v8992, %v9184
        %v9186 = vpop.f32.mrb[0].mxu0
        %v9187 = vadd.f32 %v8994, %v9186
        %9188 = vmatprep.mubr.bf16.mxu0 %v7067
        %9189 = vmatmul.mubr.bf16.gmra.mrb[0].mxu0 %v7066
        %v9190 = vpop.f32.mrb[0].mxu0
        %v9191 = vadd.f32 %v8998, %v9190
        %v9192 = vpop.f32.mrb[0].mxu0
        %v9193 = vadd.f32 %v9000, %v9192
        %v9194 = vpop.f32.mrb[0].mxu0
        %v9195 = vadd.f32 %v9002, %v9194
        %v9196 = vpop.f32.mrb[0].mxu0
        %v9197 = vadd.f32 %v9004, %v9196
        %9198 = vmatprep.mubr.bf16.mxu0 %v7075
        %9199 = vmatmul.mubr.bf16.gmra.mrb[0].mxu0 %v7074
        %v9200 = vpop.f32.mrb[0].mxu0
        %v9201 = vadd.f32 %v9008, %v9200
        %v9202 = vpop.f32.mrb[0].mxu0
        %v9203 = vadd.f32 %v9010, %v9202
        %v9204 = vpop.f32.mrb[0].mxu0
        %v9205 = vadd.f32 %v9012, %v9204
        %v9206 = vpop.f32.mrb[0].mxu0
        %v9207 = vadd.f32 %v9014, %v9206
        %9208 = vmatprep.mubr.bf16.mxu0 %v7083
        %9209 = vmatmul.mubr.bf16.gmra.mrb[0].mxu0 %v7082
        %v9210 = vpop.f32.mrb[0].mxu0
        %v9211 = vadd.f32 %v9018, %v9210
        %v9212 = vpop.f32.mrb[0].mxu0
        %v9213 = vadd.f32 %v9020, %v9212
        %v9214 = vpop.f32.mrb[0].mxu0
        %v9215 = vadd.f32 %v9022, %v9214
        %v9216 = vpop.f32.mrb[0].mxu0
        %v9217 = vadd.f32 %v9024, %v9216
        %9218 = vmatprep.mubr.bf16.mxu0 %v7091
        %9219 = vmatmul.mubr.bf16.gmra.mrb[0].mxu0 %v7090
        %v9220 = vpop.f32.mrb[0].mxu0
        %v9221 = vadd.f32 %v9028, %v9220
        %v9222 = vpop.f32.mrb[0].mxu0
        %v9223 = vadd.f32 %v9030, %v9222
        %v9224 = vpop.f32.mrb[0].mxu0
        %v9225 = vadd.f32 %v9032, %v9224
        %v9226 = vpop.f32.mrb[0].mxu0
        %v9227 = vadd.f32 %v9034, %v9226
        %9228 = vmatprep.mubr.bf16.mxu0 %v7099
        %9229 = vmatmul.mubr.bf16.gmra.mrb[0].mxu0 %v7098
        %v9230 = vpop.f32.mrb[0].mxu0
        %v9231 = vadd.f32 %v9038, %v9230
        %v9232 = vpop.f32.mrb[0].mxu0
        %v9233 = vadd.f32 %v9040, %v9232
        %v9234 = vpop.f32.mrb[0].mxu0
        %v9235 = vadd.f32 %v9042, %v9234
        %v9236 = vpop.f32.mrb[0].mxu0
        %v9237 = vadd.f32 %v9044, %v9236
        %9238 = vdwg.mxu0
        %9239 = vmatprep.subr.bf16.mxu0 %v8341
        %9240 = vmatpush1.bf16.msra.mxu0 %v8340
        %9241 = vmatprep.subr.bf16.mxu0 %v8345
        %9242 = vmatpush1.bf16.msra.mxu0 %v8344
        %9243 = vmatprep.subr.bf16.mxu0 %v8349
        %9244 = vmatpush1.bf16.msra.mxu0 %v8348
        %9245 = vmatprep.subr.bf16.mxu0 %v8353
        %9246 = vmatpush1.bf16.msra.mxu0 %v8352
        %9247 = vmatprep.subr.bf16.mxu0 %v8357
        %9248 = vmatpush1.bf16.msra.mxu0 %v8356
        %9249 = vmatprep.subr.bf16.mxu0 %v8361
        %9250 = vmatpush1.bf16.msra.mxu0 %v8360
        %9251 = vmatprep.subr.bf16.mxu0 %v8365
        %9252 = vmatpush1.bf16.msra.mxu0 %v8364
        %9253 = vmatprep.subr.bf16.mxu0 %v8369
        %9254 = vmatpush1.bf16.msra.mxu0 %v8368
        %9255 = vmatprep.subr.bf16.mxu0 %v8373
        %9256 = vmatpush1.bf16.msra.mxu0 %v8372
        %9257 = vmatprep.subr.bf16.mxu0 %v8377
        %9258 = vmatpush1.bf16.msra.mxu0 %v8376
        %9259 = vmatprep.subr.bf16.mxu0 %v8381
        %9260 = vmatpush1.bf16.msra.mxu0 %v8380
        %9261 = vmatprep.subr.bf16.mxu0 %v8385
        %9262 = vmatpush1.bf16.msra.mxu0 %v8384
        %9263 = vmatprep.subr.bf16.mxu0 %v8389
        %9264 = vmatpush1.bf16.msra.mxu0 %v8388
        %9265 = vmatprep.subr.bf16.mxu0 %v8393
        %9266 = vmatpush1.bf16.msra.mxu0 %v8392
        %9267 = vmatprep.subr.bf16.mxu0 %v8397
        %9268 = vmatpush1.bf16.msra.mxu0 %v8396
        %9269 = vmatprep.subr.bf16.mxu0 %v8401
        %9270 = vmatpush1.bf16.msra.mxu0 %v8400
        %9271 = vmatprep.mubr.bf16.mxu0 %v6981
        %9272 = vmatmul.mubr.bf16.gmra.mrb[0].mxu0 %v6980
        %v9273 = vpop.f32.mrb[0].mxu0
        %v9274 = vadd.f32 %v9081, %v9273
        %v9275 = vpop.f32.mrb[0].mxu0
        %v9276 = vadd.f32 %v9083, %v9275
        %v9277 = vpop.f32.mrb[0].mxu0
        %v9278 = vadd.f32 %v9085, %v9277
        %v9279 = vpop.f32.mrb[0].mxu0
        %v9280 = vadd.f32 %v9087, %v9279
        %9281 = vmatprep.mubr.bf16.mxu0 %v6989
        %9282 = vmatmul.mubr.bf16.gmra.mrb[0].mxu0 %v6988
        %v9283 = vpop.f32.mrb[0].mxu0
        %v9284 = vadd.f32 %v9091, %v9283
        %v9285 = vpop.f32.mrb[0].mxu0
        %v9286 = vadd.f32 %v9093, %v9285
        %v9287 = vpop.f32.mrb[0].mxu0
        %v9288 = vadd.f32 %v9095, %v9287
        %v9289 = vpop.f32.mrb[0].mxu0
        %v9290 = vadd.f32 %v9097, %v9289
        %9291 = vmatprep.mubr.bf16.mxu0 %v6997
        %9292 = vmatmul.mubr.bf16.gmra.mrb[0].mxu0 %v6996
        %v9293 = vpop.f32.mrb[0].mxu0
        %v9294 = vadd.f32 %v9101, %v9293
        %v9295 = vpop.f32.mrb[0].mxu0
        %v9296 = vadd.f32 %v9103, %v9295
        %v9297 = vpop.f32.mrb[0].mxu0
        %v9298 = vadd.f32 %v9105, %v9297
        %v9299 = vpop.f32.mrb[0].mxu0
        %v9300 = vadd.f32 %v9107, %v9299
        %9301 = vmatprep.mubr.bf16.mxu0 %v7005
        %9302 = vmatmul.mubr.bf16.gmra.mrb[0].mxu0 %v7004
        %v9303 = vpop.f32.mrb[0].mxu0
        %v9304 = vadd.f32 %v9111, %v9303
        %v9305 = vpop.f32.mrb[0].mxu0
        %v9306 = vadd.f32 %v9113, %v9305
        %v9307 = vpop.f32.mrb[0].mxu0
        %v9308 = vadd.f32 %v9115, %v9307
        %v9309 = vpop.f32.mrb[0].mxu0
        %v9310 = vadd.f32 %v9117, %v9309
        %9311 = vmatprep.mubr.bf16.mxu0 %v7013
        %9312 = vmatmul.mubr.bf16.gmra.mrb[0].mxu0 %v7012
        %v9313 = vpop.f32.mrb[0].mxu0
        %v9314 = vadd.f32 %v9121, %v9313
        %v9315 = vpop.f32.mrb[0].mxu0
        %v9316 = vadd.f32 %v9123, %v9315
        %v9317 = vpop.f32.mrb[0].mxu0
        %v9318 = vadd.f32 %v9125, %v9317
        %v9319 = vpop.f32.mrb[0].mxu0
        %v9320 = vadd.f32 %v9127, %v9319
        %9321 = vmatprep.mubr.bf16.mxu0 %v7021
        %9322 = vmatmul.mubr.bf16.gmra.mrb[0].mxu0 %v7020
        %v9323 = vpop.f32.mrb[0].mxu0
        %v9324 = vadd.f32 %v9131, %v9323
        %v9325 = vpop.f32.mrb[0].mxu0
        %v9326 = vadd.f32 %v9133, %v9325
        %v9327 = vpop.f32.mrb[0].mxu0
        %v9328 = vadd.f32 %v9135, %v9327
        %v9329 = vpop.f32.mrb[0].mxu0
        %v9330 = vadd.f32 %v9137, %v9329
        %9331 = vmatprep.mubr.bf16.mxu0 %v7029
        %9332 = vmatmul.mubr.bf16.gmra.mrb[0].mxu0 %v7028
        %v9333 = vpop.f32.mrb[0].mxu0
        %v9334 = vadd.f32 %v9141, %v9333
        %v9335 = vpop.f32.mrb[0].mxu0
        %v9336 = vadd.f32 %v9143, %v9335
        %v9337 = vpop.f32.mrb[0].mxu0
        %v9338 = vadd.f32 %v9145, %v9337
        %v9339 = vpop.f32.mrb[0].mxu0
        %v9340 = vadd.f32 %v9147, %v9339
        %9341 = vmatprep.mubr.bf16.mxu0 %v7037
        %9342 = vmatmul.mubr.bf16.gmra.mrb[0].mxu0 %v7036
        %v9343 = vpop.f32.mrb[0].mxu0
        %v9344 = vadd.f32 %v9151, %v9343
        %v9345 = vpop.f32.mrb[0].mxu0
        %v9346 = vadd.f32 %v9153, %v9345
        %v9347 = vpop.f32.mrb[0].mxu0
        %v9348 = vadd.f32 %v9155, %v9347
        %v9349 = vpop.f32.mrb[0].mxu0
        %v9350 = vadd.f32 %v9157, %v9349
        %9351 = vmatprep.mubr.bf16.mxu0 %v7045
        %9352 = vmatmul.mubr.bf16.gmra.mrb[0].mxu0 %v7044
        %v9353 = vpop.f32.mrb[0].mxu0
        %v9354 = vadd.f32 %v9161, %v9353
        %v9355 = vpop.f32.mrb[0].mxu0
        %v9356 = vadd.f32 %v9163, %v9355
        %v9357 = vpop.f32.mrb[0].mxu0
        %v9358 = vadd.f32 %v9165, %v9357
        %v9359 = vpop.f32.mrb[0].mxu0
        %v9360 = vadd.f32 %v9167, %v9359
        %9361 = vmatprep.mubr.bf16.mxu0 %v7053
        %9362 = vmatmul.mubr.bf16.gmra.mrb[0].mxu0 %v7052
        %v9363 = vpop.f32.mrb[0].mxu0
        %v9364 = vadd.f32 %v9171, %v9363
        %v9365 = vpop.f32.mrb[0].mxu0
        %v9366 = vadd.f32 %v9173, %v9365
        %v9367 = vpop.f32.mrb[0].mxu0
        %v9368 = vadd.f32 %v9175, %v9367
        %v9369 = vpop.f32.mrb[0].mxu0
        %v9370 = vadd.f32 %v9177, %v9369
        %9371 = vmatprep.mubr.bf16.mxu0 %v7061
        %9372 = vmatmul.mubr.bf16.gmra.mrb[0].mxu0 %v7060
        %v9373 = vpop.f32.mrb[0].mxu0
        %v9374 = vadd.f32 %v9181, %v9373
        %v9375 = vpop.f32.mrb[0].mxu0
        %v9376 = vadd.f32 %v9183, %v9375
        %v9377 = vpop.f32.mrb[0].mxu0
        %v9378 = vadd.f32 %v9185, %v9377
        %v9379 = vpop.f32.mrb[0].mxu0
        %v9380 = vadd.f32 %v9187, %v9379
        %9381 = vmatprep.mubr.bf16.mxu0 %v7069
        %9382 = vmatmul.mubr.bf16.gmra.mrb[0].mxu0 %v7068
        %v9383 = vpop.f32.mrb[0].mxu0
        %v9384 = vadd.f32 %v9191, %v9383
        %v9385 = vpop.f32.mrb[0].mxu0
        %v9386 = vadd.f32 %v9193, %v9385
        %v9387 = vpop.f32.mrb[0].mxu0
        %v9388 = vadd.f32 %v9195, %v9387
        %v9389 = vpop.f32.mrb[0].mxu0
        %v9390 = vadd.f32 %v9197, %v9389
        %9391 = vmatprep.mubr.bf16.mxu0 %v7077
        %9392 = vmatmul.mubr.bf16.gmra.mrb[0].mxu0 %v7076
        %v9393 = vpop.f32.mrb[0].mxu0
        %v9394 = vadd.f32 %v9201, %v9393
        %v9395 = vpop.f32.mrb[0].mxu0
        %v9396 = vadd.f32 %v9203, %v9395
        %v9397 = vpop.f32.mrb[0].mxu0
        %v9398 = vadd.f32 %v9205, %v9397
        %v9399 = vpop.f32.mrb[0].mxu0
        %v9400 = vadd.f32 %v9207, %v9399
        %9401 = vmatprep.mubr.bf16.mxu0 %v7085
        %9402 = vmatmul.mubr.bf16.gmra.mrb[0].mxu0 %v7084
        %v9403 = vpop.f32.mrb[0].mxu0
        %v9404 = vadd.f32 %v9211, %v9403
        %v9405 = vpop.f32.mrb[0].mxu0
        %v9406 = vadd.f32 %v9213, %v9405
        %v9407 = vpop.f32.mrb[0].mxu0
        %v9408 = vadd.f32 %v9215, %v9407
        %v9409 = vpop.f32.mrb[0].mxu0
        %v9410 = vadd.f32 %v9217, %v9409
        %9411 = vmatprep.mubr.bf16.mxu0 %v7093
        %9412 = vmatmul.mubr.bf16.gmra.mrb[0].mxu0 %v7092
        %v9413 = vpop.f32.mrb[0].mxu0
        %v9414 = vadd.f32 %v9221, %v9413
        %v9415 = vpop.f32.mrb[0].mxu0
        %v9416 = vadd.f32 %v9223, %v9415
        %v9417 = vpop.f32.mrb[0].mxu0
        %v9418 = vadd.f32 %v9225, %v9417
        %v9419 = vpop.f32.mrb[0].mxu0
        %v9420 = vadd.f32 %v9227, %v9419
        %9421 = vmatprep.mubr.bf16.mxu0 %v7101
        %9422 = vmatmul.mubr.bf16.gmra.mrb[0].mxu0 %v7100
        %v9423 = vpop.f32.mrb[0].mxu0
        %v9424 = vadd.f32 %v9231, %v9423
        %v9425 = vpop.f32.mrb[0].mxu0
        %v9426 = vadd.f32 %v9233, %v9425
        %v9427 = vpop.f32.mrb[0].mxu0
        %v9428 = vadd.f32 %v9235, %v9427
        %v9429 = vpop.f32.mrb[0].mxu0
        %v9430 = vadd.f32 %v9237, %v9429
        %9431 = vdwg.mxu0
        %9432 = vmatprep.subr.bf16.mxu0 %v8151
        %9433 = vmatpush1.bf16.msra.mxu0 %v8150
        %9434 = vmatprep.subr.bf16.mxu0 %v8155
        %9435 = vmatpush1.bf16.msra.mxu0 %v8154
        %9436 = vmatprep.subr.bf16.mxu0 %v8159
        %9437 = vmatpush1.bf16.msra.mxu0 %v8158
        %9438 = vmatprep.subr.bf16.mxu0 %v8163
        %9439 = vmatpush1.bf16.msra.mxu0 %v8162
        %9440 = vmatprep.subr.bf16.mxu0 %v8167
        %9441 = vmatpush1.bf16.msra.mxu0 %v8166
        %9442 = vmatprep.subr.bf16.mxu0 %v8171
        %9443 = vmatpush1.bf16.msra.mxu0 %v8170
        %9444 = vmatprep.subr.bf16.mxu0 %v8175
        %9445 = vmatpush1.bf16.msra.mxu0 %v8174
        %9446 = vmatprep.subr.bf16.mxu0 %v8179
        %9447 = vmatpush1.bf16.msra.mxu0 %v8178
        %9448 = vmatprep.subr.bf16.mxu0 %v8183
        %9449 = vmatpush1.bf16.msra.mxu0 %v8182
        %9450 = vmatprep.subr.bf16.mxu0 %v8187
        %9451 = vmatpush1.bf16.msra.mxu0 %v8186
        %9452 = vmatprep.subr.bf16.mxu0 %v8191
        %9453 = vmatpush1.bf16.msra.mxu0 %v8190
        %9454 = vmatprep.subr.bf16.mxu0 %v8195
        %9455 = vmatpush1.bf16.msra.mxu0 %v8194
        %9456 = vmatprep.subr.bf16.mxu0 %v8199
        %9457 = vmatpush1.bf16.msra.mxu0 %v8198
        %9458 = vmatprep.subr.bf16.mxu0 %v8203
        %9459 = vmatpush1.bf16.msra.mxu0 %v8202
        %9460 = vmatprep.subr.bf16.mxu0 %v8207
        %9461 = vmatpush1.bf16.msra.mxu0 %v8206
        %9462 = vmatprep.subr.bf16.mxu0 %v8211
        %9463 = vmatpush1.bf16.msra.mxu0 %v8210
        %9464 = vmatprep.mubr.bf16.mxu0 %v6975
        %9465 = vmatmul.mubr.bf16.gmra.mrb[0].mxu0 %v6974
        %v9466 = vpop.f32.mrb[0].mxu0
        %v9467 = vadd.f32 %v7371, %v9466
        %v9468 = vpop.f32.mrb[0].mxu0
        %v9469 = vadd.f32 %v7375, %v9468
        %v9470 = vpop.f32.mrb[0].mxu0
        %v9471 = vadd.f32 %v7371, %v9470
        %v9472 = vpop.f32.mrb[0].mxu0
        %v9473 = vadd.f32 %v7375, %v9472
        %9474 = vmatprep.mubr.bf16.mxu0 %v6983
        %9475 = vmatmul.mubr.bf16.gmra.mrb[0].mxu0 %v6982
        %v9476 = vpop.f32.mrb[0].mxu0
        %v9477 = vadd.f32 %v7371, %v9476
        %v9478 = vpop.f32.mrb[0].mxu0
        %v9479 = vadd.f32 %v7375, %v9478
        %v9480 = vpop.f32.mrb[0].mxu0
        %v9481 = vadd.f32 %v7371, %v9480
        %v9482 = vpop.f32.mrb[0].mxu0
        %v9483 = vadd.f32 %v7375, %v9482
        %9484 = vmatprep.mubr.bf16.mxu0 %v6991
        %9485 = vmatmul.mubr.bf16.gmra.mrb[0].mxu0 %v6990
        %v9486 = vpop.f32.mrb[0].mxu0
        %v9487 = vadd.f32 %v7371, %v9486
        %v9488 = vpop.f32.mrb[0].mxu0
        %v9489 = vadd.f32 %v7375, %v9488
        %v9490 = vpop.f32.mrb[0].mxu0
        %v9491 = vadd.f32 %v7371, %v9490
        %v9492 = vpop.f32.mrb[0].mxu0
        %v9493 = vadd.f32 %v7375, %v9492
        %9494 = vmatprep.mubr.bf16.mxu0 %v6999
        %9495 = vmatmul.mubr.bf16.gmra.mrb[0].mxu0 %v6998
        %v9496 = vpop.f32.mrb[0].mxu0
        %v9497 = vadd.f32 %v7371, %v9496
        %v9498 = vpop.f32.mrb[0].mxu0
        %v9499 = vadd.f32 %v7375, %v9498
        %v9500 = vpop.f32.mrb[0].mxu0
        %v9501 = vadd.f32 %v7371, %v9500
        %v9502 = vpop.f32.mrb[0].mxu0
        %v9503 = vadd.f32 %v7375, %v9502
        %9504 = vmatprep.mubr.bf16.mxu0 %v7007
        %9505 = vmatmul.mubr.bf16.gmra.mrb[0].mxu0 %v7006
        %v9506 = vpop.f32.mrb[0].mxu0
        %v9507 = vadd.f32 %v7371, %v9506
        %v9508 = vpop.f32.mrb[0].mxu0
        %v9509 = vadd.f32 %v7375, %v9508
        %v9510 = vpop.f32.mrb[0].mxu0
        %v9511 = vadd.f32 %v7371, %v9510
        %v9512 = vpop.f32.mrb[0].mxu0
        %v9513 = vadd.f32 %v7375, %v9512
        %9514 = vmatprep.mubr.bf16.mxu0 %v7015
        %9515 = vmatmul.mubr.bf16.gmra.mrb[0].mxu0 %v7014
        %v9516 = vpop.f32.mrb[0].mxu0
        %v9517 = vadd.f32 %v7371, %v9516
        %v9518 = vpop.f32.mrb[0].mxu0
        %v9519 = vadd.f32 %v7375, %v9518
        %v9520 = vpop.f32.mrb[0].mxu0
        %v9521 = vadd.f32 %v7371, %v9520
        %v9522 = vpop.f32.mrb[0].mxu0
        %v9523 = vadd.f32 %v7375, %v9522
        %9524 = vmatprep.mubr.bf16.mxu0 %v7023
        %9525 = vmatmul.mubr.bf16.gmra.mrb[0].mxu0 %v7022
        %v9526 = vpop.f32.mrb[0].mxu0
        %v9527 = vadd.f32 %v7371, %v9526
        %v9528 = vpop.f32.mrb[0].mxu0
        %v9529 = vadd.f32 %v7375, %v9528
        %v9530 = vpop.f32.mrb[0].mxu0
        %v9531 = vadd.f32 %v7371, %v9530
        %v9532 = vpop.f32.mrb[0].mxu0
        %v9533 = vadd.f32 %v7375, %v9532
        %9534 = vmatprep.mubr.bf16.mxu0 %v7031
        %9535 = vmatmul.mubr.bf16.gmra.mrb[0].mxu0 %v7030
        %v9536 = vpop.f32.mrb[0].mxu0
        %v9537 = vadd.f32 %v7371, %v9536
        %v9538 = vpop.f32.mrb[0].mxu0
        %v9539 = vadd.f32 %v7375, %v9538
        %v9540 = vpop.f32.mrb[0].mxu0
        %v9541 = vadd.f32 %v7371, %v9540
        %v9542 = vpop.f32.mrb[0].mxu0
        %v9543 = vadd.f32 %v7375, %v9542
        %9544 = vmatprep.mubr.bf16.mxu0 %v7039
        %9545 = vmatmul.mubr.bf16.gmra.mrb[0].mxu0 %v7038
        %v9546 = vpop.f32.mrb[0].mxu0
        %v9547 = vadd.f32 %v7371, %v9546
        %v9548 = vpop.f32.mrb[0].mxu0
        %v9549 = vadd.f32 %v7375, %v9548
        %v9550 = vpop.f32.mrb[0].mxu0
        %v9551 = vadd.f32 %v7371, %v9550
        %v9552 = vpop.f32.mrb[0].mxu0
        %v9553 = vadd.f32 %v7375, %v9552
        %9554 = vmatprep.mubr.bf16.mxu0 %v7047
        %9555 = vmatmul.mubr.bf16.gmra.mrb[0].mxu0 %v7046
        %v9556 = vpop.f32.mrb[0].mxu0
        %v9557 = vadd.f32 %v7371, %v9556
        %v9558 = vpop.f32.mrb[0].mxu0
        %v9559 = vadd.f32 %v7375, %v9558
        %v9560 = vpop.f32.mrb[0].mxu0
        %v9561 = vadd.f32 %v7371, %v9560
        %v9562 = vpop.f32.mrb[0].mxu0
        %v9563 = vadd.f32 %v7375, %v9562
        %9564 = vmatprep.mubr.bf16.mxu0 %v7055
        %9565 = vmatmul.mubr.bf16.gmra.mrb[0].mxu0 %v7054
        %v9566 = vpop.f32.mrb[0].mxu0
        %v9567 = vadd.f32 %v7371, %v9566
        %v9568 = vpop.f32.mrb[0].mxu0
        %v9569 = vadd.f32 %v7375, %v9568
        %v9570 = vpop.f32.mrb[0].mxu0
        %v9571 = vadd.f32 %v7371, %v9570
        %v9572 = vpop.f32.mrb[0].mxu0
        %v9573 = vadd.f32 %v7375, %v9572
        %9574 = vmatprep.mubr.bf16.mxu0 %v7063
        %9575 = vmatmul.mubr.bf16.gmra.mrb[0].mxu0 %v7062
        %v9576 = vpop.f32.mrb[0].mxu0
        %v9577 = vadd.f32 %v7371, %v9576
        %v9578 = vpop.f32.mrb[0].mxu0
        %v9579 = vadd.f32 %v7375, %v9578
        %v9580 = vpop.f32.mrb[0].mxu0
        %v9581 = vadd.f32 %v7371, %v9580
        %v9582 = vpop.f32.mrb[0].mxu0
        %v9583 = vadd.f32 %v7375, %v9582
        %9584 = vmatprep.mubr.bf16.mxu0 %v7071
        %9585 = vmatmul.mubr.bf16.gmra.mrb[0].mxu0 %v7070
        %v9586 = vpop.f32.mrb[0].mxu0
        %v9587 = vadd.f32 %v7371, %v9586
        %v9588 = vpop.f32.mrb[0].mxu0
        %v9589 = vadd.f32 %v7375, %v9588
        %v9590 = vpop.f32.mrb[0].mxu0
        %v9591 = vadd.f32 %v7371, %v9590
        %v9592 = vpop.f32.mrb[0].mxu0
        %v9593 = vadd.f32 %v7375, %v9592
        %9594 = vmatprep.mubr.bf16.mxu0 %v7079
        %9595 = vmatmul.mubr.bf16.gmra.mrb[0].mxu0 %v7078
        %v9596 = vpop.f32.mrb[0].mxu0
        %v9597 = vadd.f32 %v7371, %v9596
        %v9598 = vpop.f32.mrb[0].mxu0
        %v9599 = vadd.f32 %v7375, %v9598
        %v9600 = vpop.f32.mrb[0].mxu0
        %v9601 = vadd.f32 %v7371, %v9600
        %v9602 = vpop.f32.mrb[0].mxu0
        %v9603 = vadd.f32 %v7375, %v9602
        %9604 = vmatprep.mubr.bf16.mxu0 %v7087
        %9605 = vmatmul.mubr.bf16.gmra.mrb[0].mxu0 %v7086
        %v9606 = vpop.f32.mrb[0].mxu0
        %v9607 = vadd.f32 %v7371, %v9606
        %v9608 = vpop.f32.mrb[0].mxu0
        %v9609 = vadd.f32 %v7375, %v9608
        %v9610 = vpop.f32.mrb[0].mxu0
        %v9611 = vadd.f32 %v7371, %v9610
        %v9612 = vpop.f32.mrb[0].mxu0
        %v9613 = vadd.f32 %v7375, %v9612
        %9614 = vmatprep.mubr.bf16.mxu0 %v7095
        %9615 = vmatmul.mubr.bf16.gmra.mrb[0].mxu0 %v7094
        %v9616 = vpop.f32.mrb[0].mxu0
        %v9617 = vadd.f32 %v7371, %v9616
        %v9618 = vpop.f32.mrb[0].mxu0
        %v9619 = vadd.f32 %v7375, %v9618
        %v9620 = vpop.f32.mrb[0].mxu0
        %v9621 = vadd.f32 %v7371, %v9620
        %v9622 = vpop.f32.mrb[0].mxu0
        %v9623 = vadd.f32 %v7375, %v9622
        %9624 = vdwg.mxu0
        %9625 = vmatprep.subr.bf16.mxu0 %v8215
        %9626 = vmatpush1.bf16.msra.mxu0 %v8214
        %9627 = vmatprep.subr.bf16.mxu0 %v8219
        %9628 = vmatpush1.bf16.msra.mxu0 %v8218
        %9629 = vmatprep.subr.bf16.mxu0 %v8223
        %9630 = vmatpush1.bf16.msra.mxu0 %v8222
        %9631 = vmatprep.subr.bf16.mxu0 %v8227
        %9632 = vmatpush1.bf16.msra.mxu0 %v8226
        %9633 = vmatprep.subr.bf16.mxu0 %v8231
        %9634 = vmatpush1.bf16.msra.mxu0 %v8230
        %9635 = vmatprep.subr.bf16.mxu0 %v8235
        %9636 = vmatpush1.bf16.msra.mxu0 %v8234
        %9637 = vmatprep.subr.bf16.mxu0 %v8239
        %9638 = vmatpush1.bf16.msra.mxu0 %v8238
        %9639 = vmatprep.subr.bf16.mxu0 %v8243
        %9640 = vmatpush1.bf16.msra.mxu0 %v8242
        %9641 = vmatprep.subr.bf16.mxu0 %v8247
        %9642 = vmatpush1.bf16.msra.mxu0 %v8246
        %9643 = vmatprep.subr.bf16.mxu0 %v8251
        %9644 = vmatpush1.bf16.msra.mxu0 %v8250
        %9645 = vmatprep.subr.bf16.mxu0 %v8255
        %9646 = vmatpush1.bf16.msra.mxu0 %v8254
        %9647 = vmatprep.subr.bf16.mxu0 %v8259
        %9648 = vmatpush1.bf16.msra.mxu0 %v8258
        %9649 = vmatprep.subr.bf16.mxu0 %v8263
        %9650 = vmatpush1.bf16.msra.mxu0 %v8262
        %9651 = vmatprep.subr.bf16.mxu0 %v8267
        %9652 = vmatpush1.bf16.msra.mxu0 %v8266
        %9653 = vmatprep.subr.bf16.mxu0 %v8271
        %9654 = vmatpush1.bf16.msra.mxu0 %v8270
        %9655 = vmatprep.subr.bf16.mxu0 %v8275
        %9656 = vmatpush1.bf16.msra.mxu0 %v8274
        %9657 = vmatprep.mubr.bf16.mxu0 %v6977
        %9658 = vmatmul.mubr.bf16.gmra.mrb[0].mxu0 %v6976
        %v9659 = vpop.f32.mrb[0].mxu0
        %v9660 = vadd.f32 %v9467, %v9659
        %v9661 = vpop.f32.mrb[0].mxu0
        %v9662 = vadd.f32 %v9469, %v9661
        %v9663 = vpop.f32.mrb[0].mxu0
        %v9664 = vadd.f32 %v9471, %v9663
        %v9665 = vpop.f32.mrb[0].mxu0
        %v9666 = vadd.f32 %v9473, %v9665
        %9667 = vmatprep.mubr.bf16.mxu0 %v6985
        %9668 = vmatmul.mubr.bf16.gmra.mrb[0].mxu0 %v6984
        %v9669 = vpop.f32.mrb[0].mxu0
        %v9670 = vadd.f32 %v9477, %v9669
        %v9671 = vpop.f32.mrb[0].mxu0
        %v9672 = vadd.f32 %v9479, %v9671
        %v9673 = vpop.f32.mrb[0].mxu0
        %v9674 = vadd.f32 %v9481, %v9673
        %v9675 = vpop.f32.mrb[0].mxu0
        %v9676 = vadd.f32 %v9483, %v9675
        %9677 = vmatprep.mubr.bf16.mxu0 %v6993
        %9678 = vmatmul.mubr.bf16.gmra.mrb[0].mxu0 %v6992
        %v9679 = vpop.f32.mrb[0].mxu0
        %v9680 = vadd.f32 %v9487, %v9679
        %v9681 = vpop.f32.mrb[0].mxu0
        %v9682 = vadd.f32 %v9489, %v9681
        %v9683 = vpop.f32.mrb[0].mxu0
        %v9684 = vadd.f32 %v9491, %v9683
        %v9685 = vpop.f32.mrb[0].mxu0
        %v9686 = vadd.f32 %v9493, %v9685
        %9687 = vmatprep.mubr.bf16.mxu0 %v7001
        %9688 = vmatmul.mubr.bf16.gmra.mrb[0].mxu0 %v7000
        %v9689 = vpop.f32.mrb[0].mxu0
        %v9690 = vadd.f32 %v9497, %v9689
        %v9691 = vpop.f32.mrb[0].mxu0
        %v9692 = vadd.f32 %v9499, %v9691
        %v9693 = vpop.f32.mrb[0].mxu0
        %v9694 = vadd.f32 %v9501, %v9693
        %v9695 = vpop.f32.mrb[0].mxu0
        %v9696 = vadd.f32 %v9503, %v9695
        %9697 = vmatprep.mubr.bf16.mxu0 %v7009
        %9698 = vmatmul.mubr.bf16.gmra.mrb[0].mxu0 %v7008
        %v9699 = vpop.f32.mrb[0].mxu0
        %v9700 = vadd.f32 %v9507, %v9699
        %v9701 = vpop.f32.mrb[0].mxu0
        %v9702 = vadd.f32 %v9509, %v9701
        %v9703 = vpop.f32.mrb[0].mxu0
        %v9704 = vadd.f32 %v9511, %v9703
        %v9705 = vpop.f32.mrb[0].mxu0
        %v9706 = vadd.f32 %v9513, %v9705
        %9707 = vmatprep.mubr.bf16.mxu0 %v7017
        %9708 = vmatmul.mubr.bf16.gmra.mrb[0].mxu0 %v7016
        %v9709 = vpop.f32.mrb[0].mxu0
        %v9710 = vadd.f32 %v9517, %v9709
        %v9711 = vpop.f32.mrb[0].mxu0
        %v9712 = vadd.f32 %v9519, %v9711
        %v9713 = vpop.f32.mrb[0].mxu0
        %v9714 = vadd.f32 %v9521, %v9713
        %v9715 = vpop.f32.mrb[0].mxu0
        %v9716 = vadd.f32 %v9523, %v9715
        %9717 = vmatprep.mubr.bf16.mxu0 %v7025
        %9718 = vmatmul.mubr.bf16.gmra.mrb[0].mxu0 %v7024
        %v9719 = vpop.f32.mrb[0].mxu0
        %v9720 = vadd.f32 %v9527, %v9719
        %v9721 = vpop.f32.mrb[0].mxu0
        %v9722 = vadd.f32 %v9529, %v9721
        %v9723 = vpop.f32.mrb[0].mxu0
        %v9724 = vadd.f32 %v9531, %v9723
        %v9725 = vpop.f32.mrb[0].mxu0
        %v9726 = vadd.f32 %v9533, %v9725
        %9727 = vmatprep.mubr.bf16.mxu0 %v7033
        %9728 = vmatmul.mubr.bf16.gmra.mrb[0].mxu0 %v7032
        %v9729 = vpop.f32.mrb[0].mxu0
        %v9730 = vadd.f32 %v9537, %v9729
        %v9731 = vpop.f32.mrb[0].mxu0
        %v9732 = vadd.f32 %v9539, %v9731
        %v9733 = vpop.f32.mrb[0].mxu0
        %v9734 = vadd.f32 %v9541, %v9733
        %v9735 = vpop.f32.mrb[0].mxu0
        %v9736 = vadd.f32 %v9543, %v9735
        %9737 = vmatprep.mubr.bf16.mxu0 %v7041
        %9738 = vmatmul.mubr.bf16.gmra.mrb[0].mxu0 %v7040
        %v9739 = vpop.f32.mrb[0].mxu0
        %v9740 = vadd.f32 %v9547, %v9739
        %v9741 = vpop.f32.mrb[0].mxu0
        %v9742 = vadd.f32 %v9549, %v9741
        %v9743 = vpop.f32.mrb[0].mxu0
        %v9744 = vadd.f32 %v9551, %v9743
        %v9745 = vpop.f32.mrb[0].mxu0
        %v9746 = vadd.f32 %v9553, %v9745
        %9747 = vmatprep.mubr.bf16.mxu0 %v7049
        %9748 = vmatmul.mubr.bf16.gmra.mrb[0].mxu0 %v7048
        %v9749 = vpop.f32.mrb[0].mxu0
        %v9750 = vadd.f32 %v9557, %v9749
        %v9751 = vpop.f32.mrb[0].mxu0
        %v9752 = vadd.f32 %v9559, %v9751
        %v9753 = vpop.f32.mrb[0].mxu0
        %v9754 = vadd.f32 %v9561, %v9753
        %v9755 = vpop.f32.mrb[0].mxu0
        %v9756 = vadd.f32 %v9563, %v9755
        %9757 = vmatprep.mubr.bf16.mxu0 %v7057
        %9758 = vmatmul.mubr.bf16.gmra.mrb[0].mxu0 %v7056
        %v9759 = vpop.f32.mrb[0].mxu0
        %v9760 = vadd.f32 %v9567, %v9759
        %v9761 = vpop.f32.mrb[0].mxu0
        %v9762 = vadd.f32 %v9569, %v9761
        %v9763 = vpop.f32.mrb[0].mxu0
        %v9764 = vadd.f32 %v9571, %v9763
        %v9765 = vpop.f32.mrb[0].mxu0
        %v9766 = vadd.f32 %v9573, %v9765
        %9767 = vmatprep.mubr.bf16.mxu0 %v7065
        %9768 = vmatmul.mubr.bf16.gmra.mrb[0].mxu0 %v7064
        %v9769 = vpop.f32.mrb[0].mxu0
        %v9770 = vadd.f32 %v9577, %v9769
        %v9771 = vpop.f32.mrb[0].mxu0
        %v9772 = vadd.f32 %v9579, %v9771
        %v9773 = vpop.f32.mrb[0].mxu0
        %v9774 = vadd.f32 %v9581, %v9773
        %v9775 = vpop.f32.mrb[0].mxu0
        %v9776 = vadd.f32 %v9583, %v9775
        %9777 = vmatprep.mubr.bf16.mxu0 %v7073
        %9778 = vmatmul.mubr.bf16.gmra.mrb[0].mxu0 %v7072
        %v9779 = vpop.f32.mrb[0].mxu0
        %v9780 = vadd.f32 %v9587, %v9779
        %v9781 = vpop.f32.mrb[0].mxu0
        %v9782 = vadd.f32 %v9589, %v9781
        %v9783 = vpop.f32.mrb[0].mxu0
        %v9784 = vadd.f32 %v9591, %v9783
        %v9785 = vpop.f32.mrb[0].mxu0
        %v9786 = vadd.f32 %v9593, %v9785
        %9787 = vmatprep.mubr.bf16.mxu0 %v7081
        %9788 = vmatmul.mubr.bf16.gmra.mrb[0].mxu0 %v7080
        %v9789 = vpop.f32.mrb[0].mxu0
        %v9790 = vadd.f32 %v9597, %v9789
        %v9791 = vpop.f32.mrb[0].mxu0
        %v9792 = vadd.f32 %v9599, %v9791
        %v9793 = vpop.f32.mrb[0].mxu0
        %v9794 = vadd.f32 %v9601, %v9793
        %v9795 = vpop.f32.mrb[0].mxu0
        %v9796 = vadd.f32 %v9603, %v9795
        %9797 = vmatprep.mubr.bf16.mxu0 %v7089
        %9798 = vmatmul.mubr.bf16.gmra.mrb[0].mxu0 %v7088
        %v9799 = vpop.f32.mrb[0].mxu0
        %v9800 = vadd.f32 %v9607, %v9799
        %v9801 = vpop.f32.mrb[0].mxu0
        %v9802 = vadd.f32 %v9609, %v9801
        %v9803 = vpop.f32.mrb[0].mxu0
        %v9804 = vadd.f32 %v9611, %v9803
        %v9805 = vpop.f32.mrb[0].mxu0
        %v9806 = vadd.f32 %v9613, %v9805
        %9807 = vmatprep.mubr.bf16.mxu0 %v7097
        %9808 = vmatmul.mubr.bf16.gmra.mrb[0].mxu0 %v7096
        %v9809 = vpop.f32.mrb[0].mxu0
        %v9810 = vadd.f32 %v9617, %v9809
        %v9811 = vpop.f32.mrb[0].mxu0
        %v9812 = vadd.f32 %v9619, %v9811
        %v9813 = vpop.f32.mrb[0].mxu0
        %v9814 = vadd.f32 %v9621, %v9813
        %v9815 = vpop.f32.mrb[0].mxu0
        %v9816 = vadd.f32 %v9623, %v9815
        %9817 = vdwg.mxu0
        %9818 = vmatprep.subr.bf16.mxu0 %v8279
        %9819 = vmatpush1.bf16.msra.mxu0 %v8278
        %9820 = vmatprep.subr.bf16.mxu0 %v8283
        %9821 = vmatpush1.bf16.msra.mxu0 %v8282
        %9822 = vmatprep.subr.bf16.mxu0 %v8287
        %9823 = vmatpush1.bf16.msra.mxu0 %v8286
        %9824 = vmatprep.subr.bf16.mxu0 %v8291
        %9825 = vmatpush1.bf16.msra.mxu0 %v8290
        %9826 = vmatprep.subr.bf16.mxu0 %v8295
        %9827 = vmatpush1.bf16.msra.mxu0 %v8294
        %9828 = vmatprep.subr.bf16.mxu0 %v8299
        %9829 = vmatpush1.bf16.msra.mxu0 %v8298
        %9830 = vmatprep.subr.bf16.mxu0 %v8303
        %9831 = vmatpush1.bf16.msra.mxu0 %v8302
        %9832 = vmatprep.subr.bf16.mxu0 %v8307
        %9833 = vmatpush1.bf16.msra.mxu0 %v8306
        %9834 = vmatprep.subr.bf16.mxu0 %v8311
        %9835 = vmatpush1.bf16.msra.mxu0 %v8310
        %9836 = vmatprep.subr.bf16.mxu0 %v8315
        %9837 = vmatpush1.bf16.msra.mxu0 %v8314
        %9838 = vmatprep.subr.bf16.mxu0 %v8319
        %9839 = vmatpush1.bf16.msra.mxu0 %v8318
        %9840 = vmatprep.subr.bf16.mxu0 %v8323
        %9841 = vmatpush1.bf16.msra.mxu0 %v8322
        %9842 = vmatprep.subr.bf16.mxu0 %v8327
        %9843 = vmatpush1.bf16.msra.mxu0 %v8326
        %9844 = vmatprep.subr.bf16.mxu0 %v8331
        %9845 = vmatpush1.bf16.msra.mxu0 %v8330
        %9846 = vmatprep.subr.bf16.mxu0 %v8335
        %9847 = vmatpush1.bf16.msra.mxu0 %v8334
        %9848 = vmatprep.subr.bf16.mxu0 %v8339
        %9849 = vmatpush1.bf16.msra.mxu0 %v8338
        %9850 = vmatprep.mubr.bf16.mxu0 %v6979
        %9851 = vmatmul.mubr.bf16.gmra.mrb[0].mxu0 %v6978
        %v9852 = vpop.f32.mrb[0].mxu0
        %v9853 = vadd.f32 %v9660, %v9852
        %v9854 = vpop.f32.mrb[0].mxu0
        %v9855 = vadd.f32 %v9662, %v9854
        %v9856 = vpop.f32.mrb[0].mxu0
        %v9857 = vadd.f32 %v9664, %v9856
        %v9858 = vpop.f32.mrb[0].mxu0
        %v9859 = vadd.f32 %v9666, %v9858
        %9860 = vmatprep.mubr.bf16.mxu0 %v6987
        %9861 = vmatmul.mubr.bf16.gmra.mrb[0].mxu0 %v6986
        %v9862 = vpop.f32.mrb[0].mxu0
        %v9863 = vadd.f32 %v9670, %v9862
        %v9864 = vpop.f32.mrb[0].mxu0
        %v9865 = vadd.f32 %v9672, %v9864
        %v9866 = vpop.f32.mrb[0].mxu0
        %v9867 = vadd.f32 %v9674, %v9866
        %v9868 = vpop.f32.mrb[0].mxu0
        %v9869 = vadd.f32 %v9676, %v9868
        %9870 = vmatprep.mubr.bf16.mxu0 %v6995
        %9871 = vmatmul.mubr.bf16.gmra.mrb[0].mxu0 %v6994
        %v9872 = vpop.f32.mrb[0].mxu0
        %v9873 = vadd.f32 %v9680, %v9872
        %v9874 = vpop.f32.mrb[0].mxu0
        %v9875 = vadd.f32 %v9682, %v9874
        %v9876 = vpop.f32.mrb[0].mxu0
        %v9877 = vadd.f32 %v9684, %v9876
        %v9878 = vpop.f32.mrb[0].mxu0
        %v9879 = vadd.f32 %v9686, %v9878
        %9880 = vmatprep.mubr.bf16.mxu0 %v7003
        %9881 = vmatmul.mubr.bf16.gmra.mrb[0].mxu0 %v7002
        %v9882 = vpop.f32.mrb[0].mxu0
        %v9883 = vadd.f32 %v9690, %v9882
        %v9884 = vpop.f32.mrb[0].mxu0
        %v9885 = vadd.f32 %v9692, %v9884
        %v9886 = vpop.f32.mrb[0].mxu0
        %v9887 = vadd.f32 %v9694, %v9886
        %v9888 = vpop.f32.mrb[0].mxu0
        %v9889 = vadd.f32 %v9696, %v9888
        %9890 = vmatprep.mubr.bf16.mxu0 %v7011
        %9891 = vmatmul.mubr.bf16.gmra.mrb[0].mxu0 %v7010
        %v9892 = vpop.f32.mrb[0].mxu0
        %v9893 = vadd.f32 %v9700, %v9892
        %v9894 = vpop.f32.mrb[0].mxu0
        %v9895 = vadd.f32 %v9702, %v9894
        %v9896 = vpop.f32.mrb[0].mxu0
        %v9897 = vadd.f32 %v9704, %v9896
        %v9898 = vpop.f32.mrb[0].mxu0
        %v9899 = vadd.f32 %v9706, %v9898
        %9900 = vmatprep.mubr.bf16.mxu0 %v7019
        %9901 = vmatmul.mubr.bf16.gmra.mrb[0].mxu0 %v7018
        %v9902 = vpop.f32.mrb[0].mxu0
        %v9903 = vadd.f32 %v9710, %v9902
        %v9904 = vpop.f32.mrb[0].mxu0
        %v9905 = vadd.f32 %v9712, %v9904
        %v9906 = vpop.f32.mrb[0].mxu0
        %v9907 = vadd.f32 %v9714, %v9906
        %v9908 = vpop.f32.mrb[0].mxu0
        %v9909 = vadd.f32 %v9716, %v9908
        %9910 = vmatprep.mubr.bf16.mxu0 %v7027
        %9911 = vmatmul.mubr.bf16.gmra.mrb[0].mxu0 %v7026
        %v9912 = vpop.f32.mrb[0].mxu0
        %v9913 = vadd.f32 %v9720, %v9912
        %v9914 = vpop.f32.mrb[0].mxu0
        %v9915 = vadd.f32 %v9722, %v9914
        %v9916 = vpop.f32.mrb[0].mxu0
        %v9917 = vadd.f32 %v9724, %v9916
        %v9918 = vpop.f32.mrb[0].mxu0
        %v9919 = vadd.f32 %v9726, %v9918
        %9920 = vmatprep.mubr.bf16.mxu0 %v7035
        %9921 = vmatmul.mubr.bf16.gmra.mrb[0].mxu0 %v7034
        %v9922 = vpop.f32.mrb[0].mxu0
        %v9923 = vadd.f32 %v9730, %v9922
        %v9924 = vpop.f32.mrb[0].mxu0
        %v9925 = vadd.f32 %v9732, %v9924
        %v9926 = vpop.f32.mrb[0].mxu0
        %v9927 = vadd.f32 %v9734, %v9926
        %v9928 = vpop.f32.mrb[0].mxu0
        %v9929 = vadd.f32 %v9736, %v9928
        %9930 = vmatprep.mubr.bf16.mxu0 %v7043
        %9931 = vmatmul.mubr.bf16.gmra.mrb[0].mxu0 %v7042
        %v9932 = vpop.f32.mrb[0].mxu0
        %v9933 = vadd.f32 %v9740, %v9932
        %v9934 = vpop.f32.mrb[0].mxu0
        %v9935 = vadd.f32 %v9742, %v9934
        %v9936 = vpop.f32.mrb[0].mxu0
        %v9937 = vadd.f32 %v9744, %v9936
        %v9938 = vpop.f32.mrb[0].mxu0
        %v9939 = vadd.f32 %v9746, %v9938
        %9940 = vmatprep.mubr.bf16.mxu0 %v7051
        %9941 = vmatmul.mubr.bf16.gmra.mrb[0].mxu0 %v7050
        %v9942 = vpop.f32.mrb[0].mxu0
        %v9943 = vadd.f32 %v9750, %v9942
        %v9944 = vpop.f32.mrb[0].mxu0
        %v9945 = vadd.f32 %v9752, %v9944
        %v9946 = vpop.f32.mrb[0].mxu0
        %v9947 = vadd.f32 %v9754, %v9946
        %v9948 = vpop.f32.mrb[0].mxu0
        %v9949 = vadd.f32 %v9756, %v9948
        %9950 = vmatprep.mubr.bf16.mxu0 %v7059
        %9951 = vmatmul.mubr.bf16.gmra.mrb[0].mxu0 %v7058
        %v9952 = vpop.f32.mrb[0].mxu0
        %v9953 = vadd.f32 %v9760, %v9952
        %v9954 = vpop.f32.mrb[0].mxu0
        %v9955 = vadd.f32 %v9762, %v9954
        %v9956 = vpop.f32.mrb[0].mxu0
        %v9957 = vadd.f32 %v9764, %v9956
        %v9958 = vpop.f32.mrb[0].mxu0
        %v9959 = vadd.f32 %v9766, %v9958
        %9960 = vmatprep.mubr.bf16.mxu0 %v7067
        %9961 = vmatmul.mubr.bf16.gmra.mrb[0].mxu0 %v7066
        %v9962 = vpop.f32.mrb[0].mxu0
        %v9963 = vadd.f32 %v9770, %v9962
        %v9964 = vpop.f32.mrb[0].mxu0
        %v9965 = vadd.f32 %v9772, %v9964
        %v9966 = vpop.f32.mrb[0].mxu0
        %v9967 = vadd.f32 %v9774, %v9966
        %v9968 = vpop.f32.mrb[0].mxu0
        %v9969 = vadd.f32 %v9776, %v9968
        %9970 = vmatprep.mubr.bf16.mxu0 %v7075
        %9971 = vmatmul.mubr.bf16.gmra.mrb[0].mxu0 %v7074
        %v9972 = vpop.f32.mrb[0].mxu0
        %v9973 = vadd.f32 %v9780, %v9972
        %v9974 = vpop.f32.mrb[0].mxu0
        %v9975 = vadd.f32 %v9782, %v9974
        %v9976 = vpop.f32.mrb[0].mxu0
        %v9977 = vadd.f32 %v9784, %v9976
        %v9978 = vpop.f32.mrb[0].mxu0
        %v9979 = vadd.f32 %v9786, %v9978
        %9980 = vmatprep.mubr.bf16.mxu0 %v7083
        %9981 = vmatmul.mubr.bf16.gmra.mrb[0].mxu0 %v7082
        %v9982 = vpop.f32.mrb[0].mxu0
        %v9983 = vadd.f32 %v9790, %v9982
        %v9984 = vpop.f32.mrb[0].mxu0
        %v9985 = vadd.f32 %v9792, %v9984
        %v9986 = vpop.f32.mrb[0].mxu0
        %v9987 = vadd.f32 %v9794, %v9986
        %v9988 = vpop.f32.mrb[0].mxu0
        %v9989 = vadd.f32 %v9796, %v9988
        %9990 = vmatprep.mubr.bf16.mxu0 %v7091
        %9991 = vmatmul.mubr.bf16.gmra.mrb[0].mxu0 %v7090
        %v9992 = vpop.f32.mrb[0].mxu0
        %v9993 = vadd.f32 %v9800, %v9992
        %v9994 = vpop.f32.mrb[0].mxu0
        %v9995 = vadd.f32 %v9802, %v9994
        %v9996 = vpop.f32.mrb[0].mxu0
        %v9997 = vadd.f32 %v9804, %v9996
        %v9998 = vpop.f32.mrb[0].mxu0
        %v9999 = vadd.f32 %v9806, %v9998
        %10000 = vmatprep.mubr.bf16.mxu0 %v7099
        %10001 = vmatmul.mubr.bf16.gmra.mrb[0].mxu0 %v7098
        %v10002 = vpop.f32.mrb[0].mxu0
        %v10003 = vadd.f32 %v9810, %v10002
        %v10004 = vpop.f32.mrb[0].mxu0
        %v10005 = vadd.f32 %v9812, %v10004
        %v10006 = vpop.f32.mrb[0].mxu0
        %v10007 = vadd.f32 %v9814, %v10006
        %v10008 = vpop.f32.mrb[0].mxu0
        %v10009 = vadd.f32 %v9816, %v10008
        %10010 = vdwg.mxu0
        %10011 = vmatprep.subr.bf16.mxu0 %v8343
        %10012 = vmatpush1.bf16.msra.mxu0 %v8342
        %10013 = vmatprep.subr.bf16.mxu0 %v8347
        %10014 = vmatpush1.bf16.msra.mxu0 %v8346
        %10015 = vmatprep.subr.bf16.mxu0 %v8351
        %10016 = vmatpush1.bf16.msra.mxu0 %v8350
        %10017 = vmatprep.subr.bf16.mxu0 %v8355
        %10018 = vmatpush1.bf16.msra.mxu0 %v8354
        %10019 = vmatprep.subr.bf16.mxu0 %v8359
        %10020 = vmatpush1.bf16.msra.mxu0 %v8358
        %10021 = vmatprep.subr.bf16.mxu0 %v8363
        %10022 = vmatpush1.bf16.msra.mxu0 %v8362
        %10023 = vmatprep.subr.bf16.mxu0 %v8367
        %10024 = vmatpush1.bf16.msra.mxu0 %v8366
        %10025 = vmatprep.subr.bf16.mxu0 %v8371
        %10026 = vmatpush1.bf16.msra.mxu0 %v8370
        %10027 = vmatprep.subr.bf16.mxu0 %v8375
        %10028 = vmatpush1.bf16.msra.mxu0 %v8374
        %10029 = vmatprep.subr.bf16.mxu0 %v8379
        %10030 = vmatpush1.bf16.msra.mxu0 %v8378
        %10031 = vmatprep.subr.bf16.mxu0 %v8383
        %10032 = vmatpush1.bf16.msra.mxu0 %v8382
        %10033 = vmatprep.subr.bf16.mxu0 %v8387
        %10034 = vmatpush1.bf16.msra.mxu0 %v8386
        %10035 = vmatprep.subr.bf16.mxu0 %v8391
        %10036 = vmatpush1.bf16.msra.mxu0 %v8390
        %10037 = vmatprep.subr.bf16.mxu0 %v8395
        %10038 = vmatpush1.bf16.msra.mxu0 %v8394
        %10039 = vmatprep.subr.bf16.mxu0 %v8399
        %10040 = vmatpush1.bf16.msra.mxu0 %v8398
        %10041 = vmatprep.subr.bf16.mxu0 %v8403
        %10042 = vmatpush1.bf16.msra.mxu0 %v8402
        %10043 = vmatprep.mubr.bf16.mxu0 %v6981
        %10044 = vmatmul.mubr.bf16.gmra.mrb[0].mxu0 %v6980
        %v10045 = vpop.f32.mrb[0].mxu0
        %v10046 = vadd.f32 %v9853, %v10045
        %v10047 = vpop.f32.mrb[0].mxu0
        %v10048 = vadd.f32 %v9855, %v10047
        %v10049 = vpop.f32.mrb[0].mxu0
        %v10050 = vadd.f32 %v9857, %v10049
        %v10051 = vpop.f32.mrb[0].mxu0
        %v10052 = vadd.f32 %v9859, %v10051
        %10053 = vmatprep.mubr.bf16.mxu0 %v6989
        %10054 = vmatmul.mubr.bf16.gmra.mrb[0].mxu0 %v6988
        %v10055 = vpop.f32.mrb[0].mxu0
        %v10056 = vadd.f32 %v9863, %v10055
        %v10057 = vpop.f32.mrb[0].mxu0
        %v10058 = vadd.f32 %v9865, %v10057
        %v10059 = vpop.f32.mrb[0].mxu0
        %v10060 = vadd.f32 %v9867, %v10059
        %v10061 = vpop.f32.mrb[0].mxu0
        %v10062 = vadd.f32 %v9869, %v10061
        %10063 = vmatprep.mubr.bf16.mxu0 %v6997
        %10064 = vmatmul.mubr.bf16.gmra.mrb[0].mxu0 %v6996
        %v10065 = vpop.f32.mrb[0].mxu0
        %v10066 = vadd.f32 %v9873, %v10065
        %v10067 = vpop.f32.mrb[0].mxu0
        %v10068 = vadd.f32 %v9875, %v10067
        %v10069 = vpop.f32.mrb[0].mxu0
        %v10070 = vadd.f32 %v9877, %v10069
        %v10071 = vpop.f32.mrb[0].mxu0
        %v10072 = vadd.f32 %v9879, %v10071
        %10073 = vmatprep.mubr.bf16.mxu0 %v7005
        %10074 = vmatmul.mubr.bf16.gmra.mrb[0].mxu0 %v7004
        %v10075 = vpop.f32.mrb[0].mxu0
        %v10076 = vadd.f32 %v9883, %v10075
        %v10077 = vpop.f32.mrb[0].mxu0
        %v10078 = vadd.f32 %v9885, %v10077
        %v10079 = vpop.f32.mrb[0].mxu0
        %v10080 = vadd.f32 %v9887, %v10079
        %v10081 = vpop.f32.mrb[0].mxu0
        %v10082 = vadd.f32 %v9889, %v10081
        %10083 = vmatprep.mubr.bf16.mxu0 %v7013
        %10084 = vmatmul.mubr.bf16.gmra.mrb[0].mxu0 %v7012
        %v10085 = vpop.f32.mrb[0].mxu0
        %v10086 = vadd.f32 %v9893, %v10085
        %v10087 = vpop.f32.mrb[0].mxu0
        %v10088 = vadd.f32 %v9895, %v10087
        %v10089 = vpop.f32.mrb[0].mxu0
        %v10090 = vadd.f32 %v9897, %v10089
        %v10091 = vpop.f32.mrb[0].mxu0
        %v10092 = vadd.f32 %v9899, %v10091
        %10093 = vmatprep.mubr.bf16.mxu0 %v7021
        %10094 = vmatmul.mubr.bf16.gmra.mrb[0].mxu0 %v7020
        %v10095 = vpop.f32.mrb[0].mxu0
        %v10096 = vadd.f32 %v9903, %v10095
        %v10097 = vpop.f32.mrb[0].mxu0
        %v10098 = vadd.f32 %v9905, %v10097
        %v10099 = vpop.f32.mrb[0].mxu0
        %v10100 = vadd.f32 %v9907, %v10099
        %v10101 = vpop.f32.mrb[0].mxu0
        %v10102 = vadd.f32 %v9909, %v10101
        %10103 = vmatprep.mubr.bf16.mxu0 %v7029
        %10104 = vmatmul.mubr.bf16.gmra.mrb[0].mxu0 %v7028
        %v10105 = vpop.f32.mrb[0].mxu0
        %v10106 = vadd.f32 %v9913, %v10105
        %v10107 = vpop.f32.mrb[0].mxu0
        %v10108 = vadd.f32 %v9915, %v10107
        %v10109 = vpop.f32.mrb[0].mxu0
        %v10110 = vadd.f32 %v9917, %v10109
        %v10111 = vpop.f32.mrb[0].mxu0
        %v10112 = vadd.f32 %v9919, %v10111
        %10113 = vmatprep.mubr.bf16.mxu0 %v7037
        %10114 = vmatmul.mubr.bf16.gmra.mrb[0].mxu0 %v7036
        %v10115 = vpop.f32.mrb[0].mxu0
        %v10116 = vadd.f32 %v9923, %v10115
        %v10117 = vpop.f32.mrb[0].mxu0
        %v10118 = vadd.f32 %v9925, %v10117
        %v10119 = vpop.f32.mrb[0].mxu0
        %v10120 = vadd.f32 %v9927, %v10119
        %v10121 = vpop.f32.mrb[0].mxu0
        %v10122 = vadd.f32 %v9929, %v10121
        %10123 = vmatprep.mubr.bf16.mxu0 %v7045
        %10124 = vmatmul.mubr.bf16.gmra.mrb[0].mxu0 %v7044
        %v10125 = vpop.f32.mrb[0].mxu0
        %v10126 = vadd.f32 %v9933, %v10125
        %v10127 = vpop.f32.mrb[0].mxu0
        %v10128 = vadd.f32 %v9935, %v10127
        %v10129 = vpop.f32.mrb[0].mxu0
        %v10130 = vadd.f32 %v9937, %v10129
        %v10131 = vpop.f32.mrb[0].mxu0
        %v10132 = vadd.f32 %v9939, %v10131
        %10133 = vmatprep.mubr.bf16.mxu0 %v7053
        %10134 = vmatmul.mubr.bf16.gmra.mrb[0].mxu0 %v7052
        %v10135 = vpop.f32.mrb[0].mxu0
        %v10136 = vadd.f32 %v9943, %v10135
        %v10137 = vpop.f32.mrb[0].mxu0
        %v10138 = vadd.f32 %v9945, %v10137
        %v10139 = vpop.f32.mrb[0].mxu0
        %v10140 = vadd.f32 %v9947, %v10139
        %v10141 = vpop.f32.mrb[0].mxu0
        %v10142 = vadd.f32 %v9949, %v10141
        %10143 = vmatprep.mubr.bf16.mxu0 %v7061
        %10144 = vmatmul.mubr.bf16.gmra.mrb[0].mxu0 %v7060
        %v10145 = vpop.f32.mrb[0].mxu0
        %v10146 = vadd.f32 %v9953, %v10145
        %v10147 = vpop.f32.mrb[0].mxu0
        %v10148 = vadd.f32 %v9955, %v10147
        %v10149 = vpop.f32.mrb[0].mxu0
        %v10150 = vadd.f32 %v9957, %v10149
        %v10151 = vpop.f32.mrb[0].mxu0
        %v10152 = vadd.f32 %v9959, %v10151
        %10153 = vmatprep.mubr.bf16.mxu0 %v7069
        %10154 = vmatmul.mubr.bf16.gmra.mrb[0].mxu0 %v7068
        %v10155 = vpop.f32.mrb[0].mxu0
        %v10156 = vadd.f32 %v9963, %v10155
        %v10157 = vpop.f32.mrb[0].mxu0
        %v10158 = vadd.f32 %v9965, %v10157
        %v10159 = vpop.f32.mrb[0].mxu0
        %v10160 = vadd.f32 %v9967, %v10159
        %v10161 = vpop.f32.mrb[0].mxu0
        %v10162 = vadd.f32 %v9969, %v10161
        %10163 = vmatprep.mubr.bf16.mxu0 %v7077
        %10164 = vmatmul.mubr.bf16.gmra.mrb[0].mxu0 %v7076
        %v10165 = vpop.f32.mrb[0].mxu0
        %v10166 = vadd.f32 %v9973, %v10165
        %v10167 = vpop.f32.mrb[0].mxu0
        %v10168 = vadd.f32 %v9975, %v10167
        %v10169 = vpop.f32.mrb[0].mxu0
        %v10170 = vadd.f32 %v9977, %v10169
        %v10171 = vpop.f32.mrb[0].mxu0
        %v10172 = vadd.f32 %v9979, %v10171
        %10173 = vmatprep.mubr.bf16.mxu0 %v7085
        %10174 = vmatmul.mubr.bf16.gmra.mrb[0].mxu0 %v7084
        %v10175 = vpop.f32.mrb[0].mxu0
        %v10176 = vadd.f32 %v9983, %v10175
        %v10177 = vpop.f32.mrb[0].mxu0
        %v10178 = vadd.f32 %v9985, %v10177
        %v10179 = vpop.f32.mrb[0].mxu0
        %v10180 = vadd.f32 %v9987, %v10179
        %v10181 = vpop.f32.mrb[0].mxu0
        %v10182 = vadd.f32 %v9989, %v10181
        %10183 = vmatprep.mubr.bf16.mxu0 %v7093
        %10184 = vmatmul.mubr.bf16.gmra.mrb[0].mxu0 %v7092
        %v10185 = vpop.f32.mrb[0].mxu0
        %v10186 = vadd.f32 %v9993, %v10185
        %v10187 = vpop.f32.mrb[0].mxu0
        %v10188 = vadd.f32 %v9995, %v10187
        %v10189 = vpop.f32.mrb[0].mxu0
        %v10190 = vadd.f32 %v9997, %v10189
        %v10191 = vpop.f32.mrb[0].mxu0
        %v10192 = vadd.f32 %v9999, %v10191
        %10193 = vmatprep.mubr.bf16.mxu0 %v7101
        %10194 = vmatmul.mubr.bf16.gmra.mrb[0].mxu0 %v7100
        %v10195 = vpop.f32.mrb[0].mxu0
        %v10196 = vadd.f32 %v10003, %v10195
        %v10197 = vpop.f32.mrb[0].mxu0
        %v10198 = vadd.f32 %v10005, %v10197
        %v10199 = vpop.f32.mrb[0].mxu0
        %v10200 = vadd.f32 %v10007, %v10199
        %v10201 = vpop.f32.mrb[0].mxu0
        %v10202 = vadd.f32 %v10009, %v10201
        %10203 = vdwg.mxu0
        %vm10204 = vcmp.gt.f32.partialorder %v9274, 0.0
        %vm10205 = vcmp.gt.f32.partialorder %v9276, 0.0
        %vm10206 = vcmp.gt.f32.partialorder %v10046, 0.0
        %vm10207 = vcmp.gt.f32.partialorder %v10048, 0.0
        %vm10208 = vcmp.gt.f32.partialorder %v9278, 0.0
        %vm10209 = vcmp.gt.f32.partialorder %v9280, 0.0
        %vm10210 = vcmp.gt.f32.partialorder %v10050, 0.0
        %vm10211 = vcmp.gt.f32.partialorder %v10052, 0.0
        %vm10212 = vcmp.gt.f32.partialorder %v9284, 0.0
        %vm10213 = vcmp.gt.f32.partialorder %v9286, 0.0
        %vm10214 = vcmp.gt.f32.partialorder %v10056, 0.0
        %vm10215 = vcmp.gt.f32.partialorder %v10058, 0.0
        %vm10216 = vcmp.gt.f32.partialorder %v9288, 0.0
        %vm10217 = vcmp.gt.f32.partialorder %v9290, 0.0
        %vm10218 = vcmp.gt.f32.partialorder %v10060, 0.0
        %vm10219 = vcmp.gt.f32.partialorder %v10062, 0.0
        %vm10220 = vcmp.gt.f32.partialorder %v9294, 0.0
        %vm10221 = vcmp.gt.f32.partialorder %v9296, 0.0
        %vm10222 = vcmp.gt.f32.partialorder %v10066, 0.0
        %vm10223 = vcmp.gt.f32.partialorder %v10068, 0.0
        %vm10224 = vcmp.gt.f32.partialorder %v9298, 0.0
        %vm10225 = vcmp.gt.f32.partialorder %v9300, 0.0
        %vm10226 = vcmp.gt.f32.partialorder %v10070, 0.0
        %vm10227 = vcmp.gt.f32.partialorder %v10072, 0.0
        %vm10228 = vcmp.gt.f32.partialorder %v9304, 0.0
        %vm10229 = vcmp.gt.f32.partialorder %v9306, 0.0
        %vm10230 = vcmp.gt.f32.partialorder %v10076, 0.0
        %vm10231 = vcmp.gt.f32.partialorder %v10078, 0.0
        %vm10232 = vcmp.gt.f32.partialorder %v9308, 0.0
        %vm10233 = vcmp.gt.f32.partialorder %v9310, 0.0
        %vm10234 = vcmp.gt.f32.partialorder %v10080, 0.0
        %vm10235 = vcmp.gt.f32.partialorder %v10082, 0.0
        %vm10236 = vcmp.gt.f32.partialorder %v9314, 0.0
        %vm10237 = vcmp.gt.f32.partialorder %v9316, 0.0
        %vm10238 = vcmp.gt.f32.partialorder %v10086, 0.0
        %vm10239 = vcmp.gt.f32.partialorder %v10088, 0.0
        %vm10240 = vcmp.gt.f32.partialorder %v9318, 0.0
        %vm10241 = vcmp.gt.f32.partialorder %v9320, 0.0
        %vm10242 = vcmp.gt.f32.partialorder %v10090, 0.0
        %vm10243 = vcmp.gt.f32.partialorder %v10092, 0.0
        %vm10244 = vcmp.gt.f32.partialorder %v9324, 0.0
        %vm10245 = vcmp.gt.f32.partialorder %v9326, 0.0
        %vm10246 = vcmp.gt.f32.partialorder %v10096, 0.0
        %vm10247 = vcmp.gt.f32.partialorder %v10098, 0.0
        %vm10248 = vcmp.gt.f32.partialorder %v9328, 0.0
        %vm10249 = vcmp.gt.f32.partialorder %v9330, 0.0
        %vm10250 = vcmp.gt.f32.partialorder %v10100, 0.0
        %vm10251 = vcmp.gt.f32.partialorder %v10102, 0.0
        %vm10252 = vcmp.gt.f32.partialorder %v9334, 0.0
        %vm10253 = vcmp.gt.f32.partialorder %v9336, 0.0
        %vm10254 = vcmp.gt.f32.partialorder %v10106, 0.0
        %vm10255 = vcmp.gt.f32.partialorder %v10108, 0.0
        %vm10256 = vcmp.gt.f32.partialorder %v9338, 0.0
        %vm10257 = vcmp.gt.f32.partialorder %v9340, 0.0
        %vm10258 = vcmp.gt.f32.partialorder %v10110, 0.0
        %vm10259 = vcmp.gt.f32.partialorder %v10112, 0.0
        %vm10260 = vcmp.gt.f32.partialorder %v9344, 0.0
        %vm10261 = vcmp.gt.f32.partialorder %v9346, 0.0
        %vm10262 = vcmp.gt.f32.partialorder %v10116, 0.0
        %vm10263 = vcmp.gt.f32.partialorder %v10118, 0.0
        %vm10264 = vcmp.gt.f32.partialorder %v9348, 0.0
        %vm10265 = vcmp.gt.f32.partialorder %v9350, 0.0
        %vm10266 = vcmp.gt.f32.partialorder %v10120, 0.0
        %vm10267 = vcmp.gt.f32.partialorder %v10122, 0.0
        %vm10268 = vcmp.gt.f32.partialorder %v9354, 0.0
        %vm10269 = vcmp.gt.f32.partialorder %v9356, 0.0
        %vm10270 = vcmp.gt.f32.partialorder %v10126, 0.0
        %vm10271 = vcmp.gt.f32.partialorder %v10128, 0.0
        %vm10272 = vcmp.gt.f32.partialorder %v9358, 0.0
        %vm10273 = vcmp.gt.f32.partialorder %v9360, 0.0
        %vm10274 = vcmp.gt.f32.partialorder %v10130, 0.0
        %vm10275 = vcmp.gt.f32.partialorder %v10132, 0.0
        %vm10276 = vcmp.gt.f32.partialorder %v9364, 0.0
        %vm10277 = vcmp.gt.f32.partialorder %v9366, 0.0
        %vm10278 = vcmp.gt.f32.partialorder %v10136, 0.0
        %vm10279 = vcmp.gt.f32.partialorder %v10138, 0.0
        %vm10280 = vcmp.gt.f32.partialorder %v9368, 0.0
        %vm10281 = vcmp.gt.f32.partialorder %v9370, 0.0
        %vm10282 = vcmp.gt.f32.partialorder %v10140, 0.0
        %vm10283 = vcmp.gt.f32.partialorder %v10142, 0.0
        %vm10284 = vcmp.gt.f32.partialorder %v9374, 0.0
        %vm10285 = vcmp.gt.f32.partialorder %v9376, 0.0
        %vm10286 = vcmp.gt.f32.partialorder %v10146, 0.0
        %vm10287 = vcmp.gt.f32.partialorder %v10148, 0.0
        %vm10288 = vcmp.gt.f32.partialorder %v9378, 0.0
        %vm10289 = vcmp.gt.f32.partialorder %v9380, 0.0
        %vm10290 = vcmp.gt.f32.partialorder %v10150, 0.0
        %vm10291 = vcmp.gt.f32.partialorder %v10152, 0.0
        %vm10292 = vcmp.gt.f32.partialorder %v9384, 0.0
        %vm10293 = vcmp.gt.f32.partialorder %v9386, 0.0
        %vm10294 = vcmp.gt.f32.partialorder %v10156, 0.0
        %vm10295 = vcmp.gt.f32.partialorder %v10158, 0.0
        %vm10296 = vcmp.gt.f32.partialorder %v9388, 0.0
        %vm10297 = vcmp.gt.f32.partialorder %v9390, 0.0
        %vm10298 = vcmp.gt.f32.partialorder %v10160, 0.0
        %vm10299 = vcmp.gt.f32.partialorder %v10162, 0.0
        %vm10300 = vcmp.gt.f32.partialorder %v9394, 0.0
        %vm10301 = vcmp.gt.f32.partialorder %v9396, 0.0
        %vm10302 = vcmp.gt.f32.partialorder %v10166, 0.0
        %vm10303 = vcmp.gt.f32.partialorder %v10168, 0.0
        %vm10304 = vcmp.gt.f32.partialorder %v9398, 0.0
        %vm10305 = vcmp.gt.f32.partialorder %v9400, 0.0
        %vm10306 = vcmp.gt.f32.partialorder %v10170, 0.0
        %vm10307 = vcmp.gt.f32.partialorder %v10172, 0.0
        %vm10308 = vcmp.gt.f32.partialorder %v9404, 0.0
        %vm10309 = vcmp.gt.f32.partialorder %v9406, 0.0
        %vm10310 = vcmp.gt.f32.partialorder %v10176, 0.0
        %vm10311 = vcmp.gt.f32.partialorder %v10178, 0.0
        %vm10312 = vcmp.gt.f32.partialorder %v9408, 0.0
        %vm10313 = vcmp.gt.f32.partialorder %v9410, 0.0
        %vm10314 = vcmp.gt.f32.partialorder %v10180, 0.0
        %vm10315 = vcmp.gt.f32.partialorder %v10182, 0.0
        %vm10316 = vcmp.gt.f32.partialorder %v9414, 0.0
        %vm10317 = vcmp.gt.f32.partialorder %v9416, 0.0
        %vm10318 = vcmp.gt.f32.partialorder %v10186, 0.0
        %vm10319 = vcmp.gt.f32.partialorder %v10188, 0.0
        %vm10320 = vcmp.gt.f32.partialorder %v9418, 0.0
        %vm10321 = vcmp.gt.f32.partialorder %v9420, 0.0
        %vm10322 = vcmp.gt.f32.partialorder %v10190, 0.0
        %vm10323 = vcmp.gt.f32.partialorder %v10192, 0.0
        %vm10324 = vcmp.gt.f32.partialorder %v9424, 0.0
        %vm10325 = vcmp.gt.f32.partialorder %v9426, 0.0
        %vm10326 = vcmp.gt.f32.partialorder %v10196, 0.0
        %vm10327 = vcmp.gt.f32.partialorder %v10198, 0.0
        %vm10328 = vcmp.gt.f32.partialorder %v9428, 0.0
        %vm10329 = vcmp.gt.f32.partialorder %v9430, 0.0
        %vm10330 = vcmp.gt.f32.partialorder %v10200, 0.0
        %vm10331 = vcmp.gt.f32.partialorder %v10202, 0.0
        %v10332 = vmul.f32 %v9274, 0.2
        %v10333 = vmul.f32 %v9276, 0.2
        %v10334 = vmul.f32 %v10046, 0.2
        %v10335 = vmul.f32 %v10048, 0.2
        %v10336 = vmul.f32 %v9278, 0.2
        %v10337 = vmul.f32 %v9280, 0.2
        %v10338 = vmul.f32 %v10050, 0.2
        %v10339 = vmul.f32 %v10052, 0.2
        %v10340 = vmul.f32 %v9284, 0.2
        %v10341 = vmul.f32 %v9286, 0.2
        %v10342 = vmul.f32 %v10056, 0.2
        %v10343 = vmul.f32 %v10058, 0.2
        %v10344 = vmul.f32 %v9288, 0.2
        %v10345 = vmul.f32 %v9290, 0.2
        %v10346 = vmul.f32 %v10060, 0.2
        %v10347 = vmul.f32 %v10062, 0.2
        %v10348 = vmul.f32 %v9294, 0.2
        %v10349 = vmul.f32 %v9296, 0.2
        %v10350 = vmul.f32 %v10066, 0.2
        %v10351 = vmul.f32 %v10068, 0.2
        %v10352 = vmul.f32 %v9298, 0.2
        %v10353 = vmul.f32 %v9300, 0.2
        %v10354 = vmul.f32 %v10070, 0.2
        %v10355 = vmul.f32 %v10072, 0.2
        %v10356 = vmul.f32 %v9304, 0.2
        %v10357 = vmul.f32 %v9306, 0.2
        %v10358 = vmul.f32 %v10076, 0.2
        %v10359 = vmul.f32 %v10078, 0.2
        %v10360 = vmul.f32 %v9308, 0.2
        %v10361 = vmul.f32 %v9310, 0.2
        %v10362 = vmul.f32 %v10080, 0.2
        %v10363 = vmul.f32 %v10082, 0.2
        %v10364 = vmul.f32 %v9314, 0.2
        %v10365 = vmul.f32 %v9316, 0.2
        %v10366 = vmul.f32 %v10086, 0.2
        %v10367 = vmul.f32 %v10088, 0.2
        %v10368 = vmul.f32 %v9318, 0.2
        %v10369 = vmul.f32 %v9320, 0.2
        %v10370 = vmul.f32 %v10090, 0.2
        %v10371 = vmul.f32 %v10092, 0.2
        %v10372 = vmul.f32 %v9324, 0.2
        %v10373 = vmul.f32 %v9326, 0.2
        %v10374 = vmul.f32 %v10096, 0.2
        %v10375 = vmul.f32 %v10098, 0.2
        %v10376 = vmul.f32 %v9328, 0.2
        %v10377 = vmul.f32 %v9330, 0.2
        %v10378 = vmul.f32 %v10100, 0.2
        %v10379 = vmul.f32 %v10102, 0.2
        %v10380 = vmul.f32 %v9334, 0.2
        %v10381 = vmul.f32 %v9336, 0.2
        %v10382 = vmul.f32 %v10106, 0.2
        %v10383 = vmul.f32 %v10108, 0.2
        %v10384 = vmul.f32 %v9338, 0.2
        %v10385 = vmul.f32 %v9340, 0.2
        %v10386 = vmul.f32 %v10110, 0.2
        %v10387 = vmul.f32 %v10112, 0.2
        %v10388 = vmul.f32 %v9344, 0.2
        %v10389 = vmul.f32 %v9346, 0.2
        %v10390 = vmul.f32 %v10116, 0.2
        %v10391 = vmul.f32 %v10118, 0.2
        %v10392 = vmul.f32 %v9348, 0.2
        %v10393 = vmul.f32 %v9350, 0.2
        %v10394 = vmul.f32 %v10120, 0.2
        %v10395 = vmul.f32 %v10122, 0.2
        %v10396 = vmul.f32 %v9354, 0.2
        %v10397 = vmul.f32 %v9356, 0.2
        %v10398 = vmul.f32 %v10126, 0.2
        %v10399 = vmul.f32 %v10128, 0.2
        %v10400 = vmul.f32 %v9358, 0.2
        %v10401 = vmul.f32 %v9360, 0.2
        %v10402 = vmul.f32 %v10130, 0.2
        %v10403 = vmul.f32 %v10132, 0.2
        %v10404 = vmul.f32 %v9364, 0.2
        %v10405 = vmul.f32 %v9366, 0.2
        %v10406 = vmul.f32 %v10136, 0.2
        %v10407 = vmul.f32 %v10138, 0.2
        %v10408 = vmul.f32 %v9368, 0.2
        %v10409 = vmul.f32 %v9370, 0.2
        %v10410 = vmul.f32 %v10140, 0.2
        %v10411 = vmul.f32 %v10142, 0.2
        %v10412 = vmul.f32 %v9374, 0.2
        %v10413 = vmul.f32 %v9376, 0.2
        %v10414 = vmul.f32 %v10146, 0.2
        %v10415 = vmul.f32 %v10148, 0.2
        %v10416 = vmul.f32 %v9378, 0.2
        %v10417 = vmul.f32 %v9380, 0.2
        %v10418 = vmul.f32 %v10150, 0.2
        %v10419 = vmul.f32 %v10152, 0.2
        %v10420 = vmul.f32 %v9384, 0.2
        %v10421 = vmul.f32 %v9386, 0.2
        %v10422 = vmul.f32 %v10156, 0.2
        %v10423 = vmul.f32 %v10158, 0.2
        %v10424 = vmul.f32 %v9388, 0.2
        %v10425 = vmul.f32 %v9390, 0.2
        %v10426 = vmul.f32 %v10160, 0.2
        %v10427 = vmul.f32 %v10162, 0.2
        %v10428 = vmul.f32 %v9394, 0.2
        %v10429 = vmul.f32 %v9396, 0.2
        %v10430 = vmul.f32 %v10166, 0.2
        %v10431 = vmul.f32 %v10168, 0.2
        %v10432 = vmul.f32 %v9398, 0.2
        %v10433 = vmul.f32 %v9400, 0.2
        %v10434 = vmul.f32 %v10170, 0.2
        %v10435 = vmul.f32 %v10172, 0.2
        %v10436 = vmul.f32 %v9404, 0.2
        %v10437 = vmul.f32 %v9406, 0.2
        %v10438 = vmul.f32 %v10176, 0.2
        %v10439 = vmul.f32 %v10178, 0.2
        %v10440 = vmul.f32 %v9408, 0.2
        %v10441 = vmul.f32 %v9410, 0.2
        %v10442 = vmul.f32 %v10180, 0.2
        %v10443 = vmul.f32 %v10182, 0.2
        %v10444 = vmul.f32 %v9414, 0.2
        %v10445 = vmul.f32 %v9416, 0.2
        %v10446 = vmul.f32 %v10186, 0.2
        %v10447 = vmul.f32 %v10188, 0.2
        %v10448 = vmul.f32 %v9418, 0.2
        %v10449 = vmul.f32 %v9420, 0.2
        %v10450 = vmul.f32 %v10190, 0.2
        %v10451 = vmul.f32 %v10192, 0.2
        %v10452 = vmul.f32 %v9424, 0.2
        %v10453 = vmul.f32 %v9426, 0.2
        %v10454 = vmul.f32 %v10196, 0.2
        %v10455 = vmul.f32 %v10198, 0.2
        %v10456 = vmul.f32 %v9428, 0.2
        %v10457 = vmul.f32 %v9430, 0.2
        %v10458 = vmul.f32 %v10200, 0.2
        %v10459 = vmul.f32 %v10202, 0.2
        %v10460 = vsel %vm10204, %v9274, %v10332
        %v10461 = vsel %vm10205, %v9276, %v10333
        %v10462 = vsel %vm10206, %v10046, %v10334
        %v10463 = vsel %vm10207, %v10048, %v10335
        %v10464 = vsel %vm10208, %v9278, %v10336
        %v10465 = vsel %vm10209, %v9280, %v10337
        %v10466 = vsel %vm10210, %v10050, %v10338
        %v10467 = vsel %vm10211, %v10052, %v10339
        %v10468 = vsel %vm10212, %v9284, %v10340
        %v10469 = vsel %vm10213, %v9286, %v10341
        %v10470 = vsel %vm10214, %v10056, %v10342
        %v10471 = vsel %vm10215, %v10058, %v10343
        %v10472 = vsel %vm10216, %v9288, %v10344
        %v10473 = vsel %vm10217, %v9290, %v10345
        %v10474 = vsel %vm10218, %v10060, %v10346
        %v10475 = vsel %vm10219, %v10062, %v10347
        %v10476 = vsel %vm10220, %v9294, %v10348
        %v10477 = vsel %vm10221, %v9296, %v10349
        %v10478 = vsel %vm10222, %v10066, %v10350
        %v10479 = vsel %vm10223, %v10068, %v10351
        %v10480 = vsel %vm10224, %v9298, %v10352
        %v10481 = vsel %vm10225, %v9300, %v10353
        %v10482 = vsel %vm10226, %v10070, %v10354
        %v10483 = vsel %vm10227, %v10072, %v10355
        %v10484 = vsel %vm10228, %v9304, %v10356
        %v10485 = vsel %vm10229, %v9306, %v10357
        %v10486 = vsel %vm10230, %v10076, %v10358
        %v10487 = vsel %vm10231, %v10078, %v10359
        %v10488 = vsel %vm10232, %v9308, %v10360
        %v10489 = vsel %vm10233, %v9310, %v10361
        %v10490 = vsel %vm10234, %v10080, %v10362
        %v10491 = vsel %vm10235, %v10082, %v10363
        %v10492 = vsel %vm10236, %v9314, %v10364
        %v10493 = vsel %vm10237, %v9316, %v10365
        %v10494 = vsel %vm10238, %v10086, %v10366
        %v10495 = vsel %vm10239, %v10088, %v10367
        %v10496 = vsel %vm10240, %v9318, %v10368
        %v10497 = vsel %vm10241, %v9320, %v10369
        %v10498 = vsel %vm10242, %v10090, %v10370
        %v10499 = vsel %vm10243, %v10092, %v10371
        %v10500 = vsel %vm10244, %v9324, %v10372
        %v10501 = vsel %vm10245, %v9326, %v10373
        %v10502 = vsel %vm10246, %v10096, %v10374
        %v10503 = vsel %vm10247, %v10098, %v10375
        %v10504 = vsel %vm10248, %v9328, %v10376
        %v10505 = vsel %vm10249, %v9330, %v10377
        %v10506 = vsel %vm10250, %v10100, %v10378
        %v10507 = vsel %vm10251, %v10102, %v10379
        %v10508 = vsel %vm10252, %v9334, %v10380
        %v10509 = vsel %vm10253, %v9336, %v10381
        %v10510 = vsel %vm10254, %v10106, %v10382
        %v10511 = vsel %vm10255, %v10108, %v10383
        %v10512 = vsel %vm10256, %v9338, %v10384
        %v10513 = vsel %vm10257, %v9340, %v10385
        %v10514 = vsel %vm10258, %v10110, %v10386
        %v10515 = vsel %vm10259, %v10112, %v10387
        %v10516 = vsel %vm10260, %v9344, %v10388
        %v10517 = vsel %vm10261, %v9346, %v10389
        %v10518 = vsel %vm10262, %v10116, %v10390
        %v10519 = vsel %vm10263, %v10118, %v10391
        %v10520 = vsel %vm10264, %v9348, %v10392
        %v10521 = vsel %vm10265, %v9350, %v10393
        %v10522 = vsel %vm10266, %v10120, %v10394
        %v10523 = vsel %vm10267, %v10122, %v10395
        %v10524 = vsel %vm10268, %v9354, %v10396
        %v10525 = vsel %vm10269, %v9356, %v10397
        %v10526 = vsel %vm10270, %v10126, %v10398
        %v10527 = vsel %vm10271, %v10128, %v10399
        %v10528 = vsel %vm10272, %v9358, %v10400
        %v10529 = vsel %vm10273, %v9360, %v10401
        %v10530 = vsel %vm10274, %v10130, %v10402
        %v10531 = vsel %vm10275, %v10132, %v10403
        %v10532 = vsel %vm10276, %v9364, %v10404
        %v10533 = vsel %vm10277, %v9366, %v10405
        %v10534 = vsel %vm10278, %v10136, %v10406
        %v10535 = vsel %vm10279, %v10138, %v10407
        %v10536 = vsel %vm10280, %v9368, %v10408
        %v10537 = vsel %vm10281, %v9370, %v10409
        %v10538 = vsel %vm10282, %v10140, %v10410
        %v10539 = vsel %vm10283, %v10142, %v10411
        %v10540 = vsel %vm10284, %v9374, %v10412
        %v10541 = vsel %vm10285, %v9376, %v10413
        %v10542 = vsel %vm10286, %v10146, %v10414
        %v10543 = vsel %vm10287, %v10148, %v10415
        %v10544 = vsel %vm10288, %v9378, %v10416
        %v10545 = vsel %vm10289, %v9380, %v10417
        %v10546 = vsel %vm10290, %v10150, %v10418
        %v10547 = vsel %vm10291, %v10152, %v10419
        %v10548 = vsel %vm10292, %v9384, %v10420
        %v10549 = vsel %vm10293, %v9386, %v10421
        %v10550 = vsel %vm10294, %v10156, %v10422
        %v10551 = vsel %vm10295, %v10158, %v10423
        %v10552 = vsel %vm10296, %v9388, %v10424
        %v10553 = vsel %vm10297, %v9390, %v10425
        %v10554 = vsel %vm10298, %v10160, %v10426
        %v10555 = vsel %vm10299, %v10162, %v10427
        %v10556 = vsel %vm10300, %v9394, %v10428
        %v10557 = vsel %vm10301, %v9396, %v10429
        %v10558 = vsel %vm10302, %v10166, %v10430
        %v10559 = vsel %vm10303, %v10168, %v10431
        %v10560 = vsel %vm10304, %v9398, %v10432
        %v10561 = vsel %vm10305, %v9400, %v10433
        %v10562 = vsel %vm10306, %v10170, %v10434
        %v10563 = vsel %vm10307, %v10172, %v10435
        %v10564 = vsel %vm10308, %v9404, %v10436
        %v10565 = vsel %vm10309, %v9406, %v10437
        %v10566 = vsel %vm10310, %v10176, %v10438
        %v10567 = vsel %vm10311, %v10178, %v10439
        %v10568 = vsel %vm10312, %v9408, %v10440
        %v10569 = vsel %vm10313, %v9410, %v10441
        %v10570 = vsel %vm10314, %v10180, %v10442
        %v10571 = vsel %vm10315, %v10182, %v10443
        %v10572 = vsel %vm10316, %v9414, %v10444
        %v10573 = vsel %vm10317, %v9416, %v10445
        %v10574 = vsel %vm10318, %v10186, %v10446
        %v10575 = vsel %vm10319, %v10188, %v10447
        %v10576 = vsel %vm10320, %v9418, %v10448
        %v10577 = vsel %vm10321, %v9420, %v10449
        %v10578 = vsel %vm10322, %v10190, %v10450
        %v10579 = vsel %vm10323, %v10192, %v10451
        %v10580 = vsel %vm10324, %v9424, %v10452
        %v10581 = vsel %vm10325, %v9426, %v10453
        %v10582 = vsel %vm10326, %v10196, %v10454
        %v10583 = vsel %vm10327, %v10198, %v10455
        %v10584 = vsel %vm10328, %v9428, %v10456
        %v10585 = vsel %vm10329, %v9430, %v10457
        %v10586 = vsel %vm10330, %v10200, %v10458
        %v10587 = vsel %vm10331, %v10202, %v10459
        %v10588 = vpack.c.bf16 %v10464, %v10460
        %v10589 = vpack.c.bf16 %v10465, %v10461
        %v10590 = vpack.c.bf16 %v10466, %v10462
        %v10591 = vpack.c.bf16 %v10467, %v10463
        %v10592 = vpack.c.bf16 %v10472, %v10468
        %v10593 = vpack.c.bf16 %v10473, %v10469
        %v10594 = vpack.c.bf16 %v10474, %v10470
        %v10595 = vpack.c.bf16 %v10475, %v10471
        %v10596 = vpack.c.bf16 %v10480, %v10476
        %v10597 = vpack.c.bf16 %v10481, %v10477
        %v10598 = vpack.c.bf16 %v10482, %v10478
        %v10599 = vpack.c.bf16 %v10483, %v10479
        %v10600 = vpack.c.bf16 %v10488, %v10484
        %v10601 = vpack.c.bf16 %v10489, %v10485
        %v10602 = vpack.c.bf16 %v10490, %v10486
        %v10603 = vpack.c.bf16 %v10491, %v10487
        %v10604 = vpack.c.bf16 %v10496, %v10492
        %v10605 = vpack.c.bf16 %v10497, %v10493
        %v10606 = vpack.c.bf16 %v10498, %v10494
        %v10607 = vpack.c.bf16 %v10499, %v10495
        %v10608 = vpack.c.bf16 %v10504, %v10500
        %v10609 = vpack.c.bf16 %v10505, %v10501
        %v10610 = vpack.c.bf16 %v10506, %v10502
        %v10611 = vpack.c.bf16 %v10507, %v10503
        %v10612 = vpack.c.bf16 %v10512, %v10508
        %v10613 = vpack.c.bf16 %v10513, %v10509
        %v10614 = vpack.c.bf16 %v10514, %v10510
        %v10615 = vpack.c.bf16 %v10515, %v10511
        %v10616 = vpack.c.bf16 %v10520, %v10516
        %v10617 = vpack.c.bf16 %v10521, %v10517
        %v10618 = vpack.c.bf16 %v10522, %v10518
        %v10619 = vpack.c.bf16 %v10523, %v10519
        %v10620 = vpack.c.bf16 %v10528, %v10524
        %v10621 = vpack.c.bf16 %v10529, %v10525
        %v10622 = vpack.c.bf16 %v10530, %v10526
        %v10623 = vpack.c.bf16 %v10531, %v10527
        %v10624 = vpack.c.bf16 %v10536, %v10532
        %v10625 = vpack.c.bf16 %v10537, %v10533
        %v10626 = vpack.c.bf16 %v10538, %v10534
        %v10627 = vpack.c.bf16 %v10539, %v10535
        %v10628 = vpack.c.bf16 %v10544, %v10540
        %v10629 = vpack.c.bf16 %v10545, %v10541
        %v10630 = vpack.c.bf16 %v10546, %v10542
        %v10631 = vpack.c.bf16 %v10547, %v10543
        %v10632 = vpack.c.bf16 %v10552, %v10548
        %v10633 = vpack.c.bf16 %v10553, %v10549
        %v10634 = vpack.c.bf16 %v10554, %v10550
        %v10635 = vpack.c.bf16 %v10555, %v10551
        %v10636 = vpack.c.bf16 %v10560, %v10556
        %v10637 = vpack.c.bf16 %v10561, %v10557
        %v10638 = vpack.c.bf16 %v10562, %v10558
        %v10639 = vpack.c.bf16 %v10563, %v10559
        %v10640 = vpack.c.bf16 %v10568, %v10564
        %v10641 = vpack.c.bf16 %v10569, %v10565
        %v10642 = vpack.c.bf16 %v10570, %v10566
        %v10643 = vpack.c.bf16 %v10571, %v10567
        %v10644 = vpack.c.bf16 %v10576, %v10572
        %v10645 = vpack.c.bf16 %v10577, %v10573
        %v10646 = vpack.c.bf16 %v10578, %v10574
        %v10647 = vpack.c.bf16 %v10579, %v10575
        %v10648 = vpack.c.bf16 %v10584, %v10580
        %v10649 = vpack.c.bf16 %v10585, %v10581
        %v10650 = vpack.c.bf16 %v10586, %v10582
        %v10651 = vpack.c.bf16 %v10587, %v10583
        %v10652 = vld [vmem:[%s5] sm:$0xff]
        %v10653 = vld [vmem:[%s5 + $0x8] sm:$0xff]
        %v10654 = vld [vmem:[%s5 + $0x10] sm:$0xff]
        %v10655 = vld [vmem:[%s5 + $0x18] sm:$0xff]
        %v10656 = vld [vmem:[%s5 + $0x20] sm:$0xff]
        %v10657 = vld [vmem:[%s5 + $0x28] sm:$0xff]
        %v10658 = vld [vmem:[%s5 + $0x30] sm:$0xff]
        %v10659 = vld [vmem:[%s5 + $0x38] sm:$0xff]
        %v10660 = vld [vmem:[%s5 + $0x40] sm:$0xff]
        %v10661 = vld [vmem:[%s5 + $0x48] sm:$0xff]
        %v10662 = vld [vmem:[%s5 + $0x50] sm:$0xff]
        %v10663 = vld [vmem:[%s5 + $0x58] sm:$0xff]
        %v10664 = vld [vmem:[%s5 + $0x60] sm:$0xff]
        %v10665 = vld [vmem:[%s5 + $0x68] sm:$0xff]
        %v10666 = vld [vmem:[%s5 + $0x70] sm:$0xff]
        %v10667 = vld [vmem:[%s5 + $0x78] sm:$0xff]
        %v10668 = vld [vmem:[%s5 + $0x80] sm:$0xff]
        %v10669 = vld [vmem:[%s5 + $0x88] sm:$0xff]
        %v10670 = vld [vmem:[%s5 + $0x90] sm:$0xff]
        %v10671 = vld [vmem:[%s5 + $0x98] sm:$0xff]
        %v10672 = vld [vmem:[%s5 + $0xa0] sm:$0xff]
        %v10673 = vld [vmem:[%s5 + $0xa8] sm:$0xff]
        %v10674 = vld [vmem:[%s5 + $0xb0] sm:$0xff]
        %v10675 = vld [vmem:[%s5 + $0xb8] sm:$0xff]
        %v10676 = vld [vmem:[%s5 + $0xc0] sm:$0xff]
        %v10677 = vld [vmem:[%s5 + $0xc8] sm:$0xff]
        %v10678 = vld [vmem:[%s5 + $0xd0] sm:$0xff]
        %v10679 = vld [vmem:[%s5 + $0xd8] sm:$0xff]
        %v10680 = vld [vmem:[%s5 + $0xe0] sm:$0xff]
        %v10681 = vld [vmem:[%s5 + $0xe8] sm:$0xff]
        %v10682 = vld [vmem:[%s5 + $0xf0] sm:$0xff]
        %v10683 = vld [vmem:[%s5 + $0xf8] sm:$0xff]
        %v10684 = vld [vmem:[%s5 + $0x100] sm:$0xff]
        %v10685 = vld [vmem:[%s5 + $0x108] sm:$0xff]
        %v10686 = vld [vmem:[%s5 + $0x110] sm:$0xff]
        %v10687 = vld [vmem:[%s5 + $0x118] sm:$0xff]
        %v10688 = vld [vmem:[%s5 + $0x120] sm:$0xff]
        %v10689 = vld [vmem:[%s5 + $0x128] sm:$0xff]
        %v10690 = vld [vmem:[%s5 + $0x130] sm:$0xff]
        %v10691 = vld [vmem:[%s5 + $0x138] sm:$0xff]
        %v10692 = vld [vmem:[%s5 + $0x140] sm:$0xff]
        %v10693 = vld [vmem:[%s5 + $0x148] sm:$0xff]
        %v10694 = vld [vmem:[%s5 + $0x150] sm:$0xff]
        %v10695 = vld [vmem:[%s5 + $0x158] sm:$0xff]
        %v10696 = vld [vmem:[%s5 + $0x160] sm:$0xff]
        %v10697 = vld [vmem:[%s5 + $0x168] sm:$0xff]
        %v10698 = vld [vmem:[%s5 + $0x170] sm:$0xff]
        %v10699 = vld [vmem:[%s5 + $0x178] sm:$0xff]
        %v10700 = vld [vmem:[%s5 + $0x180] sm:$0xff]
        %v10701 = vld [vmem:[%s5 + $0x188] sm:$0xff]
        %v10702 = vld [vmem:[%s5 + $0x190] sm:$0xff]
        %v10703 = vld [vmem:[%s5 + $0x198] sm:$0xff]
        %v10704 = vld [vmem:[%s5 + $0x1a0] sm:$0xff]
        %v10705 = vld [vmem:[%s5 + $0x1a8] sm:$0xff]
        %v10706 = vld [vmem:[%s5 + $0x1b0] sm:$0xff]
        %v10707 = vld [vmem:[%s5 + $0x1b8] sm:$0xff]
        %v10708 = vld [vmem:[%s5 + $0x1c0] sm:$0xff]
        %v10709 = vld [vmem:[%s5 + $0x1c8] sm:$0xff]
        %v10710 = vld [vmem:[%s5 + $0x1d0] sm:$0xff]
        %v10711 = vld [vmem:[%s5 + $0x1d8] sm:$0xff]
        %v10712 = vld [vmem:[%s5 + $0x1e0] sm:$0xff]
        %v10713 = vld [vmem:[%s5 + $0x1e8] sm:$0xff]
        %v10714 = vld [vmem:[%s5 + $0x1f0] sm:$0xff]
        %v10715 = vld [vmem:[%s5 + $0x1f8] sm:$0xff]
        %v10716 = vld [vmem:[%s6] sm:$0x3]
        %v10718 = vlaneseq
        %v10719 = vshrl.u32 %v10718, 7
        %v10720 = vsub.s32 0, %v10719
        %v10721 = vrot.slane %v10716, %v10720
        %v10722 = vlaneseq
        %v10723 = vshrl.u32 %v10722, 7
        %v10724 = vsub.s32 1, %v10723
        %v10725 = vrot.slane %v10716, %v10724
        %v10792 = vunpack.c.l.b16 %v10652
        %v10793 = vunpack.c.h.b16 %v10652
        %v10794 = vunpack.c.l.b16 %v10653
        %v10795 = vunpack.c.h.b16 %v10653
        %v10796 = vunpack.c.l.b16 %v10654
        %v10797 = vunpack.c.h.b16 %v10654
        %v10798 = vunpack.c.l.b16 %v10655
        %v10799 = vunpack.c.h.b16 %v10655
        %v10800 = vunpack.c.l.b16 %v10656
        %v10801 = vunpack.c.h.b16 %v10656
        %v10802 = vunpack.c.l.b16 %v10657
        %v10803 = vunpack.c.h.b16 %v10657
        %v10804 = vunpack.c.l.b16 %v10658
        %v10805 = vunpack.c.h.b16 %v10658
        %v10806 = vunpack.c.l.b16 %v10659
        %v10807 = vunpack.c.h.b16 %v10659
        %v10808 = vunpack.c.l.b16 %v10660
        %v10809 = vunpack.c.h.b16 %v10660
        %v10810 = vunpack.c.l.b16 %v10661
        %v10811 = vunpack.c.h.b16 %v10661
        %v10812 = vunpack.c.l.b16 %v10662
        %v10813 = vunpack.c.h.b16 %v10662
        %v10814 = vunpack.c.l.b16 %v10663
        %v10815 = vunpack.c.h.b16 %v10663
        %v10816 = vunpack.c.l.b16 %v10664
        %v10817 = vunpack.c.h.b16 %v10664
        %v10818 = vunpack.c.l.b16 %v10665
        %v10819 = vunpack.c.h.b16 %v10665
        %v10820 = vunpack.c.l.b16 %v10666
        %v10821 = vunpack.c.h.b16 %v10666
        %v10822 = vunpack.c.l.b16 %v10667
        %v10823 = vunpack.c.h.b16 %v10667
        %v10824 = vunpack.c.l.b16 %v10668
        %v10825 = vunpack.c.h.b16 %v10668
        %v10826 = vunpack.c.l.b16 %v10669
        %v10827 = vunpack.c.h.b16 %v10669
        %v10828 = vunpack.c.l.b16 %v10670
        %v10829 = vunpack.c.h.b16 %v10670
        %v10830 = vunpack.c.l.b16 %v10671
        %v10831 = vunpack.c.h.b16 %v10671
        %v10832 = vunpack.c.l.b16 %v10672
        %v10833 = vunpack.c.h.b16 %v10672
        %v10834 = vunpack.c.l.b16 %v10673
        %v10835 = vunpack.c.h.b16 %v10673
        %v10836 = vunpack.c.l.b16 %v10674
        %v10837 = vunpack.c.h.b16 %v10674
        %v10838 = vunpack.c.l.b16 %v10675
        %v10839 = vunpack.c.h.b16 %v10675
        %v10840 = vunpack.c.l.b16 %v10676
        %v10841 = vunpack.c.h.b16 %v10676
        %v10842 = vunpack.c.l.b16 %v10677
        %v10843 = vunpack.c.h.b16 %v10677
        %v10844 = vunpack.c.l.b16 %v10678
        %v10845 = vunpack.c.h.b16 %v10678
        %v10846 = vunpack.c.l.b16 %v10679
        %v10847 = vunpack.c.h.b16 %v10679
        %v10848 = vunpack.c.l.b16 %v10680
        %v10849 = vunpack.c.h.b16 %v10680
        %v10850 = vunpack.c.l.b16 %v10681
        %v10851 = vunpack.c.h.b16 %v10681
        %v10852 = vunpack.c.l.b16 %v10682
        %v10853 = vunpack.c.h.b16 %v10682
        %v10854 = vunpack.c.l.b16 %v10683
        %v10855 = vunpack.c.h.b16 %v10683
        %v10856 = vunpack.c.l.b16 %v10684
        %v10857 = vunpack.c.h.b16 %v10684
        %v10858 = vunpack.c.l.b16 %v10685
        %v10859 = vunpack.c.h.b16 %v10685
        %v10860 = vunpack.c.l.b16 %v10686
        %v10861 = vunpack.c.h.b16 %v10686
        %v10862 = vunpack.c.l.b16 %v10687
        %v10863 = vunpack.c.h.b16 %v10687
        %v10864 = vunpack.c.l.b16 %v10688
        %v10865 = vunpack.c.h.b16 %v10688
        %v10866 = vunpack.c.l.b16 %v10689
        %v10867 = vunpack.c.h.b16 %v10689
        %v10868 = vunpack.c.l.b16 %v10690
        %v10869 = vunpack.c.h.b16 %v10690
        %v10870 = vunpack.c.l.b16 %v10691
        %v10871 = vunpack.c.h.b16 %v10691
        %v10872 = vunpack.c.l.b16 %v10692
        %v10873 = vunpack.c.h.b16 %v10692
        %v10874 = vunpack.c.l.b16 %v10693
        %v10875 = vunpack.c.h.b16 %v10693
        %v10876 = vunpack.c.l.b16 %v10694
        %v10877 = vunpack.c.h.b16 %v10694
        %v10878 = vunpack.c.l.b16 %v10695
        %v10879 = vunpack.c.h.b16 %v10695
        %v10880 = vunpack.c.l.b16 %v10696
        %v10881 = vunpack.c.h.b16 %v10696
        %v10882 = vunpack.c.l.b16 %v10697
        %v10883 = vunpack.c.h.b16 %v10697
        %v10884 = vunpack.c.l.b16 %v10698
        %v10885 = vunpack.c.h.b16 %v10698
        %v10886 = vunpack.c.l.b16 %v10699
        %v10887 = vunpack.c.h.b16 %v10699
        %v10888 = vunpack.c.l.b16 %v10700
        %v10889 = vunpack.c.h.b16 %v10700
        %v10890 = vunpack.c.l.b16 %v10701
        %v10891 = vunpack.c.h.b16 %v10701
        %v10892 = vunpack.c.l.b16 %v10702
        %v10893 = vunpack.c.h.b16 %v10702
        %v10894 = vunpack.c.l.b16 %v10703
        %v10895 = vunpack.c.h.b16 %v10703
        %v10896 = vunpack.c.l.b16 %v10704
        %v10897 = vunpack.c.h.b16 %v10704
        %v10898 = vunpack.c.l.b16 %v10705
        %v10899 = vunpack.c.h.b16 %v10705
        %v10900 = vunpack.c.l.b16 %v10706
        %v10901 = vunpack.c.h.b16 %v10706
        %v10902 = vunpack.c.l.b16 %v10707
        %v10903 = vunpack.c.h.b16 %v10707
        %v10904 = vunpack.c.l.b16 %v10708
        %v10905 = vunpack.c.h.b16 %v10708
        %v10906 = vunpack.c.l.b16 %v10709
        %v10907 = vunpack.c.h.b16 %v10709
        %v10908 = vunpack.c.l.b16 %v10710
        %v10909 = vunpack.c.h.b16 %v10710
        %v10910 = vunpack.c.l.b16 %v10711
        %v10911 = vunpack.c.h.b16 %v10711
        %v10912 = vunpack.c.l.b16 %v10712
        %v10913 = vunpack.c.h.b16 %v10712
        %v10914 = vunpack.c.l.b16 %v10713
        %v10915 = vunpack.c.h.b16 %v10713
        %v10916 = vunpack.c.l.b16 %v10714
        %v10917 = vunpack.c.h.b16 %v10714
        %v10918 = vunpack.c.l.b16 %v10715
        %v10919 = vunpack.c.h.b16 %v10715
        %v10920 = vpack.c.b16 %v10794, %v10792
        %v10921 = vpack.c.b16 %v10795, %v10793
        %v10922 = vpack.c.b16 %v10798, %v10796
        %v10923 = vpack.c.b16 %v10799, %v10797
        %v10924 = vpack.c.b16 %v10802, %v10800
        %v10925 = vpack.c.b16 %v10803, %v10801
        %v10926 = vpack.c.b16 %v10806, %v10804
        %v10927 = vpack.c.b16 %v10807, %v10805
        %v10928 = vpack.c.b16 %v10810, %v10808
        %v10929 = vpack.c.b16 %v10811, %v10809
        %v10930 = vpack.c.b16 %v10814, %v10812
        %v10931 = vpack.c.b16 %v10815, %v10813
        %v10932 = vpack.c.b16 %v10818, %v10816
        %v10933 = vpack.c.b16 %v10819, %v10817
        %v10934 = vpack.c.b16 %v10822, %v10820
        %v10935 = vpack.c.b16 %v10823, %v10821
        %v10936 = vpack.c.b16 %v10826, %v10824
        %v10937 = vpack.c.b16 %v10827, %v10825
        %v10938 = vpack.c.b16 %v10830, %v10828
        %v10939 = vpack.c.b16 %v10831, %v10829
        %v10940 = vpack.c.b16 %v10834, %v10832
        %v10941 = vpack.c.b16 %v10835, %v10833
        %v10942 = vpack.c.b16 %v10838, %v10836
        %v10943 = vpack.c.b16 %v10839, %v10837
        %v10944 = vpack.c.b16 %v10842, %v10840
        %v10945 = vpack.c.b16 %v10843, %v10841
        %v10946 = vpack.c.b16 %v10846, %v10844
        %v10947 = vpack.c.b16 %v10847, %v10845
        %v10948 = vpack.c.b16 %v10850, %v10848
        %v10949 = vpack.c.b16 %v10851, %v10849
        %v10950 = vpack.c.b16 %v10854, %v10852
        %v10951 = vpack.c.b16 %v10855, %v10853
        %v10952 = vpack.c.b16 %v10858, %v10856
        %v10953 = vpack.c.b16 %v10859, %v10857
        %v10954 = vpack.c.b16 %v10862, %v10860
        %v10955 = vpack.c.b16 %v10863, %v10861
        %v10956 = vpack.c.b16 %v10866, %v10864
        %v10957 = vpack.c.b16 %v10867, %v10865
        %v10958 = vpack.c.b16 %v10870, %v10868
        %v10959 = vpack.c.b16 %v10871, %v10869
        %v10960 = vpack.c.b16 %v10874, %v10872
        %v10961 = vpack.c.b16 %v10875, %v10873
        %v10962 = vpack.c.b16 %v10878, %v10876
        %v10963 = vpack.c.b16 %v10879, %v10877
        %v10964 = vpack.c.b16 %v10882, %v10880
        %v10965 = vpack.c.b16 %v10883, %v10881
        %v10966 = vpack.c.b16 %v10886, %v10884
        %v10967 = vpack.c.b16 %v10887, %v10885
        %v10968 = vpack.c.b16 %v10890, %v10888
        %v10969 = vpack.c.b16 %v10891, %v10889
        %v10970 = vpack.c.b16 %v10894, %v10892
        %v10971 = vpack.c.b16 %v10895, %v10893
        %v10972 = vpack.c.b16 %v10898, %v10896
        %v10973 = vpack.c.b16 %v10899, %v10897
        %v10974 = vpack.c.b16 %v10902, %v10900
        %v10975 = vpack.c.b16 %v10903, %v10901
        %v10976 = vpack.c.b16 %v10906, %v10904
        %v10977 = vpack.c.b16 %v10907, %v10905
        %v10978 = vpack.c.b16 %v10910, %v10908
        %v10979 = vpack.c.b16 %v10911, %v10909
        %v10980 = vpack.c.b16 %v10914, %v10912
        %v10981 = vpack.c.b16 %v10915, %v10913
        %v10982 = vpack.c.b16 %v10918, %v10916
        %v10983 = vpack.c.b16 %v10919, %v10917
        %11048 = vmatprep.subr.bf16.mxu0 %v10921
        %11049 = vmatpush1.bf16.msra.mxu0 %v10920
        %11050 = vmatprep.subr.bf16.mxu0 %v10923
        %11051 = vmatpush1.bf16.msra.mxu0 %v10922
        %11052 = vmatprep.subr.bf16.mxu0 %v10925
        %11053 = vmatpush1.bf16.msra.mxu0 %v10924
        %11054 = vmatprep.subr.bf16.mxu0 %v10927
        %11055 = vmatpush1.bf16.msra.mxu0 %v10926
        %11056 = vmatprep.subr.bf16.mxu0 %v10929
        %11057 = vmatpush1.bf16.msra.mxu0 %v10928
        %11058 = vmatprep.subr.bf16.mxu0 %v10931
        %11059 = vmatpush1.bf16.msra.mxu0 %v10930
        %11060 = vmatprep.subr.bf16.mxu0 %v10933
        %11061 = vmatpush1.bf16.msra.mxu0 %v10932
        %11062 = vmatprep.subr.bf16.mxu0 %v10935
        %11063 = vmatpush1.bf16.msra.mxu0 %v10934
        %11064 = vmatprep.subr.bf16.mxu0 %v10937
        %11065 = vmatpush1.bf16.msra.mxu0 %v10936
        %11066 = vmatprep.subr.bf16.mxu0 %v10939
        %11067 = vmatpush1.bf16.msra.mxu0 %v10938
        %11068 = vmatprep.subr.bf16.mxu0 %v10941
        %11069 = vmatpush1.bf16.msra.mxu0 %v10940
        %11070 = vmatprep.subr.bf16.mxu0 %v10943
        %11071 = vmatpush1.bf16.msra.mxu0 %v10942
        %11072 = vmatprep.subr.bf16.mxu0 %v10945
        %11073 = vmatpush1.bf16.msra.mxu0 %v10944
        %11074 = vmatprep.subr.bf16.mxu0 %v10947
        %11075 = vmatpush1.bf16.msra.mxu0 %v10946
        %11076 = vmatprep.subr.bf16.mxu0 %v10949
        %11077 = vmatpush1.bf16.msra.mxu0 %v10948
        %11078 = vmatprep.subr.bf16.mxu0 %v10951
        %11079 = vmatpush1.bf16.msra.mxu0 %v10950
        %11080 = vmatprep.mubr.bf16.mxu0 %v10589
        %11081 = vmatmul.mubr.bf16.gmra.mrb[0].mxu0 %v10588
        %v11082 = vpop.f32.mrb[0].mxu0
        %v11083 = vadd.f32 %v10721, %v11082
        %v11084 = vpop.f32.mrb[0].mxu0
        %v11085 = vadd.f32 %v10725, %v11084
        %v11086 = vpop.f32.mrb[0].mxu0
        %v11087 = vadd.f32 %v10721, %v11086
        %v11088 = vpop.f32.mrb[0].mxu0
        %v11089 = vadd.f32 %v10725, %v11088
        %11090 = vmatprep.mubr.bf16.mxu0 %v10593
        %11091 = vmatmul.mubr.bf16.gmra.mrb[0].mxu0 %v10592
        %v11092 = vpop.f32.mrb[0].mxu0
        %v11093 = vadd.f32 %v10721, %v11092
        %v11094 = vpop.f32.mrb[0].mxu0
        %v11095 = vadd.f32 %v10725, %v11094
        %v11096 = vpop.f32.mrb[0].mxu0
        %v11097 = vadd.f32 %v10721, %v11096
        %v11098 = vpop.f32.mrb[0].mxu0
        %v11099 = vadd.f32 %v10725, %v11098
        %11100 = vmatprep.mubr.bf16.mxu0 %v10597
        %11101 = vmatmul.mubr.bf16.gmra.mrb[0].mxu0 %v10596
        %v11102 = vpop.f32.mrb[0].mxu0
        %v11103 = vadd.f32 %v10721, %v11102
        %v11104 = vpop.f32.mrb[0].mxu0
        %v11105 = vadd.f32 %v10725, %v11104
        %v11106 = vpop.f32.mrb[0].mxu0
        %v11107 = vadd.f32 %v10721, %v11106
        %v11108 = vpop.f32.mrb[0].mxu0
        %v11109 = vadd.f32 %v10725, %v11108
        %11110 = vmatprep.mubr.bf16.mxu0 %v10601
        %11111 = vmatmul.mubr.bf16.gmra.mrb[0].mxu0 %v10600
        %v11112 = vpop.f32.mrb[0].mxu0
        %v11113 = vadd.f32 %v10721, %v11112
        %v11114 = vpop.f32.mrb[0].mxu0
        %v11115 = vadd.f32 %v10725, %v11114
        %v11116 = vpop.f32.mrb[0].mxu0
        %v11117 = vadd.f32 %v10721, %v11116
        %v11118 = vpop.f32.mrb[0].mxu0
        %v11119 = vadd.f32 %v10725, %v11118
        %11120 = vmatprep.mubr.bf16.mxu0 %v10605
        %11121 = vmatmul.mubr.bf16.gmra.mrb[0].mxu0 %v10604
        %v11122 = vpop.f32.mrb[0].mxu0
        %v11123 = vadd.f32 %v10721, %v11122
        %v11124 = vpop.f32.mrb[0].mxu0
        %v11125 = vadd.f32 %v10725, %v11124
        %v11126 = vpop.f32.mrb[0].mxu0
        %v11127 = vadd.f32 %v10721, %v11126
        %v11128 = vpop.f32.mrb[0].mxu0
        %v11129 = vadd.f32 %v10725, %v11128
        %11130 = vmatprep.mubr.bf16.mxu0 %v10609
        %11131 = vmatmul.mubr.bf16.gmra.mrb[0].mxu0 %v10608
        %v11132 = vpop.f32.mrb[0].mxu0
        %v11133 = vadd.f32 %v10721, %v11132
        %v11134 = vpop.f32.mrb[0].mxu0
        %v11135 = vadd.f32 %v10725, %v11134
        %v11136 = vpop.f32.mrb[0].mxu0
        %v11137 = vadd.f32 %v10721, %v11136
        %v11138 = vpop.f32.mrb[0].mxu0
        %v11139 = vadd.f32 %v10725, %v11138
        %11140 = vmatprep.mubr.bf16.mxu0 %v10613
        %11141 = vmatmul.mubr.bf16.gmra.mrb[0].mxu0 %v10612
        %v11142 = vpop.f32.mrb[0].mxu0
        %v11143 = vadd.f32 %v10721, %v11142
        %v11144 = vpop.f32.mrb[0].mxu0
        %v11145 = vadd.f32 %v10725, %v11144
        %v11146 = vpop.f32.mrb[0].mxu0
        %v11147 = vadd.f32 %v10721, %v11146
        %v11148 = vpop.f32.mrb[0].mxu0
        %v11149 = vadd.f32 %v10725, %v11148
        %11150 = vmatprep.mubr.bf16.mxu0 %v10617
        %11151 = vmatmul.mubr.bf16.gmra.mrb[0].mxu0 %v10616
        %v11152 = vpop.f32.mrb[0].mxu0
        %v11153 = vadd.f32 %v10721, %v11152
        %v11154 = vpop.f32.mrb[0].mxu0
        %v11155 = vadd.f32 %v10725, %v11154
        %v11156 = vpop.f32.mrb[0].mxu0
        %v11157 = vadd.f32 %v10721, %v11156
        %v11158 = vpop.f32.mrb[0].mxu0
        %v11159 = vadd.f32 %v10725, %v11158
        %11160 = vmatprep.mubr.bf16.mxu0 %v10621
        %11161 = vmatmul.mubr.bf16.gmra.mrb[0].mxu0 %v10620
        %v11162 = vpop.f32.mrb[0].mxu0
        %v11163 = vadd.f32 %v10721, %v11162
        %v11164 = vpop.f32.mrb[0].mxu0
        %v11165 = vadd.f32 %v10725, %v11164
        %v11166 = vpop.f32.mrb[0].mxu0
        %v11167 = vadd.f32 %v10721, %v11166
        %v11168 = vpop.f32.mrb[0].mxu0
        %v11169 = vadd.f32 %v10725, %v11168
        %11170 = vmatprep.mubr.bf16.mxu0 %v10625
        %11171 = vmatmul.mubr.bf16.gmra.mrb[0].mxu0 %v10624
        %v11172 = vpop.f32.mrb[0].mxu0
        %v11173 = vadd.f32 %v10721, %v11172
        %v11174 = vpop.f32.mrb[0].mxu0
        %v11175 = vadd.f32 %v10725, %v11174
        %v11176 = vpop.f32.mrb[0].mxu0
        %v11177 = vadd.f32 %v10721, %v11176
        %v11178 = vpop.f32.mrb[0].mxu0
        %v11179 = vadd.f32 %v10725, %v11178
        %11180 = vmatprep.mubr.bf16.mxu0 %v10629
        %11181 = vmatmul.mubr.bf16.gmra.mrb[0].mxu0 %v10628
        %v11182 = vpop.f32.mrb[0].mxu0
        %v11183 = vadd.f32 %v10721, %v11182
        %v11184 = vpop.f32.mrb[0].mxu0
        %v11185 = vadd.f32 %v10725, %v11184
        %v11186 = vpop.f32.mrb[0].mxu0
        %v11187 = vadd.f32 %v10721, %v11186
        %v11188 = vpop.f32.mrb[0].mxu0
        %v11189 = vadd.f32 %v10725, %v11188
        %11190 = vmatprep.mubr.bf16.mxu0 %v10633
        %11191 = vmatmul.mubr.bf16.gmra.mrb[0].mxu0 %v10632
        %v11192 = vpop.f32.mrb[0].mxu0
        %v11193 = vadd.f32 %v10721, %v11192
        %v11194 = vpop.f32.mrb[0].mxu0
        %v11195 = vadd.f32 %v10725, %v11194
        %v11196 = vpop.f32.mrb[0].mxu0
        %v11197 = vadd.f32 %v10721, %v11196
        %v11198 = vpop.f32.mrb[0].mxu0
        %v11199 = vadd.f32 %v10725, %v11198
        %11200 = vmatprep.mubr.bf16.mxu0 %v10637
        %11201 = vmatmul.mubr.bf16.gmra.mrb[0].mxu0 %v10636
        %v11202 = vpop.f32.mrb[0].mxu0
        %v11203 = vadd.f32 %v10721, %v11202
        %v11204 = vpop.f32.mrb[0].mxu0
        %v11205 = vadd.f32 %v10725, %v11204
        %v11206 = vpop.f32.mrb[0].mxu0
        %v11207 = vadd.f32 %v10721, %v11206
        %v11208 = vpop.f32.mrb[0].mxu0
        %v11209 = vadd.f32 %v10725, %v11208
        %11210 = vmatprep.mubr.bf16.mxu0 %v10641
        %11211 = vmatmul.mubr.bf16.gmra.mrb[0].mxu0 %v10640
        %v11212 = vpop.f32.mrb[0].mxu0
        %v11213 = vadd.f32 %v10721, %v11212
        %v11214 = vpop.f32.mrb[0].mxu0
        %v11215 = vadd.f32 %v10725, %v11214
        %v11216 = vpop.f32.mrb[0].mxu0
        %v11217 = vadd.f32 %v10721, %v11216
        %v11218 = vpop.f32.mrb[0].mxu0
        %v11219 = vadd.f32 %v10725, %v11218
        %11220 = vmatprep.mubr.bf16.mxu0 %v10645
        %11221 = vmatmul.mubr.bf16.gmra.mrb[0].mxu0 %v10644
        %v11222 = vpop.f32.mrb[0].mxu0
        %v11223 = vadd.f32 %v10721, %v11222
        %v11224 = vpop.f32.mrb[0].mxu0
        %v11225 = vadd.f32 %v10725, %v11224
        %v11226 = vpop.f32.mrb[0].mxu0
        %v11227 = vadd.f32 %v10721, %v11226
        %v11228 = vpop.f32.mrb[0].mxu0
        %v11229 = vadd.f32 %v10725, %v11228
        %11230 = vmatprep.mubr.bf16.mxu0 %v10649
        %11231 = vmatmul.mubr.bf16.gmra.mrb[0].mxu0 %v10648
        %v11232 = vpop.f32.mrb[0].mxu0
        %v11233 = vadd.f32 %v10721, %v11232
        %v11234 = vpop.f32.mrb[0].mxu0
        %v11235 = vadd.f32 %v10725, %v11234
        %v11236 = vpop.f32.mrb[0].mxu0
        %v11237 = vadd.f32 %v10721, %v11236
        %v11238 = vpop.f32.mrb[0].mxu0
        %v11239 = vadd.f32 %v10725, %v11238
        %11240 = vdwg.mxu0
        %11241 = vmatprep.subr.bf16.mxu0 %v10953
        %11242 = vmatpush1.bf16.msra.mxu0 %v10952
        %11243 = vmatprep.subr.bf16.mxu0 %v10955
        %11244 = vmatpush1.bf16.msra.mxu0 %v10954
        %11245 = vmatprep.subr.bf16.mxu0 %v10957
        %11246 = vmatpush1.bf16.msra.mxu0 %v10956
        %11247 = vmatprep.subr.bf16.mxu0 %v10959
        %11248 = vmatpush1.bf16.msra.mxu0 %v10958
        %11249 = vmatprep.subr.bf16.mxu0 %v10961
        %11250 = vmatpush1.bf16.msra.mxu0 %v10960
        %11251 = vmatprep.subr.bf16.mxu0 %v10963
        %11252 = vmatpush1.bf16.msra.mxu0 %v10962
        %11253 = vmatprep.subr.bf16.mxu0 %v10965
        %11254 = vmatpush1.bf16.msra.mxu0 %v10964
        %11255 = vmatprep.subr.bf16.mxu0 %v10967
        %11256 = vmatpush1.bf16.msra.mxu0 %v10966
        %11257 = vmatprep.subr.bf16.mxu0 %v10969
        %11258 = vmatpush1.bf16.msra.mxu0 %v10968
        %11259 = vmatprep.subr.bf16.mxu0 %v10971
        %11260 = vmatpush1.bf16.msra.mxu0 %v10970
        %11261 = vmatprep.subr.bf16.mxu0 %v10973
        %11262 = vmatpush1.bf16.msra.mxu0 %v10972
        %11263 = vmatprep.subr.bf16.mxu0 %v10975
        %11264 = vmatpush1.bf16.msra.mxu0 %v10974
        %11265 = vmatprep.subr.bf16.mxu0 %v10977
        %11266 = vmatpush1.bf16.msra.mxu0 %v10976
        %11267 = vmatprep.subr.bf16.mxu0 %v10979
        %11268 = vmatpush1.bf16.msra.mxu0 %v10978
        %11269 = vmatprep.subr.bf16.mxu0 %v10981
        %11270 = vmatpush1.bf16.msra.mxu0 %v10980
        %11271 = vmatprep.subr.bf16.mxu0 %v10983
        %11272 = vmatpush1.bf16.msra.mxu0 %v10982
        %11273 = vmatprep.mubr.bf16.mxu0 %v10591
        %11274 = vmatmul.mubr.bf16.gmra.mrb[0].mxu0 %v10590
        %v11275 = vpop.f32.mrb[0].mxu0
        %v11276 = vadd.f32 %v11083, %v11275
        %v11277 = vpop.f32.mrb[0].mxu0
        %v11278 = vadd.f32 %v11085, %v11277
        %v11279 = vpop.f32.mrb[0].mxu0
        %v11280 = vadd.f32 %v11087, %v11279
        %v11281 = vpop.f32.mrb[0].mxu0
        %v11282 = vadd.f32 %v11089, %v11281
        %11283 = vmatprep.mubr.bf16.mxu0 %v10595
        %11284 = vmatmul.mubr.bf16.gmra.mrb[0].mxu0 %v10594
        %v11285 = vpop.f32.mrb[0].mxu0
        %v11286 = vadd.f32 %v11093, %v11285
        %v11287 = vpop.f32.mrb[0].mxu0
        %v11288 = vadd.f32 %v11095, %v11287
        %v11289 = vpop.f32.mrb[0].mxu0
        %v11290 = vadd.f32 %v11097, %v11289
        %v11291 = vpop.f32.mrb[0].mxu0
        %v11292 = vadd.f32 %v11099, %v11291
        %11293 = vmatprep.mubr.bf16.mxu0 %v10599
        %11294 = vmatmul.mubr.bf16.gmra.mrb[0].mxu0 %v10598
        %v11295 = vpop.f32.mrb[0].mxu0
        %v11296 = vadd.f32 %v11103, %v11295
        %v11297 = vpop.f32.mrb[0].mxu0
        %v11298 = vadd.f32 %v11105, %v11297
        %v11299 = vpop.f32.mrb[0].mxu0
        %v11300 = vadd.f32 %v11107, %v11299
        %v11301 = vpop.f32.mrb[0].mxu0
        %v11302 = vadd.f32 %v11109, %v11301
        %11303 = vmatprep.mubr.bf16.mxu0 %v10603
        %11304 = vmatmul.mubr.bf16.gmra.mrb[0].mxu0 %v10602
        %v11305 = vpop.f32.mrb[0].mxu0
        %v11306 = vadd.f32 %v11113, %v11305
        %v11307 = vpop.f32.mrb[0].mxu0
        %v11308 = vadd.f32 %v11115, %v11307
        %v11309 = vpop.f32.mrb[0].mxu0
        %v11310 = vadd.f32 %v11117, %v11309
        %v11311 = vpop.f32.mrb[0].mxu0
        %v11312 = vadd.f32 %v11119, %v11311
        %11313 = vmatprep.mubr.bf16.mxu0 %v10607
        %11314 = vmatmul.mubr.bf16.gmra.mrb[0].mxu0 %v10606
        %v11315 = vpop.f32.mrb[0].mxu0
        %v11316 = vadd.f32 %v11123, %v11315
        %v11317 = vpop.f32.mrb[0].mxu0
        %v11318 = vadd.f32 %v11125, %v11317
        %v11319 = vpop.f32.mrb[0].mxu0
        %v11320 = vadd.f32 %v11127, %v11319
        %v11321 = vpop.f32.mrb[0].mxu0
        %v11322 = vadd.f32 %v11129, %v11321
        %11323 = vmatprep.mubr.bf16.mxu0 %v10611
        %11324 = vmatmul.mubr.bf16.gmra.mrb[0].mxu0 %v10610
        %v11325 = vpop.f32.mrb[0].mxu0
        %v11326 = vadd.f32 %v11133, %v11325
        %v11327 = vpop.f32.mrb[0].mxu0
        %v11328 = vadd.f32 %v11135, %v11327
        %v11329 = vpop.f32.mrb[0].mxu0
        %v11330 = vadd.f32 %v11137, %v11329
        %v11331 = vpop.f32.mrb[0].mxu0
        %v11332 = vadd.f32 %v11139, %v11331
        %11333 = vmatprep.mubr.bf16.mxu0 %v10615
        %11334 = vmatmul.mubr.bf16.gmra.mrb[0].mxu0 %v10614
        %v11335 = vpop.f32.mrb[0].mxu0
        %v11336 = vadd.f32 %v11143, %v11335
        %v11337 = vpop.f32.mrb[0].mxu0
        %v11338 = vadd.f32 %v11145, %v11337
        %v11339 = vpop.f32.mrb[0].mxu0
        %v11340 = vadd.f32 %v11147, %v11339
        %v11341 = vpop.f32.mrb[0].mxu0
        %v11342 = vadd.f32 %v11149, %v11341
        %11343 = vmatprep.mubr.bf16.mxu0 %v10619
        %11344 = vmatmul.mubr.bf16.gmra.mrb[0].mxu0 %v10618
        %v11345 = vpop.f32.mrb[0].mxu0
        %v11346 = vadd.f32 %v11153, %v11345
        %v11347 = vpop.f32.mrb[0].mxu0
        %v11348 = vadd.f32 %v11155, %v11347
        %v11349 = vpop.f32.mrb[0].mxu0
        %v11350 = vadd.f32 %v11157, %v11349
        %v11351 = vpop.f32.mrb[0].mxu0
        %v11352 = vadd.f32 %v11159, %v11351
        %11353 = vmatprep.mubr.bf16.mxu0 %v10623
        %11354 = vmatmul.mubr.bf16.gmra.mrb[0].mxu0 %v10622
        %v11355 = vpop.f32.mrb[0].mxu0
        %v11356 = vadd.f32 %v11163, %v11355
        %v11357 = vpop.f32.mrb[0].mxu0
        %v11358 = vadd.f32 %v11165, %v11357
        %v11359 = vpop.f32.mrb[0].mxu0
        %v11360 = vadd.f32 %v11167, %v11359
        %v11361 = vpop.f32.mrb[0].mxu0
        %v11362 = vadd.f32 %v11169, %v11361
        %11363 = vmatprep.mubr.bf16.mxu0 %v10627
        %11364 = vmatmul.mubr.bf16.gmra.mrb[0].mxu0 %v10626
        %v11365 = vpop.f32.mrb[0].mxu0
        %v11366 = vadd.f32 %v11173, %v11365
        %v11367 = vpop.f32.mrb[0].mxu0
        %v11368 = vadd.f32 %v11175, %v11367
        %v11369 = vpop.f32.mrb[0].mxu0
        %v11370 = vadd.f32 %v11177, %v11369
        %v11371 = vpop.f32.mrb[0].mxu0
        %v11372 = vadd.f32 %v11179, %v11371
        %11373 = vmatprep.mubr.bf16.mxu0 %v10631
        %11374 = vmatmul.mubr.bf16.gmra.mrb[0].mxu0 %v10630
        %v11375 = vpop.f32.mrb[0].mxu0
        %v11376 = vadd.f32 %v11183, %v11375
        %v11377 = vpop.f32.mrb[0].mxu0
        %v11378 = vadd.f32 %v11185, %v11377
        %v11379 = vpop.f32.mrb[0].mxu0
        %v11380 = vadd.f32 %v11187, %v11379
        %v11381 = vpop.f32.mrb[0].mxu0
        %v11382 = vadd.f32 %v11189, %v11381
        %11383 = vmatprep.mubr.bf16.mxu0 %v10635
        %11384 = vmatmul.mubr.bf16.gmra.mrb[0].mxu0 %v10634
        %v11385 = vpop.f32.mrb[0].mxu0
        %v11386 = vadd.f32 %v11193, %v11385
        %v11387 = vpop.f32.mrb[0].mxu0
        %v11388 = vadd.f32 %v11195, %v11387
        %v11389 = vpop.f32.mrb[0].mxu0
        %v11390 = vadd.f32 %v11197, %v11389
        %v11391 = vpop.f32.mrb[0].mxu0
        %v11392 = vadd.f32 %v11199, %v11391
        %11393 = vmatprep.mubr.bf16.mxu0 %v10639
        %11394 = vmatmul.mubr.bf16.gmra.mrb[0].mxu0 %v10638
        %v11395 = vpop.f32.mrb[0].mxu0
        %v11396 = vadd.f32 %v11203, %v11395
        %v11397 = vpop.f32.mrb[0].mxu0
        %v11398 = vadd.f32 %v11205, %v11397
        %v11399 = vpop.f32.mrb[0].mxu0
        %v11400 = vadd.f32 %v11207, %v11399
        %v11401 = vpop.f32.mrb[0].mxu0
        %v11402 = vadd.f32 %v11209, %v11401
        %11403 = vmatprep.mubr.bf16.mxu0 %v10643
        %11404 = vmatmul.mubr.bf16.gmra.mrb[0].mxu0 %v10642
        %v11405 = vpop.f32.mrb[0].mxu0
        %v11406 = vadd.f32 %v11213, %v11405
        %v11407 = vpop.f32.mrb[0].mxu0
        %v11408 = vadd.f32 %v11215, %v11407
        %v11409 = vpop.f32.mrb[0].mxu0
        %v11410 = vadd.f32 %v11217, %v11409
        %v11411 = vpop.f32.mrb[0].mxu0
        %v11412 = vadd.f32 %v11219, %v11411
        %11413 = vmatprep.mubr.bf16.mxu0 %v10647
        %11414 = vmatmul.mubr.bf16.gmra.mrb[0].mxu0 %v10646
        %v11415 = vpop.f32.mrb[0].mxu0
        %v11416 = vadd.f32 %v11223, %v11415
        %v11417 = vpop.f32.mrb[0].mxu0
        %v11418 = vadd.f32 %v11225, %v11417
        %v11419 = vpop.f32.mrb[0].mxu0
        %v11420 = vadd.f32 %v11227, %v11419
        %v11421 = vpop.f32.mrb[0].mxu0
        %v11422 = vadd.f32 %v11229, %v11421
        %11423 = vmatprep.mubr.bf16.mxu0 %v10651
        %11424 = vmatmul.mubr.bf16.gmra.mrb[0].mxu0 %v10650
        %v11425 = vpop.f32.mrb[0].mxu0
        %v11426 = vadd.f32 %v11233, %v11425
        %v11427 = vpop.f32.mrb[0].mxu0
        %v11428 = vadd.f32 %v11235, %v11427
        %v11429 = vpop.f32.mrb[0].mxu0
        %v11430 = vadd.f32 %v11237, %v11429
        %v11431 = vpop.f32.mrb[0].mxu0
        %v11432 = vadd.f32 %v11239, %v11431
        %11433 = vdwg.mxu0
        %vm11434 = vcmp.gt.f32.partialorder %v11276, 0.0
        %vm11435 = vcmp.gt.f32.partialorder %v11278, 0.0
        %vm11436 = vcmp.gt.f32.partialorder %v11280, 0.0
        %vm11437 = vcmp.gt.f32.partialorder %v11282, 0.0
        %vm11438 = vcmp.gt.f32.partialorder %v11286, 0.0
        %vm11439 = vcmp.gt.f32.partialorder %v11288, 0.0
        %vm11440 = vcmp.gt.f32.partialorder %v11290, 0.0
        %vm11441 = vcmp.gt.f32.partialorder %v11292, 0.0
        %vm11442 = vcmp.gt.f32.partialorder %v11296, 0.0
        %vm11443 = vcmp.gt.f32.partialorder %v11298, 0.0
        %vm11444 = vcmp.gt.f32.partialorder %v11300, 0.0
        %vm11445 = vcmp.gt.f32.partialorder %v11302, 0.0
        %vm11446 = vcmp.gt.f32.partialorder %v11306, 0.0
        %vm11447 = vcmp.gt.f32.partialorder %v11308, 0.0
        %vm11448 = vcmp.gt.f32.partialorder %v11310, 0.0
        %vm11449 = vcmp.gt.f32.partialorder %v11312, 0.0
        %vm11450 = vcmp.gt.f32.partialorder %v11316, 0.0
        %vm11451 = vcmp.gt.f32.partialorder %v11318, 0.0
        %vm11452 = vcmp.gt.f32.partialorder %v11320, 0.0
        %vm11453 = vcmp.gt.f32.partialorder %v11322, 0.0
        %vm11454 = vcmp.gt.f32.partialorder %v11326, 0.0
        %vm11455 = vcmp.gt.f32.partialorder %v11328, 0.0
        %vm11456 = vcmp.gt.f32.partialorder %v11330, 0.0
        %vm11457 = vcmp.gt.f32.partialorder %v11332, 0.0
        %vm11458 = vcmp.gt.f32.partialorder %v11336, 0.0
        %vm11459 = vcmp.gt.f32.partialorder %v11338, 0.0
        %vm11460 = vcmp.gt.f32.partialorder %v11340, 0.0
        %vm11461 = vcmp.gt.f32.partialorder %v11342, 0.0
        %vm11462 = vcmp.gt.f32.partialorder %v11346, 0.0
        %vm11463 = vcmp.gt.f32.partialorder %v11348, 0.0
        %vm11464 = vcmp.gt.f32.partialorder %v11350, 0.0
        %vm11465 = vcmp.gt.f32.partialorder %v11352, 0.0
        %vm11466 = vcmp.gt.f32.partialorder %v11356, 0.0
        %vm11467 = vcmp.gt.f32.partialorder %v11358, 0.0
        %vm11468 = vcmp.gt.f32.partialorder %v11360, 0.0
        %vm11469 = vcmp.gt.f32.partialorder %v11362, 0.0
        %vm11470 = vcmp.gt.f32.partialorder %v11366, 0.0
        %vm11471 = vcmp.gt.f32.partialorder %v11368, 0.0
        %vm11472 = vcmp.gt.f32.partialorder %v11370, 0.0
        %vm11473 = vcmp.gt.f32.partialorder %v11372, 0.0
        %vm11474 = vcmp.gt.f32.partialorder %v11376, 0.0
        %vm11475 = vcmp.gt.f32.partialorder %v11378, 0.0
        %vm11476 = vcmp.gt.f32.partialorder %v11380, 0.0
        %vm11477 = vcmp.gt.f32.partialorder %v11382, 0.0
        %vm11478 = vcmp.gt.f32.partialorder %v11386, 0.0
        %vm11479 = vcmp.gt.f32.partialorder %v11388, 0.0
        %vm11480 = vcmp.gt.f32.partialorder %v11390, 0.0
        %vm11481 = vcmp.gt.f32.partialorder %v11392, 0.0
        %vm11482 = vcmp.gt.f32.partialorder %v11396, 0.0
        %vm11483 = vcmp.gt.f32.partialorder %v11398, 0.0
        %vm11484 = vcmp.gt.f32.partialorder %v11400, 0.0
        %vm11485 = vcmp.gt.f32.partialorder %v11402, 0.0
        %vm11486 = vcmp.gt.f32.partialorder %v11406, 0.0
        %vm11487 = vcmp.gt.f32.partialorder %v11408, 0.0
        %vm11488 = vcmp.gt.f32.partialorder %v11410, 0.0
        %vm11489 = vcmp.gt.f32.partialorder %v11412, 0.0
        %vm11490 = vcmp.gt.f32.partialorder %v11416, 0.0
        %vm11491 = vcmp.gt.f32.partialorder %v11418, 0.0
        %vm11492 = vcmp.gt.f32.partialorder %v11420, 0.0
        %vm11493 = vcmp.gt.f32.partialorder %v11422, 0.0
        %vm11494 = vcmp.gt.f32.partialorder %v11426, 0.0
        %vm11495 = vcmp.gt.f32.partialorder %v11428, 0.0
        %vm11496 = vcmp.gt.f32.partialorder %v11430, 0.0
        %vm11497 = vcmp.gt.f32.partialorder %v11432, 0.0
        %v11498 = vmul.f32 %v11276, 0.2
        %v11499 = vmul.f32 %v11278, 0.2
        %v11500 = vmul.f32 %v11280, 0.2
        %v11501 = vmul.f32 %v11282, 0.2
        %v11502 = vmul.f32 %v11286, 0.2
        %v11503 = vmul.f32 %v11288, 0.2
        %v11504 = vmul.f32 %v11290, 0.2
        %v11505 = vmul.f32 %v11292, 0.2
        %v11506 = vmul.f32 %v11296, 0.2
        %v11507 = vmul.f32 %v11298, 0.2
        %v11508 = vmul.f32 %v11300, 0.2
        %v11509 = vmul.f32 %v11302, 0.2
        %v11510 = vmul.f32 %v11306, 0.2
        %v11511 = vmul.f32 %v11308, 0.2
        %v11512 = vmul.f32 %v11310, 0.2
        %v11513 = vmul.f32 %v11312, 0.2
        %v11514 = vmul.f32 %v11316, 0.2
        %v11515 = vmul.f32 %v11318, 0.2
        %v11516 = vmul.f32 %v11320, 0.2
        %v11517 = vmul.f32 %v11322, 0.2
        %v11518 = vmul.f32 %v11326, 0.2
        %v11519 = vmul.f32 %v11328, 0.2
        %v11520 = vmul.f32 %v11330, 0.2
        %v11521 = vmul.f32 %v11332, 0.2
        %v11522 = vmul.f32 %v11336, 0.2
        %v11523 = vmul.f32 %v11338, 0.2
        %v11524 = vmul.f32 %v11340, 0.2
        %v11525 = vmul.f32 %v11342, 0.2
        %v11526 = vmul.f32 %v11346, 0.2
        %v11527 = vmul.f32 %v11348, 0.2
        %v11528 = vmul.f32 %v11350, 0.2
        %v11529 = vmul.f32 %v11352, 0.2
        %v11530 = vmul.f32 %v11356, 0.2
        %v11531 = vmul.f32 %v11358, 0.2
        %v11532 = vmul.f32 %v11360, 0.2
        %v11533 = vmul.f32 %v11362, 0.2
        %v11534 = vmul.f32 %v11366, 0.2
        %v11535 = vmul.f32 %v11368, 0.2
        %v11536 = vmul.f32 %v11370, 0.2
        %v11537 = vmul.f32 %v11372, 0.2
        %v11538 = vmul.f32 %v11376, 0.2
        %v11539 = vmul.f32 %v11378, 0.2
        %v11540 = vmul.f32 %v11380, 0.2
        %v11541 = vmul.f32 %v11382, 0.2
        %v11542 = vmul.f32 %v11386, 0.2
        %v11543 = vmul.f32 %v11388, 0.2
        %v11544 = vmul.f32 %v11390, 0.2
        %v11545 = vmul.f32 %v11392, 0.2
        %v11546 = vmul.f32 %v11396, 0.2
        %v11547 = vmul.f32 %v11398, 0.2
        %v11548 = vmul.f32 %v11400, 0.2
        %v11549 = vmul.f32 %v11402, 0.2
        %v11550 = vmul.f32 %v11406, 0.2
        %v11551 = vmul.f32 %v11408, 0.2
        %v11552 = vmul.f32 %v11410, 0.2
        %v11553 = vmul.f32 %v11412, 0.2
        %v11554 = vmul.f32 %v11416, 0.2
        %v11555 = vmul.f32 %v11418, 0.2
        %v11556 = vmul.f32 %v11420, 0.2
        %v11557 = vmul.f32 %v11422, 0.2
        %v11558 = vmul.f32 %v11426, 0.2
        %v11559 = vmul.f32 %v11428, 0.2
        %v11560 = vmul.f32 %v11430, 0.2
        %v11561 = vmul.f32 %v11432, 0.2
        %v11562 = vsel %vm11434, %v11276, %v11498
        %v11563 = vsel %vm11435, %v11278, %v11499
        %v11564 = vsel %vm11436, %v11280, %v11500
        %v11565 = vsel %vm11437, %v11282, %v11501
        %v11566 = vsel %vm11438, %v11286, %v11502
        %v11567 = vsel %vm11439, %v11288, %v11503
        %v11568 = vsel %vm11440, %v11290, %v11504
        %v11569 = vsel %vm11441, %v11292, %v11505
        %v11570 = vsel %vm11442, %v11296, %v11506
        %v11571 = vsel %vm11443, %v11298, %v11507
        %v11572 = vsel %vm11444, %v11300, %v11508
        %v11573 = vsel %vm11445, %v11302, %v11509
        %v11574 = vsel %vm11446, %v11306, %v11510
        %v11575 = vsel %vm11447, %v11308, %v11511
        %v11576 = vsel %vm11448, %v11310, %v11512
        %v11577 = vsel %vm11449, %v11312, %v11513
        %v11578 = vsel %vm11450, %v11316, %v11514
        %v11579 = vsel %vm11451, %v11318, %v11515
        %v11580 = vsel %vm11452, %v11320, %v11516
        %v11581 = vsel %vm11453, %v11322, %v11517
        %v11582 = vsel %vm11454, %v11326, %v11518
        %v11583 = vsel %vm11455, %v11328, %v11519
        %v11584 = vsel %vm11456, %v11330, %v11520
        %v11585 = vsel %vm11457, %v11332, %v11521
        %v11586 = vsel %vm11458, %v11336, %v11522
        %v11587 = vsel %vm11459, %v11338, %v11523
        %v11588 = vsel %vm11460, %v11340, %v11524
        %v11589 = vsel %vm11461, %v11342, %v11525
        %v11590 = vsel %vm11462, %v11346, %v11526
        %v11591 = vsel %vm11463, %v11348, %v11527
        %v11592 = vsel %vm11464, %v11350, %v11528
        %v11593 = vsel %vm11465, %v11352, %v11529
        %v11594 = vsel %vm11466, %v11356, %v11530
        %v11595 = vsel %vm11467, %v11358, %v11531
        %v11596 = vsel %vm11468, %v11360, %v11532
        %v11597 = vsel %vm11469, %v11362, %v11533
        %v11598 = vsel %vm11470, %v11366, %v11534
        %v11599 = vsel %vm11471, %v11368, %v11535
        %v11600 = vsel %vm11472, %v11370, %v11536
        %v11601 = vsel %vm11473, %v11372, %v11537
        %v11602 = vsel %vm11474, %v11376, %v11538
        %v11603 = vsel %vm11475, %v11378, %v11539
        %v11604 = vsel %vm11476, %v11380, %v11540
        %v11605 = vsel %vm11477, %v11382, %v11541
        %v11606 = vsel %vm11478, %v11386, %v11542
        %v11607 = vsel %vm11479, %v11388, %v11543
        %v11608 = vsel %vm11480, %v11390, %v11544
        %v11609 = vsel %vm11481, %v11392, %v11545
        %v11610 = vsel %vm11482, %v11396, %v11546
        %v11611 = vsel %vm11483, %v11398, %v11547
        %v11612 = vsel %vm11484, %v11400, %v11548
        %v11613 = vsel %vm11485, %v11402, %v11549
        %v11614 = vsel %vm11486, %v11406, %v11550
        %v11615 = vsel %vm11487, %v11408, %v11551
        %v11616 = vsel %vm11488, %v11410, %v11552
        %v11617 = vsel %vm11489, %v11412, %v11553
        %v11618 = vsel %vm11490, %v11416, %v11554
        %v11619 = vsel %vm11491, %v11418, %v11555
        %v11620 = vsel %vm11492, %v11420, %v11556
        %v11621 = vsel %vm11493, %v11422, %v11557
        %v11622 = vsel %vm11494, %v11426, %v11558
        %v11623 = vsel %vm11495, %v11428, %v11559
        %v11624 = vsel %vm11496, %v11430, %v11560
        %v11625 = vsel %vm11497, %v11432, %v11561
        %v11626 = vld [vmem:[%s7] sm:$0x3]
        %v11627 = vpack.c.bf16 %v11564, %v11562
        %v11628 = vpack.c.bf16 %v11565, %v11563
        %v11629 = vpack.c.bf16 %v11568, %v11566
        %v11630 = vpack.c.bf16 %v11569, %v11567
        %v11631 = vpack.c.bf16 %v11572, %v11570
        %v11632 = vpack.c.bf16 %v11573, %v11571
        %v11633 = vpack.c.bf16 %v11576, %v11574
        %v11634 = vpack.c.bf16 %v11577, %v11575
        %v11635 = vpack.c.bf16 %v11580, %v11578
        %v11636 = vpack.c.bf16 %v11581, %v11579
        %v11637 = vpack.c.bf16 %v11584, %v11582
        %v11638 = vpack.c.bf16 %v11585, %v11583
        %v11639 = vpack.c.bf16 %v11588, %v11586
        %v11640 = vpack.c.bf16 %v11589, %v11587
        %v11641 = vpack.c.bf16 %v11592, %v11590
        %v11642 = vpack.c.bf16 %v11593, %v11591
        %v11643 = vpack.c.bf16 %v11596, %v11594
        %v11644 = vpack.c.bf16 %v11597, %v11595
        %v11645 = vpack.c.bf16 %v11600, %v11598
        %v11646 = vpack.c.bf16 %v11601, %v11599
        %v11647 = vpack.c.bf16 %v11604, %v11602
        %v11648 = vpack.c.bf16 %v11605, %v11603
        %v11649 = vpack.c.bf16 %v11608, %v11606
        %v11650 = vpack.c.bf16 %v11609, %v11607
        %v11651 = vpack.c.bf16 %v11612, %v11610
        %v11652 = vpack.c.bf16 %v11613, %v11611
        %v11653 = vpack.c.bf16 %v11616, %v11614
        %v11654 = vpack.c.bf16 %v11617, %v11615
        %v11655 = vpack.c.bf16 %v11620, %v11618
        %v11656 = vpack.c.bf16 %v11621, %v11619
        %v11657 = vpack.c.bf16 %v11624, %v11622
        %v11658 = vpack.c.bf16 %v11625, %v11623
        %s11659 = sld [smem:[#allocation2]]
        %v11660 = vstv %s11659
        %v11663 = vunpack.c.l.s4 1966171168
        %v11664 = vunpack.c.0.s8 %v11663
        %v11665 = vlaneseq
        %v11666 = vshrl.u32 %v11665, 7
        %v11667 = vsub.s32 %v11664, %v11666
        %v11668 = vrot.slane %v11626, %v11667
        %v11669 = vcombine.high %v11668, %v11668
        %v11671 = vunpack.c.l.s4 1966171168
        %v11672 = vunpack.c.0.s8 %v11671
        %v11673 = vlaneseq
        %v11674 = vshrl.u32 %v11673, 7
        %v11675 = vsub.s32 %v11672, %v11674
        %v11676 = vrot.slane %v11668, %v11675
        %v11678 = vunpack.c.l.s4 1966171168
        %v11679 = vunpack.c.0.s8 %v11678
        %v11680 = vlaneseq
        %v11681 = vshrl.u32 %v11680, 7
        %v11682 = vsub.s32 %v11679, %v11681
        %v11683 = vrot.slane %v11669, %v11682
        %11686 = vmatprep.subr.bf16.mxu0 %v11628
        %11687 = vmatpush1.bf16.xpose.msra.mxu0 %v11627
        %11688 = vmatprep.subr.bf16.mxu0 %v11630
        %11689 = vmatpush1.bf16.xpose.msra.mxu0 %v11629
        %11690 = vmatprep.subr.bf16.mxu0 %v11632
        %11691 = vmatpush1.bf16.xpose.msra.mxu0 %v11631
        %11692 = vmatprep.subr.bf16.mxu0 %v11634
        %11693 = vmatpush1.bf16.xpose.msra.mxu0 %v11633
        %11694 = vmatprep.subr.bf16.mxu0 %v11636
        %11695 = vmatpush1.bf16.xpose.msra.mxu0 %v11635
        %11696 = vmatprep.subr.bf16.mxu0 %v11638
        %11697 = vmatpush1.bf16.xpose.msra.mxu0 %v11637
        %11698 = vmatprep.subr.bf16.mxu0 %v11640
        %11699 = vmatpush1.bf16.xpose.msra.mxu0 %v11639
        %11700 = vmatprep.subr.bf16.mxu0 %v11642
        %11701 = vmatpush1.bf16.xpose.msra.mxu0 %v11641
        %11702 = vmatprep.subr.bf16.mxu0 %v11644
        %11703 = vmatpush1.bf16.xpose.msra.mxu0 %v11643
        %11704 = vmatprep.subr.bf16.mxu0 %v11646
        %11705 = vmatpush1.bf16.xpose.msra.mxu0 %v11645
        %11706 = vmatprep.subr.bf16.mxu0 %v11648
        %11707 = vmatpush1.bf16.xpose.msra.mxu0 %v11647
        %11708 = vmatprep.subr.bf16.mxu0 %v11650
        %11709 = vmatpush1.bf16.xpose.msra.mxu0 %v11649
        %11710 = vmatprep.subr.bf16.mxu0 %v11652
        %11711 = vmatpush1.bf16.xpose.msra.mxu0 %v11651
        %11712 = vmatprep.subr.bf16.mxu0 %v11654
        %11713 = vmatpush1.bf16.xpose.msra.mxu0 %v11653
        %11714 = vmatprep.subr.bf16.mxu0 %v11656
        %11715 = vmatpush1.bf16.xpose.msra.mxu0 %v11655
        %11716 = vmatprep.subr.bf16.mxu0 %v11658
        %11717 = vmatpush1.bf16.xpose.msra.mxu0 %v11657
        %11718 = vmatprep.mubr.bf16.mxu0 %v11683
        %11719 = vmatmul.mubr.bf16.gmra.mrb[0].mxu0 %v11676
        %v11720 = vpop.f32.mrb[0].mxu0
        %v11721 = vadd.f32 %v11660, %v11720
        %v11722 = vpop.f32.mrb[0].mxu0
        %v11723 = vadd.f32 %v11660, %v11722
        %v11724 = vpop.f32.mrb[0].mxu0
        %v11725 = vpop.f32.mrb[0].mxu0
        %11726 = vdwg.mxu0
        %v11727 = vand.u32 2147483647, %v11721
        %v11728 = vand.u32 2147483647, %v11723
        %v11729 = vsub.f32 0.0, %v11727
        %v11730 = vsub.f32 0.0, %v11728
        %v11731 = vmul.f32 %v11729, 1.442695
        %v11732 = vpow.pop %v11731
        %v11733 = vmul.f32 %v11730, 1.442695
        %v11734 = vpow.pop %v11733
        %vm11735 = vcmp.ge.f32.partialorder %v11721, 0.0
        %vm11736 = vcmp.ge.f32.partialorder %v11723, 0.0
        %v11737 = vadd.f32 %v11732, 1.0
        %v11738 = vadd.f32 %v11734, 1.0
        %v11739 = vrcp.pop %v11737
        %v11740 = vmul.f32 1.0, %v11739
        %v11741 = vrcp.pop %v11738
        %v11742 = vmul.f32 1.0, %v11741
        %v11743 = vmul.f32 %v11732, %v11739
        %v11744 = vmul.f32 %v11734, %v11741
        %v11745 = vsel %vm11735, %v11740, %v11743
        %v11746 = vsel %vm11736, %v11742, %v11744
        %v11749 = vcombine.low %v11745, %v11746
        %v11751 = vunpack.c.l.s4 1966171168
        %v11752 = vunpack.c.0.s8 %v11751
        %v11753 = vlaneseq
        %v11754 = vshrl.u32 %v11753, 7
        %v11755 = vsub.s32 %v11752, %v11754
        %v11756 = vrot.slane %v11749, %v11755
        %v11758 = vunpack.c.l.s4 1966171168
        %v11759 = vunpack.c.0.s8 %v11758
        %v11760 = vlaneseq
        %v11761 = vshrl.u32 %v11760, 7
        %v11762 = vsub.s32 %v11759, %v11761
        %v11763 = vrot.slane %v11756, %v11762
        %v11765 = vlaneseq
        %vm11766 = vcmp.ge.s32.totalorder %v11765, 0
        %vm11767 = vcmp.lt.s32.totalorder %v11765, 256
        %vm11768 = vmand %vm11766, %vm11767
        %11769 = vst.msk [vmem:[%s329] sm:$0x3] %vm11768, %v11763
        %s11770 = sand.u32 %s226, 1
        %s11771 = scalar_lea.sflag [#allocation4], %s11770
        %s11772 = sand.u32 %s226, 1
        %s11773 = smul.addr %s11772, 2
        %s11774 = scalar_lea.vmem [#allocation3], %s11773
        // Predicated region
        $region57: #{tpu_custom_call.1} parent=55 // pred_check
          %p11775 = pneg %p236
        $region58: #{tpu_custom_call.1} parent=55 // pred_check_branch
          %11777 = sbr.rel (%p11775) target = $region60
        $region59: #{tpu_custom_call.1} parent=55 // pred_region
          %s11778 = smul.u32 2, %s24
          %s11780 = ssub.s32 32, 32
          %11781 = vsyncadd %s11771, %s11780
          %s11782 = smul.addr %s11778, 16
          %s11783 = scalar_lea.hbm %s9, %s11782
          %s11785 = sshll.u32 %s11774, 4
          %s11786 = int_to_ptr.vmem [resolvable:$true] %s11785
          %11788 = dma.vmem_to_hbm [thread:$0]  %s11786, 32, %s11783, %s11771
        $region60: #{tpu_custom_call.1} parent=55 // pred_fallthru
          _
      $region56: #{tpu_custom_call.1} parent=5 // pred_fallthru
        _
      %p11789 = scmp.le.s32.totalorder 2, %s19
      // Predicated region
      $region61: #{tpu_custom_call.1} parent=5 // pred_check
        %p11790 = pneg %p11789
      $region62: #{tpu_custom_call.1} parent=5 // pred_check_branch
        %11792 = sbr.rel (%p11790) target = $region64
      $region63: #{tpu_custom_call.1} parent=5 // pred_region
        %s11793 = ssub.s32 %s19, 2
        // Predicated region
        $region65: #{tpu_custom_call.1} parent=63 // pred_check
          %p11794 = pneg %p242
        $region66: #{tpu_custom_call.1} parent=63 // pred_check_branch
          %11796 = sbr.rel (%p11794) target = $region68
        $region67: #{tpu_custom_call.1} parent=63 // pred_region
          %s11797 = sand.u32 %s227, 1
          %s11798 = scalar_lea.sflag [#allocation4], %s11797
          %s11799 = sand.u32 %s227, 1
          %s11800 = smul.addr %s11799, 2
          %s11801 = scalar_lea.vmem [#allocation3], %s11800
          %11802 = dma.done %s11798, 32
        $region68: #{tpu_custom_call.1} parent=63 // pred_fallthru
          _
      $region64: #{tpu_custom_call.1} parent=5 // pred_fallthru
        _
    $region6: #{tpu_custom_call.1} parent=1 // loop_footer
      %s23 = sadd.s32 1, %s19
    $region7: #{tpu_custom_call.1} parent=1 // loop_footer_branch
      %18 = sbr.rel target = $region3
    $region8: #{tpu_custom_call.1} parent=1 // loop_exit
      _
    %11803 = vsyncpa [#allocation4], 1
    %s11804 = scalar_lea.sflag [#allocation4], 1
    %11805 = vsyncpa %s11804, 1

</llo_original>
